<compile_context>
chip_gen: v7x
topology: tpu7x:2x2x1
jax: 0.10.0
libtpu: 0.0.40
codegen_flags: <defaults>
</compile_context>

<pallas_src>
import functools
import math

import jax
import jax.numpy as jnp
from jax.experimental import pallas as pl
from jax.experimental.pallas import tpu as pltpu

# ----------------------------- config ---------------------------------------
D_MODEL = 32
NHEAD = 4
DHEAD = D_MODEL // NHEAD
DIM_FF = 64
NUM_LAYERS = 2
LQ = 8         # number of object queries (tgt length)
LS = 16        # memory length (flattened H*W)
BATCH = 2
LN_EPS = 1e-5
RETURN_INTERMEDIATE = True


# ----------------------------- fused kernel ----------------------------------
def _decoder_kernel(tgt_ref, mem_ref, pos_ref, qpos_ref,
                    sa_wqk_ref, sa_bqk_ref, sa_wv_ref, sa_bv_ref,
                    sa_wo_ref, sa_bo_ref,
                    ca_wq_ref, ca_bq_ref, ca_wk_ref, ca_bk_ref,
                    ca_wv_ref, ca_bv_ref, ca_wo_ref, ca_bo_ref,
                    ffn_w1_ref, ffn_b1_ref, ffn_w2_ref, ffn_b2_ref,
                    ln_g_ref, ln_b_ref, fin_g_ref, fin_b_ref,
                    out_ref):
    """Entire decoder forward.  Activations are 2-D (B*L, D), batch-major rows.

    out_ref[li] = final_norm(output after layer li)  -- matches the PyTorch
    return_intermediate semantics (the pop/append of the last layer yields the
    same value, so one LN per layer suffices)."""
    f32 = jnp.float32
    tgt = tgt_ref[...].astype(f32)                    # (B*LQ, D)
    mem = mem_ref[...].astype(f32)                    # (B*LS, D)
    qpos = qpos_ref[...].astype(f32)                  # (B*LQ, D)
    mem_k = mem + pos_ref[...].astype(f32)            # cross-attn key input (layer-invariant)

    def layer_norm(x, g, b):
        mu = jnp.mean(x, axis=-1, keepdims=True)
        xc = x - mu
        var = jnp.mean(xc * xc, axis=-1, keepdims=True)
        return xc * jax.lax.rsqrt(var + LN_EPS) * g + b

    def softmax_lastdim(s):
        s = s - jnp.max(s, axis=-1, keepdims=True)
        p = jnp.exp(s)
        return p * pl.reciprocal(jnp.sum(p, axis=-1, keepdims=True), approx=False)

    def attend(q, k, v, wo, bo, lq, lk):
        # q: (B*lq, D); k, v: (B*lk, D).  Scale is already folded into q's
        # projection.  Per-head loop is static; each head does B-batched
        # einsums and accumulates its output projection through the matching
        # (DHEAD, D) row-slice of Wo^T -> no concatenate / relayout.
        q3 = q.reshape(BATCH, lq, D_MODEL)
        k3 = k.reshape(BATCH, lk, D_MODEL)
        v3 = v.reshape(BATCH, lk, D_MODEL)
        acc = jnp.zeros((BATCH * lq, D_MODEL), f32)
        for h in range(NHEAD):                         # static unroll
            sl = slice(h * DHEAD, (h + 1) * DHEAD)
            s = jnp.einsum('bqd,bkd->bqk', q3[:, :, sl], k3[:, :, sl],
                           preferred_element_type=f32)
            p = softmax_lastdim(s)
            oh = jnp.einsum('bqk,bkd->bqd', p, v3[:, :, sl],
                            preferred_element_type=f32)
            acc = acc + jnp.dot(oh.reshape(BATCH * lq, DHEAD), wo[sl, :],
                                preferred_element_type=f32)
        return acc + bo

    out = tgt
    for li in range(NUM_LAYERS):                       # static unroll over layers
        lg = ln_g_ref[li]                              # (3, D): norm1/2/3 gammas
        lb = ln_b_ref[li]                              # (3, D): norm1/2/3 betas

        # ---- self-attention: q = k = out + query_pos, v = out ----
        qk_in = out + qpos
        qk = (jnp.dot(qk_in, sa_wqk_ref[li], preferred_element_type=f32)
              + sa_bqk_ref[li])                        # fused Q|K projection, (B*LQ, 2D)
        v = jnp.dot(out, sa_wv_ref[li], preferred_element_type=f32) + sa_bv_ref[li]
        sa = attend(qk[:, :D_MODEL], qk[:, D_MODEL:], v,
                    sa_wo_ref[li], sa_bo_ref[li], LQ, LQ)
        out = layer_norm(out + sa, lg[0:1], lb[0:1])

        # ---- cross-attention: q = out + query_pos, k = memory + pos, v = memory ----
        q = jnp.dot(out + qpos, ca_wq_ref[li], preferred_element_type=f32) + ca_bq_ref[li]
        k = jnp.dot(mem_k, ca_wk_ref[li], preferred_element_type=f32) + ca_bk_ref[li]
        v = jnp.dot(mem, ca_wv_ref[li], preferred_element_type=f32) + ca_bv_ref[li]
        ca = attend(q, k, v, ca_wo_ref[li], ca_bo_ref[li], LQ, LS)
        out = layer_norm(out + ca, lg[1:2], lb[1:2])

        # ---- FFN: Linear -> ReLU -> Linear ----
        h = jnp.dot(out, ffn_w1_ref[li], preferred_element_type=f32) + ffn_b1_ref[li]
        h = jnp.maximum(h, 0.0)
        ff = jnp.dot(h, ffn_w2_ref[li], preferred_element_type=f32) + ffn_b2_ref[li]
        out = layer_norm(out + ff, lg[2:3], lb[2:3])

        # per-layer intermediate = final-norm(out)
        out_ref[li] = layer_norm(out, fin_g_ref[...], fin_b_ref[...]).astype(out_ref.dtype)


# ----------------------------- pallas wrapper --------------------------------
def _spec(shape):
    zeros = (0,) * len(shape)
    return pl.BlockSpec(shape, lambda i, _z=zeros: _z)


def _decoder_pallas(tgt2d, mem2d, pos2d, qpos2d, p):
    nl = p["sa_wqk"].shape[0]
    mq, d = tgt2d.shape
    args = (tgt2d, mem2d, pos2d, qpos2d,
            p["sa_wqk"], p["sa_bqk"], p["sa_wv"], p["sa_bv"],
            p["sa_wo"], p["sa_bo"],
            p["ca_wq"], p["ca_bq"], p["ca_wk"], p["ca_bk"],
            p["ca_wv"], p["ca_bv"], p["ca_wo"], p["ca_bo"],
            p["ffn_w1"], p["ffn_b1"], p["ffn_w2"], p["ffn_b2"],
            p["ln_g"], p["ln_b"], p["fin_g"], p["fin_b"])
    return pl.pallas_call(
        _decoder_kernel,
        out_shape=jax.ShapeDtypeStruct((nl, mq, d), tgt2d.dtype),
        grid=(1,),
        in_specs=[_spec(a.shape) for a in args],
        out_specs=_spec((nl, mq, d)),
        compiler_params=pltpu.CompilerParams(dimension_semantics=("arbitrary",)),
    )(*args)


@functools.partial(jax.jit, static_argnames=("return_intermediate",))
def transformer_decoder(tgt, memory, pos, query_pos, params,
                        return_intermediate=RETURN_INTERMEDIATE):
    """Inputs in (L, B, D) seq-first layout (PyTorch convention).
    Returns (num_layers, Lq, B, D) if return_intermediate else (1, Lq, B, D)."""
    lq, b, d = tgt.shape
    ls = memory.shape[0]
    # (L, B, D) -> (B*L, D) batch-major rows.  These are tiny (<=4 KB) relayouts
    # done once per forward inside the same jit; the decoder itself is 1 kernel.
    tgt2d = jnp.transpose(tgt, (1, 0, 2)).reshape(b * lq, d)
    mem2d = jnp.transpose(memory, (1, 0, 2)).reshape(b * ls, d)
    pos2d = jnp.transpose(pos, (1, 0, 2)).reshape(b * ls, d)
    qpos2d = jnp.transpose(query_pos, (1, 0, 2)).reshape(b * lq, d)

    stack2d = _decoder_pallas(tgt2d, mem2d, pos2d, qpos2d, params)   # (NL, B*Lq, D)
    stack = jnp.transpose(stack2d.reshape(-1, b, lq, d), (0, 2, 1, 3))  # (NL, Lq, B, D)
    if return_intermediate:
        return stack
    return stack[-1:]


# ----------------------------- parameter init --------------------------------
def init_params(key):
    """Random PyTorch-style weights, packed for the fused kernel:
    pre-transposed, attention scale folded into Wq/bq, self-attn Q|K fused,
    per-layer tensors stacked along a leading NUM_LAYERS axis."""
    scale = 1.0 / math.sqrt(DHEAD)

    def rand(k, shape):
        return jax.random.normal(k, shape, jnp.float32) * 0.02

    names = ("sa_wqk", "sa_bqk", "sa_wv", "sa_bv", "sa_wo", "sa_bo",
             "ca_wq", "ca_bq", "ca_wk", "ca_bk", "ca_wv", "ca_bv",
             "ca_wo", "ca_bo",
             "ffn_w1", "ffn_b1", "ffn_w2", "ffn_b2", "ln_g", "ln_b")
    packed = {n: [] for n in names}

    layer_keys = jax.random.split(key, NUM_LAYERS)
    for i in range(NUM_LAYERS):
        ks = jax.random.split(layer_keys[i], 10)
        # PyTorch-style (out_features, in_features) weights; biases zero.
        sWq, sWk, sWv, sWo = (rand(ks[j], (D_MODEL, D_MODEL)) for j in range(4))
        cWq, cWk, cWv, cWo = (rand(ks[j], (D_MODEL, D_MODEL)) for j in range(4, 8))
        W1 = rand(ks[8], (DIM_FF, D_MODEL))
        W2 = rand(ks[9], (D_MODEL, DIM_FF))
        zD = jnp.zeros((1, D_MODEL), jnp.float32)

        packed["sa_wqk"].append(jnp.concatenate([sWq.T * scale, sWk.T], axis=1))
        packed["sa_bqk"].append(jnp.zeros((1, 2 * D_MODEL), jnp.float32))
        packed["sa_wv"].append(sWv.T); packed["sa_bv"].append(zD)
        packed["sa_wo"].append(sWo.T); packed["sa_bo"].append(zD)
        packed["ca_wq"].append(cWq.T * scale); packed["ca_bq"].append(zD)
        packed["ca_wk"].append(cWk.T); packed["ca_bk"].append(zD)
        packed["ca_wv"].append(cWv.T); packed["ca_bv"].append(zD)
        packed["ca_wo"].append(cWo.T); packed["ca_bo"].append(zD)
        packed["ffn_w1"].append(W1.T)
        packed["ffn_b1"].append(jnp.zeros((1, DIM_FF), jnp.float32))
        packed["ffn_w2"].append(W2.T)
        packed["ffn_b2"].append(jnp.zeros((1, D_MODEL), jnp.float32))
        packed["ln_g"].append(jnp.ones((3, D_MODEL), jnp.float32))
        packed["ln_b"].append(jnp.zeros((3, D_MODEL), jnp.float32))

    params = {n: jnp.stack(v) for n, v in packed.items()}
    params["fin_g"] = jnp.ones((1, D_MODEL), jnp.float32)
    params["fin_b"] = jnp.zeros((1, D_MODEL), jnp.float32)
    return params


# ----------------------------- pure-JAX reference ----------------------------
def _ref_mha(q_in, k_in, v_in, wq, bq, wk, bk, wv, bv, wo, bo, b, lq, lk):
    q = (q_in @ wq + bq).reshape(b, lq, NHEAD, DHEAD)
    k = (k_in @ wk + bk).reshape(b, lk, NHEAD, DHEAD)
    v = (v_in @ wv + bv).reshape(b, lk, NHEAD, DHEAD)
    s = jnp.einsum('bqhd,bkhd->bhqk', q, k)
    p = jax.nn.softmax(s, axis=-1)
    o = jnp.einsum('bhqk,bkhd->bqhd', p, v).reshape(b * lq, D_MODEL)
    return o @ wo + bo


def _ref_forward(tgt, memory, pos, query_pos, p):
    lq, b, d = tgt.shape
    ls = memory.shape[0]
    t2 = jnp.transpose(tgt, (1, 0, 2)).reshape(b * lq, d)
    m2 = jnp.transpose(memory, (1, 0, 2)).reshape(b * ls, d)
    p2 = jnp.transpose(pos, (1, 0, 2)).reshape(b * ls, d)
    q2 = jnp.transpose(query_pos, (1, 0, 2)).reshape(b * lq, d)

    def ln(x, g, beta):
        mu = x.mean(-1, keepdims=True)
        var = ((x - mu) ** 2).mean(-1, keepdims=True)
        return (x - mu) / jnp.sqrt(var + LN_EPS) * g + beta

    out = t2
    memk = m2 + p2
    outs = []
    for li in range(NUM_LAYERS):
        wqk, bqk = p["sa_wqk"][li], p["sa_bqk"][li]
        sa = _ref_mha(out + q2, out + q2, out,
                      wqk[:, :d], bqk[:, :d], wqk[:, d:], bqk[:, d:],
                      p["sa_wv"][li], p["sa_bv"][li],
                      p["sa_wo"][li], p["sa_bo"][li], b, lq, lq)
        out = ln(out + sa, p["ln_g"][li, 0:1], p["ln_b"][li, 0:1])
        ca = _ref_mha(out + q2, memk, m2,
                      p["ca_wq"][li], p["ca_bq"][li],
                      p["ca_wk"][li], p["ca_bk"][li],
                      p["ca_wv"][li], p["ca_bv"][li],
                      p["ca_wo"][li], p["ca_bo"][li], b, lq, ls)
        out = ln(out + ca, p["ln_g"][li, 1:2], p["ln_b"][li, 1:2])
        h = jnp.maximum(out @ p["ffn_w1"][li] + p["ffn_b1"][li], 0.0)
        ff = h @ p["ffn_w2"][li] + p["ffn_b2"][li]
        out = ln(out + ff, p["ln_g"][li, 2:3], p["ln_b"][li, 2:3])
        outs.append(ln(out, p["fin_g"], p["fin_b"]))
    stack2d = jnp.stack(outs)
    return jnp.transpose(stack2d.reshape(-1, b, lq, d), (0, 2, 1, 3))


# ----------------------------- main ------------------------------------------
if __name__ == "__main__":
    key = jax.random.PRNGKey(0)
    k_tgt, k_mem, k_pos, k_qpos, k_par = jax.random.split(key, 5)

    # (L, B, D) seq-first layout, as in the PyTorch module.
    tgt = jax.random.normal(k_tgt, (LQ, BATCH, D_MODEL), jnp.float32)
    memory = jax.random.normal(k_mem, (LS, BATCH, D_MODEL), jnp.float32)
    pos = jax.random.normal(k_pos, (LS, BATCH, D_MODEL), jnp.float32)
    query_pos = jax.random.normal(k_qpos, (LQ, BATCH, D_MODEL), jnp.float32)

    params = init_params(k_par)

    out = transformer_decoder(tgt, memory, pos, query_pos, params,
                              return_intermediate=RETURN_INTERMEDIATE)
    out = jax.block_until_ready(out)
    assert out.shape == (NUM_LAYERS, LQ, BATCH, D_MODEL), out.shape
    assert bool(jnp.all(jnp.isfinite(out)))

    ref = _ref_forward(tgt, memory, pos, query_pos, params)
    err = float(jnp.max(jnp.abs(out - ref)))
    assert err < 2e-3, f"max abs error vs pure-JAX reference: {err}"
    print("KERNEL_OK")
</pallas_src>

<mosaic_0001>
module attributes {stable_mosaic.version = 11 : i64} {
  func.func @_decoder_kernel(%arg0: i32, %arg1: memref<16x32xf32, #tpu.memory_space<vmem>>, %arg2: memref<32x32xf32, #tpu.memory_space<vmem>>, %arg3: memref<32x32xf32, #tpu.memory_space<vmem>>, %arg4: memref<16x32xf32, #tpu.memory_space<vmem>>, %arg5: memref<2x32x64xf32, #tpu.memory_space<vmem>>, %arg6: memref<2x1x64xf32, #tpu.memory_space<vmem>>, %arg7: memref<2x32x32xf32, #tpu.memory_space<vmem>>, %arg8: memref<2x1x32xf32, #tpu.memory_space<vmem>>, %arg9: memref<2x32x32xf32, #tpu.memory_space<vmem>>, %arg10: memref<2x1x32xf32, #tpu.memory_space<vmem>>, %arg11: memref<2x32x32xf32, #tpu.memory_space<vmem>>, %arg12: memref<2x1x32xf32, #tpu.memory_space<vmem>>, %arg13: memref<2x32x32xf32, #tpu.memory_space<vmem>>, %arg14: memref<2x1x32xf32, #tpu.memory_space<vmem>>, %arg15: memref<2x32x32xf32, #tpu.memory_space<vmem>>, %arg16: memref<2x1x32xf32, #tpu.memory_space<vmem>>, %arg17: memref<2x32x32xf32, #tpu.memory_space<vmem>>, %arg18: memref<2x1x32xf32, #tpu.memory_space<vmem>>, %arg19: memref<2x32x64xf32, #tpu.memory_space<vmem>>, %arg20: memref<2x1x64xf32, #tpu.memory_space<vmem>>, %arg21: memref<2x64x32xf32, #tpu.memory_space<vmem>>, %arg22: memref<2x1x32xf32, #tpu.memory_space<vmem>>, %arg23: memref<2x3x32xf32, #tpu.memory_space<vmem>>, %arg24: memref<2x3x32xf32, #tpu.memory_space<vmem>>, %arg25: memref<1x32xf32, #tpu.memory_space<vmem>>, %arg26: memref<1x32xf32, #tpu.memory_space<vmem>>, %arg27: memref<2x16x32xf32, #tpu.memory_space<vmem>>) attributes {dimension_semantics = [#tpu.dimension_semantics<arbitrary>], iteration_bounds = array<i64: 1>, scalar_prefetch = 0 : i64, scratch_operands = 0 : i64, tpu.core_type = #tpu.core_type<tc>, window_params = [{pipeline_mode = #tpu.pipeline_mode<synchronous>, transform_indices = @transform_0, window_bounds = array<i64: 16, 32>}, {pipeline_mode = #tpu.pipeline_mode<synchronous>, transform_indices = @transform_1, window_bounds = array<i64: 32, 32>}, {pipeline_mode = #tpu.pipeline_mode<synchronous>, transform_indices = @transform_2, window_bounds = array<i64: 32, 32>}, {pipeline_mode = #tpu.pipeline_mode<synchronous>, transform_indices = @transform_3, window_bounds = array<i64: 16, 32>}, {pipeline_mode = #tpu.pipeline_mode<synchronous>, transform_indices = @transform_4, window_bounds = array<i64: 2, 32, 64>}, {pipeline_mode = #tpu.pipeline_mode<synchronous>, transform_indices = @transform_5, window_bounds = array<i64: 2, 1, 64>}, {pipeline_mode = #tpu.pipeline_mode<synchronous>, transform_indices = @transform_6, window_bounds = array<i64: 2, 32, 32>}, {pipeline_mode = #tpu.pipeline_mode<synchronous>, transform_indices = @transform_7, window_bounds = array<i64: 2, 1, 32>}, {pipeline_mode = #tpu.pipeline_mode<synchronous>, transform_indices = @transform_8, window_bounds = array<i64: 2, 32, 32>}, {pipeline_mode = #tpu.pipeline_mode<synchronous>, transform_indices = @transform_9, window_bounds = array<i64: 2, 1, 32>}, {pipeline_mode = #tpu.pipeline_mode<synchronous>, transform_indices = @transform_10, window_bounds = array<i64: 2, 32, 32>}, {pipeline_mode = #tpu.pipeline_mode<synchronous>, transform_indices = @transform_11, window_bounds = array<i64: 2, 1, 32>}, {pipeline_mode = #tpu.pipeline_mode<synchronous>, transform_indices = @transform_12, window_bounds = array<i64: 2, 32, 32>}, {pipeline_mode = #tpu.pipeline_mode<synchronous>, transform_indices = @transform_13, window_bounds = array<i64: 2, 1, 32>}, {pipeline_mode = #tpu.pipeline_mode<synchronous>, transform_indices = @transform_14, window_bounds = array<i64: 2, 32, 32>}, {pipeline_mode = #tpu.pipeline_mode<synchronous>, transform_indices = @transform_15, window_bounds = array<i64: 2, 1, 32>}, {pipeline_mode = #tpu.pipeline_mode<synchronous>, transform_indices = @transform_16, window_bounds = array<i64: 2, 32, 32>}, {pipeline_mode = #tpu.pipeline_mode<synchronous>, transform_indices = @transform_17, window_bounds = array<i64: 2, 1, 32>}, {pipeline_mode = #tpu.pipeline_mode<synchronous>, transform_indices = @transform_18, window_bounds = array<i64: 2, 32, 64>}, {pipeline_mode = #tpu.pipeline_mode<synchronous>, transform_indices = @transform_19, window_bounds = array<i64: 2, 1, 64>}, {pipeline_mode = #tpu.pipeline_mode<synchronous>, transform_indices = @transform_20, window_bounds = array<i64: 2, 64, 32>}, {pipeline_mode = #tpu.pipeline_mode<synchronous>, transform_indices = @transform_21, window_bounds = array<i64: 2, 1, 32>}, {pipeline_mode = #tpu.pipeline_mode<synchronous>, transform_indices = @transform_22, window_bounds = array<i64: 2, 3, 32>}, {pipeline_mode = #tpu.pipeline_mode<synchronous>, transform_indices = @transform_23, window_bounds = array<i64: 2, 3, 32>}, {pipeline_mode = #tpu.pipeline_mode<synchronous>, transform_indices = @transform_24, window_bounds = array<i64: 1, 32>}, {pipeline_mode = #tpu.pipeline_mode<synchronous>, transform_indices = @transform_25, window_bounds = array<i64: 1, 32>}, {pipeline_mode = #tpu.pipeline_mode<synchronous>, transform_indices = @transform_26, window_bounds = array<i64: 2, 16, 32>}]} {
    %c0 = arith.constant 0 : index
    %c0_0 = arith.constant 0 : index
    %0 = vector.load %arg1[%c0, %c0_0] : memref<16x32xf32, #tpu.memory_space<vmem>>, vector<16x32xf32>
    %c0_1 = arith.constant 0 : index
    %c0_2 = arith.constant 0 : index
    %1 = vector.load %arg2[%c0_1, %c0_2] : memref<32x32xf32, #tpu.memory_space<vmem>>, vector<32x32xf32>
    %c0_3 = arith.constant 0 : index
    %c0_4 = arith.constant 0 : index
    %2 = vector.load %arg4[%c0_3, %c0_4] : memref<16x32xf32, #tpu.memory_space<vmem>>, vector<16x32xf32>
    %c0_5 = arith.constant 0 : index
    %c0_6 = arith.constant 0 : index
    %3 = vector.load %arg3[%c0_5, %c0_6] : memref<32x32xf32, #tpu.memory_space<vmem>>, vector<32x32xf32>
    %4 = arith.addf %1, %3 : vector<32x32xf32>
    %c0_7 = arith.constant 0 : index
    %c0_8 = arith.constant 0 : index
    %c0_9 = arith.constant 0 : index
    %5 = vector.load %arg23[%c0_7, %c0_8, %c0_9] : memref<2x3x32xf32, #tpu.memory_space<vmem>>, vector<1x3x32xf32>
    %6 = vector.shape_cast %5 : vector<1x3x32xf32> to vector<3x32xf32>
    %c0_10 = arith.constant 0 : index
    %c0_11 = arith.constant 0 : index
    %c0_12 = arith.constant 0 : index
    %7 = vector.load %arg24[%c0_10, %c0_11, %c0_12] : memref<2x3x32xf32, #tpu.memory_space<vmem>>, vector<1x3x32xf32>
    %8 = vector.shape_cast %7 : vector<1x3x32xf32> to vector<3x32xf32>
    %9 = arith.addf %0, %2 : vector<16x32xf32>
    %c0_13 = arith.constant 0 : index
    %c0_14 = arith.constant 0 : index
    %c0_15 = arith.constant 0 : index
    %10 = vector.load %arg5[%c0_13, %c0_14, %c0_15] : memref<2x32x64xf32, #tpu.memory_space<vmem>>, vector<1x32x64xf32>
    %11 = vector.shape_cast %10 : vector<1x32x64xf32> to vector<32x64xf32>
    %cst = arith.constant dense<0.000000e+00> : vector<16x64xf32>
    %12 = tpu.matmul %9, %11, %cst {dimension_numbers = #tpu.dot_dimension_numbers<[1], [0], [0], [1], [0, 0, 1, 1], [], []>} : vector<16x32xf32>, vector<32x64xf32>, vector<16x64xf32> -> vector<16x64xf32>
    %c0_16 = arith.constant 0 : index
    %c0_17 = arith.constant 0 : index
    %c0_18 = arith.constant 0 : index
    %13 = vector.load %arg6[%c0_16, %c0_17, %c0_18] : memref<2x1x64xf32, #tpu.memory_space<vmem>>, vector<1x1x64xf32>
    %14 = vector.shape_cast %13 : vector<1x1x64xf32> to vector<1x64xf32>
    %15 = vector.broadcast %14 : vector<1x64xf32> to vector<16x64xf32>
    %16 = arith.addf %12, %15 : vector<16x64xf32>
    %c0_19 = arith.constant 0 : index
    %c0_20 = arith.constant 0 : index
    %c0_21 = arith.constant 0 : index
    %17 = vector.load %arg7[%c0_19, %c0_20, %c0_21] : memref<2x32x32xf32, #tpu.memory_space<vmem>>, vector<1x32x32xf32>
    %18 = vector.shape_cast %17 : vector<1x32x32xf32> to vector<32x32xf32>
    %cst_22 = arith.constant dense<0.000000e+00> : vector<16x32xf32>
    %19 = tpu.matmul %0, %18, %cst_22 {dimension_numbers = #tpu.dot_dimension_numbers<[1], [0], [0], [1], [0, 0, 1, 1], [], []>} : vector<16x32xf32>, vector<32x32xf32>, vector<16x32xf32> -> vector<16x32xf32>
    %c0_23 = arith.constant 0 : index
    %c0_24 = arith.constant 0 : index
    %c0_25 = arith.constant 0 : index
    %20 = vector.load %arg8[%c0_23, %c0_24, %c0_25] : memref<2x1x32xf32, #tpu.memory_space<vmem>>, vector<1x1x32xf32>
    %21 = vector.shape_cast %20 : vector<1x1x32xf32> to vector<1x32xf32>
    %22 = vector.broadcast %21 : vector<1x32xf32> to vector<16x32xf32>
    %23 = arith.addf %19, %22 : vector<16x32xf32>
    %24 = vector.extract_strided_slice %16 {offsets = [0, 0], sizes = [16, 32], strides = [1, 1]} : vector<16x64xf32> to vector<16x32xf32>
    %25 = vector.extract_strided_slice %16 {offsets = [0, 32], sizes = [16, 32], strides = [1, 1]} : vector<16x64xf32> to vector<16x32xf32>
    %c0_26 = arith.constant 0 : index
    %c0_27 = arith.constant 0 : index
    %c0_28 = arith.constant 0 : index
    %26 = vector.load %arg9[%c0_26, %c0_27, %c0_28] : memref<2x32x32xf32, #tpu.memory_space<vmem>>, vector<1x32x32xf32>
    %27 = vector.shape_cast %26 : vector<1x32x32xf32> to vector<32x32xf32>
    %c0_29 = arith.constant 0 : index
    %c0_30 = arith.constant 0 : index
    %c0_31 = arith.constant 0 : index
    %28 = vector.load %arg10[%c0_29, %c0_30, %c0_31] : memref<2x1x32xf32, #tpu.memory_space<vmem>>, vector<1x1x32xf32>
    %29 = vector.shape_cast %28 : vector<1x1x32xf32> to vector<1x32xf32>
    %30 = vector.shape_cast %24 : vector<16x32xf32> to vector<2x8x32xf32>
    %31 = vector.shape_cast %25 : vector<16x32xf32> to vector<2x8x32xf32>
    %32 = vector.shape_cast %23 : vector<16x32xf32> to vector<2x8x32xf32>
    %cst_32 = arith.constant 0.000000e+00 : f32
    %33 = vector.broadcast %cst_32 : f32 to vector<16x32xf32>
    %34 = vector.extract_strided_slice %30 {offsets = [0, 0, 0], sizes = [2, 8, 8], strides = [1, 1, 1]} : vector<2x8x32xf32> to vector<2x8x8xf32>
    %35 = vector.extract_strided_slice %31 {offsets = [0, 0, 0], sizes = [2, 8, 8], strides = [1, 1, 1]} : vector<2x8x32xf32> to vector<2x8x8xf32>
    "tpu.trace_start"() <{level = 10 : i32, message = "bqd,bkd->bqk"}> : () -> ()
    %cst_33 = arith.constant dense<0.000000e+00> : vector<2x8x8xf32>
    %36 = tpu.matmul %34, %35, %cst_33 {dimension_numbers = #tpu.dot_dimension_numbers<[2], [2], [1], [1], [0, 0, 0, 1, 1, 1], [0], [0]>} : vector<2x8x8xf32>, vector<2x8x8xf32>, vector<2x8x8xf32> -> vector<2x8x8xf32>
    "tpu.trace_stop"() : () -> ()
    %cst_34 = arith.constant dense<0xFF800000> : vector<2x8xf32>
    %37 = vector.multi_reduction <maximumf>, %36, %cst_34 [2] : vector<2x8x8xf32> to vector<2x8xf32>
    %38 = vector.shape_cast %37 : vector<2x8xf32> to vector<2x8x1xf32>
    %39 = vector.broadcast %38 : vector<2x8x1xf32> to vector<2x8x8xf32>
    %40 = arith.subf %36, %39 : vector<2x8x8xf32>
    %41 = math.exp %40 : vector<2x8x8xf32>
    %cst_35 = arith.constant dense<0.000000e+00> : vector<2x8xf32>
    %42 = vector.multi_reduction <add>, %41, %cst_35 [2] : vector<2x8x8xf32> to vector<2x8xf32>
    %43 = vector.shape_cast %42 : vector<2x8xf32> to vector<2x8x1xf32>
    %44 = tpu.reciprocal %43 : vector<2x8x1xf32> -> vector<2x8x1xf32>
    %45 = vector.broadcast %44 : vector<2x8x1xf32> to vector<2x8x8xf32>
    %46 = arith.mulf %41, %45 : vector<2x8x8xf32>
    %47 = vector.extract_strided_slice %32 {offsets = [0, 0, 0], sizes = [2, 8, 8], strides = [1, 1, 1]} : vector<2x8x32xf32> to vector<2x8x8xf32>
    "tpu.trace_start"() <{level = 10 : i32, message = "bqk,bkd->bqd"}> : () -> ()
    %cst_36 = arith.constant dense<0.000000e+00> : vector<2x8x8xf32>
    %48 = tpu.matmul %46, %47, %cst_36 {dimension_numbers = #tpu.dot_dimension_numbers<[2], [1], [1], [2], [0, 0, 0, 1, 1, 2], [0], [0]>} : vector<2x8x8xf32>, vector<2x8x8xf32>, vector<2x8x8xf32> -> vector<2x8x8xf32>
    "tpu.trace_stop"() : () -> ()
    %49 = vector.shape_cast %48 : vector<2x8x8xf32> to vector<16x8xf32>
    %50 = vector.extract_strided_slice %27 {offsets = [0, 0], sizes = [8, 32], strides = [1, 1]} : vector<32x32xf32> to vector<8x32xf32>
    %cst_37 = arith.constant dense<0.000000e+00> : vector<16x32xf32>
    %51 = tpu.matmul %49, %50, %cst_37 {dimension_numbers = #tpu.dot_dimension_numbers<[1], [0], [0], [1], [0, 0, 1, 1], [], []>} : vector<16x8xf32>, vector<8x32xf32>, vector<16x32xf32> -> vector<16x32xf32>
    %52 = arith.addf %33, %51 : vector<16x32xf32>
    %53 = vector.extract_strided_slice %30 {offsets = [0, 0, 8], sizes = [2, 8, 8], strides = [1, 1, 1]} : vector<2x8x32xf32> to vector<2x8x8xf32>
    %54 = vector.extract_strided_slice %31 {offsets = [0, 0, 8], sizes = [2, 8, 8], strides = [1, 1, 1]} : vector<2x8x32xf32> to vector<2x8x8xf32>
    "tpu.trace_start"() <{level = 10 : i32, message = "bqd,bkd->bqk"}> : () -> ()
    %cst_38 = arith.constant dense<0.000000e+00> : vector<2x8x8xf32>
    %55 = tpu.matmul %53, %54, %cst_38 {dimension_numbers = #tpu.dot_dimension_numbers<[2], [2], [1], [1], [0, 0, 0, 1, 1, 1], [0], [0]>} : vector<2x8x8xf32>, vector<2x8x8xf32>, vector<2x8x8xf32> -> vector<2x8x8xf32>
    "tpu.trace_stop"() : () -> ()
    %cst_39 = arith.constant dense<0xFF800000> : vector<2x8xf32>
    %56 = vector.multi_reduction <maximumf>, %55, %cst_39 [2] : vector<2x8x8xf32> to vector<2x8xf32>
    %57 = vector.shape_cast %56 : vector<2x8xf32> to vector<2x8x1xf32>
    %58 = vector.broadcast %57 : vector<2x8x1xf32> to vector<2x8x8xf32>
    %59 = arith.subf %55, %58 : vector<2x8x8xf32>
    %60 = math.exp %59 : vector<2x8x8xf32>
    %cst_40 = arith.constant dense<0.000000e+00> : vector<2x8xf32>
    %61 = vector.multi_reduction <add>, %60, %cst_40 [2] : vector<2x8x8xf32> to vector<2x8xf32>
    %62 = vector.shape_cast %61 : vector<2x8xf32> to vector<2x8x1xf32>
    %63 = tpu.reciprocal %62 : vector<2x8x1xf32> -> vector<2x8x1xf32>
    %64 = vector.broadcast %63 : vector<2x8x1xf32> to vector<2x8x8xf32>
    %65 = arith.mulf %60, %64 : vector<2x8x8xf32>
    %66 = vector.extract_strided_slice %32 {offsets = [0, 0, 8], sizes = [2, 8, 8], strides = [1, 1, 1]} : vector<2x8x32xf32> to vector<2x8x8xf32>
    "tpu.trace_start"() <{level = 10 : i32, message = "bqk,bkd->bqd"}> : () -> ()
    %cst_41 = arith.constant dense<0.000000e+00> : vector<2x8x8xf32>
    %67 = tpu.matmul %65, %66, %cst_41 {dimension_numbers = #tpu.dot_dimension_numbers<[2], [1], [1], [2], [0, 0, 0, 1, 1, 2], [0], [0]>} : vector<2x8x8xf32>, vector<2x8x8xf32>, vector<2x8x8xf32> -> vector<2x8x8xf32>
    "tpu.trace_stop"() : () -> ()
    %68 = vector.shape_cast %67 : vector<2x8x8xf32> to vector<16x8xf32>
    %69 = vector.extract_strided_slice %27 {offsets = [8, 0], sizes = [8, 32], strides = [1, 1]} : vector<32x32xf32> to vector<8x32xf32>
    %cst_42 = arith.constant dense<0.000000e+00> : vector<16x32xf32>
    %70 = tpu.matmul %68, %69, %cst_42 {dimension_numbers = #tpu.dot_dimension_numbers<[1], [0], [0], [1], [0, 0, 1, 1], [], []>} : vector<16x8xf32>, vector<8x32xf32>, vector<16x32xf32> -> vector<16x32xf32>
    %71 = arith.addf %52, %70 : vector<16x32xf32>
    %72 = vector.extract_strided_slice %30 {offsets = [0, 0, 16], sizes = [2, 8, 8], strides = [1, 1, 1]} : vector<2x8x32xf32> to vector<2x8x8xf32>
    %73 = vector.extract_strided_slice %31 {offsets = [0, 0, 16], sizes = [2, 8, 8], strides = [1, 1, 1]} : vector<2x8x32xf32> to vector<2x8x8xf32>
    "tpu.trace_start"() <{level = 10 : i32, message = "bqd,bkd->bqk"}> : () -> ()
    %cst_43 = arith.constant dense<0.000000e+00> : vector<2x8x8xf32>
    %74 = tpu.matmul %72, %73, %cst_43 {dimension_numbers = #tpu.dot_dimension_numbers<[2], [2], [1], [1], [0, 0, 0, 1, 1, 1], [0], [0]>} : vector<2x8x8xf32>, vector<2x8x8xf32>, vector<2x8x8xf32> -> vector<2x8x8xf32>
    "tpu.trace_stop"() : () -> ()
    %cst_44 = arith.constant dense<0xFF800000> : vector<2x8xf32>
    %75 = vector.multi_reduction <maximumf>, %74, %cst_44 [2] : vector<2x8x8xf32> to vector<2x8xf32>
    %76 = vector.shape_cast %75 : vector<2x8xf32> to vector<2x8x1xf32>
    %77 = vector.broadcast %76 : vector<2x8x1xf32> to vector<2x8x8xf32>
    %78 = arith.subf %74, %77 : vector<2x8x8xf32>
    %79 = math.exp %78 : vector<2x8x8xf32>
    %cst_45 = arith.constant dense<0.000000e+00> : vector<2x8xf32>
    %80 = vector.multi_reduction <add>, %79, %cst_45 [2] : vector<2x8x8xf32> to vector<2x8xf32>
    %81 = vector.shape_cast %80 : vector<2x8xf32> to vector<2x8x1xf32>
    %82 = tpu.reciprocal %81 : vector<2x8x1xf32> -> vector<2x8x1xf32>
    %83 = vector.broadcast %82 : vector<2x8x1xf32> to vector<2x8x8xf32>
    %84 = arith.mulf %79, %83 : vector<2x8x8xf32>
    %85 = vector.extract_strided_slice %32 {offsets = [0, 0, 16], sizes = [2, 8, 8], strides = [1, 1, 1]} : vector<2x8x32xf32> to vector<2x8x8xf32>
    "tpu.trace_start"() <{level = 10 : i32, message = "bqk,bkd->bqd"}> : () -> ()
    %cst_46 = arith.constant dense<0.000000e+00> : vector<2x8x8xf32>
    %86 = tpu.matmul %84, %85, %cst_46 {dimension_numbers = #tpu.dot_dimension_numbers<[2], [1], [1], [2], [0, 0, 0, 1, 1, 2], [0], [0]>} : vector<2x8x8xf32>, vector<2x8x8xf32>, vector<2x8x8xf32> -> vector<2x8x8xf32>
    "tpu.trace_stop"() : () -> ()
    %87 = vector.shape_cast %86 : vector<2x8x8xf32> to vector<16x8xf32>
    %88 = vector.extract_strided_slice %27 {offsets = [16, 0], sizes = [8, 32], strides = [1, 1]} : vector<32x32xf32> to vector<8x32xf32>
    %cst_47 = arith.constant dense<0.000000e+00> : vector<16x32xf32>
    %89 = tpu.matmul %87, %88, %cst_47 {dimension_numbers = #tpu.dot_dimension_numbers<[1], [0], [0], [1], [0, 0, 1, 1], [], []>} : vector<16x8xf32>, vector<8x32xf32>, vector<16x32xf32> -> vector<16x32xf32>
    %90 = arith.addf %71, %89 : vector<16x32xf32>
    %91 = vector.extract_strided_slice %30 {offsets = [0, 0, 24], sizes = [2, 8, 8], strides = [1, 1, 1]} : vector<2x8x32xf32> to vector<2x8x8xf32>
    %92 = vector.extract_strided_slice %31 {offsets = [0, 0, 24], sizes = [2, 8, 8], strides = [1, 1, 1]} : vector<2x8x32xf32> to vector<2x8x8xf32>
    "tpu.trace_start"() <{level = 10 : i32, message = "bqd,bkd->bqk"}> : () -> ()
    %cst_48 = arith.constant dense<0.000000e+00> : vector<2x8x8xf32>
    %93 = tpu.matmul %91, %92, %cst_48 {dimension_numbers = #tpu.dot_dimension_numbers<[2], [2], [1], [1], [0, 0, 0, 1, 1, 1], [0], [0]>} : vector<2x8x8xf32>, vector<2x8x8xf32>, vector<2x8x8xf32> -> vector<2x8x8xf32>
    "tpu.trace_stop"() : () -> ()
    %cst_49 = arith.constant dense<0xFF800000> : vector<2x8xf32>
    %94 = vector.multi_reduction <maximumf>, %93, %cst_49 [2] : vector<2x8x8xf32> to vector<2x8xf32>
    %95 = vector.shape_cast %94 : vector<2x8xf32> to vector<2x8x1xf32>
    %96 = vector.broadcast %95 : vector<2x8x1xf32> to vector<2x8x8xf32>
    %97 = arith.subf %93, %96 : vector<2x8x8xf32>
    %98 = math.exp %97 : vector<2x8x8xf32>
    %cst_50 = arith.constant dense<0.000000e+00> : vector<2x8xf32>
    %99 = vector.multi_reduction <add>, %98, %cst_50 [2] : vector<2x8x8xf32> to vector<2x8xf32>
    %100 = vector.shape_cast %99 : vector<2x8xf32> to vector<2x8x1xf32>
    %101 = tpu.reciprocal %100 : vector<2x8x1xf32> -> vector<2x8x1xf32>
    %102 = vector.broadcast %101 : vector<2x8x1xf32> to vector<2x8x8xf32>
    %103 = arith.mulf %98, %102 : vector<2x8x8xf32>
    %104 = vector.extract_strided_slice %32 {offsets = [0, 0, 24], sizes = [2, 8, 8], strides = [1, 1, 1]} : vector<2x8x32xf32> to vector<2x8x8xf32>
    "tpu.trace_start"() <{level = 10 : i32, message = "bqk,bkd->bqd"}> : () -> ()
    %cst_51 = arith.constant dense<0.000000e+00> : vector<2x8x8xf32>
    %105 = tpu.matmul %103, %104, %cst_51 {dimension_numbers = #tpu.dot_dimension_numbers<[2], [1], [1], [2], [0, 0, 0, 1, 1, 2], [0], [0]>} : vector<2x8x8xf32>, vector<2x8x8xf32>, vector<2x8x8xf32> -> vector<2x8x8xf32>
    "tpu.trace_stop"() : () -> ()
    %106 = vector.shape_cast %105 : vector<2x8x8xf32> to vector<16x8xf32>
    %107 = vector.extract_strided_slice %27 {offsets = [24, 0], sizes = [8, 32], strides = [1, 1]} : vector<32x32xf32> to vector<8x32xf32>
    %cst_52 = arith.constant dense<0.000000e+00> : vector<16x32xf32>
    %108 = tpu.matmul %106, %107, %cst_52 {dimension_numbers = #tpu.dot_dimension_numbers<[1], [0], [0], [1], [0, 0, 1, 1], [], []>} : vector<16x8xf32>, vector<8x32xf32>, vector<16x32xf32> -> vector<16x32xf32>
    %109 = arith.addf %90, %108 : vector<16x32xf32>
    %110 = vector.broadcast %29 : vector<1x32xf32> to vector<16x32xf32>
    %111 = arith.addf %109, %110 : vector<16x32xf32>
    %112 = arith.addf %0, %111 : vector<16x32xf32>
    %113 = vector.extract_strided_slice %6 {offsets = [0, 0], sizes = [1, 32], strides = [1, 1]} : vector<3x32xf32> to vector<1x32xf32>
    %114 = vector.extract_strided_slice %8 {offsets = [0, 0], sizes = [1, 32], strides = [1, 1]} : vector<3x32xf32> to vector<1x32xf32>
    %cst_53 = arith.constant dense<0.000000e+00> : vector<16xf32>
    %115 = vector.multi_reduction <add>, %112, %cst_53 [1] : vector<16x32xf32> to vector<16xf32>
    %116 = vector.shape_cast %115 : vector<16xf32> to vector<16x1xf32>
    %cst_54 = arith.constant 3.200000e+01 : f32
    %117 = vector.broadcast %cst_54 : f32 to vector<16x1xf32>
    %118 = arith.divf %116, %117 : vector<16x1xf32>
    %119 = vector.broadcast %118 : vector<16x1xf32> to vector<16x32xf32>
    %120 = arith.subf %112, %119 : vector<16x32xf32>
    %121 = arith.mulf %120, %120 : vector<16x32xf32>
    %cst_55 = arith.constant dense<0.000000e+00> : vector<16xf32>
    %122 = vector.multi_reduction <add>, %121, %cst_55 [1] : vector<16x32xf32> to vector<16xf32>
    %123 = vector.shape_cast %122 : vector<16xf32> to vector<16x1xf32>
    %cst_56 = arith.constant 3.200000e+01 : f32
    %124 = vector.broadcast %cst_56 : f32 to vector<16x1xf32>
    %125 = arith.divf %123, %124 : vector<16x1xf32>
    %cst_57 = arith.constant 9.99999974E-6 : f32
    %126 = vector.broadcast %cst_57 : f32 to vector<16x1xf32>
    %127 = arith.addf %125, %126 : vector<16x1xf32>
    %128 = math.rsqrt %127 : vector<16x1xf32>
    %129 = vector.broadcast %128 : vector<16x1xf32> to vector<16x32xf32>
    %130 = arith.mulf %120, %129 : vector<16x32xf32>
    %131 = vector.broadcast %113 : vector<1x32xf32> to vector<16x32xf32>
    %132 = arith.mulf %130, %131 : vector<16x32xf32>
    %133 = vector.broadcast %114 : vector<1x32xf32> to vector<16x32xf32>
    %134 = arith.addf %132, %133 : vector<16x32xf32>
    %135 = arith.addf %134, %2 : vector<16x32xf32>
    %c0_58 = arith.constant 0 : index
    %c0_59 = arith.constant 0 : index
    %c0_60 = arith.constant 0 : index
    %136 = vector.load %arg11[%c0_58, %c0_59, %c0_60] : memref<2x32x32xf32, #tpu.memory_space<vmem>>, vector<1x32x32xf32>
    %137 = vector.shape_cast %136 : vector<1x32x32xf32> to vector<32x32xf32>
    %cst_61 = arith.constant dense<0.000000e+00> : vector<16x32xf32>
    %138 = tpu.matmul %135, %137, %cst_61 {dimension_numbers = #tpu.dot_dimension_numbers<[1], [0], [0], [1], [0, 0, 1, 1], [], []>} : vector<16x32xf32>, vector<32x32xf32>, vector<16x32xf32> -> vector<16x32xf32>
    %c0_62 = arith.constant 0 : index
    %c0_63 = arith.constant 0 : index
    %c0_64 = arith.constant 0 : index
    %139 = vector.load %arg12[%c0_62, %c0_63, %c0_64] : memref<2x1x32xf32, #tpu.memory_space<vmem>>, vector<1x1x32xf32>
    %140 = vector.shape_cast %139 : vector<1x1x32xf32> to vector<1x32xf32>
    %141 = vector.broadcast %140 : vector<1x32xf32> to vector<16x32xf32>
    %142 = arith.addf %138, %141 : vector<16x32xf32>
    %c0_65 = arith.constant 0 : index
    %c0_66 = arith.constant 0 : index
    %c0_67 = arith.constant 0 : index
    %143 = vector.load %arg13[%c0_65, %c0_66, %c0_67] : memref<2x32x32xf32, #tpu.memory_space<vmem>>, vector<1x32x32xf32>
    %144 = vector.shape_cast %143 : vector<1x32x32xf32> to vector<32x32xf32>
    %cst_68 = arith.constant dense<0.000000e+00> : vector<32x32xf32>
    %145 = tpu.matmul %4, %144, %cst_68 {dimension_numbers = #tpu.dot_dimension_numbers<[1], [0], [0], [1], [0, 0, 1, 1], [], []>} : vector<32x32xf32>, vector<32x32xf32>, vector<32x32xf32> -> vector<32x32xf32>
    %c0_69 = arith.constant 0 : index
    %c0_70 = arith.constant 0 : index
    %c0_71 = arith.constant 0 : index
    %146 = vector.load %arg14[%c0_69, %c0_70, %c0_71] : memref<2x1x32xf32, #tpu.memory_space<vmem>>, vector<1x1x32xf32>
    %147 = vector.shape_cast %146 : vector<1x1x32xf32> to vector<1x32xf32>
    %148 = vector.broadcast %147 : vector<1x32xf32> to vector<32x32xf32>
    %149 = arith.addf %145, %148 : vector<32x32xf32>
    %c0_72 = arith.constant 0 : index
    %c0_73 = arith.constant 0 : index
    %c0_74 = arith.constant 0 : index
    %150 = vector.load %arg15[%c0_72, %c0_73, %c0_74] : memref<2x32x32xf32, #tpu.memory_space<vmem>>, vector<1x32x32xf32>
    %151 = vector.shape_cast %150 : vector<1x32x32xf32> to vector<32x32xf32>
    %cst_75 = arith.constant dense<0.000000e+00> : vector<32x32xf32>
    %152 = tpu.matmul %1, %151, %cst_75 {dimension_numbers = #tpu.dot_dimension_numbers<[1], [0], [0], [1], [0, 0, 1, 1], [], []>} : vector<32x32xf32>, vector<32x32xf32>, vector<32x32xf32> -> vector<32x32xf32>
    %c0_76 = arith.constant 0 : index
    %c0_77 = arith.constant 0 : index
    %c0_78 = arith.constant 0 : index
    %153 = vector.load %arg16[%c0_76, %c0_77, %c0_78] : memref<2x1x32xf32, #tpu.memory_space<vmem>>, vector<1x1x32xf32>
    %154 = vector.shape_cast %153 : vector<1x1x32xf32> to vector<1x32xf32>
    %155 = vector.broadcast %154 : vector<1x32xf32> to vector<32x32xf32>
    %156 = arith.addf %152, %155 : vector<32x32xf32>
    %c0_79 = arith.constant 0 : index
    %c0_80 = arith.constant 0 : index
    %c0_81 = arith.constant 0 : index
    %157 = vector.load %arg17[%c0_79, %c0_80, %c0_81] : memref<2x32x32xf32, #tpu.memory_space<vmem>>, vector<1x32x32xf32>
    %158 = vector.shape_cast %157 : vector<1x32x32xf32> to vector<32x32xf32>
    %c0_82 = arith.constant 0 : index
    %c0_83 = arith.constant 0 : index
    %c0_84 = arith.constant 0 : index
    %159 = vector.load %arg18[%c0_82, %c0_83, %c0_84] : memref<2x1x32xf32, #tpu.memory_space<vmem>>, vector<1x1x32xf32>
    %160 = vector.shape_cast %159 : vector<1x1x32xf32> to vector<1x32xf32>
    %161 = vector.shape_cast %142 : vector<16x32xf32> to vector<2x8x32xf32>
    %162 = vector.shape_cast %149 : vector<32x32xf32> to vector<2x16x32xf32>
    %163 = vector.shape_cast %156 : vector<32x32xf32> to vector<2x16x32xf32>
    %cst_85 = arith.constant 0.000000e+00 : f32
    %164 = vector.broadcast %cst_85 : f32 to vector<16x32xf32>
    %165 = vector.extract_strided_slice %161 {offsets = [0, 0, 0], sizes = [2, 8, 8], strides = [1, 1, 1]} : vector<2x8x32xf32> to vector<2x8x8xf32>
    %166 = vector.extract_strided_slice %162 {offsets = [0, 0, 0], sizes = [2, 16, 8], strides = [1, 1, 1]} : vector<2x16x32xf32> to vector<2x16x8xf32>
    "tpu.trace_start"() <{level = 10 : i32, message = "bqd,bkd->bqk"}> : () -> ()
    %cst_86 = arith.constant dense<0.000000e+00> : vector<2x8x16xf32>
    %167 = tpu.matmul %165, %166, %cst_86 {dimension_numbers = #tpu.dot_dimension_numbers<[2], [2], [1], [1], [0, 0, 0, 1, 1, 1], [0], [0]>} : vector<2x8x8xf32>, vector<2x16x8xf32>, vector<2x8x16xf32> -> vector<2x8x16xf32>
    "tpu.trace_stop"() : () -> ()
    %cst_87 = arith.constant dense<0xFF800000> : vector<2x8xf32>
    %168 = vector.multi_reduction <maximumf>, %167, %cst_87 [2] : vector<2x8x16xf32> to vector<2x8xf32>
    %169 = vector.shape_cast %168 : vector<2x8xf32> to vector<2x8x1xf32>
    %170 = vector.broadcast %169 : vector<2x8x1xf32> to vector<2x8x16xf32>
    %171 = arith.subf %167, %170 : vector<2x8x16xf32>
    %172 = math.exp %171 : vector<2x8x16xf32>
    %cst_88 = arith.constant dense<0.000000e+00> : vector<2x8xf32>
    %173 = vector.multi_reduction <add>, %172, %cst_88 [2] : vector<2x8x16xf32> to vector<2x8xf32>
    %174 = vector.shape_cast %173 : vector<2x8xf32> to vector<2x8x1xf32>
    %175 = tpu.reciprocal %174 : vector<2x8x1xf32> -> vector<2x8x1xf32>
    %176 = vector.broadcast %175 : vector<2x8x1xf32> to vector<2x8x16xf32>
    %177 = arith.mulf %172, %176 : vector<2x8x16xf32>
    %178 = vector.extract_strided_slice %163 {offsets = [0, 0, 0], sizes = [2, 16, 8], strides = [1, 1, 1]} : vector<2x16x32xf32> to vector<2x16x8xf32>
    "tpu.trace_start"() <{level = 10 : i32, message = "bqk,bkd->bqd"}> : () -> ()
    %cst_89 = arith.constant dense<0.000000e+00> : vector<2x8x8xf32>
    %179 = tpu.matmul %177, %178, %cst_89 {dimension_numbers = #tpu.dot_dimension_numbers<[2], [1], [1], [2], [0, 0, 0, 1, 1, 2], [0], [0]>} : vector<2x8x16xf32>, vector<2x16x8xf32>, vector<2x8x8xf32> -> vector<2x8x8xf32>
    "tpu.trace_stop"() : () -> ()
    %180 = vector.shape_cast %179 : vector<2x8x8xf32> to vector<16x8xf32>
    %181 = vector.extract_strided_slice %158 {offsets = [0, 0], sizes = [8, 32], strides = [1, 1]} : vector<32x32xf32> to vector<8x32xf32>
    %cst_90 = arith.constant dense<0.000000e+00> : vector<16x32xf32>
    %182 = tpu.matmul %180, %181, %cst_90 {dimension_numbers = #tpu.dot_dimension_numbers<[1], [0], [0], [1], [0, 0, 1, 1], [], []>} : vector<16x8xf32>, vector<8x32xf32>, vector<16x32xf32> -> vector<16x32xf32>
    %183 = arith.addf %164, %182 : vector<16x32xf32>
    %184 = vector.extract_strided_slice %161 {offsets = [0, 0, 8], sizes = [2, 8, 8], strides = [1, 1, 1]} : vector<2x8x32xf32> to vector<2x8x8xf32>
    %185 = vector.extract_strided_slice %162 {offsets = [0, 0, 8], sizes = [2, 16, 8], strides = [1, 1, 1]} : vector<2x16x32xf32> to vector<2x16x8xf32>
    "tpu.trace_start"() <{level = 10 : i32, message = "bqd,bkd->bqk"}> : () -> ()
    %cst_91 = arith.constant dense<0.000000e+00> : vector<2x8x16xf32>
    %186 = tpu.matmul %184, %185, %cst_91 {dimension_numbers = #tpu.dot_dimension_numbers<[2], [2], [1], [1], [0, 0, 0, 1, 1, 1], [0], [0]>} : vector<2x8x8xf32>, vector<2x16x8xf32>, vector<2x8x16xf32> -> vector<2x8x16xf32>
    "tpu.trace_stop"() : () -> ()
    %cst_92 = arith.constant dense<0xFF800000> : vector<2x8xf32>
    %187 = vector.multi_reduction <maximumf>, %186, %cst_92 [2] : vector<2x8x16xf32> to vector<2x8xf32>
    %188 = vector.shape_cast %187 : vector<2x8xf32> to vector<2x8x1xf32>
    %189 = vector.broadcast %188 : vector<2x8x1xf32> to vector<2x8x16xf32>
    %190 = arith.subf %186, %189 : vector<2x8x16xf32>
    %191 = math.exp %190 : vector<2x8x16xf32>
    %cst_93 = arith.constant dense<0.000000e+00> : vector<2x8xf32>
    %192 = vector.multi_reduction <add>, %191, %cst_93 [2] : vector<2x8x16xf32> to vector<2x8xf32>
    %193 = vector.shape_cast %192 : vector<2x8xf32> to vector<2x8x1xf32>
    %194 = tpu.reciprocal %193 : vector<2x8x1xf32> -> vector<2x8x1xf32>
    %195 = vector.broadcast %194 : vector<2x8x1xf32> to vector<2x8x16xf32>
    %196 = arith.mulf %191, %195 : vector<2x8x16xf32>
    %197 = vector.extract_strided_slice %163 {offsets = [0, 0, 8], sizes = [2, 16, 8], strides = [1, 1, 1]} : vector<2x16x32xf32> to vector<2x16x8xf32>
    "tpu.trace_start"() <{level = 10 : i32, message = "bqk,bkd->bqd"}> : () -> ()
    %cst_94 = arith.constant dense<0.000000e+00> : vector<2x8x8xf32>
    %198 = tpu.matmul %196, %197, %cst_94 {dimension_numbers = #tpu.dot_dimension_numbers<[2], [1], [1], [2], [0, 0, 0, 1, 1, 2], [0], [0]>} : vector<2x8x16xf32>, vector<2x16x8xf32>, vector<2x8x8xf32> -> vector<2x8x8xf32>
    "tpu.trace_stop"() : () -> ()
    %199 = vector.shape_cast %198 : vector<2x8x8xf32> to vector<16x8xf32>
    %200 = vector.extract_strided_slice %158 {offsets = [8, 0], sizes = [8, 32], strides = [1, 1]} : vector<32x32xf32> to vector<8x32xf32>
    %cst_95 = arith.constant dense<0.000000e+00> : vector<16x32xf32>
    %201 = tpu.matmul %199, %200, %cst_95 {dimension_numbers = #tpu.dot_dimension_numbers<[1], [0], [0], [1], [0, 0, 1, 1], [], []>} : vector<16x8xf32>, vector<8x32xf32>, vector<16x32xf32> -> vector<16x32xf32>
    %202 = arith.addf %183, %201 : vector<16x32xf32>
    %203 = vector.extract_strided_slice %161 {offsets = [0, 0, 16], sizes = [2, 8, 8], strides = [1, 1, 1]} : vector<2x8x32xf32> to vector<2x8x8xf32>
    %204 = vector.extract_strided_slice %162 {offsets = [0, 0, 16], sizes = [2, 16, 8], strides = [1, 1, 1]} : vector<2x16x32xf32> to vector<2x16x8xf32>
    "tpu.trace_start"() <{level = 10 : i32, message = "bqd,bkd->bqk"}> : () -> ()
    %cst_96 = arith.constant dense<0.000000e+00> : vector<2x8x16xf32>
    %205 = tpu.matmul %203, %204, %cst_96 {dimension_numbers = #tpu.dot_dimension_numbers<[2], [2], [1], [1], [0, 0, 0, 1, 1, 1], [0], [0]>} : vector<2x8x8xf32>, vector<2x16x8xf32>, vector<2x8x16xf32> -> vector<2x8x16xf32>
    "tpu.trace_stop"() : () -> ()
    %cst_97 = arith.constant dense<0xFF800000> : vector<2x8xf32>
    %206 = vector.multi_reduction <maximumf>, %205, %cst_97 [2] : vector<2x8x16xf32> to vector<2x8xf32>
    %207 = vector.shape_cast %206 : vector<2x8xf32> to vector<2x8x1xf32>
    %208 = vector.broadcast %207 : vector<2x8x1xf32> to vector<2x8x16xf32>
    %209 = arith.subf %205, %208 : vector<2x8x16xf32>
    %210 = math.exp %209 : vector<2x8x16xf32>
    %cst_98 = arith.constant dense<0.000000e+00> : vector<2x8xf32>
    %211 = vector.multi_reduction <add>, %210, %cst_98 [2] : vector<2x8x16xf32> to vector<2x8xf32>
    %212 = vector.shape_cast %211 : vector<2x8xf32> to vector<2x8x1xf32>
    %213 = tpu.reciprocal %212 : vector<2x8x1xf32> -> vector<2x8x1xf32>
    %214 = vector.broadcast %213 : vector<2x8x1xf32> to vector<2x8x16xf32>
    %215 = arith.mulf %210, %214 : vector<2x8x16xf32>
    %216 = vector.extract_strided_slice %163 {offsets = [0, 0, 16], sizes = [2, 16, 8], strides = [1, 1, 1]} : vector<2x16x32xf32> to vector<2x16x8xf32>
    "tpu.trace_start"() <{level = 10 : i32, message = "bqk,bkd->bqd"}> : () -> ()
    %cst_99 = arith.constant dense<0.000000e+00> : vector<2x8x8xf32>
    %217 = tpu.matmul %215, %216, %cst_99 {dimension_numbers = #tpu.dot_dimension_numbers<[2], [1], [1], [2], [0, 0, 0, 1, 1, 2], [0], [0]>} : vector<2x8x16xf32>, vector<2x16x8xf32>, vector<2x8x8xf32> -> vector<2x8x8xf32>
    "tpu.trace_stop"() : () -> ()
    %218 = vector.shape_cast %217 : vector<2x8x8xf32> to vector<16x8xf32>
    %219 = vector.extract_strided_slice %158 {offsets = [16, 0], sizes = [8, 32], strides = [1, 1]} : vector<32x32xf32> to vector<8x32xf32>
    %cst_100 = arith.constant dense<0.000000e+00> : vector<16x32xf32>
    %220 = tpu.matmul %218, %219, %cst_100 {dimension_numbers = #tpu.dot_dimension_numbers<[1], [0], [0], [1], [0, 0, 1, 1], [], []>} : vector<16x8xf32>, vector<8x32xf32>, vector<16x32xf32> -> vector<16x32xf32>
    %221 = arith.addf %202, %220 : vector<16x32xf32>
    %222 = vector.extract_strided_slice %161 {offsets = [0, 0, 24], sizes = [2, 8, 8], strides = [1, 1, 1]} : vector<2x8x32xf32> to vector<2x8x8xf32>
    %223 = vector.extract_strided_slice %162 {offsets = [0, 0, 24], sizes = [2, 16, 8], strides = [1, 1, 1]} : vector<2x16x32xf32> to vector<2x16x8xf32>
    "tpu.trace_start"() <{level = 10 : i32, message = "bqd,bkd->bqk"}> : () -> ()
    %cst_101 = arith.constant dense<0.000000e+00> : vector<2x8x16xf32>
    %224 = tpu.matmul %222, %223, %cst_101 {dimension_numbers = #tpu.dot_dimension_numbers<[2], [2], [1], [1], [0, 0, 0, 1, 1, 1], [0], [0]>} : vector<2x8x8xf32>, vector<2x16x8xf32>, vector<2x8x16xf32> -> vector<2x8x16xf32>
    "tpu.trace_stop"() : () -> ()
    %cst_102 = arith.constant dense<0xFF800000> : vector<2x8xf32>
    %225 = vector.multi_reduction <maximumf>, %224, %cst_102 [2] : vector<2x8x16xf32> to vector<2x8xf32>
    %226 = vector.shape_cast %225 : vector<2x8xf32> to vector<2x8x1xf32>
    %227 = vector.broadcast %226 : vector<2x8x1xf32> to vector<2x8x16xf32>
    %228 = arith.subf %224, %227 : vector<2x8x16xf32>
    %229 = math.exp %228 : vector<2x8x16xf32>
    %cst_103 = arith.constant dense<0.000000e+00> : vector<2x8xf32>
    %230 = vector.multi_reduction <add>, %229, %cst_103 [2] : vector<2x8x16xf32> to vector<2x8xf32>
    %231 = vector.shape_cast %230 : vector<2x8xf32> to vector<2x8x1xf32>
    %232 = tpu.reciprocal %231 : vector<2x8x1xf32> -> vector<2x8x1xf32>
    %233 = vector.broadcast %232 : vector<2x8x1xf32> to vector<2x8x16xf32>
    %234 = arith.mulf %229, %233 : vector<2x8x16xf32>
    %235 = vector.extract_strided_slice %163 {offsets = [0, 0, 24], sizes = [2, 16, 8], strides = [1, 1, 1]} : vector<2x16x32xf32> to vector<2x16x8xf32>
    "tpu.trace_start"() <{level = 10 : i32, message = "bqk,bkd->bqd"}> : () -> ()
    %cst_104 = arith.constant dense<0.000000e+00> : vector<2x8x8xf32>
    %236 = tpu.matmul %234, %235, %cst_104 {dimension_numbers = #tpu.dot_dimension_numbers<[2], [1], [1], [2], [0, 0, 0, 1, 1, 2], [0], [0]>} : vector<2x8x16xf32>, vector<2x16x8xf32>, vector<2x8x8xf32> -> vector<2x8x8xf32>
    "tpu.trace_stop"() : () -> ()
    %237 = vector.shape_cast %236 : vector<2x8x8xf32> to vector<16x8xf32>
    %238 = vector.extract_strided_slice %158 {offsets = [24, 0], sizes = [8, 32], strides = [1, 1]} : vector<32x32xf32> to vector<8x32xf32>
    %cst_105 = arith.constant dense<0.000000e+00> : vector<16x32xf32>
    %239 = tpu.matmul %237, %238, %cst_105 {dimension_numbers = #tpu.dot_dimension_numbers<[1], [0], [0], [1], [0, 0, 1, 1], [], []>} : vector<16x8xf32>, vector<8x32xf32>, vector<16x32xf32> -> vector<16x32xf32>
    %240 = arith.addf %221, %239 : vector<16x32xf32>
    %241 = vector.broadcast %160 : vector<1x32xf32> to vector<16x32xf32>
    %242 = arith.addf %240, %241 : vector<16x32xf32>
    %243 = arith.addf %134, %242 : vector<16x32xf32>
    %244 = vector.extract_strided_slice %6 {offsets = [1, 0], sizes = [1, 32], strides = [1, 1]} : vector<3x32xf32> to vector<1x32xf32>
    %245 = vector.extract_strided_slice %8 {offsets = [1, 0], sizes = [1, 32], strides = [1, 1]} : vector<3x32xf32> to vector<1x32xf32>
    %cst_106 = arith.constant dense<0.000000e+00> : vector<16xf32>
    %246 = vector.multi_reduction <add>, %243, %cst_106 [1] : vector<16x32xf32> to vector<16xf32>
    %247 = vector.shape_cast %246 : vector<16xf32> to vector<16x1xf32>
    %cst_107 = arith.constant 3.200000e+01 : f32
    %248 = vector.broadcast %cst_107 : f32 to vector<16x1xf32>
    %249 = arith.divf %247, %248 : vector<16x1xf32>
    %250 = vector.broadcast %249 : vector<16x1xf32> to vector<16x32xf32>
    %251 = arith.subf %243, %250 : vector<16x32xf32>
    %252 = arith.mulf %251, %251 : vector<16x32xf32>
    %cst_108 = arith.constant dense<0.000000e+00> : vector<16xf32>
    %253 = vector.multi_reduction <add>, %252, %cst_108 [1] : vector<16x32xf32> to vector<16xf32>
    %254 = vector.shape_cast %253 : vector<16xf32> to vector<16x1xf32>
    %cst_109 = arith.constant 3.200000e+01 : f32
    %255 = vector.broadcast %cst_109 : f32 to vector<16x1xf32>
    %256 = arith.divf %254, %255 : vector<16x1xf32>
    %cst_110 = arith.constant 9.99999974E-6 : f32
    %257 = vector.broadcast %cst_110 : f32 to vector<16x1xf32>
    %258 = arith.addf %256, %257 : vector<16x1xf32>
    %259 = math.rsqrt %258 : vector<16x1xf32>
    %260 = vector.broadcast %259 : vector<16x1xf32> to vector<16x32xf32>
    %261 = arith.mulf %251, %260 : vector<16x32xf32>
    %262 = vector.broadcast %244 : vector<1x32xf32> to vector<16x32xf32>
    %263 = arith.mulf %261, %262 : vector<16x32xf32>
    %264 = vector.broadcast %245 : vector<1x32xf32> to vector<16x32xf32>
    %265 = arith.addf %263, %264 : vector<16x32xf32>
    %c0_111 = arith.constant 0 : index
    %c0_112 = arith.constant 0 : index
    %c0_113 = arith.constant 0 : index
    %266 = vector.load %arg19[%c0_111, %c0_112, %c0_113] : memref<2x32x64xf32, #tpu.memory_space<vmem>>, vector<1x32x64xf32>
    %267 = vector.shape_cast %266 : vector<1x32x64xf32> to vector<32x64xf32>
    %cst_114 = arith.constant dense<0.000000e+00> : vector<16x64xf32>
    %268 = tpu.matmul %265, %267, %cst_114 {dimension_numbers = #tpu.dot_dimension_numbers<[1], [0], [0], [1], [0, 0, 1, 1], [], []>} : vector<16x32xf32>, vector<32x64xf32>, vector<16x64xf32> -> vector<16x64xf32>
    %c0_115 = arith.constant 0 : index
    %c0_116 = arith.constant 0 : index
    %c0_117 = arith.constant 0 : index
    %269 = vector.load %arg20[%c0_115, %c0_116, %c0_117] : memref<2x1x64xf32, #tpu.memory_space<vmem>>, vector<1x1x64xf32>
    %270 = vector.shape_cast %269 : vector<1x1x64xf32> to vector<1x64xf32>
    %271 = vector.broadcast %270 : vector<1x64xf32> to vector<16x64xf32>
    %272 = arith.addf %268, %271 : vector<16x64xf32>
    %cst_118 = arith.constant 0.000000e+00 : f32
    %273 = vector.broadcast %cst_118 : f32 to vector<16x64xf32>
    %274 = arith.maximumf %272, %273 : vector<16x64xf32>
    %c0_119 = arith.constant 0 : index
    %c0_120 = arith.constant 0 : index
    %c0_121 = arith.constant 0 : index
    %275 = vector.load %arg21[%c0_119, %c0_120, %c0_121] : memref<2x64x32xf32, #tpu.memory_space<vmem>>, vector<1x64x32xf32>
    %276 = vector.shape_cast %275 : vector<1x64x32xf32> to vector<64x32xf32>
    %cst_122 = arith.constant dense<0.000000e+00> : vector<16x32xf32>
    %277 = tpu.matmul %274, %276, %cst_122 {dimension_numbers = #tpu.dot_dimension_numbers<[1], [0], [0], [1], [0, 0, 1, 1], [], []>} : vector<16x64xf32>, vector<64x32xf32>, vector<16x32xf32> -> vector<16x32xf32>
    %c0_123 = arith.constant 0 : index
    %c0_124 = arith.constant 0 : index
    %c0_125 = arith.constant 0 : index
    %278 = vector.load %arg22[%c0_123, %c0_124, %c0_125] : memref<2x1x32xf32, #tpu.memory_space<vmem>>, vector<1x1x32xf32>
    %279 = vector.shape_cast %278 : vector<1x1x32xf32> to vector<1x32xf32>
    %280 = vector.broadcast %279 : vector<1x32xf32> to vector<16x32xf32>
    %281 = arith.addf %277, %280 : vector<16x32xf32>
    %282 = arith.addf %265, %281 : vector<16x32xf32>
    %283 = vector.extract_strided_slice %6 {offsets = [2, 0], sizes = [1, 32], strides = [1, 1]} : vector<3x32xf32> to vector<1x32xf32>
    %284 = vector.extract_strided_slice %8 {offsets = [2, 0], sizes = [1, 32], strides = [1, 1]} : vector<3x32xf32> to vector<1x32xf32>
    %cst_126 = arith.constant dense<0.000000e+00> : vector<16xf32>
    %285 = vector.multi_reduction <add>, %282, %cst_126 [1] : vector<16x32xf32> to vector<16xf32>
    %286 = vector.shape_cast %285 : vector<16xf32> to vector<16x1xf32>
    %cst_127 = arith.constant 3.200000e+01 : f32
    %287 = vector.broadcast %cst_127 : f32 to vector<16x1xf32>
    %288 = arith.divf %286, %287 : vector<16x1xf32>
    %289 = vector.broadcast %288 : vector<16x1xf32> to vector<16x32xf32>
    %290 = arith.subf %282, %289 : vector<16x32xf32>
    %291 = arith.mulf %290, %290 : vector<16x32xf32>
    %cst_128 = arith.constant dense<0.000000e+00> : vector<16xf32>
    %292 = vector.multi_reduction <add>, %291, %cst_128 [1] : vector<16x32xf32> to vector<16xf32>
    %293 = vector.shape_cast %292 : vector<16xf32> to vector<16x1xf32>
    %cst_129 = arith.constant 3.200000e+01 : f32
    %294 = vector.broadcast %cst_129 : f32 to vector<16x1xf32>
    %295 = arith.divf %293, %294 : vector<16x1xf32>
    %cst_130 = arith.constant 9.99999974E-6 : f32
    %296 = vector.broadcast %cst_130 : f32 to vector<16x1xf32>
    %297 = arith.addf %295, %296 : vector<16x1xf32>
    %298 = math.rsqrt %297 : vector<16x1xf32>
    %299 = vector.broadcast %298 : vector<16x1xf32> to vector<16x32xf32>
    %300 = arith.mulf %290, %299 : vector<16x32xf32>
    %301 = vector.broadcast %283 : vector<1x32xf32> to vector<16x32xf32>
    %302 = arith.mulf %300, %301 : vector<16x32xf32>
    %303 = vector.broadcast %284 : vector<1x32xf32> to vector<16x32xf32>
    %304 = arith.addf %302, %303 : vector<16x32xf32>
    %c0_131 = arith.constant 0 : index
    %c0_132 = arith.constant 0 : index
    %305 = vector.load %arg25[%c0_131, %c0_132] : memref<1x32xf32, #tpu.memory_space<vmem>>, vector<1x32xf32>
    %c0_133 = arith.constant 0 : index
    %c0_134 = arith.constant 0 : index
    %306 = vector.load %arg26[%c0_133, %c0_134] : memref<1x32xf32, #tpu.memory_space<vmem>>, vector<1x32xf32>
    %cst_135 = arith.constant dense<0.000000e+00> : vector<16xf32>
    %307 = vector.multi_reduction <add>, %304, %cst_135 [1] : vector<16x32xf32> to vector<16xf32>
    %308 = vector.shape_cast %307 : vector<16xf32> to vector<16x1xf32>
    %cst_136 = arith.constant 3.200000e+01 : f32
    %309 = vector.broadcast %cst_136 : f32 to vector<16x1xf32>
    %310 = arith.divf %308, %309 : vector<16x1xf32>
    %311 = vector.broadcast %310 : vector<16x1xf32> to vector<16x32xf32>
    %312 = arith.subf %304, %311 : vector<16x32xf32>
    %313 = arith.mulf %312, %312 : vector<16x32xf32>
    %cst_137 = arith.constant dense<0.000000e+00> : vector<16xf32>
    %314 = vector.multi_reduction <add>, %313, %cst_137 [1] : vector<16x32xf32> to vector<16xf32>
    %315 = vector.shape_cast %314 : vector<16xf32> to vector<16x1xf32>
    %cst_138 = arith.constant 3.200000e+01 : f32
    %316 = vector.broadcast %cst_138 : f32 to vector<16x1xf32>
    %317 = arith.divf %315, %316 : vector<16x1xf32>
    %cst_139 = arith.constant 9.99999974E-6 : f32
    %318 = vector.broadcast %cst_139 : f32 to vector<16x1xf32>
    %319 = arith.addf %317, %318 : vector<16x1xf32>
    %320 = math.rsqrt %319 : vector<16x1xf32>
    %321 = vector.broadcast %320 : vector<16x1xf32> to vector<16x32xf32>
    %322 = arith.mulf %312, %321 : vector<16x32xf32>
    %323 = vector.broadcast %305 : vector<1x32xf32> to vector<16x32xf32>
    %324 = arith.mulf %322, %323 : vector<16x32xf32>
    %325 = vector.broadcast %306 : vector<1x32xf32> to vector<16x32xf32>
    %326 = arith.addf %324, %325 : vector<16x32xf32>
    %c0_140 = arith.constant 0 : index
    %c0_141 = arith.constant 0 : index
    %c0_142 = arith.constant 0 : index
    %327 = vector.load %arg27[%c0_140, %c0_141, %c0_142] : memref<2x16x32xf32, #tpu.memory_space<vmem>>, vector<1x16x32xf32>
    %328 = vector.shape_cast %327 : vector<1x16x32xf32> to vector<16x32xf32>
    %329 = vector.shape_cast %326 : vector<16x32xf32> to vector<1x16x32xf32>
    tpu.vector_store %arg27[%c0_140, %c0_141, %c0_142], %329 {strides = array<i32>} : memref<2x16x32xf32, #tpu.memory_space<vmem>>, vector<1x16x32xf32>,
    %c1 = arith.constant 1 : index
    %c0_143 = arith.constant 0 : index
    %c0_144 = arith.constant 0 : index
    %330 = vector.load %arg23[%c1, %c0_143, %c0_144] : memref<2x3x32xf32, #tpu.memory_space<vmem>>, vector<1x3x32xf32>
    %331 = vector.shape_cast %330 : vector<1x3x32xf32> to vector<3x32xf32>
    %c1_145 = arith.constant 1 : index
    %c0_146 = arith.constant 0 : index
    %c0_147 = arith.constant 0 : index
    %332 = vector.load %arg24[%c1_145, %c0_146, %c0_147] : memref<2x3x32xf32, #tpu.memory_space<vmem>>, vector<1x3x32xf32>
    %333 = vector.shape_cast %332 : vector<1x3x32xf32> to vector<3x32xf32>
    %334 = arith.addf %304, %2 : vector<16x32xf32>
    %c1_148 = arith.constant 1 : index
    %c0_149 = arith.constant 0 : index
    %c0_150 = arith.constant 0 : index
    %335 = vector.load %arg5[%c1_148, %c0_149, %c0_150] : memref<2x32x64xf32, #tpu.memory_space<vmem>>, vector<1x32x64xf32>
    %336 = vector.shape_cast %335 : vector<1x32x64xf32> to vector<32x64xf32>
    %cst_151 = arith.constant dense<0.000000e+00> : vector<16x64xf32>
    %337 = tpu.matmul %334, %336, %cst_151 {dimension_numbers = #tpu.dot_dimension_numbers<[1], [0], [0], [1], [0, 0, 1, 1], [], []>} : vector<16x32xf32>, vector<32x64xf32>, vector<16x64xf32> -> vector<16x64xf32>
    %c1_152 = arith.constant 1 : index
    %c0_153 = arith.constant 0 : index
    %c0_154 = arith.constant 0 : index
    %338 = vector.load %arg6[%c1_152, %c0_153, %c0_154] : memref<2x1x64xf32, #tpu.memory_space<vmem>>, vector<1x1x64xf32>
    %339 = vector.shape_cast %338 : vector<1x1x64xf32> to vector<1x64xf32>
    %340 = vector.broadcast %339 : vector<1x64xf32> to vector<16x64xf32>
    %341 = arith.addf %337, %340 : vector<16x64xf32>
    %c1_155 = arith.constant 1 : index
    %c0_156 = arith.constant 0 : index
    %c0_157 = arith.constant 0 : index
    %342 = vector.load %arg7[%c1_155, %c0_156, %c0_157] : memref<2x32x32xf32, #tpu.memory_space<vmem>>, vector<1x32x32xf32>
    %343 = vector.shape_cast %342 : vector<1x32x32xf32> to vector<32x32xf32>
    %cst_158 = arith.constant dense<0.000000e+00> : vector<16x32xf32>
    %344 = tpu.matmul %304, %343, %cst_158 {dimension_numbers = #tpu.dot_dimension_numbers<[1], [0], [0], [1], [0, 0, 1, 1], [], []>} : vector<16x32xf32>, vector<32x32xf32>, vector<16x32xf32> -> vector<16x32xf32>
    %c1_159 = arith.constant 1 : index
    %c0_160 = arith.constant 0 : index
    %c0_161 = arith.constant 0 : index
    %345 = vector.load %arg8[%c1_159, %c0_160, %c0_161] : memref<2x1x32xf32, #tpu.memory_space<vmem>>, vector<1x1x32xf32>
    %346 = vector.shape_cast %345 : vector<1x1x32xf32> to vector<1x32xf32>
    %347 = vector.broadcast %346 : vector<1x32xf32> to vector<16x32xf32>
    %348 = arith.addf %344, %347 : vector<16x32xf32>
    %349 = vector.extract_strided_slice %341 {offsets = [0, 0], sizes = [16, 32], strides = [1, 1]} : vector<16x64xf32> to vector<16x32xf32>
    %350 = vector.extract_strided_slice %341 {offsets = [0, 32], sizes = [16, 32], strides = [1, 1]} : vector<16x64xf32> to vector<16x32xf32>
    %c1_162 = arith.constant 1 : index
    %c0_163 = arith.constant 0 : index
    %c0_164 = arith.constant 0 : index
    %351 = vector.load %arg9[%c1_162, %c0_163, %c0_164] : memref<2x32x32xf32, #tpu.memory_space<vmem>>, vector<1x32x32xf32>
    %352 = vector.shape_cast %351 : vector<1x32x32xf32> to vector<32x32xf32>
    %c1_165 = arith.constant 1 : index
    %c0_166 = arith.constant 0 : index
    %c0_167 = arith.constant 0 : index
    %353 = vector.load %arg10[%c1_165, %c0_166, %c0_167] : memref<2x1x32xf32, #tpu.memory_space<vmem>>, vector<1x1x32xf32>
    %354 = vector.shape_cast %353 : vector<1x1x32xf32> to vector<1x32xf32>
    %355 = vector.shape_cast %349 : vector<16x32xf32> to vector<2x8x32xf32>
    %356 = vector.shape_cast %350 : vector<16x32xf32> to vector<2x8x32xf32>
    %357 = vector.shape_cast %348 : vector<16x32xf32> to vector<2x8x32xf32>
    %cst_168 = arith.constant 0.000000e+00 : f32
    %358 = vector.broadcast %cst_168 : f32 to vector<16x32xf32>
    %359 = vector.extract_strided_slice %355 {offsets = [0, 0, 0], sizes = [2, 8, 8], strides = [1, 1, 1]} : vector<2x8x32xf32> to vector<2x8x8xf32>
    %360 = vector.extract_strided_slice %356 {offsets = [0, 0, 0], sizes = [2, 8, 8], strides = [1, 1, 1]} : vector<2x8x32xf32> to vector<2x8x8xf32>
    "tpu.trace_start"() <{level = 10 : i32, message = "bqd,bkd->bqk"}> : () -> ()
    %cst_169 = arith.constant dense<0.000000e+00> : vector<2x8x8xf32>
    %361 = tpu.matmul %359, %360, %cst_169 {dimension_numbers = #tpu.dot_dimension_numbers<[2], [2], [1], [1], [0, 0, 0, 1, 1, 1], [0], [0]>} : vector<2x8x8xf32>, vector<2x8x8xf32>, vector<2x8x8xf32> -> vector<2x8x8xf32>
    "tpu.trace_stop"() : () -> ()
    %cst_170 = arith.constant dense<0xFF800000> : vector<2x8xf32>
    %362 = vector.multi_reduction <maximumf>, %361, %cst_170 [2] : vector<2x8x8xf32> to vector<2x8xf32>
    %363 = vector.shape_cast %362 : vector<2x8xf32> to vector<2x8x1xf32>
    %364 = vector.broadcast %363 : vector<2x8x1xf32> to vector<2x8x8xf32>
    %365 = arith.subf %361, %364 : vector<2x8x8xf32>
    %366 = math.exp %365 : vector<2x8x8xf32>
    %cst_171 = arith.constant dense<0.000000e+00> : vector<2x8xf32>
    %367 = vector.multi_reduction <add>, %366, %cst_171 [2] : vector<2x8x8xf32> to vector<2x8xf32>
    %368 = vector.shape_cast %367 : vector<2x8xf32> to vector<2x8x1xf32>
    %369 = tpu.reciprocal %368 : vector<2x8x1xf32> -> vector<2x8x1xf32>
    %370 = vector.broadcast %369 : vector<2x8x1xf32> to vector<2x8x8xf32>
    %371 = arith.mulf %366, %370 : vector<2x8x8xf32>
    %372 = vector.extract_strided_slice %357 {offsets = [0, 0, 0], sizes = [2, 8, 8], strides = [1, 1, 1]} : vector<2x8x32xf32> to vector<2x8x8xf32>
    "tpu.trace_start"() <{level = 10 : i32, message = "bqk,bkd->bqd"}> : () -> ()
    %cst_172 = arith.constant dense<0.000000e+00> : vector<2x8x8xf32>
    %373 = tpu.matmul %371, %372, %cst_172 {dimension_numbers = #tpu.dot_dimension_numbers<[2], [1], [1], [2], [0, 0, 0, 1, 1, 2], [0], [0]>} : vector<2x8x8xf32>, vector<2x8x8xf32>, vector<2x8x8xf32> -> vector<2x8x8xf32>
    "tpu.trace_stop"() : () -> ()
    %374 = vector.shape_cast %373 : vector<2x8x8xf32> to vector<16x8xf32>
    %375 = vector.extract_strided_slice %352 {offsets = [0, 0], sizes = [8, 32], strides = [1, 1]} : vector<32x32xf32> to vector<8x32xf32>
    %cst_173 = arith.constant dense<0.000000e+00> : vector<16x32xf32>
    %376 = tpu.matmul %374, %375, %cst_173 {dimension_numbers = #tpu.dot_dimension_numbers<[1], [0], [0], [1], [0, 0, 1, 1], [], []>} : vector<16x8xf32>, vector<8x32xf32>, vector<16x32xf32> -> vector<16x32xf32>
    %377 = arith.addf %358, %376 : vector<16x32xf32>
    %378 = vector.extract_strided_slice %355 {offsets = [0, 0, 8], sizes = [2, 8, 8], strides = [1, 1, 1]} : vector<2x8x32xf32> to vector<2x8x8xf32>
    %379 = vector.extract_strided_slice %356 {offsets = [0, 0, 8], sizes = [2, 8, 8], strides = [1, 1, 1]} : vector<2x8x32xf32> to vector<2x8x8xf32>
    "tpu.trace_start"() <{level = 10 : i32, message = "bqd,bkd->bqk"}> : () -> ()
    %cst_174 = arith.constant dense<0.000000e+00> : vector<2x8x8xf32>
    %380 = tpu.matmul %378, %379, %cst_174 {dimension_numbers = #tpu.dot_dimension_numbers<[2], [2], [1], [1], [0, 0, 0, 1, 1, 1], [0], [0]>} : vector<2x8x8xf32>, vector<2x8x8xf32>, vector<2x8x8xf32> -> vector<2x8x8xf32>
    "tpu.trace_stop"() : () -> ()
    %cst_175 = arith.constant dense<0xFF800000> : vector<2x8xf32>
    %381 = vector.multi_reduction <maximumf>, %380, %cst_175 [2] : vector<2x8x8xf32> to vector<2x8xf32>
    %382 = vector.shape_cast %381 : vector<2x8xf32> to vector<2x8x1xf32>
    %383 = vector.broadcast %382 : vector<2x8x1xf32> to vector<2x8x8xf32>
    %384 = arith.subf %380, %383 : vector<2x8x8xf32>
    %385 = math.exp %384 : vector<2x8x8xf32>
    %cst_176 = arith.constant dense<0.000000e+00> : vector<2x8xf32>
    %386 = vector.multi_reduction <add>, %385, %cst_176 [2] : vector<2x8x8xf32> to vector<2x8xf32>
    %387 = vector.shape_cast %386 : vector<2x8xf32> to vector<2x8x1xf32>
    %388 = tpu.reciprocal %387 : vector<2x8x1xf32> -> vector<2x8x1xf32>
    %389 = vector.broadcast %388 : vector<2x8x1xf32> to vector<2x8x8xf32>
    %390 = arith.mulf %385, %389 : vector<2x8x8xf32>
    %391 = vector.extract_strided_slice %357 {offsets = [0, 0, 8], sizes = [2, 8, 8], strides = [1, 1, 1]} : vector<2x8x32xf32> to vector<2x8x8xf32>
    "tpu.trace_start"() <{level = 10 : i32, message = "bqk,bkd->bqd"}> : () -> ()
    %cst_177 = arith.constant dense<0.000000e+00> : vector<2x8x8xf32>
    %392 = tpu.matmul %390, %391, %cst_177 {dimension_numbers = #tpu.dot_dimension_numbers<[2], [1], [1], [2], [0, 0, 0, 1, 1, 2], [0], [0]>} : vector<2x8x8xf32>, vector<2x8x8xf32>, vector<2x8x8xf32> -> vector<2x8x8xf32>
    "tpu.trace_stop"() : () -> ()
    %393 = vector.shape_cast %392 : vector<2x8x8xf32> to vector<16x8xf32>
    %394 = vector.extract_strided_slice %352 {offsets = [8, 0], sizes = [8, 32], strides = [1, 1]} : vector<32x32xf32> to vector<8x32xf32>
    %cst_178 = arith.constant dense<0.000000e+00> : vector<16x32xf32>
    %395 = tpu.matmul %393, %394, %cst_178 {dimension_numbers = #tpu.dot_dimension_numbers<[1], [0], [0], [1], [0, 0, 1, 1], [], []>} : vector<16x8xf32>, vector<8x32xf32>, vector<16x32xf32> -> vector<16x32xf32>
    %396 = arith.addf %377, %395 : vector<16x32xf32>
    %397 = vector.extract_strided_slice %355 {offsets = [0, 0, 16], sizes = [2, 8, 8], strides = [1, 1, 1]} : vector<2x8x32xf32> to vector<2x8x8xf32>
    %398 = vector.extract_strided_slice %356 {offsets = [0, 0, 16], sizes = [2, 8, 8], strides = [1, 1, 1]} : vector<2x8x32xf32> to vector<2x8x8xf32>
    "tpu.trace_start"() <{level = 10 : i32, message = "bqd,bkd->bqk"}> : () -> ()
    %cst_179 = arith.constant dense<0.000000e+00> : vector<2x8x8xf32>
    %399 = tpu.matmul %397, %398, %cst_179 {dimension_numbers = #tpu.dot_dimension_numbers<[2], [2], [1], [1], [0, 0, 0, 1, 1, 1], [0], [0]>} : vector<2x8x8xf32>, vector<2x8x8xf32>, vector<2x8x8xf32> -> vector<2x8x8xf32>
    "tpu.trace_stop"() : () -> ()
    %cst_180 = arith.constant dense<0xFF800000> : vector<2x8xf32>
    %400 = vector.multi_reduction <maximumf>, %399, %cst_180 [2] : vector<2x8x8xf32> to vector<2x8xf32>
    %401 = vector.shape_cast %400 : vector<2x8xf32> to vector<2x8x1xf32>
    %402 = vector.broadcast %401 : vector<2x8x1xf32> to vector<2x8x8xf32>
    %403 = arith.subf %399, %402 : vector<2x8x8xf32>
    %404 = math.exp %403 : vector<2x8x8xf32>
    %cst_181 = arith.constant dense<0.000000e+00> : vector<2x8xf32>
    %405 = vector.multi_reduction <add>, %404, %cst_181 [2] : vector<2x8x8xf32> to vector<2x8xf32>
    %406 = vector.shape_cast %405 : vector<2x8xf32> to vector<2x8x1xf32>
    %407 = tpu.reciprocal %406 : vector<2x8x1xf32> -> vector<2x8x1xf32>
    %408 = vector.broadcast %407 : vector<2x8x1xf32> to vector<2x8x8xf32>
    %409 = arith.mulf %404, %408 : vector<2x8x8xf32>
    %410 = vector.extract_strided_slice %357 {offsets = [0, 0, 16], sizes = [2, 8, 8], strides = [1, 1, 1]} : vector<2x8x32xf32> to vector<2x8x8xf32>
    "tpu.trace_start"() <{level = 10 : i32, message = "bqk,bkd->bqd"}> : () -> ()
    %cst_182 = arith.constant dense<0.000000e+00> : vector<2x8x8xf32>
    %411 = tpu.matmul %409, %410, %cst_182 {dimension_numbers = #tpu.dot_dimension_numbers<[2], [1], [1], [2], [0, 0, 0, 1, 1, 2], [0], [0]>} : vector<2x8x8xf32>, vector<2x8x8xf32>, vector<2x8x8xf32> -> vector<2x8x8xf32>
    "tpu.trace_stop"() : () -> ()
    %412 = vector.shape_cast %411 : vector<2x8x8xf32> to vector<16x8xf32>
    %413 = vector.extract_strided_slice %352 {offsets = [16, 0], sizes = [8, 32], strides = [1, 1]} : vector<32x32xf32> to vector<8x32xf32>
    %cst_183 = arith.constant dense<0.000000e+00> : vector<16x32xf32>
    %414 = tpu.matmul %412, %413, %cst_183 {dimension_numbers = #tpu.dot_dimension_numbers<[1], [0], [0], [1], [0, 0, 1, 1], [], []>} : vector<16x8xf32>, vector<8x32xf32>, vector<16x32xf32> -> vector<16x32xf32>
    %415 = arith.addf %396, %414 : vector<16x32xf32>
    %416 = vector.extract_strided_slice %355 {offsets = [0, 0, 24], sizes = [2, 8, 8], strides = [1, 1, 1]} : vector<2x8x32xf32> to vector<2x8x8xf32>
    %417 = vector.extract_strided_slice %356 {offsets = [0, 0, 24], sizes = [2, 8, 8], strides = [1, 1, 1]} : vector<2x8x32xf32> to vector<2x8x8xf32>
    "tpu.trace_start"() <{level = 10 : i32, message = "bqd,bkd->bqk"}> : () -> ()
    %cst_184 = arith.constant dense<0.000000e+00> : vector<2x8x8xf32>
    %418 = tpu.matmul %416, %417, %cst_184 {dimension_numbers = #tpu.dot_dimension_numbers<[2], [2], [1], [1], [0, 0, 0, 1, 1, 1], [0], [0]>} : vector<2x8x8xf32>, vector<2x8x8xf32>, vector<2x8x8xf32> -> vector<2x8x8xf32>
    "tpu.trace_stop"() : () -> ()
    %cst_185 = arith.constant dense<0xFF800000> : vector<2x8xf32>
    %419 = vector.multi_reduction <maximumf>, %418, %cst_185 [2] : vector<2x8x8xf32> to vector<2x8xf32>
    %420 = vector.shape_cast %419 : vector<2x8xf32> to vector<2x8x1xf32>
    %421 = vector.broadcast %420 : vector<2x8x1xf32> to vector<2x8x8xf32>
    %422 = arith.subf %418, %421 : vector<2x8x8xf32>
    %423 = math.exp %422 : vector<2x8x8xf32>
    %cst_186 = arith.constant dense<0.000000e+00> : vector<2x8xf32>
    %424 = vector.multi_reduction <add>, %423, %cst_186 [2] : vector<2x8x8xf32> to vector<2x8xf32>
    %425 = vector.shape_cast %424 : vector<2x8xf32> to vector<2x8x1xf32>
    %426 = tpu.reciprocal %425 : vector<2x8x1xf32> -> vector<2x8x1xf32>
    %427 = vector.broadcast %426 : vector<2x8x1xf32> to vector<2x8x8xf32>
    %428 = arith.mulf %423, %427 : vector<2x8x8xf32>
    %429 = vector.extract_strided_slice %357 {offsets = [0, 0, 24], sizes = [2, 8, 8], strides = [1, 1, 1]} : vector<2x8x32xf32> to vector<2x8x8xf32>
    "tpu.trace_start"() <{level = 10 : i32, message = "bqk,bkd->bqd"}> : () -> ()
    %cst_187 = arith.constant dense<0.000000e+00> : vector<2x8x8xf32>
    %430 = tpu.matmul %428, %429, %cst_187 {dimension_numbers = #tpu.dot_dimension_numbers<[2], [1], [1], [2], [0, 0, 0, 1, 1, 2], [0], [0]>} : vector<2x8x8xf32>, vector<2x8x8xf32>, vector<2x8x8xf32> -> vector<2x8x8xf32>
    "tpu.trace_stop"() : () -> ()
    %431 = vector.shape_cast %430 : vector<2x8x8xf32> to vector<16x8xf32>
    %432 = vector.extract_strided_slice %352 {offsets = [24, 0], sizes = [8, 32], strides = [1, 1]} : vector<32x32xf32> to vector<8x32xf32>
    %cst_188 = arith.constant dense<0.000000e+00> : vector<16x32xf32>
    %433 = tpu.matmul %431, %432, %cst_188 {dimension_numbers = #tpu.dot_dimension_numbers<[1], [0], [0], [1], [0, 0, 1, 1], [], []>} : vector<16x8xf32>, vector<8x32xf32>, vector<16x32xf32> -> vector<16x32xf32>
    %434 = arith.addf %415, %433 : vector<16x32xf32>
    %435 = vector.broadcast %354 : vector<1x32xf32> to vector<16x32xf32>
    %436 = arith.addf %434, %435 : vector<16x32xf32>
    %437 = arith.addf %304, %436 : vector<16x32xf32>
    %438 = vector.extract_strided_slice %331 {offsets = [0, 0], sizes = [1, 32], strides = [1, 1]} : vector<3x32xf32> to vector<1x32xf32>
    %439 = vector.extract_strided_slice %333 {offsets = [0, 0], sizes = [1, 32], strides = [1, 1]} : vector<3x32xf32> to vector<1x32xf32>
    %cst_189 = arith.constant dense<0.000000e+00> : vector<16xf32>
    %440 = vector.multi_reduction <add>, %437, %cst_189 [1] : vector<16x32xf32> to vector<16xf32>
    %441 = vector.shape_cast %440 : vector<16xf32> to vector<16x1xf32>
    %cst_190 = arith.constant 3.200000e+01 : f32
    %442 = vector.broadcast %cst_190 : f32 to vector<16x1xf32>
    %443 = arith.divf %441, %442 : vector<16x1xf32>
    %444 = vector.broadcast %443 : vector<16x1xf32> to vector<16x32xf32>
    %445 = arith.subf %437, %444 : vector<16x32xf32>
    %446 = arith.mulf %445, %445 : vector<16x32xf32>
    %cst_191 = arith.constant dense<0.000000e+00> : vector<16xf32>
    %447 = vector.multi_reduction <add>, %446, %cst_191 [1] : vector<16x32xf32> to vector<16xf32>
    %448 = vector.shape_cast %447 : vector<16xf32> to vector<16x1xf32>
    %cst_192 = arith.constant 3.200000e+01 : f32
    %449 = vector.broadcast %cst_192 : f32 to vector<16x1xf32>
    %450 = arith.divf %448, %449 : vector<16x1xf32>
    %cst_193 = arith.constant 9.99999974E-6 : f32
    %451 = vector.broadcast %cst_193 : f32 to vector<16x1xf32>
    %452 = arith.addf %450, %451 : vector<16x1xf32>
    %453 = math.rsqrt %452 : vector<16x1xf32>
    %454 = vector.broadcast %453 : vector<16x1xf32> to vector<16x32xf32>
    %455 = arith.mulf %445, %454 : vector<16x32xf32>
    %456 = vector.broadcast %438 : vector<1x32xf32> to vector<16x32xf32>
    %457 = arith.mulf %455, %456 : vector<16x32xf32>
    %458 = vector.broadcast %439 : vector<1x32xf32> to vector<16x32xf32>
    %459 = arith.addf %457, %458 : vector<16x32xf32>
    %460 = arith.addf %459, %2 : vector<16x32xf32>
    %c1_194 = arith.constant 1 : index
    %c0_195 = arith.constant 0 : index
    %c0_196 = arith.constant 0 : index
    %461 = vector.load %arg11[%c1_194, %c0_195, %c0_196] : memref<2x32x32xf32, #tpu.memory_space<vmem>>, vector<1x32x32xf32>
    %462 = vector.shape_cast %461 : vector<1x32x32xf32> to vector<32x32xf32>
    %cst_197 = arith.constant dense<0.000000e+00> : vector<16x32xf32>
    %463 = tpu.matmul %460, %462, %cst_197 {dimension_numbers = #tpu.dot_dimension_numbers<[1], [0], [0], [1], [0, 0, 1, 1], [], []>} : vector<16x32xf32>, vector<32x32xf32>, vector<16x32xf32> -> vector<16x32xf32>
    %c1_198 = arith.constant 1 : index
    %c0_199 = arith.constant 0 : index
    %c0_200 = arith.constant 0 : index
    %464 = vector.load %arg12[%c1_198, %c0_199, %c0_200] : memref<2x1x32xf32, #tpu.memory_space<vmem>>, vector<1x1x32xf32>
    %465 = vector.shape_cast %464 : vector<1x1x32xf32> to vector<1x32xf32>
    %466 = vector.broadcast %465 : vector<1x32xf32> to vector<16x32xf32>
    %467 = arith.addf %463, %466 : vector<16x32xf32>
    %c1_201 = arith.constant 1 : index
    %c0_202 = arith.constant 0 : index
    %c0_203 = arith.constant 0 : index
    %468 = vector.load %arg13[%c1_201, %c0_202, %c0_203] : memref<2x32x32xf32, #tpu.memory_space<vmem>>, vector<1x32x32xf32>
    %469 = vector.shape_cast %468 : vector<1x32x32xf32> to vector<32x32xf32>
    %cst_204 = arith.constant dense<0.000000e+00> : vector<32x32xf32>
    %470 = tpu.matmul %4, %469, %cst_204 {dimension_numbers = #tpu.dot_dimension_numbers<[1], [0], [0], [1], [0, 0, 1, 1], [], []>} : vector<32x32xf32>, vector<32x32xf32>, vector<32x32xf32> -> vector<32x32xf32>
    %c1_205 = arith.constant 1 : index
    %c0_206 = arith.constant 0 : index
    %c0_207 = arith.constant 0 : index
    %471 = vector.load %arg14[%c1_205, %c0_206, %c0_207] : memref<2x1x32xf32, #tpu.memory_space<vmem>>, vector<1x1x32xf32>
    %472 = vector.shape_cast %471 : vector<1x1x32xf32> to vector<1x32xf32>
    %473 = vector.broadcast %472 : vector<1x32xf32> to vector<32x32xf32>
    %474 = arith.addf %470, %473 : vector<32x32xf32>
    %c1_208 = arith.constant 1 : index
    %c0_209 = arith.constant 0 : index
    %c0_210 = arith.constant 0 : index
    %475 = vector.load %arg15[%c1_208, %c0_209, %c0_210] : memref<2x32x32xf32, #tpu.memory_space<vmem>>, vector<1x32x32xf32>
    %476 = vector.shape_cast %475 : vector<1x32x32xf32> to vector<32x32xf32>
    %cst_211 = arith.constant dense<0.000000e+00> : vector<32x32xf32>
    %477 = tpu.matmul %1, %476, %cst_211 {dimension_numbers = #tpu.dot_dimension_numbers<[1], [0], [0], [1], [0, 0, 1, 1], [], []>} : vector<32x32xf32>, vector<32x32xf32>, vector<32x32xf32> -> vector<32x32xf32>
    %c1_212 = arith.constant 1 : index
    %c0_213 = arith.constant 0 : index
    %c0_214 = arith.constant 0 : index
    %478 = vector.load %arg16[%c1_212, %c0_213, %c0_214] : memref<2x1x32xf32, #tpu.memory_space<vmem>>, vector<1x1x32xf32>
    %479 = vector.shape_cast %478 : vector<1x1x32xf32> to vector<1x32xf32>
    %480 = vector.broadcast %479 : vector<1x32xf32> to vector<32x32xf32>
    %481 = arith.addf %477, %480 : vector<32x32xf32>
    %c1_215 = arith.constant 1 : index
    %c0_216 = arith.constant 0 : index
    %c0_217 = arith.constant 0 : index
    %482 = vector.load %arg17[%c1_215, %c0_216, %c0_217] : memref<2x32x32xf32, #tpu.memory_space<vmem>>, vector<1x32x32xf32>
    %483 = vector.shape_cast %482 : vector<1x32x32xf32> to vector<32x32xf32>
    %c1_218 = arith.constant 1 : index
    %c0_219 = arith.constant 0 : index
    %c0_220 = arith.constant 0 : index
    %484 = vector.load %arg18[%c1_218, %c0_219, %c0_220] : memref<2x1x32xf32, #tpu.memory_space<vmem>>, vector<1x1x32xf32>
    %485 = vector.shape_cast %484 : vector<1x1x32xf32> to vector<1x32xf32>
    %486 = vector.shape_cast %467 : vector<16x32xf32> to vector<2x8x32xf32>
    %487 = vector.shape_cast %474 : vector<32x32xf32> to vector<2x16x32xf32>
    %488 = vector.shape_cast %481 : vector<32x32xf32> to vector<2x16x32xf32>
    %cst_221 = arith.constant 0.000000e+00 : f32
    %489 = vector.broadcast %cst_221 : f32 to vector<16x32xf32>
    %490 = vector.extract_strided_slice %486 {offsets = [0, 0, 0], sizes = [2, 8, 8], strides = [1, 1, 1]} : vector<2x8x32xf32> to vector<2x8x8xf32>
    %491 = vector.extract_strided_slice %487 {offsets = [0, 0, 0], sizes = [2, 16, 8], strides = [1, 1, 1]} : vector<2x16x32xf32> to vector<2x16x8xf32>
    "tpu.trace_start"() <{level = 10 : i32, message = "bqd,bkd->bqk"}> : () -> ()
    %cst_222 = arith.constant dense<0.000000e+00> : vector<2x8x16xf32>
    %492 = tpu.matmul %490, %491, %cst_222 {dimension_numbers = #tpu.dot_dimension_numbers<[2], [2], [1], [1], [0, 0, 0, 1, 1, 1], [0], [0]>} : vector<2x8x8xf32>, vector<2x16x8xf32>, vector<2x8x16xf32> -> vector<2x8x16xf32>
    "tpu.trace_stop"() : () -> ()
    %cst_223 = arith.constant dense<0xFF800000> : vector<2x8xf32>
    %493 = vector.multi_reduction <maximumf>, %492, %cst_223 [2] : vector<2x8x16xf32> to vector<2x8xf32>
    %494 = vector.shape_cast %493 : vector<2x8xf32> to vector<2x8x1xf32>
    %495 = vector.broadcast %494 : vector<2x8x1xf32> to vector<2x8x16xf32>
    %496 = arith.subf %492, %495 : vector<2x8x16xf32>
    %497 = math.exp %496 : vector<2x8x16xf32>
    %cst_224 = arith.constant dense<0.000000e+00> : vector<2x8xf32>
    %498 = vector.multi_reduction <add>, %497, %cst_224 [2] : vector<2x8x16xf32> to vector<2x8xf32>
    %499 = vector.shape_cast %498 : vector<2x8xf32> to vector<2x8x1xf32>
    %500 = tpu.reciprocal %499 : vector<2x8x1xf32> -> vector<2x8x1xf32>
    %501 = vector.broadcast %500 : vector<2x8x1xf32> to vector<2x8x16xf32>
    %502 = arith.mulf %497, %501 : vector<2x8x16xf32>
    %503 = vector.extract_strided_slice %488 {offsets = [0, 0, 0], sizes = [2, 16, 8], strides = [1, 1, 1]} : vector<2x16x32xf32> to vector<2x16x8xf32>
    "tpu.trace_start"() <{level = 10 : i32, message = "bqk,bkd->bqd"}> : () -> ()
    %cst_225 = arith.constant dense<0.000000e+00> : vector<2x8x8xf32>
    %504 = tpu.matmul %502, %503, %cst_225 {dimension_numbers = #tpu.dot_dimension_numbers<[2], [1], [1], [2], [0, 0, 0, 1, 1, 2], [0], [0]>} : vector<2x8x16xf32>, vector<2x16x8xf32>, vector<2x8x8xf32> -> vector<2x8x8xf32>
    "tpu.trace_stop"() : () -> ()
    %505 = vector.shape_cast %504 : vector<2x8x8xf32> to vector<16x8xf32>
    %506 = vector.extract_strided_slice %483 {offsets = [0, 0], sizes = [8, 32], strides = [1, 1]} : vector<32x32xf32> to vector<8x32xf32>
    %cst_226 = arith.constant dense<0.000000e+00> : vector<16x32xf32>
    %507 = tpu.matmul %505, %506, %cst_226 {dimension_numbers = #tpu.dot_dimension_numbers<[1], [0], [0], [1], [0, 0, 1, 1], [], []>} : vector<16x8xf32>, vector<8x32xf32>, vector<16x32xf32> -> vector<16x32xf32>
    %508 = arith.addf %489, %507 : vector<16x32xf32>
    %509 = vector.extract_strided_slice %486 {offsets = [0, 0, 8], sizes = [2, 8, 8], strides = [1, 1, 1]} : vector<2x8x32xf32> to vector<2x8x8xf32>
    %510 = vector.extract_strided_slice %487 {offsets = [0, 0, 8], sizes = [2, 16, 8], strides = [1, 1, 1]} : vector<2x16x32xf32> to vector<2x16x8xf32>
    "tpu.trace_start"() <{level = 10 : i32, message = "bqd,bkd->bqk"}> : () -> ()
    %cst_227 = arith.constant dense<0.000000e+00> : vector<2x8x16xf32>
    %511 = tpu.matmul %509, %510, %cst_227 {dimension_numbers = #tpu.dot_dimension_numbers<[2], [2], [1], [1], [0, 0, 0, 1, 1, 1], [0], [0]>} : vector<2x8x8xf32>, vector<2x16x8xf32>, vector<2x8x16xf32> -> vector<2x8x16xf32>
    "tpu.trace_stop"() : () -> ()
    %cst_228 = arith.constant dense<0xFF800000> : vector<2x8xf32>
    %512 = vector.multi_reduction <maximumf>, %511, %cst_228 [2] : vector<2x8x16xf32> to vector<2x8xf32>
    %513 = vector.shape_cast %512 : vector<2x8xf32> to vector<2x8x1xf32>
    %514 = vector.broadcast %513 : vector<2x8x1xf32> to vector<2x8x16xf32>
    %515 = arith.subf %511, %514 : vector<2x8x16xf32>
    %516 = math.exp %515 : vector<2x8x16xf32>
    %cst_229 = arith.constant dense<0.000000e+00> : vector<2x8xf32>
    %517 = vector.multi_reduction <add>, %516, %cst_229 [2] : vector<2x8x16xf32> to vector<2x8xf32>
    %518 = vector.shape_cast %517 : vector<2x8xf32> to vector<2x8x1xf32>
    %519 = tpu.reciprocal %518 : vector<2x8x1xf32> -> vector<2x8x1xf32>
    %520 = vector.broadcast %519 : vector<2x8x1xf32> to vector<2x8x16xf32>
    %521 = arith.mulf %516, %520 : vector<2x8x16xf32>
    %522 = vector.extract_strided_slice %488 {offsets = [0, 0, 8], sizes = [2, 16, 8], strides = [1, 1, 1]} : vector<2x16x32xf32> to vector<2x16x8xf32>
    "tpu.trace_start"() <{level = 10 : i32, message = "bqk,bkd->bqd"}> : () -> ()
    %cst_230 = arith.constant dense<0.000000e+00> : vector<2x8x8xf32>
    %523 = tpu.matmul %521, %522, %cst_230 {dimension_numbers = #tpu.dot_dimension_numbers<[2], [1], [1], [2], [0, 0, 0, 1, 1, 2], [0], [0]>} : vector<2x8x16xf32>, vector<2x16x8xf32>, vector<2x8x8xf32> -> vector<2x8x8xf32>
    "tpu.trace_stop"() : () -> ()
    %524 = vector.shape_cast %523 : vector<2x8x8xf32> to vector<16x8xf32>
    %525 = vector.extract_strided_slice %483 {offsets = [8, 0], sizes = [8, 32], strides = [1, 1]} : vector<32x32xf32> to vector<8x32xf32>
    %cst_231 = arith.constant dense<0.000000e+00> : vector<16x32xf32>
    %526 = tpu.matmul %524, %525, %cst_231 {dimension_numbers = #tpu.dot_dimension_numbers<[1], [0], [0], [1], [0, 0, 1, 1], [], []>} : vector<16x8xf32>, vector<8x32xf32>, vector<16x32xf32> -> vector<16x32xf32>
    %527 = arith.addf %508, %526 : vector<16x32xf32>
    %528 = vector.extract_strided_slice %486 {offsets = [0, 0, 16], sizes = [2, 8, 8], strides = [1, 1, 1]} : vector<2x8x32xf32> to vector<2x8x8xf32>
    %529 = vector.extract_strided_slice %487 {offsets = [0, 0, 16], sizes = [2, 16, 8], strides = [1, 1, 1]} : vector<2x16x32xf32> to vector<2x16x8xf32>
    "tpu.trace_start"() <{level = 10 : i32, message = "bqd,bkd->bqk"}> : () -> ()
    %cst_232 = arith.constant dense<0.000000e+00> : vector<2x8x16xf32>
    %530 = tpu.matmul %528, %529, %cst_232 {dimension_numbers = #tpu.dot_dimension_numbers<[2], [2], [1], [1], [0, 0, 0, 1, 1, 1], [0], [0]>} : vector<2x8x8xf32>, vector<2x16x8xf32>, vector<2x8x16xf32> -> vector<2x8x16xf32>
    "tpu.trace_stop"() : () -> ()
    %cst_233 = arith.constant dense<0xFF800000> : vector<2x8xf32>
    %531 = vector.multi_reduction <maximumf>, %530, %cst_233 [2] : vector<2x8x16xf32> to vector<2x8xf32>
    %532 = vector.shape_cast %531 : vector<2x8xf32> to vector<2x8x1xf32>
    %533 = vector.broadcast %532 : vector<2x8x1xf32> to vector<2x8x16xf32>
    %534 = arith.subf %530, %533 : vector<2x8x16xf32>
    %535 = math.exp %534 : vector<2x8x16xf32>
    %cst_234 = arith.constant dense<0.000000e+00> : vector<2x8xf32>
    %536 = vector.multi_reduction <add>, %535, %cst_234 [2] : vector<2x8x16xf32> to vector<2x8xf32>
    %537 = vector.shape_cast %536 : vector<2x8xf32> to vector<2x8x1xf32>
    %538 = tpu.reciprocal %537 : vector<2x8x1xf32> -> vector<2x8x1xf32>
    %539 = vector.broadcast %538 : vector<2x8x1xf32> to vector<2x8x16xf32>
    %540 = arith.mulf %535, %539 : vector<2x8x16xf32>
    %541 = vector.extract_strided_slice %488 {offsets = [0, 0, 16], sizes = [2, 16, 8], strides = [1, 1, 1]} : vector<2x16x32xf32> to vector<2x16x8xf32>
    "tpu.trace_start"() <{level = 10 : i32, message = "bqk,bkd->bqd"}> : () -> ()
    %cst_235 = arith.constant dense<0.000000e+00> : vector<2x8x8xf32>
    %542 = tpu.matmul %540, %541, %cst_235 {dimension_numbers = #tpu.dot_dimension_numbers<[2], [1], [1], [2], [0, 0, 0, 1, 1, 2], [0], [0]>} : vector<2x8x16xf32>, vector<2x16x8xf32>, vector<2x8x8xf32> -> vector<2x8x8xf32>
    "tpu.trace_stop"() : () -> ()
    %543 = vector.shape_cast %542 : vector<2x8x8xf32> to vector<16x8xf32>
    %544 = vector.extract_strided_slice %483 {offsets = [16, 0], sizes = [8, 32], strides = [1, 1]} : vector<32x32xf32> to vector<8x32xf32>
    %cst_236 = arith.constant dense<0.000000e+00> : vector<16x32xf32>
    %545 = tpu.matmul %543, %544, %cst_236 {dimension_numbers = #tpu.dot_dimension_numbers<[1], [0], [0], [1], [0, 0, 1, 1], [], []>} : vector<16x8xf32>, vector<8x32xf32>, vector<16x32xf32> -> vector<16x32xf32>
    %546 = arith.addf %527, %545 : vector<16x32xf32>
    %547 = vector.extract_strided_slice %486 {offsets = [0, 0, 24], sizes = [2, 8, 8], strides = [1, 1, 1]} : vector<2x8x32xf32> to vector<2x8x8xf32>
    %548 = vector.extract_strided_slice %487 {offsets = [0, 0, 24], sizes = [2, 16, 8], strides = [1, 1, 1]} : vector<2x16x32xf32> to vector<2x16x8xf32>
    "tpu.trace_start"() <{level = 10 : i32, message = "bqd,bkd->bqk"}> : () -> ()
    %cst_237 = arith.constant dense<0.000000e+00> : vector<2x8x16xf32>
    %549 = tpu.matmul %547, %548, %cst_237 {dimension_numbers = #tpu.dot_dimension_numbers<[2], [2], [1], [1], [0, 0, 0, 1, 1, 1], [0], [0]>} : vector<2x8x8xf32>, vector<2x16x8xf32>, vector<2x8x16xf32> -> vector<2x8x16xf32>
    "tpu.trace_stop"() : () -> ()
    %cst_238 = arith.constant dense<0xFF800000> : vector<2x8xf32>
    %550 = vector.multi_reduction <maximumf>, %549, %cst_238 [2] : vector<2x8x16xf32> to vector<2x8xf32>
    %551 = vector.shape_cast %550 : vector<2x8xf32> to vector<2x8x1xf32>
    %552 = vector.broadcast %551 : vector<2x8x1xf32> to vector<2x8x16xf32>
    %553 = arith.subf %549, %552 : vector<2x8x16xf32>
    %554 = math.exp %553 : vector<2x8x16xf32>
    %cst_239 = arith.constant dense<0.000000e+00> : vector<2x8xf32>
    %555 = vector.multi_reduction <add>, %554, %cst_239 [2] : vector<2x8x16xf32> to vector<2x8xf32>
    %556 = vector.shape_cast %555 : vector<2x8xf32> to vector<2x8x1xf32>
    %557 = tpu.reciprocal %556 : vector<2x8x1xf32> -> vector<2x8x1xf32>
    %558 = vector.broadcast %557 : vector<2x8x1xf32> to vector<2x8x16xf32>
    %559 = arith.mulf %554, %558 : vector<2x8x16xf32>
    %560 = vector.extract_strided_slice %488 {offsets = [0, 0, 24], sizes = [2, 16, 8], strides = [1, 1, 1]} : vector<2x16x32xf32> to vector<2x16x8xf32>
    "tpu.trace_start"() <{level = 10 : i32, message = "bqk,bkd->bqd"}> : () -> ()
    %cst_240 = arith.constant dense<0.000000e+00> : vector<2x8x8xf32>
    %561 = tpu.matmul %559, %560, %cst_240 {dimension_numbers = #tpu.dot_dimension_numbers<[2], [1], [1], [2], [0, 0, 0, 1, 1, 2], [0], [0]>} : vector<2x8x16xf32>, vector<2x16x8xf32>, vector<2x8x8xf32> -> vector<2x8x8xf32>
    "tpu.trace_stop"() : () -> ()
    %562 = vector.shape_cast %561 : vector<2x8x8xf32> to vector<16x8xf32>
    %563 = vector.extract_strided_slice %483 {offsets = [24, 0], sizes = [8, 32], strides = [1, 1]} : vector<32x32xf32> to vector<8x32xf32>
    %cst_241 = arith.constant dense<0.000000e+00> : vector<16x32xf32>
    %564 = tpu.matmul %562, %563, %cst_241 {dimension_numbers = #tpu.dot_dimension_numbers<[1], [0], [0], [1], [0, 0, 1, 1], [], []>} : vector<16x8xf32>, vector<8x32xf32>, vector<16x32xf32> -> vector<16x32xf32>
    %565 = arith.addf %546, %564 : vector<16x32xf32>
    %566 = vector.broadcast %485 : vector<1x32xf32> to vector<16x32xf32>
    %567 = arith.addf %565, %566 : vector<16x32xf32>
    %568 = arith.addf %459, %567 : vector<16x32xf32>
    %569 = vector.extract_strided_slice %331 {offsets = [1, 0], sizes = [1, 32], strides = [1, 1]} : vector<3x32xf32> to vector<1x32xf32>
    %570 = vector.extract_strided_slice %333 {offsets = [1, 0], sizes = [1, 32], strides = [1, 1]} : vector<3x32xf32> to vector<1x32xf32>
    %cst_242 = arith.constant dense<0.000000e+00> : vector<16xf32>
    %571 = vector.multi_reduction <add>, %568, %cst_242 [1] : vector<16x32xf32> to vector<16xf32>
    %572 = vector.shape_cast %571 : vector<16xf32> to vector<16x1xf32>
    %cst_243 = arith.constant 3.200000e+01 : f32
    %573 = vector.broadcast %cst_243 : f32 to vector<16x1xf32>
    %574 = arith.divf %572, %573 : vector<16x1xf32>
    %575 = vector.broadcast %574 : vector<16x1xf32> to vector<16x32xf32>
    %576 = arith.subf %568, %575 : vector<16x32xf32>
    %577 = arith.mulf %576, %576 : vector<16x32xf32>
    %cst_244 = arith.constant dense<0.000000e+00> : vector<16xf32>
    %578 = vector.multi_reduction <add>, %577, %cst_244 [1] : vector<16x32xf32> to vector<16xf32>
    %579 = vector.shape_cast %578 : vector<16xf32> to vector<16x1xf32>
    %cst_245 = arith.constant 3.200000e+01 : f32
    %580 = vector.broadcast %cst_245 : f32 to vector<16x1xf32>
    %581 = arith.divf %579, %580 : vector<16x1xf32>
    %cst_246 = arith.constant 9.99999974E-6 : f32
    %582 = vector.broadcast %cst_246 : f32 to vector<16x1xf32>
    %583 = arith.addf %581, %582 : vector<16x1xf32>
    %584 = math.rsqrt %583 : vector<16x1xf32>
    %585 = vector.broadcast %584 : vector<16x1xf32> to vector<16x32xf32>
    %586 = arith.mulf %576, %585 : vector<16x32xf32>
    %587 = vector.broadcast %569 : vector<1x32xf32> to vector<16x32xf32>
    %588 = arith.mulf %586, %587 : vector<16x32xf32>
    %589 = vector.broadcast %570 : vector<1x32xf32> to vector<16x32xf32>
    %590 = arith.addf %588, %589 : vector<16x32xf32>
    %c1_247 = arith.constant 1 : index
    %c0_248 = arith.constant 0 : index
    %c0_249 = arith.constant 0 : index
    %591 = vector.load %arg19[%c1_247, %c0_248, %c0_249] : memref<2x32x64xf32, #tpu.memory_space<vmem>>, vector<1x32x64xf32>
    %592 = vector.shape_cast %591 : vector<1x32x64xf32> to vector<32x64xf32>
    %cst_250 = arith.constant dense<0.000000e+00> : vector<16x64xf32>
    %593 = tpu.matmul %590, %592, %cst_250 {dimension_numbers = #tpu.dot_dimension_numbers<[1], [0], [0], [1], [0, 0, 1, 1], [], []>} : vector<16x32xf32>, vector<32x64xf32>, vector<16x64xf32> -> vector<16x64xf32>
    %c1_251 = arith.constant 1 : index
    %c0_252 = arith.constant 0 : index
    %c0_253 = arith.constant 0 : index
    %594 = vector.load %arg20[%c1_251, %c0_252, %c0_253] : memref<2x1x64xf32, #tpu.memory_space<vmem>>, vector<1x1x64xf32>
    %595 = vector.shape_cast %594 : vector<1x1x64xf32> to vector<1x64xf32>
    %596 = vector.broadcast %595 : vector<1x64xf32> to vector<16x64xf32>
    %597 = arith.addf %593, %596 : vector<16x64xf32>
    %cst_254 = arith.constant 0.000000e+00 : f32
    %598 = vector.broadcast %cst_254 : f32 to vector<16x64xf32>
    %599 = arith.maximumf %597, %598 : vector<16x64xf32>
    %c1_255 = arith.constant 1 : index
    %c0_256 = arith.constant 0 : index
    %c0_257 = arith.constant 0 : index
    %600 = vector.load %arg21[%c1_255, %c0_256, %c0_257] : memref<2x64x32xf32, #tpu.memory_space<vmem>>, vector<1x64x32xf32>
    %601 = vector.shape_cast %600 : vector<1x64x32xf32> to vector<64x32xf32>
    %cst_258 = arith.constant dense<0.000000e+00> : vector<16x32xf32>
    %602 = tpu.matmul %599, %601, %cst_258 {dimension_numbers = #tpu.dot_dimension_numbers<[1], [0], [0], [1], [0, 0, 1, 1], [], []>} : vector<16x64xf32>, vector<64x32xf32>, vector<16x32xf32> -> vector<16x32xf32>
    %c1_259 = arith.constant 1 : index
    %c0_260 = arith.constant 0 : index
    %c0_261 = arith.constant 0 : index
    %603 = vector.load %arg22[%c1_259, %c0_260, %c0_261] : memref<2x1x32xf32, #tpu.memory_space<vmem>>, vector<1x1x32xf32>
    %604 = vector.shape_cast %603 : vector<1x1x32xf32> to vector<1x32xf32>
    %605 = vector.broadcast %604 : vector<1x32xf32> to vector<16x32xf32>
    %606 = arith.addf %602, %605 : vector<16x32xf32>
    %607 = arith.addf %590, %606 : vector<16x32xf32>
    %608 = vector.extract_strided_slice %331 {offsets = [2, 0], sizes = [1, 32], strides = [1, 1]} : vector<3x32xf32> to vector<1x32xf32>
    %609 = vector.extract_strided_slice %333 {offsets = [2, 0], sizes = [1, 32], strides = [1, 1]} : vector<3x32xf32> to vector<1x32xf32>
    %cst_262 = arith.constant dense<0.000000e+00> : vector<16xf32>
    %610 = vector.multi_reduction <add>, %607, %cst_262 [1] : vector<16x32xf32> to vector<16xf32>
    %611 = vector.shape_cast %610 : vector<16xf32> to vector<16x1xf32>
    %cst_263 = arith.constant 3.200000e+01 : f32
    %612 = vector.broadcast %cst_263 : f32 to vector<16x1xf32>
    %613 = arith.divf %611, %612 : vector<16x1xf32>
    %614 = vector.broadcast %613 : vector<16x1xf32> to vector<16x32xf32>
    %615 = arith.subf %607, %614 : vector<16x32xf32>
    %616 = arith.mulf %615, %615 : vector<16x32xf32>
    %cst_264 = arith.constant dense<0.000000e+00> : vector<16xf32>
    %617 = vector.multi_reduction <add>, %616, %cst_264 [1] : vector<16x32xf32> to vector<16xf32>
    %618 = vector.shape_cast %617 : vector<16xf32> to vector<16x1xf32>
    %cst_265 = arith.constant 3.200000e+01 : f32
    %619 = vector.broadcast %cst_265 : f32 to vector<16x1xf32>
    %620 = arith.divf %618, %619 : vector<16x1xf32>
    %cst_266 = arith.constant 9.99999974E-6 : f32
    %621 = vector.broadcast %cst_266 : f32 to vector<16x1xf32>
    %622 = arith.addf %620, %621 : vector<16x1xf32>
    %623 = math.rsqrt %622 : vector<16x1xf32>
    %624 = vector.broadcast %623 : vector<16x1xf32> to vector<16x32xf32>
    %625 = arith.mulf %615, %624 : vector<16x32xf32>
    %626 = vector.broadcast %608 : vector<1x32xf32> to vector<16x32xf32>
    %627 = arith.mulf %625, %626 : vector<16x32xf32>
    %628 = vector.broadcast %609 : vector<1x32xf32> to vector<16x32xf32>
    %629 = arith.addf %627, %628 : vector<16x32xf32>
    %c0_267 = arith.constant 0 : index
    %c0_268 = arith.constant 0 : index
    %630 = vector.load %arg25[%c0_267, %c0_268] : memref<1x32xf32, #tpu.memory_space<vmem>>, vector<1x32xf32>
    %c0_269 = arith.constant 0 : index
    %c0_270 = arith.constant 0 : index
    %631 = vector.load %arg26[%c0_269, %c0_270] : memref<1x32xf32, #tpu.memory_space<vmem>>, vector<1x32xf32>
    %cst_271 = arith.constant dense<0.000000e+00> : vector<16xf32>
    %632 = vector.multi_reduction <add>, %629, %cst_271 [1] : vector<16x32xf32> to vector<16xf32>
    %633 = vector.shape_cast %632 : vector<16xf32> to vector<16x1xf32>
    %cst_272 = arith.constant 3.200000e+01 : f32
    %634 = vector.broadcast %cst_272 : f32 to vector<16x1xf32>
    %635 = arith.divf %633, %634 : vector<16x1xf32>
    %636 = vector.broadcast %635 : vector<16x1xf32> to vector<16x32xf32>
    %637 = arith.subf %629, %636 : vector<16x32xf32>
    %638 = arith.mulf %637, %637 : vector<16x32xf32>
    %cst_273 = arith.constant dense<0.000000e+00> : vector<16xf32>
    %639 = vector.multi_reduction <add>, %638, %cst_273 [1] : vector<16x32xf32> to vector<16xf32>
    %640 = vector.shape_cast %639 : vector<16xf32> to vector<16x1xf32>
    %cst_274 = arith.constant 3.200000e+01 : f32
    %641 = vector.broadcast %cst_274 : f32 to vector<16x1xf32>
    %642 = arith.divf %640, %641 : vector<16x1xf32>
    %cst_275 = arith.constant 9.99999974E-6 : f32
    %643 = vector.broadcast %cst_275 : f32 to vector<16x1xf32>
    %644 = arith.addf %642, %643 : vector<16x1xf32>
    %645 = math.rsqrt %644 : vector<16x1xf32>
    %646 = vector.broadcast %645 : vector<16x1xf32> to vector<16x32xf32>
    %647 = arith.mulf %637, %646 : vector<16x32xf32>
    %648 = vector.broadcast %630 : vector<1x32xf32> to vector<16x32xf32>
    %649 = arith.mulf %647, %648 : vector<16x32xf32>
    %650 = vector.broadcast %631 : vector<1x32xf32> to vector<16x32xf32>
    %651 = arith.addf %649, %650 : vector<16x32xf32>
    %c1_276 = arith.constant 1 : index
    %c0_277 = arith.constant 0 : index
    %c0_278 = arith.constant 0 : index
    %652 = vector.load %arg27[%c1_276, %c0_277, %c0_278] : memref<2x16x32xf32, #tpu.memory_space<vmem>>, vector<1x16x32xf32>
    %653 = vector.shape_cast %652 : vector<1x16x32xf32> to vector<16x32xf32>
    %654 = vector.shape_cast %651 : vector<16x32xf32> to vector<1x16x32xf32>
    tpu.vector_store %arg27[%c1_276, %c0_277, %c0_278], %654 {strides = array<i32>} : memref<2x16x32xf32, #tpu.memory_space<vmem>>, vector<1x16x32xf32>,
    return
  }
  func.func @transform_0(%arg0: i32) -> (i32, i32) {
    %c0_i32 = arith.constant 0 : i32
    %c0_i32_0 = arith.constant 0 : i32
    %c0_i32_1 = arith.constant 0 : i32
    return %c0_i32, %c0_i32_0 : i32, i32
  }
  func.func @transform_1(%arg0: i32) -> (i32, i32) {
    %c0_i32 = arith.constant 0 : i32
    %c0_i32_0 = arith.constant 0 : i32
    %c0_i32_1 = arith.constant 0 : i32
    return %c0_i32, %c0_i32_0 : i32, i32
  }
  func.func @transform_2(%arg0: i32) -> (i32, i32) {
    %c0_i32 = arith.constant 0 : i32
    %c0_i32_0 = arith.constant 0 : i32
    %c0_i32_1 = arith.constant 0 : i32
    return %c0_i32, %c0_i32_0 : i32, i32
  }
  func.func @transform_3(%arg0: i32) -> (i32, i32) {
    %c0_i32 = arith.constant 0 : i32
    %c0_i32_0 = arith.constant 0 : i32
    %c0_i32_1 = arith.constant 0 : i32
    return %c0_i32, %c0_i32_0 : i32, i32
  }
  func.func @transform_4(%arg0: i32) -> (i32, i32, i32) {
    %c0_i32 = arith.constant 0 : i32
    %c0_i32_0 = arith.constant 0 : i32
    %c0_i32_1 = arith.constant 0 : i32
    %c0_i32_2 = arith.constant 0 : i32
    return %c0_i32, %c0_i32_0, %c0_i32_1 : i32, i32, i32
  }
  func.func @transform_5(%arg0: i32) -> (i32, i32, i32) {
    %c0_i32 = arith.constant 0 : i32
    %c0_i32_0 = arith.constant 0 : i32
    %c0_i32_1 = arith.constant 0 : i32
    %c0_i32_2 = arith.constant 0 : i32
    return %c0_i32, %c0_i32_0, %c0_i32_1 : i32, i32, i32
  }
  func.func @transform_6(%arg0: i32) -> (i32, i32, i32) {
    %c0_i32 = arith.constant 0 : i32
    %c0_i32_0 = arith.constant 0 : i32
    %c0_i32_1 = arith.constant 0 : i32
    %c0_i32_2 = arith.constant 0 : i32
    return %c0_i32, %c0_i32_0, %c0_i32_1 : i32, i32, i32
  }
  func.func @transform_7(%arg0: i32) -> (i32, i32, i32) {
    %c0_i32 = arith.constant 0 : i32
    %c0_i32_0 = arith.constant 0 : i32
    %c0_i32_1 = arith.constant 0 : i32
    %c0_i32_2 = arith.constant 0 : i32
    return %c0_i32, %c0_i32_0, %c0_i32_1 : i32, i32, i32
  }
  func.func @transform_8(%arg0: i32) -> (i32, i32, i32) {
    %c0_i32 = arith.constant 0 : i32
    %c0_i32_0 = arith.constant 0 : i32
    %c0_i32_1 = arith.constant 0 : i32
    %c0_i32_2 = arith.constant 0 : i32
    return %c0_i32, %c0_i32_0, %c0_i32_1 : i32, i32, i32
  }
  func.func @transform_9(%arg0: i32) -> (i32, i32, i32) {
    %c0_i32 = arith.constant 0 : i32
    %c0_i32_0 = arith.constant 0 : i32
    %c0_i32_1 = arith.constant 0 : i32
    %c0_i32_2 = arith.constant 0 : i32
    return %c0_i32, %c0_i32_0, %c0_i32_1 : i32, i32, i32
  }
  func.func @transform_10(%arg0: i32) -> (i32, i32, i32) {
    %c0_i32 = arith.constant 0 : i32
    %c0_i32_0 = arith.constant 0 : i32
    %c0_i32_1 = arith.constant 0 : i32
    %c0_i32_2 = arith.constant 0 : i32
    return %c0_i32, %c0_i32_0, %c0_i32_1 : i32, i32, i32
  }
  func.func @transform_11(%arg0: i32) -> (i32, i32, i32) {
    %c0_i32 = arith.constant 0 : i32
    %c0_i32_0 = arith.constant 0 : i32
    %c0_i32_1 = arith.constant 0 : i32
    %c0_i32_2 = arith.constant 0 : i32
    return %c0_i32, %c0_i32_0, %c0_i32_1 : i32, i32, i32
  }
  func.func @transform_12(%arg0: i32) -> (i32, i32, i32) {
    %c0_i32 = arith.constant 0 : i32
    %c0_i32_0 = arith.constant 0 : i32
    %c0_i32_1 = arith.constant 0 : i32
    %c0_i32_2 = arith.constant 0 : i32
    return %c0_i32, %c0_i32_0, %c0_i32_1 : i32, i32, i32
  }
  func.func @transform_13(%arg0: i32) -> (i32, i32, i32) {
    %c0_i32 = arith.constant 0 : i32
    %c0_i32_0 = arith.constant 0 : i32
    %c0_i32_1 = arith.constant 0 : i32
    %c0_i32_2 = arith.constant 0 : i32
    return %c0_i32, %c0_i32_0, %c0_i32_1 : i32, i32, i32
  }
  func.func @transform_14(%arg0: i32) -> (i32, i32, i32) {
    %c0_i32 = arith.constant 0 : i32
    %c0_i32_0 = arith.constant 0 : i32
    %c0_i32_1 = arith.constant 0 : i32
    %c0_i32_2 = arith.constant 0 : i32
    return %c0_i32, %c0_i32_0, %c0_i32_1 : i32, i32, i32
  }
  func.func @transform_15(%arg0: i32) -> (i32, i32, i32) {
    %c0_i32 = arith.constant 0 : i32
    %c0_i32_0 = arith.constant 0 : i32
    %c0_i32_1 = arith.constant 0 : i32
    %c0_i32_2 = arith.constant 0 : i32
    return %c0_i32, %c0_i32_0, %c0_i32_1 : i32, i32, i32
  }
  func.func @transform_16(%arg0: i32) -> (i32, i32, i32) {
    %c0_i32 = arith.constant 0 : i32
    %c0_i32_0 = arith.constant 0 : i32
    %c0_i32_1 = arith.constant 0 : i32
    %c0_i32_2 = arith.constant 0 : i32
    return %c0_i32, %c0_i32_0, %c0_i32_1 : i32, i32, i32
  }
  func.func @transform_17(%arg0: i32) -> (i32, i32, i32) {
    %c0_i32 = arith.constant 0 : i32
    %c0_i32_0 = arith.constant 0 : i32
    %c0_i32_1 = arith.constant 0 : i32
    %c0_i32_2 = arith.constant 0 : i32
    return %c0_i32, %c0_i32_0, %c0_i32_1 : i32, i32, i32
  }
  func.func @transform_18(%arg0: i32) -> (i32, i32, i32) {
    %c0_i32 = arith.constant 0 : i32
    %c0_i32_0 = arith.constant 0 : i32
    %c0_i32_1 = arith.constant 0 : i32
    %c0_i32_2 = arith.constant 0 : i32
    return %c0_i32, %c0_i32_0, %c0_i32_1 : i32, i32, i32
  }
  func.func @transform_19(%arg0: i32) -> (i32, i32, i32) {
    %c0_i32 = arith.constant 0 : i32
    %c0_i32_0 = arith.constant 0 : i32
    %c0_i32_1 = arith.constant 0 : i32
    %c0_i32_2 = arith.constant 0 : i32
    return %c0_i32, %c0_i32_0, %c0_i32_1 : i32, i32, i32
  }
  func.func @transform_20(%arg0: i32) -> (i32, i32, i32) {
    %c0_i32 = arith.constant 0 : i32
    %c0_i32_0 = arith.constant 0 : i32
    %c0_i32_1 = arith.constant 0 : i32
    %c0_i32_2 = arith.constant 0 : i32
    return %c0_i32, %c0_i32_0, %c0_i32_1 : i32, i32, i32
  }
  func.func @transform_21(%arg0: i32) -> (i32, i32, i32) {
    %c0_i32 = arith.constant 0 : i32
    %c0_i32_0 = arith.constant 0 : i32
    %c0_i32_1 = arith.constant 0 : i32
    %c0_i32_2 = arith.constant 0 : i32
    return %c0_i32, %c0_i32_0, %c0_i32_1 : i32, i32, i32
  }
  func.func @transform_22(%arg0: i32) -> (i32, i32, i32) {
    %c0_i32 = arith.constant 0 : i32
    %c0_i32_0 = arith.constant 0 : i32
    %c0_i32_1 = arith.constant 0 : i32
    %c0_i32_2 = arith.constant 0 : i32
    return %c0_i32, %c0_i32_0, %c0_i32_1 : i32, i32, i32
  }
  func.func @transform_23(%arg0: i32) -> (i32, i32, i32) {
    %c0_i32 = arith.constant 0 : i32
    %c0_i32_0 = arith.constant 0 : i32
    %c0_i32_1 = arith.constant 0 : i32
    %c0_i32_2 = arith.constant 0 : i32
    return %c0_i32, %c0_i32_0, %c0_i32_1 : i32, i32, i32
  }
  func.func @transform_24(%arg0: i32) -> (i32, i32) {
    %c0_i32 = arith.constant 0 : i32
    %c0_i32_0 = arith.constant 0 : i32
    %c0_i32_1 = arith.constant 0 : i32
    return %c0_i32, %c0_i32_0 : i32, i32
  }
  func.func @transform_25(%arg0: i32) -> (i32, i32) {
    %c0_i32 = arith.constant 0 : i32
    %c0_i32_0 = arith.constant 0 : i32
    %c0_i32_1 = arith.constant 0 : i32
    return %c0_i32, %c0_i32_0 : i32, i32
  }
  func.func @transform_26(%arg0: i32) -> (i32, i32, i32) {
    %c0_i32 = arith.constant 0 : i32
    %c0_i32_0 = arith.constant 0 : i32
    %c0_i32_1 = arith.constant 0 : i32
    %c0_i32_2 = arith.constant 0 : i32
    return %c0_i32, %c0_i32_0, %c0_i32_1 : i32, i32, i32
  }
}

</mosaic_0001>

<llo_original>
// kernel: transformer_decoder.1
$region0: #{transformer_decoder.1}
  #allocation0 [shape = 'u32[]', space=smem, size = 0x4, offset = 0x4, fixed_abs, tag = 'smem constant byte address 0x4 - core index']
  #allocation1 [shape = 'u32[144,128]{1,0:T(1,128)}', space=vmem, size = 0x12000, scoped, tag = 'internal scratch']
  %s0 = inlined_call_operand.vmem [shape: f32[16,32], index: 0, kind: input, shape index: {}]
  %s1 = inlined_call_operand.vmem [shape: f32[32,32], index: 1, kind: input, shape index: {}]
  %s2 = inlined_call_operand.vmem [shape: f32[32,32], index: 2, kind: input, shape index: {}]
  %s3 = inlined_call_operand.vmem [shape: f32[16,32], index: 3, kind: input, shape index: {}]
  %s4 = inlined_call_operand.vmem [shape: f32[2,32,64], index: 4, kind: input, shape index: {}]
  %s5 = inlined_call_operand.vmem [shape: f32[2,1,64], index: 5, kind: input, shape index: {}]
  %s6 = inlined_call_operand.vmem [shape: f32[2,32,32], index: 6, kind: input, shape index: {}]
  %s7 = inlined_call_operand.vmem [shape: f32[2,1,32], index: 7, kind: input, shape index: {}]
  %s8 = inlined_call_operand.vmem [shape: f32[2,32,32], index: 8, kind: input, shape index: {}]
  %s9 = inlined_call_operand.vmem [shape: f32[2,1,32], index: 9, kind: input, shape index: {}]
  %s10 = inlined_call_operand.vmem [shape: f32[2,32,32], index: 10, kind: input, shape index: {}]
  %s11 = inlined_call_operand.hbm [shape: f32[2,1,32], index: 11, kind: input, shape index: {}]
  %s12 = inlined_call_operand.vmem [shape: f32[2,32,32], index: 12, kind: input, shape index: {}]
  %s13 = inlined_call_operand.hbm [shape: f32[2,1,32], index: 13, kind: input, shape index: {}]
  %s14 = inlined_call_operand.vmem [shape: f32[2,32,32], index: 14, kind: input, shape index: {}]
  %s15 = inlined_call_operand.hbm [shape: f32[2,1,32], index: 15, kind: input, shape index: {}]
  %s16 = inlined_call_operand.hbm [shape: f32[2,32,32], index: 16, kind: input, shape index: {}]
  %s17 = inlined_call_operand.hbm [shape: f32[2,1,32], index: 17, kind: input, shape index: {}]
  %s18 = inlined_call_operand.hbm [shape: f32[2,32,64], index: 18, kind: input, shape index: {}]
  %s19 = inlined_call_operand.vmem [shape: f32[2,1,64], index: 19, kind: input, shape index: {}]
  %s20 = inlined_call_operand.vmem [shape: f32[2,64,32], index: 20, kind: input, shape index: {}]
  %s21 = inlined_call_operand.vmem [shape: f32[2,1,32], index: 21, kind: input, shape index: {}]
  %s22 = inlined_call_operand.vmem [shape: f32[2,3,32], index: 22, kind: input, shape index: {}]
  %s23 = inlined_call_operand.vmem [shape: f32[2,3,32], index: 23, kind: input, shape index: {}]
  %s24 = inlined_call_operand.vmem [shape: f32[1,32], index: 24, kind: input, shape index: {}]
  %s25 = inlined_call_operand.vmem [shape: f32[1,32], index: 25, kind: input, shape index: {}]
  %s26 = inlined_call_operand.vmem [shape: f32[2,16,32], index: 26, kind: output, shape index: {}]
  %s27 = sld [smem:[#allocation0]]
  $region138: #{transformer_decoder.1} parent=0
    _
  %s29 = ssub.s32 1, %s27
  %s30 = scalar_select 0, %s29, %s27
  $region1: #{transformer_decoder.1} parent=0
    #allocation2 [shape = 'u8[1024]{0}', space=vmem, size = 0x400, scoped, tag = 'input window, operand 11, single buffered']
    #allocation3 [shape = 's32[1]{0}', space=sflag, size = 0x4, scoped, tag = 'scoped memory for transformer_decoder.1']
    #allocation4 [shape = 'u8[1024]{0}', space=vmem, size = 0x400, scoped, tag = 'input window, operand 13, single buffered']
    #allocation5 [shape = 's32[1]{0}', space=sflag, size = 0x4, scoped, tag = 'scoped memory for transformer_decoder.1']
    #allocation6 [shape = 'u8[1024]{0}', space=vmem, size = 0x400, scoped, tag = 'input window, operand 15, single buffered']
    #allocation7 [shape = 'u8[32768]{0}', space=vmem, size = 0x8000, scoped, tag = 'input window, operand 16, single buffered']
    #allocation8 [shape = 's32[1]{0}', space=sflag, size = 0x4, scoped, tag = 'scoped memory for transformer_decoder.1']
    #allocation9 [shape = 'u8[1024]{0}', space=vmem, size = 0x400, scoped, tag = 'input window, operand 17, single buffered']
    #allocation10 [shape = 'u8[32768]{0}', space=vmem, size = 0x8000, scoped, tag = 'input window, operand 18, single buffered']
    #allocation11 [shape = 's32[1]{0}', space=sflag, size = 0x4, scoped, tag = 'scoped memory for transformer_decoder.1']
    %31 = vsyncpa [#allocation3], 0
    %32 = vsyncpa [#allocation5], 0
    %33 = vsyncpa [#allocation8], 0
    %34 = vsyncpa [#allocation11], 0
    // Predicated region
    $region2: #{transformer_decoder.1} parent=1 // pred_check
      _
    $region3: #{transformer_decoder.1} parent=1 // pred_check_branch
      %36 = sbr.rel (0) target = $region5
    $region4: #{transformer_decoder.1} parent=1 // pred_region
      _
    $region5: #{transformer_decoder.1} parent=1 // pred_fallthru
      _
    // Predicated region
    $region6: #{transformer_decoder.1} parent=1 // pred_check
      _
    $region7: #{transformer_decoder.1} parent=1 // pred_check_branch
      %38 = sbr.rel (0) target = $region9
    $region8: #{transformer_decoder.1} parent=1 // pred_region
      _
    $region9: #{transformer_decoder.1} parent=1 // pred_fallthru
      _
    // Predicated region
    $region10: #{transformer_decoder.1} parent=1 // pred_check
      _
    $region11: #{transformer_decoder.1} parent=1 // pred_check_branch
      %40 = sbr.rel (0) target = $region13
    $region12: #{transformer_decoder.1} parent=1 // pred_region
      _
    $region13: #{transformer_decoder.1} parent=1 // pred_fallthru
      _
    // Predicated region
    $region14: #{transformer_decoder.1} parent=1 // pred_check
      _
    $region15: #{transformer_decoder.1} parent=1 // pred_check_branch
      %42 = sbr.rel (0) target = $region17
    $region16: #{transformer_decoder.1} parent=1 // pred_region
      _
    $region17: #{transformer_decoder.1} parent=1 // pred_fallthru
      _
    // Predicated region
    $region18: #{transformer_decoder.1} parent=1 // pred_check
      _
    $region19: #{transformer_decoder.1} parent=1 // pred_check_branch
      %44 = sbr.rel (0) target = $region21
    $region20: #{transformer_decoder.1} parent=1 // pred_region
      _
    $region21: #{transformer_decoder.1} parent=1 // pred_fallthru
      _
    // Predicated region
    $region22: #{transformer_decoder.1} parent=1 // pred_check
      _
    $region23: #{transformer_decoder.1} parent=1 // pred_check_branch
      %46 = sbr.rel (0) target = $region25
    $region24: #{transformer_decoder.1} parent=1 // pred_region
      _
    $region25: #{transformer_decoder.1} parent=1 // pred_fallthru
      _
    // Predicated region
    $region26: #{transformer_decoder.1} parent=1 // pred_check
      _
    $region27: #{transformer_decoder.1} parent=1 // pred_check_branch
      %48 = sbr.rel (0) target = $region29
    $region28: #{transformer_decoder.1} parent=1 // pred_region
      _
    $region29: #{transformer_decoder.1} parent=1 // pred_fallthru
      _
    // Predicated region
    $region30: #{transformer_decoder.1} parent=1 // pred_check
      _
    $region31: #{transformer_decoder.1} parent=1 // pred_check_branch
      %50 = sbr.rel (0) target = $region33
    $region32: #{transformer_decoder.1} parent=1 // pred_region
      _
    $region33: #{transformer_decoder.1} parent=1 // pred_fallthru
      _
    // Predicated region
    $region34: #{transformer_decoder.1} parent=1 // pred_check
      _
    $region35: #{transformer_decoder.1} parent=1 // pred_check_branch
      %52 = sbr.rel (0) target = $region37
    $region36: #{transformer_decoder.1} parent=1 // pred_region
      _
    $region37: #{transformer_decoder.1} parent=1 // pred_fallthru
      _
    // Predicated region
    $region38: #{transformer_decoder.1} parent=1 // pred_check
      _
    $region39: #{transformer_decoder.1} parent=1 // pred_check_branch
      %54 = sbr.rel (0) target = $region41
    $region40: #{transformer_decoder.1} parent=1 // pred_region
      _
    $region41: #{transformer_decoder.1} parent=1 // pred_fallthru
      _
    // Predicated region
    $region42: #{transformer_decoder.1} parent=1 // pred_check
      _
    $region43: #{transformer_decoder.1} parent=1 // pred_check_branch
      %56 = sbr.rel (0) target = $region45
    $region44: #{transformer_decoder.1} parent=1 // pred_region
      _
    $region45: #{transformer_decoder.1} parent=1 // pred_fallthru
      _
    // Predicated region
    $region46: #{transformer_decoder.1} parent=1 // pred_check
      _
    $region47: #{transformer_decoder.1} parent=1 // pred_check_branch
      %58 = sbr.rel (0) target = $region49
    $region48: #{transformer_decoder.1} parent=1 // pred_region
      %s60 = ssub.s32 32, 32
      %61 = vsyncadd [#allocation3], %s60
      %s62 = sshll.u32 [#allocation2], 4
      %s63 = int_to_ptr.vmem [resolvable:$true] %s62
      %68 = dma.hbm_to_vmem [thread:$0]  %s11, 32, %s63, [#allocation3], 16, 16, 1
    $region49: #{transformer_decoder.1} parent=1 // pred_fallthru
      _
    // Predicated region
    $region50: #{transformer_decoder.1} parent=1 // pred_check
      _
    $region51: #{transformer_decoder.1} parent=1 // pred_check_branch
      %70 = sbr.rel (0) target = $region53
    $region52: #{transformer_decoder.1} parent=1 // pred_region
      _
    $region53: #{transformer_decoder.1} parent=1 // pred_fallthru
      _
    // Predicated region
    $region54: #{transformer_decoder.1} parent=1 // pred_check
      _
    $region55: #{transformer_decoder.1} parent=1 // pred_check_branch
      %72 = sbr.rel (0) target = $region57
    $region56: #{transformer_decoder.1} parent=1 // pred_region
      %s74 = ssub.s32 32, 32
      %75 = vsyncadd [#allocation5], %s74
      %s76 = sshll.u32 [#allocation4], 4
      %s77 = int_to_ptr.vmem [resolvable:$true] %s76
      %82 = dma.hbm_to_vmem [thread:$0]  %s13, 32, %s77, [#allocation5], 16, 16, 1
    $region57: #{transformer_decoder.1} parent=1 // pred_fallthru
      _
    // Predicated region
    $region58: #{transformer_decoder.1} parent=1 // pred_check
      _
    $region59: #{transformer_decoder.1} parent=1 // pred_check_branch
      %84 = sbr.rel (0) target = $region61
    $region60: #{transformer_decoder.1} parent=1 // pred_region
      _
    $region61: #{transformer_decoder.1} parent=1 // pred_fallthru
      _
    // Predicated region
    $region62: #{transformer_decoder.1} parent=1 // pred_check
      _
    $region63: #{transformer_decoder.1} parent=1 // pred_check_branch
      %86 = sbr.rel (0) target = $region65
    $region64: #{transformer_decoder.1} parent=1 // pred_region
      %s88 = ssub.s32 32, 32
      %89 = vsyncadd [#allocation5], %s88
      %s90 = sshll.u32 [#allocation6], 4
      %s91 = int_to_ptr.vmem [resolvable:$true] %s90
      %96 = dma.hbm_to_vmem [thread:$0]  %s15, 32, %s91, [#allocation5], 16, 16, 1
    $region65: #{transformer_decoder.1} parent=1 // pred_fallthru
      _
    // Predicated region
    $region66: #{transformer_decoder.1} parent=1 // pred_check
      _
    $region67: #{transformer_decoder.1} parent=1 // pred_check_branch
      %98 = sbr.rel (0) target = $region69
    $region68: #{transformer_decoder.1} parent=1 // pred_region
      %s100 = ssub.s32 1024, 1024
      %101 = vsyncadd [#allocation8], %s100
      %s102 = sshll.u32 [#allocation7], 4
      %s103 = int_to_ptr.vmem [resolvable:$true] %s102
      %108 = dma.hbm_to_vmem [thread:$0]  %s16, 1024, %s103, [#allocation8], 128, 128, 8
    $region69: #{transformer_decoder.1} parent=1 // pred_fallthru
      _
    // Predicated region
    $region70: #{transformer_decoder.1} parent=1 // pred_check
      _
    $region71: #{transformer_decoder.1} parent=1 // pred_check_branch
      %110 = sbr.rel (0) target = $region73
    $region72: #{transformer_decoder.1} parent=1 // pred_region
      %s112 = ssub.s32 32, 32
      %113 = vsyncadd [#allocation8], %s112
      %s114 = sshll.u32 [#allocation9], 4
      %s115 = int_to_ptr.vmem [resolvable:$true] %s114
      %120 = dma.hbm_to_vmem [thread:$0]  %s17, 32, %s115, [#allocation8], 16, 16, 1
    $region73: #{transformer_decoder.1} parent=1 // pred_fallthru
      _
    // Predicated region
    $region74: #{transformer_decoder.1} parent=1 // pred_check
      _
    $region75: #{transformer_decoder.1} parent=1 // pred_check_branch
      %122 = sbr.rel (0) target = $region77
    $region76: #{transformer_decoder.1} parent=1 // pred_region
      %s124 = ssub.s32 1024, 1024
      %125 = vsyncadd [#allocation11], %s124
      %s126 = sshll.u32 [#allocation10], 4
      %s127 = int_to_ptr.vmem [resolvable:$true] %s126
      %132 = dma.hbm_to_vmem [thread:$0]  %s18, 1024, %s127, [#allocation11], 128, 128, 8
    $region77: #{transformer_decoder.1} parent=1 // pred_fallthru
      _
    // Predicated region
    $region78: #{transformer_decoder.1} parent=1 // pred_check
      _
    $region79: #{transformer_decoder.1} parent=1 // pred_check_branch
      %134 = sbr.rel (0) target = $region81
    $region80: #{transformer_decoder.1} parent=1 // pred_region
      _
    $region81: #{transformer_decoder.1} parent=1 // pred_fallthru
      _
    // Predicated region
    $region82: #{transformer_decoder.1} parent=1 // pred_check
      _
    $region83: #{transformer_decoder.1} parent=1 // pred_check_branch
      %136 = sbr.rel (0) target = $region85
    $region84: #{transformer_decoder.1} parent=1 // pred_region
      _
    $region85: #{transformer_decoder.1} parent=1 // pred_fallthru
      _
    // Predicated region
    $region86: #{transformer_decoder.1} parent=1 // pred_check
      _
    $region87: #{transformer_decoder.1} parent=1 // pred_check_branch
      %138 = sbr.rel (0) target = $region89
    $region88: #{transformer_decoder.1} parent=1 // pred_region
      _
    $region89: #{transformer_decoder.1} parent=1 // pred_fallthru
      _
    // Predicated region
    $region90: #{transformer_decoder.1} parent=1 // pred_check
      _
    $region91: #{transformer_decoder.1} parent=1 // pred_check_branch
      %140 = sbr.rel (0) target = $region93
    $region92: #{transformer_decoder.1} parent=1 // pred_region
      _
    $region93: #{transformer_decoder.1} parent=1 // pred_fallthru
      _
    // Predicated region
    $region94: #{transformer_decoder.1} parent=1 // pred_check
      _
    $region95: #{transformer_decoder.1} parent=1 // pred_check_branch
      %142 = sbr.rel (0) target = $region97
    $region96: #{transformer_decoder.1} parent=1 // pred_region
      _
    $region97: #{transformer_decoder.1} parent=1 // pred_fallthru
      _
    // Predicated region
    $region98: #{transformer_decoder.1} parent=1 // pred_check
      _
    $region99: #{transformer_decoder.1} parent=1 // pred_check_branch
      %144 = sbr.rel (0) target = $region101
    $region100: #{transformer_decoder.1} parent=1 // pred_region
      _
    $region101: #{transformer_decoder.1} parent=1 // pred_fallthru
      _
    // Predicated region
    $region102: #{transformer_decoder.1} parent=1 // pred_check
      _
    $region103: #{transformer_decoder.1} parent=1 // pred_check_branch
      %146 = sbr.rel (0) target = $region105
    $region104: #{transformer_decoder.1} parent=1 // pred_region
      _
    $region105: #{transformer_decoder.1} parent=1 // pred_fallthru
      _
    // Predicated region
    $region106: #{transformer_decoder.1} parent=1 // pred_check
      _
    $region107: #{transformer_decoder.1} parent=1 // pred_check_branch
      %148 = sbr.rel (0) target = $region109
    $region108: #{transformer_decoder.1} parent=1 // pred_region
      %149 = dma.done [#allocation3], 32
    $region109: #{transformer_decoder.1} parent=1 // pred_fallthru
      _
    // Predicated region
    $region110: #{transformer_decoder.1} parent=1 // pred_check
      _
    $region111: #{transformer_decoder.1} parent=1 // pred_check_branch
      %151 = sbr.rel (0) target = $region113
    $region112: #{transformer_decoder.1} parent=1 // pred_region
      %152 = dma.done [#allocation5], 32
    $region113: #{transformer_decoder.1} parent=1 // pred_fallthru
      _
    // Predicated region
    $region114: #{transformer_decoder.1} parent=1 // pred_check
      _
    $region115: #{transformer_decoder.1} parent=1 // pred_check_branch
      %154 = sbr.rel (0) target = $region117
    $region116: #{transformer_decoder.1} parent=1 // pred_region
      %155 = dma.done [#allocation5], 32
    $region117: #{transformer_decoder.1} parent=1 // pred_fallthru
      _
    // Predicated region
    $region118: #{transformer_decoder.1} parent=1 // pred_check
      _
    $region119: #{transformer_decoder.1} parent=1 // pred_check_branch
      %157 = sbr.rel (0) target = $region121
    $region120: #{transformer_decoder.1} parent=1 // pred_region
      %158 = dma.done [#allocation8], 1024
    $region121: #{transformer_decoder.1} parent=1 // pred_fallthru
      _
    // Predicated region
    $region122: #{transformer_decoder.1} parent=1 // pred_check
      _
    $region123: #{transformer_decoder.1} parent=1 // pred_check_branch
      %160 = sbr.rel (0) target = $region125
    $region124: #{transformer_decoder.1} parent=1 // pred_region
      %161 = dma.done [#allocation8], 32
    $region125: #{transformer_decoder.1} parent=1 // pred_fallthru
      _
    // Predicated region
    $region126: #{transformer_decoder.1} parent=1 // pred_check
      _
    $region127: #{transformer_decoder.1} parent=1 // pred_check_branch
      %163 = sbr.rel (0) target = $region129
    $region128: #{transformer_decoder.1} parent=1 // pred_region
      %164 = dma.done [#allocation11], 1024
    $region129: #{transformer_decoder.1} parent=1 // pred_fallthru
      _
    %v165 = vld [vmem:[%s0] sm:$0xff]
    %v166 = vld [vmem:[%s0 + $0x8] sm:$0xff]
    %v167 = vld [vmem:[%s1] sm:$0xff]
    %v168 = vld [vmem:[%s1 + $0x8] sm:$0xff]
    %v169 = vld [vmem:[%s1 + $0x10] sm:$0xff]
    %v170 = vld [vmem:[%s1 + $0x18] sm:$0xff]
    %v171 = vld [vmem:[%s3] sm:$0xff]
    %v172 = vld [vmem:[%s3 + $0x8] sm:$0xff]
    %v173 = vld [vmem:[%s2] sm:$0xff]
    %v174 = vld [vmem:[%s2 + $0x8] sm:$0xff]
    %v175 = vld [vmem:[%s2 + $0x10] sm:$0xff]
    %v176 = vld [vmem:[%s2 + $0x18] sm:$0xff]
    %v177 = vadd.f32 %v167, %v173
    %v178 = vadd.f32 %v168, %v174
    %v179 = vadd.f32 %v169, %v175
    %v180 = vadd.f32 %v170, %v176
    %v181 = vld [vmem:[%s22] sm:$0x7]
    %v182 = vld [vmem:[%s23] sm:$0x7]
    %v183 = vadd.f32 %v165, %v171
    %v184 = vadd.f32 %v166, %v172
    %v185 = vld [vmem:[%s4] sm:$0xff]
    %v186 = vld [vmem:[%s4 + $0x8] sm:$0xff]
    %v187 = vld [vmem:[%s4 + $0x10] sm:$0xff]
    %v188 = vld [vmem:[%s4 + $0x18] sm:$0xff]
    %v189 = vld [vmem:[%s5] sm:$0x1]
    %v191 = vlaneseq
    %v192 = vshrl.u32 %v191, 7
    %v193 = vsub.s32 0, %v192
    %v194 = vrot.slane %v189, %v193
    %vm196 = vcmask 261120
    %v198 = vsel %vm196, %v183, 0
    %v201 = vsel %vm196, %v184, 0
    %203 = vmatprep.subr.mxu0 0.0
    %204 = vmatpush1.msra.mxu0 %v185
    %205 = vmatprep.subr.mxu0 0.0
    %206 = vmatpush1.msra.mxu0 %v186
    %207 = vmatprep.subr.mxu0 0.0
    %208 = vmatpush1.msra.mxu0 %v187
    %209 = vmatprep.subr.mxu0 0.0
    %210 = vmatpush1.msra.mxu0 %v188
    %211 = vmatprep.subr.mxu0 0.0
    %212 = vmatpush1.msra.mxu0 0.0
    %213 = vmatprep.subr.mxu0 0.0
    %214 = vmatpush1.msra.mxu0 0.0
    %215 = vmatprep.subr.mxu0 0.0
    %216 = vmatpush1.msra.mxu0 0.0
    %217 = vmatprep.subr.mxu0 0.0
    %218 = vmatpush1.msra.mxu0 0.0
    %219 = vmatprep.subr.mxu0 0.0
    %220 = vmatpush1.msra.mxu0 0.0
    %221 = vmatprep.subr.mxu0 0.0
    %222 = vmatpush1.msra.mxu0 0.0
    %223 = vmatprep.subr.mxu0 0.0
    %224 = vmatpush1.msra.mxu0 0.0
    %225 = vmatprep.subr.mxu0 0.0
    %226 = vmatpush1.msra.mxu0 0.0
    %227 = vmatprep.subr.mxu0 0.0
    %228 = vmatpush1.msra.mxu0 0.0
    %229 = vmatprep.subr.mxu0 0.0
    %230 = vmatpush1.msra.mxu0 0.0
    %231 = vmatprep.subr.mxu0 0.0
    %232 = vmatpush1.msra.mxu0 0.0
    %233 = vmatprep.subr.mxu0 0.0
    %234 = vmatpush1.msra.mxu0 0.0
    %235 = vmatprep.subr.mxu0 0.0
    %236 = vmatpush1.msra.mxu0 0.0
    %237 = vmatprep.subr.mxu0 0.0
    %238 = vmatpush1.msra.mxu0 0.0
    %239 = vmatprep.subr.mxu0 0.0
    %240 = vmatpush1.msra.mxu0 0.0
    %241 = vmatprep.subr.mxu0 0.0
    %242 = vmatpush1.msra.mxu0 0.0
    %243 = vmatprep.subr.mxu0 0.0
    %244 = vmatpush1.msra.mxu0 0.0
    %245 = vmatprep.subr.mxu0 0.0
    %246 = vmatpush1.msra.mxu0 0.0
    %247 = vmatprep.subr.mxu0 0.0
    %248 = vmatpush1.msra.mxu0 0.0
    %249 = vmatprep.subr.mxu0 0.0
    %250 = vmatpush1.msra.mxu0 0.0
    %251 = vmatprep.subr.mxu0 0.0
    %252 = vmatpush1.msra.mxu0 0.0
    %253 = vmatprep.subr.mxu0 0.0
    %254 = vmatpush1.msra.mxu0 0.0
    %255 = vmatprep.subr.mxu0 0.0
    %256 = vmatpush1.msra.mxu0 0.0
    %257 = vmatprep.subr.mxu0 0.0
    %258 = vmatpush1.msra.mxu0 0.0
    %259 = vmatprep.subr.mxu0 0.0
    %260 = vmatpush1.msra.mxu0 0.0
    %261 = vmatprep.subr.mxu0 0.0
    %262 = vmatpush1.msra.mxu0 0.0
    %263 = vmatprep.subr.mxu0 0.0
    %264 = vmatpush1.msra.mxu0 0.0
    %265 = vmatprep.subr.mxu0 0.0
    %266 = vmatpush1.msra.mxu0 0.0
    %267 = vmatprep.mubr.f32.mxu0 0.0
    %268 = vmatmul.mubr.f32.gmra.mrb[0].mxu0 %v198
    %v269 = vpop.f32.mrb[0].mxu0
    %v270 = vadd.f32 %v194, %v269
    %v271 = vpop.f32.mrb[0].mxu0
    %272 = vmatprep.mubr.f32.mxu0 0.0
    %273 = vmatmul.mubr.f32.gmra.mrb[0].mxu0 %v201
    %v274 = vpop.f32.mrb[0].mxu0
    %v275 = vadd.f32 %v194, %v274
    %v276 = vpop.f32.mrb[0].mxu0
    %277 = vdwg.mxu0
    %v278 = vld [vmem:[%s6] sm:$0xff]
    %v279 = vld [vmem:[%s6 + $0x8] sm:$0xff]
    %v280 = vld [vmem:[%s6 + $0x10] sm:$0xff]
    %v281 = vld [vmem:[%s6 + $0x18] sm:$0xff]
    %v282 = vld [vmem:[%s7] sm:$0x1]
    %v284 = vlaneseq
    %v285 = vshrl.u32 %v284, 7
    %v286 = vsub.s32 0, %v285
    %v287 = vrot.slane %v282, %v286
    %v290 = vsel %vm196, %v165, 0
    %v293 = vsel %vm196, %v166, 0
    %295 = vmatprep.subr.mxu0 0.0
    %296 = vmatpush1.msra.mxu0 %v278
    %297 = vmatprep.subr.mxu0 0.0
    %298 = vmatpush1.msra.mxu0 %v279
    %299 = vmatprep.subr.mxu0 0.0
    %300 = vmatpush1.msra.mxu0 %v280
    %301 = vmatprep.subr.mxu0 0.0
    %302 = vmatpush1.msra.mxu0 %v281
    %303 = vmatprep.subr.mxu0 0.0
    %304 = vmatpush1.msra.mxu0 0.0
    %305 = vmatprep.subr.mxu0 0.0
    %306 = vmatpush1.msra.mxu0 0.0
    %307 = vmatprep.subr.mxu0 0.0
    %308 = vmatpush1.msra.mxu0 0.0
    %309 = vmatprep.subr.mxu0 0.0
    %310 = vmatpush1.msra.mxu0 0.0
    %311 = vmatprep.subr.mxu0 0.0
    %312 = vmatpush1.msra.mxu0 0.0
    %313 = vmatprep.subr.mxu0 0.0
    %314 = vmatpush1.msra.mxu0 0.0
    %315 = vmatprep.subr.mxu0 0.0
    %316 = vmatpush1.msra.mxu0 0.0
    %317 = vmatprep.subr.mxu0 0.0
    %318 = vmatpush1.msra.mxu0 0.0
    %319 = vmatprep.subr.mxu0 0.0
    %320 = vmatpush1.msra.mxu0 0.0
    %321 = vmatprep.subr.mxu0 0.0
    %322 = vmatpush1.msra.mxu0 0.0
    %323 = vmatprep.subr.mxu0 0.0
    %324 = vmatpush1.msra.mxu0 0.0
    %325 = vmatprep.subr.mxu0 0.0
    %326 = vmatpush1.msra.mxu0 0.0
    %327 = vmatprep.subr.mxu0 0.0
    %328 = vmatpush1.msra.mxu0 0.0
    %329 = vmatprep.subr.mxu0 0.0
    %330 = vmatpush1.msra.mxu0 0.0
    %331 = vmatprep.subr.mxu0 0.0
    %332 = vmatpush1.msra.mxu0 0.0
    %333 = vmatprep.subr.mxu0 0.0
    %334 = vmatpush1.msra.mxu0 0.0
    %335 = vmatprep.subr.mxu0 0.0
    %336 = vmatpush1.msra.mxu0 0.0
    %337 = vmatprep.subr.mxu0 0.0
    %338 = vmatpush1.msra.mxu0 0.0
    %339 = vmatprep.subr.mxu0 0.0
    %340 = vmatpush1.msra.mxu0 0.0
    %341 = vmatprep.subr.mxu0 0.0
    %342 = vmatpush1.msra.mxu0 0.0
    %343 = vmatprep.subr.mxu0 0.0
    %344 = vmatpush1.msra.mxu0 0.0
    %345 = vmatprep.subr.mxu0 0.0
    %346 = vmatpush1.msra.mxu0 0.0
    %347 = vmatprep.subr.mxu0 0.0
    %348 = vmatpush1.msra.mxu0 0.0
    %349 = vmatprep.subr.mxu0 0.0
    %350 = vmatpush1.msra.mxu0 0.0
    %351 = vmatprep.subr.mxu0 0.0
    %352 = vmatpush1.msra.mxu0 0.0
    %353 = vmatprep.subr.mxu0 0.0
    %354 = vmatpush1.msra.mxu0 0.0
    %355 = vmatprep.subr.mxu0 0.0
    %356 = vmatpush1.msra.mxu0 0.0
    %357 = vmatprep.subr.mxu0 0.0
    %358 = vmatpush1.msra.mxu0 0.0
    %359 = vmatprep.mubr.f32.mxu0 0.0
    %360 = vmatmul.mubr.f32.gmra.mrb[0].mxu0 %v290
    %v361 = vpop.f32.mrb[0].mxu0
    %v362 = vadd.f32 %v287, %v361
    %v363 = vpop.f32.mrb[0].mxu0
    %364 = vmatprep.mubr.f32.mxu0 0.0
    %365 = vmatmul.mubr.f32.gmra.mrb[0].mxu0 %v293
    %v366 = vpop.f32.mrb[0].mxu0
    %v367 = vadd.f32 %v287, %v366
    %v368 = vpop.f32.mrb[0].mxu0
    %369 = vdwg.mxu0
    %v370 = vld [vmem:[%s8] sm:$0xff]
    %v371 = vld [vmem:[%s8 + $0x8] sm:$0xff]
    %v372 = vld [vmem:[%s8 + $0x10] sm:$0xff]
    %v373 = vld [vmem:[%s8 + $0x18] sm:$0xff]
    %v374 = vld [vmem:[%s9] sm:$0x1]
    %376 = vrot.lane.b32.xlu0 %v270, 96
    %v377 = vpop.permute.xlu0 %376
    %vm378 = vcmask 64512
    %v379 = vsel %vm378, %v270, 0
    %v381 = vsel %vm378, %v377, 0
    %383 = vmatprep.subr.mxu0 0.0
    %384 = vmatpush1.xpose.msra.mxu0 %v381
    %385 = vmatprep.subr.mxu0 0.0
    %386 = vmatpush1.xpose.msra.mxu0 0.0
    %387 = vmatprep.subr.mxu0 0.0
    %388 = vmatpush1.xpose.msra.mxu0 0.0
    %389 = vmatprep.subr.mxu0 0.0
    %390 = vmatpush1.xpose.msra.mxu0 0.0
    %391 = vmatprep.subr.mxu0 0.0
    %392 = vmatpush1.xpose.msra.mxu0 0.0
    %393 = vmatprep.subr.mxu0 0.0
    %394 = vmatpush1.xpose.msra.mxu0 0.0
    %395 = vmatprep.subr.mxu0 0.0
    %396 = vmatpush1.xpose.msra.mxu0 0.0
    %397 = vmatprep.subr.mxu0 0.0
    %398 = vmatpush1.xpose.msra.mxu0 0.0
    %399 = vmatprep.subr.mxu0 0.0
    %400 = vmatpush1.xpose.msra.mxu0 0.0
    %401 = vmatprep.subr.mxu0 0.0
    %402 = vmatpush1.xpose.msra.mxu0 0.0
    %403 = vmatprep.subr.mxu0 0.0
    %404 = vmatpush1.xpose.msra.mxu0 0.0
    %405 = vmatprep.subr.mxu0 0.0
    %406 = vmatpush1.xpose.msra.mxu0 0.0
    %407 = vmatprep.subr.mxu0 0.0
    %408 = vmatpush1.xpose.msra.mxu0 0.0
    %409 = vmatprep.subr.mxu0 0.0
    %410 = vmatpush1.xpose.msra.mxu0 0.0
    %411 = vmatprep.subr.mxu0 0.0
    %412 = vmatpush1.xpose.msra.mxu0 0.0
    %413 = vmatprep.subr.mxu0 0.0
    %414 = vmatpush1.xpose.msra.mxu0 0.0
    %415 = vmatprep.subr.mxu0 0.0
    %416 = vmatpush1.xpose.msra.mxu0 0.0
    %417 = vmatprep.subr.mxu0 0.0
    %418 = vmatpush1.xpose.msra.mxu0 0.0
    %419 = vmatprep.subr.mxu0 0.0
    %420 = vmatpush1.xpose.msra.mxu0 0.0
    %421 = vmatprep.subr.mxu0 0.0
    %422 = vmatpush1.xpose.msra.mxu0 0.0
    %423 = vmatprep.subr.mxu0 0.0
    %424 = vmatpush1.xpose.msra.mxu0 0.0
    %425 = vmatprep.subr.mxu0 0.0
    %426 = vmatpush1.xpose.msra.mxu0 0.0
    %427 = vmatprep.subr.mxu0 0.0
    %428 = vmatpush1.xpose.msra.mxu0 0.0
    %429 = vmatprep.subr.mxu0 0.0
    %430 = vmatpush1.xpose.msra.mxu0 0.0
    %431 = vmatprep.subr.mxu0 0.0
    %432 = vmatpush1.xpose.msra.mxu0 0.0
    %433 = vmatprep.subr.mxu0 0.0
    %434 = vmatpush1.xpose.msra.mxu0 0.0
    %435 = vmatprep.subr.mxu0 0.0
    %436 = vmatpush1.xpose.msra.mxu0 0.0
    %437 = vmatprep.subr.mxu0 0.0
    %438 = vmatpush1.xpose.msra.mxu0 0.0
    %439 = vmatprep.subr.mxu0 0.0
    %440 = vmatpush1.xpose.msra.mxu0 0.0
    %441 = vmatprep.subr.mxu0 0.0
    %442 = vmatpush1.xpose.msra.mxu0 0.0
    %443 = vmatprep.subr.mxu0 0.0
    %444 = vmatpush1.xpose.msra.mxu0 0.0
    %445 = vmatprep.subr.mxu0 0.0
    %446 = vmatpush1.xpose.msra.mxu0 0.0
    %447 = vmatprep.mubr.f32.mxu0 0.0
    %448 = vmatmul.mubr.f32.gmra.mrb[0].mxu0 %v379
    %v449 = vpop.f32.mrb[0].mxu0
    %v450 = vadd.f32 0.0, %v449
    %v451 = vpop.f32.mrb[0].mxu0
    %452 = vdwg.mxu0
    %454 = vrot.lane.b32.xlu0 %v275, 96
    %v455 = vpop.permute.xlu0 %454
    %v456 = vsel %vm378, %v275, 0
    %v458 = vsel %vm378, %v455, 0
    %460 = vmatprep.subr.mxu0 0.0
    %461 = vmatpush1.xpose.msra.mxu0 %v458
    %462 = vmatprep.subr.mxu0 0.0
    %463 = vmatpush1.xpose.msra.mxu0 0.0
    %464 = vmatprep.subr.mxu0 0.0
    %465 = vmatpush1.xpose.msra.mxu0 0.0
    %466 = vmatprep.subr.mxu0 0.0
    %467 = vmatpush1.xpose.msra.mxu0 0.0
    %468 = vmatprep.subr.mxu0 0.0
    %469 = vmatpush1.xpose.msra.mxu0 0.0
    %470 = vmatprep.subr.mxu0 0.0
    %471 = vmatpush1.xpose.msra.mxu0 0.0
    %472 = vmatprep.subr.mxu0 0.0
    %473 = vmatpush1.xpose.msra.mxu0 0.0
    %474 = vmatprep.subr.mxu0 0.0
    %475 = vmatpush1.xpose.msra.mxu0 0.0
    %476 = vmatprep.subr.mxu0 0.0
    %477 = vmatpush1.xpose.msra.mxu0 0.0
    %478 = vmatprep.subr.mxu0 0.0
    %479 = vmatpush1.xpose.msra.mxu0 0.0
    %480 = vmatprep.subr.mxu0 0.0
    %481 = vmatpush1.xpose.msra.mxu0 0.0
    %482 = vmatprep.subr.mxu0 0.0
    %483 = vmatpush1.xpose.msra.mxu0 0.0
    %484 = vmatprep.subr.mxu0 0.0
    %485 = vmatpush1.xpose.msra.mxu0 0.0
    %486 = vmatprep.subr.mxu0 0.0
    %487 = vmatpush1.xpose.msra.mxu0 0.0
    %488 = vmatprep.subr.mxu0 0.0
    %489 = vmatpush1.xpose.msra.mxu0 0.0
    %490 = vmatprep.subr.mxu0 0.0
    %491 = vmatpush1.xpose.msra.mxu0 0.0
    %492 = vmatprep.subr.mxu0 0.0
    %493 = vmatpush1.xpose.msra.mxu0 0.0
    %494 = vmatprep.subr.mxu0 0.0
    %495 = vmatpush1.xpose.msra.mxu0 0.0
    %496 = vmatprep.subr.mxu0 0.0
    %497 = vmatpush1.xpose.msra.mxu0 0.0
    %498 = vmatprep.subr.mxu0 0.0
    %499 = vmatpush1.xpose.msra.mxu0 0.0
    %500 = vmatprep.subr.mxu0 0.0
    %501 = vmatpush1.xpose.msra.mxu0 0.0
    %502 = vmatprep.subr.mxu0 0.0
    %503 = vmatpush1.xpose.msra.mxu0 0.0
    %504 = vmatprep.subr.mxu0 0.0
    %505 = vmatpush1.xpose.msra.mxu0 0.0
    %506 = vmatprep.subr.mxu0 0.0
    %507 = vmatpush1.xpose.msra.mxu0 0.0
    %508 = vmatprep.subr.mxu0 0.0
    %509 = vmatpush1.xpose.msra.mxu0 0.0
    %510 = vmatprep.subr.mxu0 0.0
    %511 = vmatpush1.xpose.msra.mxu0 0.0
    %512 = vmatprep.subr.mxu0 0.0
    %513 = vmatpush1.xpose.msra.mxu0 0.0
    %514 = vmatprep.subr.mxu0 0.0
    %515 = vmatpush1.xpose.msra.mxu0 0.0
    %516 = vmatprep.subr.mxu0 0.0
    %517 = vmatpush1.xpose.msra.mxu0 0.0
    %518 = vmatprep.subr.mxu0 0.0
    %519 = vmatpush1.xpose.msra.mxu0 0.0
    %520 = vmatprep.subr.mxu0 0.0
    %521 = vmatpush1.xpose.msra.mxu0 0.0
    %522 = vmatprep.subr.mxu0 0.0
    %523 = vmatpush1.xpose.msra.mxu0 0.0
    %524 = vmatprep.mubr.f32.mxu0 0.0
    %525 = vmatmul.mubr.f32.gmra.mrb[0].mxu0 %v456
    %v526 = vpop.f32.mrb[0].mxu0
    %v527 = vadd.f32 0.0, %v526
    %v528 = vpop.f32.mrb[0].mxu0
    %529 = vdwg.mxu0
    %v530 = vsel %vm378, %v450, -inf
    %531 = vmax.xlane.f32.xlu0 %v530
    %v532 = vpop.xlane.xlu0 %531
    %v533 = vsel %vm378, %v527, -inf
    %534 = vmax.xlane.f32.xlu0 %v533
    %v535 = vpop.xlane.xlu0 %534
    %v536 = vsub.f32 %v450, %v532
    %v537 = vsub.f32 %v527, %v535
    %v538 = vmul.f32 %v536, 1.442695
    %v539 = vpow.pop %v538
    %v540 = vmul.f32 %v537, 1.442695
    %v541 = vpow.pop %v540
    %v542 = vsel %vm378, %v539, 0.0
    %543 = vadd.xlane.f32.xlu0 %v542
    %v544 = vpop.xlane.xlu0 %543
    %v545 = vsel %vm378, %v541, 0.0
    %546 = vadd.xlane.f32.xlu0 %v545
    %v547 = vpop.xlane.xlu0 %546
    %v548 = vrcp.pop %v544
    %v549 = vrcp.pop %v547
    %v550 = vmul.f32 %v539, %v548
    %v551 = vmul.f32 %v541, %v549
    %v553 = vsel %vm378, %v550, 0
    %555 = vmatprep.subr.mxu0 0.0
    %556 = vmatpush1.msra.mxu0 %v362
    %557 = vmatprep.subr.mxu0 0.0
    %558 = vmatpush1.msra.mxu0 0.0
    %559 = vmatprep.subr.mxu0 0.0
    %560 = vmatpush1.msra.mxu0 0.0
    %561 = vmatprep.subr.mxu0 0.0
    %562 = vmatpush1.msra.mxu0 0.0
    %563 = vmatprep.subr.mxu0 0.0
    %564 = vmatpush1.msra.mxu0 0.0
    %565 = vmatprep.subr.mxu0 0.0
    %566 = vmatpush1.msra.mxu0 0.0
    %567 = vmatprep.subr.mxu0 0.0
    %568 = vmatpush1.msra.mxu0 0.0
    %569 = vmatprep.subr.mxu0 0.0
    %570 = vmatpush1.msra.mxu0 0.0
    %571 = vmatprep.subr.mxu0 0.0
    %572 = vmatpush1.msra.mxu0 0.0
    %573 = vmatprep.subr.mxu0 0.0
    %574 = vmatpush1.msra.mxu0 0.0
    %575 = vmatprep.subr.mxu0 0.0
    %576 = vmatpush1.msra.mxu0 0.0
    %577 = vmatprep.subr.mxu0 0.0
    %578 = vmatpush1.msra.mxu0 0.0
    %579 = vmatprep.subr.mxu0 0.0
    %580 = vmatpush1.msra.mxu0 0.0
    %581 = vmatprep.subr.mxu0 0.0
    %582 = vmatpush1.msra.mxu0 0.0
    %583 = vmatprep.subr.mxu0 0.0
    %584 = vmatpush1.msra.mxu0 0.0
    %585 = vmatprep.subr.mxu0 0.0
    %586 = vmatpush1.msra.mxu0 0.0
    %587 = vmatprep.subr.mxu0 0.0
    %588 = vmatpush1.msra.mxu0 0.0
    %589 = vmatprep.subr.mxu0 0.0
    %590 = vmatpush1.msra.mxu0 0.0
    %591 = vmatprep.subr.mxu0 0.0
    %592 = vmatpush1.msra.mxu0 0.0
    %593 = vmatprep.subr.mxu0 0.0
    %594 = vmatpush1.msra.mxu0 0.0
    %595 = vmatprep.subr.mxu0 0.0
    %596 = vmatpush1.msra.mxu0 0.0
    %597 = vmatprep.subr.mxu0 0.0
    %598 = vmatpush1.msra.mxu0 0.0
    %599 = vmatprep.subr.mxu0 0.0
    %600 = vmatpush1.msra.mxu0 0.0
    %601 = vmatprep.subr.mxu0 0.0
    %602 = vmatpush1.msra.mxu0 0.0
    %603 = vmatprep.subr.mxu0 0.0
    %604 = vmatpush1.msra.mxu0 0.0
    %605 = vmatprep.subr.mxu0 0.0
    %606 = vmatpush1.msra.mxu0 0.0
    %607 = vmatprep.subr.mxu0 0.0
    %608 = vmatpush1.msra.mxu0 0.0
    %609 = vmatprep.subr.mxu0 0.0
    %610 = vmatpush1.msra.mxu0 0.0
    %611 = vmatprep.subr.mxu0 0.0
    %612 = vmatpush1.msra.mxu0 0.0
    %613 = vmatprep.subr.mxu0 0.0
    %614 = vmatpush1.msra.mxu0 0.0
    %615 = vmatprep.subr.mxu0 0.0
    %616 = vmatpush1.msra.mxu0 0.0
    %617 = vmatprep.subr.mxu0 0.0
    %618 = vmatpush1.msra.mxu0 0.0
    %619 = vmatprep.mubr.f32.mxu0 0.0
    %620 = vmatmul.mubr.f32.gmra.mrb[0].mxu0 %v553
    %v621 = vpop.f32.mrb[0].mxu0
    %v622 = vadd.f32 0.0, %v621
    %v623 = vpop.f32.mrb[0].mxu0
    %624 = vdwg.mxu0
    %v626 = vsel %vm378, %v551, 0
    %628 = vmatprep.subr.mxu0 0.0
    %629 = vmatpush1.msra.mxu0 %v367
    %630 = vmatprep.subr.mxu0 0.0
    %631 = vmatpush1.msra.mxu0 0.0
    %632 = vmatprep.subr.mxu0 0.0
    %633 = vmatpush1.msra.mxu0 0.0
    %634 = vmatprep.subr.mxu0 0.0
    %635 = vmatpush1.msra.mxu0 0.0
    %636 = vmatprep.subr.mxu0 0.0
    %637 = vmatpush1.msra.mxu0 0.0
    %638 = vmatprep.subr.mxu0 0.0
    %639 = vmatpush1.msra.mxu0 0.0
    %640 = vmatprep.subr.mxu0 0.0
    %641 = vmatpush1.msra.mxu0 0.0
    %642 = vmatprep.subr.mxu0 0.0
    %643 = vmatpush1.msra.mxu0 0.0
    %644 = vmatprep.subr.mxu0 0.0
    %645 = vmatpush1.msra.mxu0 0.0
    %646 = vmatprep.subr.mxu0 0.0
    %647 = vmatpush1.msra.mxu0 0.0
    %648 = vmatprep.subr.mxu0 0.0
    %649 = vmatpush1.msra.mxu0 0.0
    %650 = vmatprep.subr.mxu0 0.0
    %651 = vmatpush1.msra.mxu0 0.0
    %652 = vmatprep.subr.mxu0 0.0
    %653 = vmatpush1.msra.mxu0 0.0
    %654 = vmatprep.subr.mxu0 0.0
    %655 = vmatpush1.msra.mxu0 0.0
    %656 = vmatprep.subr.mxu0 0.0
    %657 = vmatpush1.msra.mxu0 0.0
    %658 = vmatprep.subr.mxu0 0.0
    %659 = vmatpush1.msra.mxu0 0.0
    %660 = vmatprep.subr.mxu0 0.0
    %661 = vmatpush1.msra.mxu0 0.0
    %662 = vmatprep.subr.mxu0 0.0
    %663 = vmatpush1.msra.mxu0 0.0
    %664 = vmatprep.subr.mxu0 0.0
    %665 = vmatpush1.msra.mxu0 0.0
    %666 = vmatprep.subr.mxu0 0.0
    %667 = vmatpush1.msra.mxu0 0.0
    %668 = vmatprep.subr.mxu0 0.0
    %669 = vmatpush1.msra.mxu0 0.0
    %670 = vmatprep.subr.mxu0 0.0
    %671 = vmatpush1.msra.mxu0 0.0
    %672 = vmatprep.subr.mxu0 0.0
    %673 = vmatpush1.msra.mxu0 0.0
    %674 = vmatprep.subr.mxu0 0.0
    %675 = vmatpush1.msra.mxu0 0.0
    %676 = vmatprep.subr.mxu0 0.0
    %677 = vmatpush1.msra.mxu0 0.0
    %678 = vmatprep.subr.mxu0 0.0
    %679 = vmatpush1.msra.mxu0 0.0
    %680 = vmatprep.subr.mxu0 0.0
    %681 = vmatpush1.msra.mxu0 0.0
    %682 = vmatprep.subr.mxu0 0.0
    %683 = vmatpush1.msra.mxu0 0.0
    %684 = vmatprep.subr.mxu0 0.0
    %685 = vmatpush1.msra.mxu0 0.0
    %686 = vmatprep.subr.mxu0 0.0
    %687 = vmatpush1.msra.mxu0 0.0
    %688 = vmatprep.subr.mxu0 0.0
    %689 = vmatpush1.msra.mxu0 0.0
    %690 = vmatprep.subr.mxu0 0.0
    %691 = vmatpush1.msra.mxu0 0.0
    %692 = vmatprep.mubr.f32.mxu0 0.0
    %693 = vmatmul.mubr.f32.gmra.mrb[0].mxu0 %v626
    %v694 = vpop.f32.mrb[0].mxu0
    %v695 = vadd.f32 0.0, %v694
    %v696 = vpop.f32.mrb[0].mxu0
    %697 = vdwg.mxu0
    %698 = vrot.lane.b32.xlu0 %v270, 120
    %v699 = vpop.permute.xlu0 %698
    %700 = vrot.lane.b32.xlu0 %v270, 88
    %v701 = vpop.permute.xlu0 %700
    %v702 = vsel %vm378, %v699, 0
    %v704 = vsel %vm378, %v701, 0
    %706 = vmatprep.subr.mxu0 0.0
    %707 = vmatpush1.xpose.msra.mxu0 %v704
    %708 = vmatprep.subr.mxu0 0.0
    %709 = vmatpush1.xpose.msra.mxu0 0.0
    %710 = vmatprep.subr.mxu0 0.0
    %711 = vmatpush1.xpose.msra.mxu0 0.0
    %712 = vmatprep.subr.mxu0 0.0
    %713 = vmatpush1.xpose.msra.mxu0 0.0
    %714 = vmatprep.subr.mxu0 0.0
    %715 = vmatpush1.xpose.msra.mxu0 0.0
    %716 = vmatprep.subr.mxu0 0.0
    %717 = vmatpush1.xpose.msra.mxu0 0.0
    %718 = vmatprep.subr.mxu0 0.0
    %719 = vmatpush1.xpose.msra.mxu0 0.0
    %720 = vmatprep.subr.mxu0 0.0
    %721 = vmatpush1.xpose.msra.mxu0 0.0
    %722 = vmatprep.subr.mxu0 0.0
    %723 = vmatpush1.xpose.msra.mxu0 0.0
    %724 = vmatprep.subr.mxu0 0.0
    %725 = vmatpush1.xpose.msra.mxu0 0.0
    %726 = vmatprep.subr.mxu0 0.0
    %727 = vmatpush1.xpose.msra.mxu0 0.0
    %728 = vmatprep.subr.mxu0 0.0
    %729 = vmatpush1.xpose.msra.mxu0 0.0
    %730 = vmatprep.subr.mxu0 0.0
    %731 = vmatpush1.xpose.msra.mxu0 0.0
    %732 = vmatprep.subr.mxu0 0.0
    %733 = vmatpush1.xpose.msra.mxu0 0.0
    %734 = vmatprep.subr.mxu0 0.0
    %735 = vmatpush1.xpose.msra.mxu0 0.0
    %736 = vmatprep.subr.mxu0 0.0
    %737 = vmatpush1.xpose.msra.mxu0 0.0
    %738 = vmatprep.subr.mxu0 0.0
    %739 = vmatpush1.xpose.msra.mxu0 0.0
    %740 = vmatprep.subr.mxu0 0.0
    %741 = vmatpush1.xpose.msra.mxu0 0.0
    %742 = vmatprep.subr.mxu0 0.0
    %743 = vmatpush1.xpose.msra.mxu0 0.0
    %744 = vmatprep.subr.mxu0 0.0
    %745 = vmatpush1.xpose.msra.mxu0 0.0
    %746 = vmatprep.subr.mxu0 0.0
    %747 = vmatpush1.xpose.msra.mxu0 0.0
    %748 = vmatprep.subr.mxu0 0.0
    %749 = vmatpush1.xpose.msra.mxu0 0.0
    %750 = vmatprep.subr.mxu0 0.0
    %751 = vmatpush1.xpose.msra.mxu0 0.0
    %752 = vmatprep.subr.mxu0 0.0
    %753 = vmatpush1.xpose.msra.mxu0 0.0
    %754 = vmatprep.subr.mxu0 0.0
    %755 = vmatpush1.xpose.msra.mxu0 0.0
    %756 = vmatprep.subr.mxu0 0.0
    %757 = vmatpush1.xpose.msra.mxu0 0.0
    %758 = vmatprep.subr.mxu0 0.0
    %759 = vmatpush1.xpose.msra.mxu0 0.0
    %760 = vmatprep.subr.mxu0 0.0
    %761 = vmatpush1.xpose.msra.mxu0 0.0
    %762 = vmatprep.subr.mxu0 0.0
    %763 = vmatpush1.xpose.msra.mxu0 0.0
    %764 = vmatprep.subr.mxu0 0.0
    %765 = vmatpush1.xpose.msra.mxu0 0.0
    %766 = vmatprep.subr.mxu0 0.0
    %767 = vmatpush1.xpose.msra.mxu0 0.0
    %768 = vmatprep.subr.mxu0 0.0
    %769 = vmatpush1.xpose.msra.mxu0 0.0
    %770 = vmatprep.mubr.f32.mxu0 0.0
    %771 = vmatmul.mubr.f32.gmra.mrb[0].mxu0 %v702
    %v772 = vpop.f32.mrb[0].mxu0
    %v773 = vadd.f32 0.0, %v772
    %v774 = vpop.f32.mrb[0].mxu0
    %775 = vdwg.mxu0
    %776 = vrot.lane.b32.xlu0 %v275, 120
    %v777 = vpop.permute.xlu0 %776
    %778 = vrot.lane.b32.xlu0 %v275, 88
    %v779 = vpop.permute.xlu0 %778
    %v780 = vsel %vm378, %v777, 0
    %v782 = vsel %vm378, %v779, 0
    %784 = vmatprep.subr.mxu0 0.0
    %785 = vmatpush1.xpose.msra.mxu0 %v782
    %786 = vmatprep.subr.mxu0 0.0
    %787 = vmatpush1.xpose.msra.mxu0 0.0
    %788 = vmatprep.subr.mxu0 0.0
    %789 = vmatpush1.xpose.msra.mxu0 0.0
    %790 = vmatprep.subr.mxu0 0.0
    %791 = vmatpush1.xpose.msra.mxu0 0.0
    %792 = vmatprep.subr.mxu0 0.0
    %793 = vmatpush1.xpose.msra.mxu0 0.0
    %794 = vmatprep.subr.mxu0 0.0
    %795 = vmatpush1.xpose.msra.mxu0 0.0
    %796 = vmatprep.subr.mxu0 0.0
    %797 = vmatpush1.xpose.msra.mxu0 0.0
    %798 = vmatprep.subr.mxu0 0.0
    %799 = vmatpush1.xpose.msra.mxu0 0.0
    %800 = vmatprep.subr.mxu0 0.0
    %801 = vmatpush1.xpose.msra.mxu0 0.0
    %802 = vmatprep.subr.mxu0 0.0
    %803 = vmatpush1.xpose.msra.mxu0 0.0
    %804 = vmatprep.subr.mxu0 0.0
    %805 = vmatpush1.xpose.msra.mxu0 0.0
    %806 = vmatprep.subr.mxu0 0.0
    %807 = vmatpush1.xpose.msra.mxu0 0.0
    %808 = vmatprep.subr.mxu0 0.0
    %809 = vmatpush1.xpose.msra.mxu0 0.0
    %810 = vmatprep.subr.mxu0 0.0
    %811 = vmatpush1.xpose.msra.mxu0 0.0
    %812 = vmatprep.subr.mxu0 0.0
    %813 = vmatpush1.xpose.msra.mxu0 0.0
    %814 = vmatprep.subr.mxu0 0.0
    %815 = vmatpush1.xpose.msra.mxu0 0.0
    %816 = vmatprep.subr.mxu0 0.0
    %817 = vmatpush1.xpose.msra.mxu0 0.0
    %818 = vmatprep.subr.mxu0 0.0
    %819 = vmatpush1.xpose.msra.mxu0 0.0
    %820 = vmatprep.subr.mxu0 0.0
    %821 = vmatpush1.xpose.msra.mxu0 0.0
    %822 = vmatprep.subr.mxu0 0.0
    %823 = vmatpush1.xpose.msra.mxu0 0.0
    %824 = vmatprep.subr.mxu0 0.0
    %825 = vmatpush1.xpose.msra.mxu0 0.0
    %826 = vmatprep.subr.mxu0 0.0
    %827 = vmatpush1.xpose.msra.mxu0 0.0
    %828 = vmatprep.subr.mxu0 0.0
    %829 = vmatpush1.xpose.msra.mxu0 0.0
    %830 = vmatprep.subr.mxu0 0.0
    %831 = vmatpush1.xpose.msra.mxu0 0.0
    %832 = vmatprep.subr.mxu0 0.0
    %833 = vmatpush1.xpose.msra.mxu0 0.0
    %834 = vmatprep.subr.mxu0 0.0
    %835 = vmatpush1.xpose.msra.mxu0 0.0
    %836 = vmatprep.subr.mxu0 0.0
    %837 = vmatpush1.xpose.msra.mxu0 0.0
    %838 = vmatprep.subr.mxu0 0.0
    %839 = vmatpush1.xpose.msra.mxu0 0.0
    %840 = vmatprep.subr.mxu0 0.0
    %841 = vmatpush1.xpose.msra.mxu0 0.0
    %842 = vmatprep.subr.mxu0 0.0
    %843 = vmatpush1.xpose.msra.mxu0 0.0
    %844 = vmatprep.subr.mxu0 0.0
    %845 = vmatpush1.xpose.msra.mxu0 0.0
    %846 = vmatprep.subr.mxu0 0.0
    %847 = vmatpush1.xpose.msra.mxu0 0.0
    %848 = vmatprep.mubr.f32.mxu0 0.0
    %849 = vmatmul.mubr.f32.gmra.mrb[0].mxu0 %v780
    %v850 = vpop.f32.mrb[0].mxu0
    %v851 = vadd.f32 0.0, %v850
    %v852 = vpop.f32.mrb[0].mxu0
    %853 = vdwg.mxu0
    %v854 = vsel %vm378, %v773, -inf
    %855 = vmax.xlane.f32.xlu0 %v854
    %v856 = vpop.xlane.xlu0 %855
    %v857 = vsel %vm378, %v851, -inf
    %858 = vmax.xlane.f32.xlu0 %v857
    %v859 = vpop.xlane.xlu0 %858
    %v860 = vsub.f32 %v773, %v856
    %v861 = vsub.f32 %v851, %v859
    %v862 = vmul.f32 %v860, 1.442695
    %v863 = vpow.pop %v862
    %v864 = vmul.f32 %v861, 1.442695
    %v865 = vpow.pop %v864
    %v866 = vsel %vm378, %v863, 0.0
    %867 = vadd.xlane.f32.xlu0 %v866
    %v868 = vpop.xlane.xlu0 %867
    %v869 = vsel %vm378, %v865, 0.0
    %870 = vadd.xlane.f32.xlu0 %v869
    %v871 = vpop.xlane.xlu0 %870
    %v872 = vrcp.pop %v868
    %v873 = vrcp.pop %v871
    %v874 = vmul.f32 %v863, %v872
    %v875 = vmul.f32 %v865, %v873
    %877 = vrot.lane.b32.xlu0 %v362, 120
    %v878 = vpop.permute.xlu0 %877
    %v881 = vsel %vm378, %v874, 0
    %883 = vmatprep.subr.mxu0 0.0
    %884 = vmatpush1.msra.mxu0 %v878
    %885 = vmatprep.subr.mxu0 0.0
    %886 = vmatpush1.msra.mxu0 0.0
    %887 = vmatprep.subr.mxu0 0.0
    %888 = vmatpush1.msra.mxu0 0.0
    %889 = vmatprep.subr.mxu0 0.0
    %890 = vmatpush1.msra.mxu0 0.0
    %891 = vmatprep.subr.mxu0 0.0
    %892 = vmatpush1.msra.mxu0 0.0
    %893 = vmatprep.subr.mxu0 0.0
    %894 = vmatpush1.msra.mxu0 0.0
    %895 = vmatprep.subr.mxu0 0.0
    %896 = vmatpush1.msra.mxu0 0.0
    %897 = vmatprep.subr.mxu0 0.0
    %898 = vmatpush1.msra.mxu0 0.0
    %899 = vmatprep.subr.mxu0 0.0
    %900 = vmatpush1.msra.mxu0 0.0
    %901 = vmatprep.subr.mxu0 0.0
    %902 = vmatpush1.msra.mxu0 0.0
    %903 = vmatprep.subr.mxu0 0.0
    %904 = vmatpush1.msra.mxu0 0.0
    %905 = vmatprep.subr.mxu0 0.0
    %906 = vmatpush1.msra.mxu0 0.0
    %907 = vmatprep.subr.mxu0 0.0
    %908 = vmatpush1.msra.mxu0 0.0
    %909 = vmatprep.subr.mxu0 0.0
    %910 = vmatpush1.msra.mxu0 0.0
    %911 = vmatprep.subr.mxu0 0.0
    %912 = vmatpush1.msra.mxu0 0.0
    %913 = vmatprep.subr.mxu0 0.0
    %914 = vmatpush1.msra.mxu0 0.0
    %915 = vmatprep.subr.mxu0 0.0
    %916 = vmatpush1.msra.mxu0 0.0
    %917 = vmatprep.subr.mxu0 0.0
    %918 = vmatpush1.msra.mxu0 0.0
    %919 = vmatprep.subr.mxu0 0.0
    %920 = vmatpush1.msra.mxu0 0.0
    %921 = vmatprep.subr.mxu0 0.0
    %922 = vmatpush1.msra.mxu0 0.0
    %923 = vmatprep.subr.mxu0 0.0
    %924 = vmatpush1.msra.mxu0 0.0
    %925 = vmatprep.subr.mxu0 0.0
    %926 = vmatpush1.msra.mxu0 0.0
    %927 = vmatprep.subr.mxu0 0.0
    %928 = vmatpush1.msra.mxu0 0.0
    %929 = vmatprep.subr.mxu0 0.0
    %930 = vmatpush1.msra.mxu0 0.0
    %931 = vmatprep.subr.mxu0 0.0
    %932 = vmatpush1.msra.mxu0 0.0
    %933 = vmatprep.subr.mxu0 0.0
    %934 = vmatpush1.msra.mxu0 0.0
    %935 = vmatprep.subr.mxu0 0.0
    %936 = vmatpush1.msra.mxu0 0.0
    %937 = vmatprep.subr.mxu0 0.0
    %938 = vmatpush1.msra.mxu0 0.0
    %939 = vmatprep.subr.mxu0 0.0
    %940 = vmatpush1.msra.mxu0 0.0
    %941 = vmatprep.subr.mxu0 0.0
    %942 = vmatpush1.msra.mxu0 0.0
    %943 = vmatprep.subr.mxu0 0.0
    %944 = vmatpush1.msra.mxu0 0.0
    %945 = vmatprep.subr.mxu0 0.0
    %946 = vmatpush1.msra.mxu0 0.0
    %947 = vmatprep.mubr.f32.mxu0 0.0
    %948 = vmatmul.mubr.f32.gmra.mrb[0].mxu0 %v881
    %v949 = vpop.f32.mrb[0].mxu0
    %v950 = vadd.f32 0.0, %v949
    %v951 = vpop.f32.mrb[0].mxu0
    %952 = vdwg.mxu0
    %954 = vrot.lane.b32.xlu0 %v367, 120
    %v955 = vpop.permute.xlu0 %954
    %v958 = vsel %vm378, %v875, 0
    %960 = vmatprep.subr.mxu0 0.0
    %961 = vmatpush1.msra.mxu0 %v955
    %962 = vmatprep.subr.mxu0 0.0
    %963 = vmatpush1.msra.mxu0 0.0
    %964 = vmatprep.subr.mxu0 0.0
    %965 = vmatpush1.msra.mxu0 0.0
    %966 = vmatprep.subr.mxu0 0.0
    %967 = vmatpush1.msra.mxu0 0.0
    %968 = vmatprep.subr.mxu0 0.0
    %969 = vmatpush1.msra.mxu0 0.0
    %970 = vmatprep.subr.mxu0 0.0
    %971 = vmatpush1.msra.mxu0 0.0
    %972 = vmatprep.subr.mxu0 0.0
    %973 = vmatpush1.msra.mxu0 0.0
    %974 = vmatprep.subr.mxu0 0.0
    %975 = vmatpush1.msra.mxu0 0.0
    %976 = vmatprep.subr.mxu0 0.0
    %977 = vmatpush1.msra.mxu0 0.0
    %978 = vmatprep.subr.mxu0 0.0
    %979 = vmatpush1.msra.mxu0 0.0
    %980 = vmatprep.subr.mxu0 0.0
    %981 = vmatpush1.msra.mxu0 0.0
    %982 = vmatprep.subr.mxu0 0.0
    %983 = vmatpush1.msra.mxu0 0.0
    %984 = vmatprep.subr.mxu0 0.0
    %985 = vmatpush1.msra.mxu0 0.0
    %986 = vmatprep.subr.mxu0 0.0
    %987 = vmatpush1.msra.mxu0 0.0
    %988 = vmatprep.subr.mxu0 0.0
    %989 = vmatpush1.msra.mxu0 0.0
    %990 = vmatprep.subr.mxu0 0.0
    %991 = vmatpush1.msra.mxu0 0.0
    %992 = vmatprep.subr.mxu0 0.0
    %993 = vmatpush1.msra.mxu0 0.0
    %994 = vmatprep.subr.mxu0 0.0
    %995 = vmatpush1.msra.mxu0 0.0
    %996 = vmatprep.subr.mxu0 0.0
    %997 = vmatpush1.msra.mxu0 0.0
    %998 = vmatprep.subr.mxu0 0.0
    %999 = vmatpush1.msra.mxu0 0.0
    %1000 = vmatprep.subr.mxu0 0.0
    %1001 = vmatpush1.msra.mxu0 0.0
    %1002 = vmatprep.subr.mxu0 0.0
    %1003 = vmatpush1.msra.mxu0 0.0
    %1004 = vmatprep.subr.mxu0 0.0
    %1005 = vmatpush1.msra.mxu0 0.0
    %1006 = vmatprep.subr.mxu0 0.0
    %1007 = vmatpush1.msra.mxu0 0.0
    %1008 = vmatprep.subr.mxu0 0.0
    %1009 = vmatpush1.msra.mxu0 0.0
    %1010 = vmatprep.subr.mxu0 0.0
    %1011 = vmatpush1.msra.mxu0 0.0
    %1012 = vmatprep.subr.mxu0 0.0
    %1013 = vmatpush1.msra.mxu0 0.0
    %1014 = vmatprep.subr.mxu0 0.0
    %1015 = vmatpush1.msra.mxu0 0.0
    %1016 = vmatprep.subr.mxu0 0.0
    %1017 = vmatpush1.msra.mxu0 0.0
    %1018 = vmatprep.subr.mxu0 0.0
    %1019 = vmatpush1.msra.mxu0 0.0
    %1020 = vmatprep.subr.mxu0 0.0
    %1021 = vmatpush1.msra.mxu0 0.0
    %1022 = vmatprep.subr.mxu0 0.0
    %1023 = vmatpush1.msra.mxu0 0.0
    %1024 = vmatprep.mubr.f32.mxu0 0.0
    %1025 = vmatmul.mubr.f32.gmra.mrb[0].mxu0 %v958
    %v1026 = vpop.f32.mrb[0].mxu0
    %v1027 = vadd.f32 0.0, %v1026
    %v1028 = vpop.f32.mrb[0].mxu0
    %1029 = vdwg.mxu0
    %v1031 = vsel %vm378, %v950, 0
    %v1034 = vsel %vm378, %v1027, 0
    %1036 = vmatprep.subr.mxu0 0.0
    %1037 = vmatpush1.msra.mxu0 %v371
    %1038 = vmatprep.subr.mxu0 0.0
    %1039 = vmatpush1.msra.mxu0 0.0
    %1040 = vmatprep.subr.mxu0 0.0
    %1041 = vmatpush1.msra.mxu0 0.0
    %1042 = vmatprep.subr.mxu0 0.0
    %1043 = vmatpush1.msra.mxu0 0.0
    %1044 = vmatprep.subr.mxu0 0.0
    %1045 = vmatpush1.msra.mxu0 0.0
    %1046 = vmatprep.subr.mxu0 0.0
    %1047 = vmatpush1.msra.mxu0 0.0
    %1048 = vmatprep.subr.mxu0 0.0
    %1049 = vmatpush1.msra.mxu0 0.0
    %1050 = vmatprep.subr.mxu0 0.0
    %1051 = vmatpush1.msra.mxu0 0.0
    %1052 = vmatprep.subr.mxu0 0.0
    %1053 = vmatpush1.msra.mxu0 0.0
    %1054 = vmatprep.subr.mxu0 0.0
    %1055 = vmatpush1.msra.mxu0 0.0
    %1056 = vmatprep.subr.mxu0 0.0
    %1057 = vmatpush1.msra.mxu0 0.0
    %1058 = vmatprep.subr.mxu0 0.0
    %1059 = vmatpush1.msra.mxu0 0.0
    %1060 = vmatprep.subr.mxu0 0.0
    %1061 = vmatpush1.msra.mxu0 0.0
    %1062 = vmatprep.subr.mxu0 0.0
    %1063 = vmatpush1.msra.mxu0 0.0
    %1064 = vmatprep.subr.mxu0 0.0
    %1065 = vmatpush1.msra.mxu0 0.0
    %1066 = vmatprep.subr.mxu0 0.0
    %1067 = vmatpush1.msra.mxu0 0.0
    %1068 = vmatprep.subr.mxu0 0.0
    %1069 = vmatpush1.msra.mxu0 0.0
    %1070 = vmatprep.subr.mxu0 0.0
    %1071 = vmatpush1.msra.mxu0 0.0
    %1072 = vmatprep.subr.mxu0 0.0
    %1073 = vmatpush1.msra.mxu0 0.0
    %1074 = vmatprep.subr.mxu0 0.0
    %1075 = vmatpush1.msra.mxu0 0.0
    %1076 = vmatprep.subr.mxu0 0.0
    %1077 = vmatpush1.msra.mxu0 0.0
    %1078 = vmatprep.subr.mxu0 0.0
    %1079 = vmatpush1.msra.mxu0 0.0
    %1080 = vmatprep.subr.mxu0 0.0
    %1081 = vmatpush1.msra.mxu0 0.0
    %1082 = vmatprep.subr.mxu0 0.0
    %1083 = vmatpush1.msra.mxu0 0.0
    %1084 = vmatprep.subr.mxu0 0.0
    %1085 = vmatpush1.msra.mxu0 0.0
    %1086 = vmatprep.subr.mxu0 0.0
    %1087 = vmatpush1.msra.mxu0 0.0
    %1088 = vmatprep.subr.mxu0 0.0
    %1089 = vmatpush1.msra.mxu0 0.0
    %1090 = vmatprep.subr.mxu0 0.0
    %1091 = vmatpush1.msra.mxu0 0.0
    %1092 = vmatprep.subr.mxu0 0.0
    %1093 = vmatpush1.msra.mxu0 0.0
    %1094 = vmatprep.subr.mxu0 0.0
    %1095 = vmatpush1.msra.mxu0 0.0
    %1096 = vmatprep.subr.mxu0 0.0
    %1097 = vmatpush1.msra.mxu0 0.0
    %1098 = vmatprep.subr.mxu0 0.0
    %1099 = vmatpush1.msra.mxu0 0.0
    %1100 = vmatprep.mubr.f32.mxu0 0.0
    %1101 = vmatmul.mubr.f32.gmra.mrb[0].mxu0 %v1031
    %v1102 = vpop.f32.mrb[0].mxu0
    %v1103 = vadd.f32 0.0, %v1102
    %v1104 = vpop.f32.mrb[0].mxu0
    %1105 = vmatprep.mubr.f32.mxu0 0.0
    %1106 = vmatmul.mubr.f32.gmra.mrb[0].mxu0 %v1034
    %v1107 = vpop.f32.mrb[0].mxu0
    %v1108 = vadd.f32 0.0, %v1107
    %v1109 = vpop.f32.mrb[0].mxu0
    %1110 = vdwg.mxu0
    %v1112 = vsel %vm378, %v622, 0
    %v1115 = vsel %vm378, %v695, 0
    %1117 = vmatprep.subr.mxu0 0.0
    %1118 = vmatpush1.msra.mxu0 %v370
    %1119 = vmatprep.subr.mxu0 0.0
    %1120 = vmatpush1.msra.mxu0 0.0
    %1121 = vmatprep.subr.mxu0 0.0
    %1122 = vmatpush1.msra.mxu0 0.0
    %1123 = vmatprep.subr.mxu0 0.0
    %1124 = vmatpush1.msra.mxu0 0.0
    %1125 = vmatprep.subr.mxu0 0.0
    %1126 = vmatpush1.msra.mxu0 0.0
    %1127 = vmatprep.subr.mxu0 0.0
    %1128 = vmatpush1.msra.mxu0 0.0
    %1129 = vmatprep.subr.mxu0 0.0
    %1130 = vmatpush1.msra.mxu0 0.0
    %1131 = vmatprep.subr.mxu0 0.0
    %1132 = vmatpush1.msra.mxu0 0.0
    %1133 = vmatprep.subr.mxu0 0.0
    %1134 = vmatpush1.msra.mxu0 0.0
    %1135 = vmatprep.subr.mxu0 0.0
    %1136 = vmatpush1.msra.mxu0 0.0
    %1137 = vmatprep.subr.mxu0 0.0
    %1138 = vmatpush1.msra.mxu0 0.0
    %1139 = vmatprep.subr.mxu0 0.0
    %1140 = vmatpush1.msra.mxu0 0.0
    %1141 = vmatprep.subr.mxu0 0.0
    %1142 = vmatpush1.msra.mxu0 0.0
    %1143 = vmatprep.subr.mxu0 0.0
    %1144 = vmatpush1.msra.mxu0 0.0
    %1145 = vmatprep.subr.mxu0 0.0
    %1146 = vmatpush1.msra.mxu0 0.0
    %1147 = vmatprep.subr.mxu0 0.0
    %1148 = vmatpush1.msra.mxu0 0.0
    %1149 = vmatprep.subr.mxu0 0.0
    %1150 = vmatpush1.msra.mxu0 0.0
    %1151 = vmatprep.subr.mxu0 0.0
    %1152 = vmatpush1.msra.mxu0 0.0
    %1153 = vmatprep.subr.mxu0 0.0
    %1154 = vmatpush1.msra.mxu0 0.0
    %1155 = vmatprep.subr.mxu0 0.0
    %1156 = vmatpush1.msra.mxu0 0.0
    %1157 = vmatprep.subr.mxu0 0.0
    %1158 = vmatpush1.msra.mxu0 0.0
    %1159 = vmatprep.subr.mxu0 0.0
    %1160 = vmatpush1.msra.mxu0 0.0
    %1161 = vmatprep.subr.mxu0 0.0
    %1162 = vmatpush1.msra.mxu0 0.0
    %1163 = vmatprep.subr.mxu0 0.0
    %1164 = vmatpush1.msra.mxu0 0.0
    %1165 = vmatprep.subr.mxu0 0.0
    %1166 = vmatpush1.msra.mxu0 0.0
    %1167 = vmatprep.subr.mxu0 0.0
    %1168 = vmatpush1.msra.mxu0 0.0
    %1169 = vmatprep.subr.mxu0 0.0
    %1170 = vmatpush1.msra.mxu0 0.0
    %1171 = vmatprep.subr.mxu0 0.0
    %1172 = vmatpush1.msra.mxu0 0.0
    %1173 = vmatprep.subr.mxu0 0.0
    %1174 = vmatpush1.msra.mxu0 0.0
    %1175 = vmatprep.subr.mxu0 0.0
    %1176 = vmatpush1.msra.mxu0 0.0
    %1177 = vmatprep.subr.mxu0 0.0
    %1178 = vmatpush1.msra.mxu0 0.0
    %1179 = vmatprep.subr.mxu0 0.0
    %1180 = vmatpush1.msra.mxu0 0.0
    %1181 = vmatprep.mubr.f32.mxu0 0.0
    %1182 = vmatmul.mubr.f32.gmra.mrb[0].mxu0 %v1112
    %v1183 = vpop.f32.mrb[0].mxu0
    %v1184 = vadd.f32 %v1103, %v1183
    %v1185 = vpop.f32.mrb[0].mxu0
    %1186 = vmatprep.mubr.f32.mxu0 0.0
    %1187 = vmatmul.mubr.f32.gmra.mrb[0].mxu0 %v1115
    %v1188 = vpop.f32.mrb[0].mxu0
    %v1189 = vadd.f32 %v1108, %v1188
    %v1190 = vpop.f32.mrb[0].mxu0
    %1191 = vdwg.mxu0
    %1192 = vrot.lane.b32.xlu0 %v270, 112
    %v1193 = vpop.permute.xlu0 %1192
    %1194 = vrot.lane.b32.xlu0 %v270, 80
    %v1195 = vpop.permute.xlu0 %1194
    %v1196 = vsel %vm378, %v1193, 0
    %v1198 = vsel %vm378, %v1195, 0
    %1200 = vmatprep.subr.mxu0 0.0
    %1201 = vmatpush1.xpose.msra.mxu0 %v1198
    %1202 = vmatprep.subr.mxu0 0.0
    %1203 = vmatpush1.xpose.msra.mxu0 0.0
    %1204 = vmatprep.subr.mxu0 0.0
    %1205 = vmatpush1.xpose.msra.mxu0 0.0
    %1206 = vmatprep.subr.mxu0 0.0
    %1207 = vmatpush1.xpose.msra.mxu0 0.0
    %1208 = vmatprep.subr.mxu0 0.0
    %1209 = vmatpush1.xpose.msra.mxu0 0.0
    %1210 = vmatprep.subr.mxu0 0.0
    %1211 = vmatpush1.xpose.msra.mxu0 0.0
    %1212 = vmatprep.subr.mxu0 0.0
    %1213 = vmatpush1.xpose.msra.mxu0 0.0
    %1214 = vmatprep.subr.mxu0 0.0
    %1215 = vmatpush1.xpose.msra.mxu0 0.0
    %1216 = vmatprep.subr.mxu0 0.0
    %1217 = vmatpush1.xpose.msra.mxu0 0.0
    %1218 = vmatprep.subr.mxu0 0.0
    %1219 = vmatpush1.xpose.msra.mxu0 0.0
    %1220 = vmatprep.subr.mxu0 0.0
    %1221 = vmatpush1.xpose.msra.mxu0 0.0
    %1222 = vmatprep.subr.mxu0 0.0
    %1223 = vmatpush1.xpose.msra.mxu0 0.0
    %1224 = vmatprep.subr.mxu0 0.0
    %1225 = vmatpush1.xpose.msra.mxu0 0.0
    %1226 = vmatprep.subr.mxu0 0.0
    %1227 = vmatpush1.xpose.msra.mxu0 0.0
    %1228 = vmatprep.subr.mxu0 0.0
    %1229 = vmatpush1.xpose.msra.mxu0 0.0
    %1230 = vmatprep.subr.mxu0 0.0
    %1231 = vmatpush1.xpose.msra.mxu0 0.0
    %1232 = vmatprep.subr.mxu0 0.0
    %1233 = vmatpush1.xpose.msra.mxu0 0.0
    %1234 = vmatprep.subr.mxu0 0.0
    %1235 = vmatpush1.xpose.msra.mxu0 0.0
    %1236 = vmatprep.subr.mxu0 0.0
    %1237 = vmatpush1.xpose.msra.mxu0 0.0
    %1238 = vmatprep.subr.mxu0 0.0
    %1239 = vmatpush1.xpose.msra.mxu0 0.0
    %1240 = vmatprep.subr.mxu0 0.0
    %1241 = vmatpush1.xpose.msra.mxu0 0.0
    %1242 = vmatprep.subr.mxu0 0.0
    %1243 = vmatpush1.xpose.msra.mxu0 0.0
    %1244 = vmatprep.subr.mxu0 0.0
    %1245 = vmatpush1.xpose.msra.mxu0 0.0
    %1246 = vmatprep.subr.mxu0 0.0
    %1247 = vmatpush1.xpose.msra.mxu0 0.0
    %1248 = vmatprep.subr.mxu0 0.0
    %1249 = vmatpush1.xpose.msra.mxu0 0.0
    %1250 = vmatprep.subr.mxu0 0.0
    %1251 = vmatpush1.xpose.msra.mxu0 0.0
    %1252 = vmatprep.subr.mxu0 0.0
    %1253 = vmatpush1.xpose.msra.mxu0 0.0
    %1254 = vmatprep.subr.mxu0 0.0
    %1255 = vmatpush1.xpose.msra.mxu0 0.0
    %1256 = vmatprep.subr.mxu0 0.0
    %1257 = vmatpush1.xpose.msra.mxu0 0.0
    %1258 = vmatprep.subr.mxu0 0.0
    %1259 = vmatpush1.xpose.msra.mxu0 0.0
    %1260 = vmatprep.subr.mxu0 0.0
    %1261 = vmatpush1.xpose.msra.mxu0 0.0
    %1262 = vmatprep.subr.mxu0 0.0
    %1263 = vmatpush1.xpose.msra.mxu0 0.0
    %1264 = vmatprep.mubr.f32.mxu0 0.0
    %1265 = vmatmul.mubr.f32.gmra.mrb[0].mxu0 %v1196
    %v1266 = vpop.f32.mrb[0].mxu0
    %v1267 = vadd.f32 0.0, %v1266
    %v1268 = vpop.f32.mrb[0].mxu0
    %1269 = vdwg.mxu0
    %1270 = vrot.lane.b32.xlu0 %v275, 112
    %v1271 = vpop.permute.xlu0 %1270
    %1272 = vrot.lane.b32.xlu0 %v275, 80
    %v1273 = vpop.permute.xlu0 %1272
    %v1274 = vsel %vm378, %v1271, 0
    %v1276 = vsel %vm378, %v1273, 0
    %1278 = vmatprep.subr.mxu0 0.0
    %1279 = vmatpush1.xpose.msra.mxu0 %v1276
    %1280 = vmatprep.subr.mxu0 0.0
    %1281 = vmatpush1.xpose.msra.mxu0 0.0
    %1282 = vmatprep.subr.mxu0 0.0
    %1283 = vmatpush1.xpose.msra.mxu0 0.0
    %1284 = vmatprep.subr.mxu0 0.0
    %1285 = vmatpush1.xpose.msra.mxu0 0.0
    %1286 = vmatprep.subr.mxu0 0.0
    %1287 = vmatpush1.xpose.msra.mxu0 0.0
    %1288 = vmatprep.subr.mxu0 0.0
    %1289 = vmatpush1.xpose.msra.mxu0 0.0
    %1290 = vmatprep.subr.mxu0 0.0
    %1291 = vmatpush1.xpose.msra.mxu0 0.0
    %1292 = vmatprep.subr.mxu0 0.0
    %1293 = vmatpush1.xpose.msra.mxu0 0.0
    %1294 = vmatprep.subr.mxu0 0.0
    %1295 = vmatpush1.xpose.msra.mxu0 0.0
    %1296 = vmatprep.subr.mxu0 0.0
    %1297 = vmatpush1.xpose.msra.mxu0 0.0
    %1298 = vmatprep.subr.mxu0 0.0
    %1299 = vmatpush1.xpose.msra.mxu0 0.0
    %1300 = vmatprep.subr.mxu0 0.0
    %1301 = vmatpush1.xpose.msra.mxu0 0.0
    %1302 = vmatprep.subr.mxu0 0.0
    %1303 = vmatpush1.xpose.msra.mxu0 0.0
    %1304 = vmatprep.subr.mxu0 0.0
    %1305 = vmatpush1.xpose.msra.mxu0 0.0
    %1306 = vmatprep.subr.mxu0 0.0
    %1307 = vmatpush1.xpose.msra.mxu0 0.0
    %1308 = vmatprep.subr.mxu0 0.0
    %1309 = vmatpush1.xpose.msra.mxu0 0.0
    %1310 = vmatprep.subr.mxu0 0.0
    %1311 = vmatpush1.xpose.msra.mxu0 0.0
    %1312 = vmatprep.subr.mxu0 0.0
    %1313 = vmatpush1.xpose.msra.mxu0 0.0
    %1314 = vmatprep.subr.mxu0 0.0
    %1315 = vmatpush1.xpose.msra.mxu0 0.0
    %1316 = vmatprep.subr.mxu0 0.0
    %1317 = vmatpush1.xpose.msra.mxu0 0.0
    %1318 = vmatprep.subr.mxu0 0.0
    %1319 = vmatpush1.xpose.msra.mxu0 0.0
    %1320 = vmatprep.subr.mxu0 0.0
    %1321 = vmatpush1.xpose.msra.mxu0 0.0
    %1322 = vmatprep.subr.mxu0 0.0
    %1323 = vmatpush1.xpose.msra.mxu0 0.0
    %1324 = vmatprep.subr.mxu0 0.0
    %1325 = vmatpush1.xpose.msra.mxu0 0.0
    %1326 = vmatprep.subr.mxu0 0.0
    %1327 = vmatpush1.xpose.msra.mxu0 0.0
    %1328 = vmatprep.subr.mxu0 0.0
    %1329 = vmatpush1.xpose.msra.mxu0 0.0
    %1330 = vmatprep.subr.mxu0 0.0
    %1331 = vmatpush1.xpose.msra.mxu0 0.0
    %1332 = vmatprep.subr.mxu0 0.0
    %1333 = vmatpush1.xpose.msra.mxu0 0.0
    %1334 = vmatprep.subr.mxu0 0.0
    %1335 = vmatpush1.xpose.msra.mxu0 0.0
    %1336 = vmatprep.subr.mxu0 0.0
    %1337 = vmatpush1.xpose.msra.mxu0 0.0
    %1338 = vmatprep.subr.mxu0 0.0
    %1339 = vmatpush1.xpose.msra.mxu0 0.0
    %1340 = vmatprep.subr.mxu0 0.0
    %1341 = vmatpush1.xpose.msra.mxu0 0.0
    %1342 = vmatprep.mubr.f32.mxu0 0.0
    %1343 = vmatmul.mubr.f32.gmra.mrb[0].mxu0 %v1274
    %v1344 = vpop.f32.mrb[0].mxu0
    %v1345 = vadd.f32 0.0, %v1344
    %v1346 = vpop.f32.mrb[0].mxu0
    %1347 = vdwg.mxu0
    %v1348 = vsel %vm378, %v1267, -inf
    %1349 = vmax.xlane.f32.xlu0 %v1348
    %v1350 = vpop.xlane.xlu0 %1349
    %v1351 = vsel %vm378, %v1345, -inf
    %1352 = vmax.xlane.f32.xlu0 %v1351
    %v1353 = vpop.xlane.xlu0 %1352
    %v1354 = vsub.f32 %v1267, %v1350
    %v1355 = vsub.f32 %v1345, %v1353
    %v1356 = vmul.f32 %v1354, 1.442695
    %v1357 = vpow.pop %v1356
    %v1358 = vmul.f32 %v1355, 1.442695
    %v1359 = vpow.pop %v1358
    %v1360 = vsel %vm378, %v1357, 0.0
    %1361 = vadd.xlane.f32.xlu0 %v1360
    %v1362 = vpop.xlane.xlu0 %1361
    %v1363 = vsel %vm378, %v1359, 0.0
    %1364 = vadd.xlane.f32.xlu0 %v1363
    %v1365 = vpop.xlane.xlu0 %1364
    %v1366 = vrcp.pop %v1362
    %v1367 = vrcp.pop %v1365
    %v1368 = vmul.f32 %v1357, %v1366
    %v1369 = vmul.f32 %v1359, %v1367
    %1370 = vrot.lane.b32.xlu0 %v362, 112
    %v1371 = vpop.permute.xlu0 %1370
    %v1374 = vsel %vm378, %v1368, 0
    %1376 = vmatprep.subr.mxu0 0.0
    %1377 = vmatpush1.msra.mxu0 %v1371
    %1378 = vmatprep.subr.mxu0 0.0
    %1379 = vmatpush1.msra.mxu0 0.0
    %1380 = vmatprep.subr.mxu0 0.0
    %1381 = vmatpush1.msra.mxu0 0.0
    %1382 = vmatprep.subr.mxu0 0.0
    %1383 = vmatpush1.msra.mxu0 0.0
    %1384 = vmatprep.subr.mxu0 0.0
    %1385 = vmatpush1.msra.mxu0 0.0
    %1386 = vmatprep.subr.mxu0 0.0
    %1387 = vmatpush1.msra.mxu0 0.0
    %1388 = vmatprep.subr.mxu0 0.0
    %1389 = vmatpush1.msra.mxu0 0.0
    %1390 = vmatprep.subr.mxu0 0.0
    %1391 = vmatpush1.msra.mxu0 0.0
    %1392 = vmatprep.subr.mxu0 0.0
    %1393 = vmatpush1.msra.mxu0 0.0
    %1394 = vmatprep.subr.mxu0 0.0
    %1395 = vmatpush1.msra.mxu0 0.0
    %1396 = vmatprep.subr.mxu0 0.0
    %1397 = vmatpush1.msra.mxu0 0.0
    %1398 = vmatprep.subr.mxu0 0.0
    %1399 = vmatpush1.msra.mxu0 0.0
    %1400 = vmatprep.subr.mxu0 0.0
    %1401 = vmatpush1.msra.mxu0 0.0
    %1402 = vmatprep.subr.mxu0 0.0
    %1403 = vmatpush1.msra.mxu0 0.0
    %1404 = vmatprep.subr.mxu0 0.0
    %1405 = vmatpush1.msra.mxu0 0.0
    %1406 = vmatprep.subr.mxu0 0.0
    %1407 = vmatpush1.msra.mxu0 0.0
    %1408 = vmatprep.subr.mxu0 0.0
    %1409 = vmatpush1.msra.mxu0 0.0
    %1410 = vmatprep.subr.mxu0 0.0
    %1411 = vmatpush1.msra.mxu0 0.0
    %1412 = vmatprep.subr.mxu0 0.0
    %1413 = vmatpush1.msra.mxu0 0.0
    %1414 = vmatprep.subr.mxu0 0.0
    %1415 = vmatpush1.msra.mxu0 0.0
    %1416 = vmatprep.subr.mxu0 0.0
    %1417 = vmatpush1.msra.mxu0 0.0
    %1418 = vmatprep.subr.mxu0 0.0
    %1419 = vmatpush1.msra.mxu0 0.0
    %1420 = vmatprep.subr.mxu0 0.0
    %1421 = vmatpush1.msra.mxu0 0.0
    %1422 = vmatprep.subr.mxu0 0.0
    %1423 = vmatpush1.msra.mxu0 0.0
    %1424 = vmatprep.subr.mxu0 0.0
    %1425 = vmatpush1.msra.mxu0 0.0
    %1426 = vmatprep.subr.mxu0 0.0
    %1427 = vmatpush1.msra.mxu0 0.0
    %1428 = vmatprep.subr.mxu0 0.0
    %1429 = vmatpush1.msra.mxu0 0.0
    %1430 = vmatprep.subr.mxu0 0.0
    %1431 = vmatpush1.msra.mxu0 0.0
    %1432 = vmatprep.subr.mxu0 0.0
    %1433 = vmatpush1.msra.mxu0 0.0
    %1434 = vmatprep.subr.mxu0 0.0
    %1435 = vmatpush1.msra.mxu0 0.0
    %1436 = vmatprep.subr.mxu0 0.0
    %1437 = vmatpush1.msra.mxu0 0.0
    %1438 = vmatprep.subr.mxu0 0.0
    %1439 = vmatpush1.msra.mxu0 0.0
    %1440 = vmatprep.mubr.f32.mxu0 0.0
    %1441 = vmatmul.mubr.f32.gmra.mrb[0].mxu0 %v1374
    %v1442 = vpop.f32.mrb[0].mxu0
    %v1443 = vadd.f32 0.0, %v1442
    %v1444 = vpop.f32.mrb[0].mxu0
    %1445 = vdwg.mxu0
    %1446 = vrot.lane.b32.xlu0 %v367, 112
    %v1447 = vpop.permute.xlu0 %1446
    %v1450 = vsel %vm378, %v1369, 0
    %1452 = vmatprep.subr.mxu0 0.0
    %1453 = vmatpush1.msra.mxu0 %v1447
    %1454 = vmatprep.subr.mxu0 0.0
    %1455 = vmatpush1.msra.mxu0 0.0
    %1456 = vmatprep.subr.mxu0 0.0
    %1457 = vmatpush1.msra.mxu0 0.0
    %1458 = vmatprep.subr.mxu0 0.0
    %1459 = vmatpush1.msra.mxu0 0.0
    %1460 = vmatprep.subr.mxu0 0.0
    %1461 = vmatpush1.msra.mxu0 0.0
    %1462 = vmatprep.subr.mxu0 0.0
    %1463 = vmatpush1.msra.mxu0 0.0
    %1464 = vmatprep.subr.mxu0 0.0
    %1465 = vmatpush1.msra.mxu0 0.0
    %1466 = vmatprep.subr.mxu0 0.0
    %1467 = vmatpush1.msra.mxu0 0.0
    %1468 = vmatprep.subr.mxu0 0.0
    %1469 = vmatpush1.msra.mxu0 0.0
    %1470 = vmatprep.subr.mxu0 0.0
    %1471 = vmatpush1.msra.mxu0 0.0
    %1472 = vmatprep.subr.mxu0 0.0
    %1473 = vmatpush1.msra.mxu0 0.0
    %1474 = vmatprep.subr.mxu0 0.0
    %1475 = vmatpush1.msra.mxu0 0.0
    %1476 = vmatprep.subr.mxu0 0.0
    %1477 = vmatpush1.msra.mxu0 0.0
    %1478 = vmatprep.subr.mxu0 0.0
    %1479 = vmatpush1.msra.mxu0 0.0
    %1480 = vmatprep.subr.mxu0 0.0
    %1481 = vmatpush1.msra.mxu0 0.0
    %1482 = vmatprep.subr.mxu0 0.0
    %1483 = vmatpush1.msra.mxu0 0.0
    %1484 = vmatprep.subr.mxu0 0.0
    %1485 = vmatpush1.msra.mxu0 0.0
    %1486 = vmatprep.subr.mxu0 0.0
    %1487 = vmatpush1.msra.mxu0 0.0
    %1488 = vmatprep.subr.mxu0 0.0
    %1489 = vmatpush1.msra.mxu0 0.0
    %1490 = vmatprep.subr.mxu0 0.0
    %1491 = vmatpush1.msra.mxu0 0.0
    %1492 = vmatprep.subr.mxu0 0.0
    %1493 = vmatpush1.msra.mxu0 0.0
    %1494 = vmatprep.subr.mxu0 0.0
    %1495 = vmatpush1.msra.mxu0 0.0
    %1496 = vmatprep.subr.mxu0 0.0
    %1497 = vmatpush1.msra.mxu0 0.0
    %1498 = vmatprep.subr.mxu0 0.0
    %1499 = vmatpush1.msra.mxu0 0.0
    %1500 = vmatprep.subr.mxu0 0.0
    %1501 = vmatpush1.msra.mxu0 0.0
    %1502 = vmatprep.subr.mxu0 0.0
    %1503 = vmatpush1.msra.mxu0 0.0
    %1504 = vmatprep.subr.mxu0 0.0
    %1505 = vmatpush1.msra.mxu0 0.0
    %1506 = vmatprep.subr.mxu0 0.0
    %1507 = vmatpush1.msra.mxu0 0.0
    %1508 = vmatprep.subr.mxu0 0.0
    %1509 = vmatpush1.msra.mxu0 0.0
    %1510 = vmatprep.subr.mxu0 0.0
    %1511 = vmatpush1.msra.mxu0 0.0
    %1512 = vmatprep.subr.mxu0 0.0
    %1513 = vmatpush1.msra.mxu0 0.0
    %1514 = vmatprep.subr.mxu0 0.0
    %1515 = vmatpush1.msra.mxu0 0.0
    %1516 = vmatprep.mubr.f32.mxu0 0.0
    %1517 = vmatmul.mubr.f32.gmra.mrb[0].mxu0 %v1450
    %v1518 = vpop.f32.mrb[0].mxu0
    %v1519 = vadd.f32 0.0, %v1518
    %v1520 = vpop.f32.mrb[0].mxu0
    %1521 = vdwg.mxu0
    %v1523 = vsel %vm378, %v1443, 0
    %v1526 = vsel %vm378, %v1519, 0
    %1528 = vmatprep.subr.mxu0 0.0
    %1529 = vmatpush1.msra.mxu0 %v372
    %1530 = vmatprep.subr.mxu0 0.0
    %1531 = vmatpush1.msra.mxu0 0.0
    %1532 = vmatprep.subr.mxu0 0.0
    %1533 = vmatpush1.msra.mxu0 0.0
    %1534 = vmatprep.subr.mxu0 0.0
    %1535 = vmatpush1.msra.mxu0 0.0
    %1536 = vmatprep.subr.mxu0 0.0
    %1537 = vmatpush1.msra.mxu0 0.0
    %1538 = vmatprep.subr.mxu0 0.0
    %1539 = vmatpush1.msra.mxu0 0.0
    %1540 = vmatprep.subr.mxu0 0.0
    %1541 = vmatpush1.msra.mxu0 0.0
    %1542 = vmatprep.subr.mxu0 0.0
    %1543 = vmatpush1.msra.mxu0 0.0
    %1544 = vmatprep.subr.mxu0 0.0
    %1545 = vmatpush1.msra.mxu0 0.0
    %1546 = vmatprep.subr.mxu0 0.0
    %1547 = vmatpush1.msra.mxu0 0.0
    %1548 = vmatprep.subr.mxu0 0.0
    %1549 = vmatpush1.msra.mxu0 0.0
    %1550 = vmatprep.subr.mxu0 0.0
    %1551 = vmatpush1.msra.mxu0 0.0
    %1552 = vmatprep.subr.mxu0 0.0
    %1553 = vmatpush1.msra.mxu0 0.0
    %1554 = vmatprep.subr.mxu0 0.0
    %1555 = vmatpush1.msra.mxu0 0.0
    %1556 = vmatprep.subr.mxu0 0.0
    %1557 = vmatpush1.msra.mxu0 0.0
    %1558 = vmatprep.subr.mxu0 0.0
    %1559 = vmatpush1.msra.mxu0 0.0
    %1560 = vmatprep.subr.mxu0 0.0
    %1561 = vmatpush1.msra.mxu0 0.0
    %1562 = vmatprep.subr.mxu0 0.0
    %1563 = vmatpush1.msra.mxu0 0.0
    %1564 = vmatprep.subr.mxu0 0.0
    %1565 = vmatpush1.msra.mxu0 0.0
    %1566 = vmatprep.subr.mxu0 0.0
    %1567 = vmatpush1.msra.mxu0 0.0
    %1568 = vmatprep.subr.mxu0 0.0
    %1569 = vmatpush1.msra.mxu0 0.0
    %1570 = vmatprep.subr.mxu0 0.0
    %1571 = vmatpush1.msra.mxu0 0.0
    %1572 = vmatprep.subr.mxu0 0.0
    %1573 = vmatpush1.msra.mxu0 0.0
    %1574 = vmatprep.subr.mxu0 0.0
    %1575 = vmatpush1.msra.mxu0 0.0
    %1576 = vmatprep.subr.mxu0 0.0
    %1577 = vmatpush1.msra.mxu0 0.0
    %1578 = vmatprep.subr.mxu0 0.0
    %1579 = vmatpush1.msra.mxu0 0.0
    %1580 = vmatprep.subr.mxu0 0.0
    %1581 = vmatpush1.msra.mxu0 0.0
    %1582 = vmatprep.subr.mxu0 0.0
    %1583 = vmatpush1.msra.mxu0 0.0
    %1584 = vmatprep.subr.mxu0 0.0
    %1585 = vmatpush1.msra.mxu0 0.0
    %1586 = vmatprep.subr.mxu0 0.0
    %1587 = vmatpush1.msra.mxu0 0.0
    %1588 = vmatprep.subr.mxu0 0.0
    %1589 = vmatpush1.msra.mxu0 0.0
    %1590 = vmatprep.subr.mxu0 0.0
    %1591 = vmatpush1.msra.mxu0 0.0
    %1592 = vmatprep.mubr.f32.mxu0 0.0
    %1593 = vmatmul.mubr.f32.gmra.mrb[0].mxu0 %v1523
    %v1594 = vpop.f32.mrb[0].mxu0
    %v1595 = vadd.f32 0.0, %v1594
    %v1596 = vpop.f32.mrb[0].mxu0
    %1597 = vmatprep.mubr.f32.mxu0 0.0
    %1598 = vmatmul.mubr.f32.gmra.mrb[0].mxu0 %v1526
    %v1599 = vpop.f32.mrb[0].mxu0
    %v1600 = vadd.f32 0.0, %v1599
    %v1601 = vpop.f32.mrb[0].mxu0
    %1602 = vdwg.mxu0
    %v1603 = vadd.f32 %v1184, %v1595
    %v1604 = vadd.f32 %v1189, %v1600
    %1605 = vrot.lane.b32.xlu0 %v270, 104
    %v1606 = vpop.permute.xlu0 %1605
    %1607 = vrot.lane.b32.xlu0 %v270, 72
    %v1608 = vpop.permute.xlu0 %1607
    %v1609 = vsel %vm378, %v1606, 0
    %v1611 = vsel %vm378, %v1608, 0
    %1613 = vmatprep.subr.mxu0 0.0
    %1614 = vmatpush1.xpose.msra.mxu0 %v1611
    %1615 = vmatprep.subr.mxu0 0.0
    %1616 = vmatpush1.xpose.msra.mxu0 0.0
    %1617 = vmatprep.subr.mxu0 0.0
    %1618 = vmatpush1.xpose.msra.mxu0 0.0
    %1619 = vmatprep.subr.mxu0 0.0
    %1620 = vmatpush1.xpose.msra.mxu0 0.0
    %1621 = vmatprep.subr.mxu0 0.0
    %1622 = vmatpush1.xpose.msra.mxu0 0.0
    %1623 = vmatprep.subr.mxu0 0.0
    %1624 = vmatpush1.xpose.msra.mxu0 0.0
    %1625 = vmatprep.subr.mxu0 0.0
    %1626 = vmatpush1.xpose.msra.mxu0 0.0
    %1627 = vmatprep.subr.mxu0 0.0
    %1628 = vmatpush1.xpose.msra.mxu0 0.0
    %1629 = vmatprep.subr.mxu0 0.0
    %1630 = vmatpush1.xpose.msra.mxu0 0.0
    %1631 = vmatprep.subr.mxu0 0.0
    %1632 = vmatpush1.xpose.msra.mxu0 0.0
    %1633 = vmatprep.subr.mxu0 0.0
    %1634 = vmatpush1.xpose.msra.mxu0 0.0
    %1635 = vmatprep.subr.mxu0 0.0
    %1636 = vmatpush1.xpose.msra.mxu0 0.0
    %1637 = vmatprep.subr.mxu0 0.0
    %1638 = vmatpush1.xpose.msra.mxu0 0.0
    %1639 = vmatprep.subr.mxu0 0.0
    %1640 = vmatpush1.xpose.msra.mxu0 0.0
    %1641 = vmatprep.subr.mxu0 0.0
    %1642 = vmatpush1.xpose.msra.mxu0 0.0
    %1643 = vmatprep.subr.mxu0 0.0
    %1644 = vmatpush1.xpose.msra.mxu0 0.0
    %1645 = vmatprep.subr.mxu0 0.0
    %1646 = vmatpush1.xpose.msra.mxu0 0.0
    %1647 = vmatprep.subr.mxu0 0.0
    %1648 = vmatpush1.xpose.msra.mxu0 0.0
    %1649 = vmatprep.subr.mxu0 0.0
    %1650 = vmatpush1.xpose.msra.mxu0 0.0
    %1651 = vmatprep.subr.mxu0 0.0
    %1652 = vmatpush1.xpose.msra.mxu0 0.0
    %1653 = vmatprep.subr.mxu0 0.0
    %1654 = vmatpush1.xpose.msra.mxu0 0.0
    %1655 = vmatprep.subr.mxu0 0.0
    %1656 = vmatpush1.xpose.msra.mxu0 0.0
    %1657 = vmatprep.subr.mxu0 0.0
    %1658 = vmatpush1.xpose.msra.mxu0 0.0
    %1659 = vmatprep.subr.mxu0 0.0
    %1660 = vmatpush1.xpose.msra.mxu0 0.0
    %1661 = vmatprep.subr.mxu0 0.0
    %1662 = vmatpush1.xpose.msra.mxu0 0.0
    %1663 = vmatprep.subr.mxu0 0.0
    %1664 = vmatpush1.xpose.msra.mxu0 0.0
    %1665 = vmatprep.subr.mxu0 0.0
    %1666 = vmatpush1.xpose.msra.mxu0 0.0
    %1667 = vmatprep.subr.mxu0 0.0
    %1668 = vmatpush1.xpose.msra.mxu0 0.0
    %1669 = vmatprep.subr.mxu0 0.0
    %1670 = vmatpush1.xpose.msra.mxu0 0.0
    %1671 = vmatprep.subr.mxu0 0.0
    %1672 = vmatpush1.xpose.msra.mxu0 0.0
    %1673 = vmatprep.subr.mxu0 0.0
    %1674 = vmatpush1.xpose.msra.mxu0 0.0
    %1675 = vmatprep.subr.mxu0 0.0
    %1676 = vmatpush1.xpose.msra.mxu0 0.0
    %1677 = vmatprep.mubr.f32.mxu0 0.0
    %1678 = vmatmul.mubr.f32.gmra.mrb[0].mxu0 %v1609
    %v1679 = vpop.f32.mrb[0].mxu0
    %v1680 = vadd.f32 0.0, %v1679
    %v1681 = vpop.f32.mrb[0].mxu0
    %1682 = vdwg.mxu0
    %1683 = vrot.lane.b32.xlu0 %v275, 104
    %v1684 = vpop.permute.xlu0 %1683
    %1685 = vrot.lane.b32.xlu0 %v275, 72
    %v1686 = vpop.permute.xlu0 %1685
    %v1687 = vsel %vm378, %v1684, 0
    %v1689 = vsel %vm378, %v1686, 0
    %1691 = vmatprep.subr.mxu0 0.0
    %1692 = vmatpush1.xpose.msra.mxu0 %v1689
    %1693 = vmatprep.subr.mxu0 0.0
    %1694 = vmatpush1.xpose.msra.mxu0 0.0
    %1695 = vmatprep.subr.mxu0 0.0
    %1696 = vmatpush1.xpose.msra.mxu0 0.0
    %1697 = vmatprep.subr.mxu0 0.0
    %1698 = vmatpush1.xpose.msra.mxu0 0.0
    %1699 = vmatprep.subr.mxu0 0.0
    %1700 = vmatpush1.xpose.msra.mxu0 0.0
    %1701 = vmatprep.subr.mxu0 0.0
    %1702 = vmatpush1.xpose.msra.mxu0 0.0
    %1703 = vmatprep.subr.mxu0 0.0
    %1704 = vmatpush1.xpose.msra.mxu0 0.0
    %1705 = vmatprep.subr.mxu0 0.0
    %1706 = vmatpush1.xpose.msra.mxu0 0.0
    %1707 = vmatprep.subr.mxu0 0.0
    %1708 = vmatpush1.xpose.msra.mxu0 0.0
    %1709 = vmatprep.subr.mxu0 0.0
    %1710 = vmatpush1.xpose.msra.mxu0 0.0
    %1711 = vmatprep.subr.mxu0 0.0
    %1712 = vmatpush1.xpose.msra.mxu0 0.0
    %1713 = vmatprep.subr.mxu0 0.0
    %1714 = vmatpush1.xpose.msra.mxu0 0.0
    %1715 = vmatprep.subr.mxu0 0.0
    %1716 = vmatpush1.xpose.msra.mxu0 0.0
    %1717 = vmatprep.subr.mxu0 0.0
    %1718 = vmatpush1.xpose.msra.mxu0 0.0
    %1719 = vmatprep.subr.mxu0 0.0
    %1720 = vmatpush1.xpose.msra.mxu0 0.0
    %1721 = vmatprep.subr.mxu0 0.0
    %1722 = vmatpush1.xpose.msra.mxu0 0.0
    %1723 = vmatprep.subr.mxu0 0.0
    %1724 = vmatpush1.xpose.msra.mxu0 0.0
    %1725 = vmatprep.subr.mxu0 0.0
    %1726 = vmatpush1.xpose.msra.mxu0 0.0
    %1727 = vmatprep.subr.mxu0 0.0
    %1728 = vmatpush1.xpose.msra.mxu0 0.0
    %1729 = vmatprep.subr.mxu0 0.0
    %1730 = vmatpush1.xpose.msra.mxu0 0.0
    %1731 = vmatprep.subr.mxu0 0.0
    %1732 = vmatpush1.xpose.msra.mxu0 0.0
    %1733 = vmatprep.subr.mxu0 0.0
    %1734 = vmatpush1.xpose.msra.mxu0 0.0
    %1735 = vmatprep.subr.mxu0 0.0
    %1736 = vmatpush1.xpose.msra.mxu0 0.0
    %1737 = vmatprep.subr.mxu0 0.0
    %1738 = vmatpush1.xpose.msra.mxu0 0.0
    %1739 = vmatprep.subr.mxu0 0.0
    %1740 = vmatpush1.xpose.msra.mxu0 0.0
    %1741 = vmatprep.subr.mxu0 0.0
    %1742 = vmatpush1.xpose.msra.mxu0 0.0
    %1743 = vmatprep.subr.mxu0 0.0
    %1744 = vmatpush1.xpose.msra.mxu0 0.0
    %1745 = vmatprep.subr.mxu0 0.0
    %1746 = vmatpush1.xpose.msra.mxu0 0.0
    %1747 = vmatprep.subr.mxu0 0.0
    %1748 = vmatpush1.xpose.msra.mxu0 0.0
    %1749 = vmatprep.subr.mxu0 0.0
    %1750 = vmatpush1.xpose.msra.mxu0 0.0
    %1751 = vmatprep.subr.mxu0 0.0
    %1752 = vmatpush1.xpose.msra.mxu0 0.0
    %1753 = vmatprep.subr.mxu0 0.0
    %1754 = vmatpush1.xpose.msra.mxu0 0.0
    %1755 = vmatprep.mubr.f32.mxu0 0.0
    %1756 = vmatmul.mubr.f32.gmra.mrb[0].mxu0 %v1687
    %v1757 = vpop.f32.mrb[0].mxu0
    %v1758 = vadd.f32 0.0, %v1757
    %v1759 = vpop.f32.mrb[0].mxu0
    %1760 = vdwg.mxu0
    %v1761 = vsel %vm378, %v1680, -inf
    %1762 = vmax.xlane.f32.xlu0 %v1761
    %v1763 = vpop.xlane.xlu0 %1762
    %v1764 = vsel %vm378, %v1758, -inf
    %1765 = vmax.xlane.f32.xlu0 %v1764
    %v1766 = vpop.xlane.xlu0 %1765
    %v1767 = vsub.f32 %v1680, %v1763
    %v1768 = vsub.f32 %v1758, %v1766
    %v1769 = vmul.f32 %v1767, 1.442695
    %v1770 = vpow.pop %v1769
    %v1771 = vmul.f32 %v1768, 1.442695
    %v1772 = vpow.pop %v1771
    %v1773 = vsel %vm378, %v1770, 0.0
    %1774 = vadd.xlane.f32.xlu0 %v1773
    %v1775 = vpop.xlane.xlu0 %1774
    %v1776 = vsel %vm378, %v1772, 0.0
    %1777 = vadd.xlane.f32.xlu0 %v1776
    %v1778 = vpop.xlane.xlu0 %1777
    %v1779 = vrcp.pop %v1775
    %v1780 = vrcp.pop %v1778
    %v1781 = vmul.f32 %v1770, %v1779
    %v1782 = vmul.f32 %v1772, %v1780
    %1783 = vrot.lane.b32.xlu0 %v362, 104
    %v1784 = vpop.permute.xlu0 %1783
    %v1787 = vsel %vm378, %v1781, 0
    %1789 = vmatprep.subr.mxu0 0.0
    %1790 = vmatpush1.msra.mxu0 %v1784
    %1791 = vmatprep.subr.mxu0 0.0
    %1792 = vmatpush1.msra.mxu0 0.0
    %1793 = vmatprep.subr.mxu0 0.0
    %1794 = vmatpush1.msra.mxu0 0.0
    %1795 = vmatprep.subr.mxu0 0.0
    %1796 = vmatpush1.msra.mxu0 0.0
    %1797 = vmatprep.subr.mxu0 0.0
    %1798 = vmatpush1.msra.mxu0 0.0
    %1799 = vmatprep.subr.mxu0 0.0
    %1800 = vmatpush1.msra.mxu0 0.0
    %1801 = vmatprep.subr.mxu0 0.0
    %1802 = vmatpush1.msra.mxu0 0.0
    %1803 = vmatprep.subr.mxu0 0.0
    %1804 = vmatpush1.msra.mxu0 0.0
    %1805 = vmatprep.subr.mxu0 0.0
    %1806 = vmatpush1.msra.mxu0 0.0
    %1807 = vmatprep.subr.mxu0 0.0
    %1808 = vmatpush1.msra.mxu0 0.0
    %1809 = vmatprep.subr.mxu0 0.0
    %1810 = vmatpush1.msra.mxu0 0.0
    %1811 = vmatprep.subr.mxu0 0.0
    %1812 = vmatpush1.msra.mxu0 0.0
    %1813 = vmatprep.subr.mxu0 0.0
    %1814 = vmatpush1.msra.mxu0 0.0
    %1815 = vmatprep.subr.mxu0 0.0
    %1816 = vmatpush1.msra.mxu0 0.0
    %1817 = vmatprep.subr.mxu0 0.0
    %1818 = vmatpush1.msra.mxu0 0.0
    %1819 = vmatprep.subr.mxu0 0.0
    %1820 = vmatpush1.msra.mxu0 0.0
    %1821 = vmatprep.subr.mxu0 0.0
    %1822 = vmatpush1.msra.mxu0 0.0
    %1823 = vmatprep.subr.mxu0 0.0
    %1824 = vmatpush1.msra.mxu0 0.0
    %1825 = vmatprep.subr.mxu0 0.0
    %1826 = vmatpush1.msra.mxu0 0.0
    %1827 = vmatprep.subr.mxu0 0.0
    %1828 = vmatpush1.msra.mxu0 0.0
    %1829 = vmatprep.subr.mxu0 0.0
    %1830 = vmatpush1.msra.mxu0 0.0
    %1831 = vmatprep.subr.mxu0 0.0
    %1832 = vmatpush1.msra.mxu0 0.0
    %1833 = vmatprep.subr.mxu0 0.0
    %1834 = vmatpush1.msra.mxu0 0.0
    %1835 = vmatprep.subr.mxu0 0.0
    %1836 = vmatpush1.msra.mxu0 0.0
    %1837 = vmatprep.subr.mxu0 0.0
    %1838 = vmatpush1.msra.mxu0 0.0
    %1839 = vmatprep.subr.mxu0 0.0
    %1840 = vmatpush1.msra.mxu0 0.0
    %1841 = vmatprep.subr.mxu0 0.0
    %1842 = vmatpush1.msra.mxu0 0.0
    %1843 = vmatprep.subr.mxu0 0.0
    %1844 = vmatpush1.msra.mxu0 0.0
    %1845 = vmatprep.subr.mxu0 0.0
    %1846 = vmatpush1.msra.mxu0 0.0
    %1847 = vmatprep.subr.mxu0 0.0
    %1848 = vmatpush1.msra.mxu0 0.0
    %1849 = vmatprep.subr.mxu0 0.0
    %1850 = vmatpush1.msra.mxu0 0.0
    %1851 = vmatprep.subr.mxu0 0.0
    %1852 = vmatpush1.msra.mxu0 0.0
    %1853 = vmatprep.mubr.f32.mxu0 0.0
    %1854 = vmatmul.mubr.f32.gmra.mrb[0].mxu0 %v1787
    %v1855 = vpop.f32.mrb[0].mxu0
    %v1856 = vadd.f32 0.0, %v1855
    %v1857 = vpop.f32.mrb[0].mxu0
    %1858 = vdwg.mxu0
    %1859 = vrot.lane.b32.xlu0 %v367, 104
    %v1860 = vpop.permute.xlu0 %1859
    %v1863 = vsel %vm378, %v1782, 0
    %1865 = vmatprep.subr.mxu0 0.0
    %1866 = vmatpush1.msra.mxu0 %v1860
    %1867 = vmatprep.subr.mxu0 0.0
    %1868 = vmatpush1.msra.mxu0 0.0
    %1869 = vmatprep.subr.mxu0 0.0
    %1870 = vmatpush1.msra.mxu0 0.0
    %1871 = vmatprep.subr.mxu0 0.0
    %1872 = vmatpush1.msra.mxu0 0.0
    %1873 = vmatprep.subr.mxu0 0.0
    %1874 = vmatpush1.msra.mxu0 0.0
    %1875 = vmatprep.subr.mxu0 0.0
    %1876 = vmatpush1.msra.mxu0 0.0
    %1877 = vmatprep.subr.mxu0 0.0
    %1878 = vmatpush1.msra.mxu0 0.0
    %1879 = vmatprep.subr.mxu0 0.0
    %1880 = vmatpush1.msra.mxu0 0.0
    %1881 = vmatprep.subr.mxu0 0.0
    %1882 = vmatpush1.msra.mxu0 0.0
    %1883 = vmatprep.subr.mxu0 0.0
    %1884 = vmatpush1.msra.mxu0 0.0
    %1885 = vmatprep.subr.mxu0 0.0
    %1886 = vmatpush1.msra.mxu0 0.0
    %1887 = vmatprep.subr.mxu0 0.0
    %1888 = vmatpush1.msra.mxu0 0.0
    %1889 = vmatprep.subr.mxu0 0.0
    %1890 = vmatpush1.msra.mxu0 0.0
    %1891 = vmatprep.subr.mxu0 0.0
    %1892 = vmatpush1.msra.mxu0 0.0
    %1893 = vmatprep.subr.mxu0 0.0
    %1894 = vmatpush1.msra.mxu0 0.0
    %1895 = vmatprep.subr.mxu0 0.0
    %1896 = vmatpush1.msra.mxu0 0.0
    %1897 = vmatprep.subr.mxu0 0.0
    %1898 = vmatpush1.msra.mxu0 0.0
    %1899 = vmatprep.subr.mxu0 0.0
    %1900 = vmatpush1.msra.mxu0 0.0
    %1901 = vmatprep.subr.mxu0 0.0
    %1902 = vmatpush1.msra.mxu0 0.0
    %1903 = vmatprep.subr.mxu0 0.0
    %1904 = vmatpush1.msra.mxu0 0.0
    %1905 = vmatprep.subr.mxu0 0.0
    %1906 = vmatpush1.msra.mxu0 0.0
    %1907 = vmatprep.subr.mxu0 0.0
    %1908 = vmatpush1.msra.mxu0 0.0
    %1909 = vmatprep.subr.mxu0 0.0
    %1910 = vmatpush1.msra.mxu0 0.0
    %1911 = vmatprep.subr.mxu0 0.0
    %1912 = vmatpush1.msra.mxu0 0.0
    %1913 = vmatprep.subr.mxu0 0.0
    %1914 = vmatpush1.msra.mxu0 0.0
    %1915 = vmatprep.subr.mxu0 0.0
    %1916 = vmatpush1.msra.mxu0 0.0
    %1917 = vmatprep.subr.mxu0 0.0
    %1918 = vmatpush1.msra.mxu0 0.0
    %1919 = vmatprep.subr.mxu0 0.0
    %1920 = vmatpush1.msra.mxu0 0.0
    %1921 = vmatprep.subr.mxu0 0.0
    %1922 = vmatpush1.msra.mxu0 0.0
    %1923 = vmatprep.subr.mxu0 0.0
    %1924 = vmatpush1.msra.mxu0 0.0
    %1925 = vmatprep.subr.mxu0 0.0
    %1926 = vmatpush1.msra.mxu0 0.0
    %1927 = vmatprep.subr.mxu0 0.0
    %1928 = vmatpush1.msra.mxu0 0.0
    %1929 = vmatprep.mubr.f32.mxu0 0.0
    %1930 = vmatmul.mubr.f32.gmra.mrb[0].mxu0 %v1863
    %v1931 = vpop.f32.mrb[0].mxu0
    %v1932 = vadd.f32 0.0, %v1931
    %v1933 = vpop.f32.mrb[0].mxu0
    %1934 = vdwg.mxu0
    %v1936 = vsel %vm378, %v1856, 0
    %v1939 = vsel %vm378, %v1932, 0
    %1941 = vmatprep.subr.mxu0 0.0
    %1942 = vmatpush1.msra.mxu0 %v373
    %1943 = vmatprep.subr.mxu0 0.0
    %1944 = vmatpush1.msra.mxu0 0.0
    %1945 = vmatprep.subr.mxu0 0.0
    %1946 = vmatpush1.msra.mxu0 0.0
    %1947 = vmatprep.subr.mxu0 0.0
    %1948 = vmatpush1.msra.mxu0 0.0
    %1949 = vmatprep.subr.mxu0 0.0
    %1950 = vmatpush1.msra.mxu0 0.0
    %1951 = vmatprep.subr.mxu0 0.0
    %1952 = vmatpush1.msra.mxu0 0.0
    %1953 = vmatprep.subr.mxu0 0.0
    %1954 = vmatpush1.msra.mxu0 0.0
    %1955 = vmatprep.subr.mxu0 0.0
    %1956 = vmatpush1.msra.mxu0 0.0
    %1957 = vmatprep.subr.mxu0 0.0
    %1958 = vmatpush1.msra.mxu0 0.0
    %1959 = vmatprep.subr.mxu0 0.0
    %1960 = vmatpush1.msra.mxu0 0.0
    %1961 = vmatprep.subr.mxu0 0.0
    %1962 = vmatpush1.msra.mxu0 0.0
    %1963 = vmatprep.subr.mxu0 0.0
    %1964 = vmatpush1.msra.mxu0 0.0
    %1965 = vmatprep.subr.mxu0 0.0
    %1966 = vmatpush1.msra.mxu0 0.0
    %1967 = vmatprep.subr.mxu0 0.0
    %1968 = vmatpush1.msra.mxu0 0.0
    %1969 = vmatprep.subr.mxu0 0.0
    %1970 = vmatpush1.msra.mxu0 0.0
    %1971 = vmatprep.subr.mxu0 0.0
    %1972 = vmatpush1.msra.mxu0 0.0
    %1973 = vmatprep.subr.mxu0 0.0
    %1974 = vmatpush1.msra.mxu0 0.0
    %1975 = vmatprep.subr.mxu0 0.0
    %1976 = vmatpush1.msra.mxu0 0.0
    %1977 = vmatprep.subr.mxu0 0.0
    %1978 = vmatpush1.msra.mxu0 0.0
    %1979 = vmatprep.subr.mxu0 0.0
    %1980 = vmatpush1.msra.mxu0 0.0
    %1981 = vmatprep.subr.mxu0 0.0
    %1982 = vmatpush1.msra.mxu0 0.0
    %1983 = vmatprep.subr.mxu0 0.0
    %1984 = vmatpush1.msra.mxu0 0.0
    %1985 = vmatprep.subr.mxu0 0.0
    %1986 = vmatpush1.msra.mxu0 0.0
    %1987 = vmatprep.subr.mxu0 0.0
    %1988 = vmatpush1.msra.mxu0 0.0
    %1989 = vmatprep.subr.mxu0 0.0
    %1990 = vmatpush1.msra.mxu0 0.0
    %1991 = vmatprep.subr.mxu0 0.0
    %1992 = vmatpush1.msra.mxu0 0.0
    %1993 = vmatprep.subr.mxu0 0.0
    %1994 = vmatpush1.msra.mxu0 0.0
    %1995 = vmatprep.subr.mxu0 0.0
    %1996 = vmatpush1.msra.mxu0 0.0
    %1997 = vmatprep.subr.mxu0 0.0
    %1998 = vmatpush1.msra.mxu0 0.0
    %1999 = vmatprep.subr.mxu0 0.0
    %2000 = vmatpush1.msra.mxu0 0.0
    %2001 = vmatprep.subr.mxu0 0.0
    %2002 = vmatpush1.msra.mxu0 0.0
    %2003 = vmatprep.subr.mxu0 0.0
    %2004 = vmatpush1.msra.mxu0 0.0
    %2005 = vmatprep.mubr.f32.mxu0 0.0
    %2006 = vmatmul.mubr.f32.gmra.mrb[0].mxu0 %v1936
    %v2007 = vpop.f32.mrb[0].mxu0
    %v2008 = vadd.f32 0.0, %v2007
    %v2009 = vpop.f32.mrb[0].mxu0
    %2010 = vmatprep.mubr.f32.mxu0 0.0
    %2011 = vmatmul.mubr.f32.gmra.mrb[0].mxu0 %v1939
    %v2012 = vpop.f32.mrb[0].mxu0
    %v2013 = vadd.f32 0.0, %v2012
    %v2014 = vpop.f32.mrb[0].mxu0
    %2015 = vdwg.mxu0
    %v2016 = vadd.f32 %v1603, %v2008
    %v2017 = vadd.f32 %v1604, %v2013
    %v2019 = vlaneseq
    %v2020 = vshrl.u32 %v2019, 7
    %v2021 = vsub.s32 0, %v2020
    %v2022 = vrot.slane %v374, %v2021
    %v2024 = vadd.f32 %v2016, %v2022
    %v2025 = vadd.f32 %v2017, %v2022
    %v2026 = vadd.f32 %v165, %v2024
    %v2027 = vadd.f32 %v166, %v2025
    %v2028 = vsel %vm196, %v2026, 0.0
    %2029 = vadd.xlane.f32.xlu0 %v2028
    %v2030 = vpop.xlane.xlu0 %2029
    %v2031 = vsel %vm196, %v2027, 0.0
    %2032 = vadd.xlane.f32.xlu0 %v2031
    %v2033 = vpop.xlane.xlu0 %2032
    %v2034 = vrcp.pop 32.0
    %v2035 = vmul.f32 %v2030, %v2034
    %v2036 = vmul.f32 %v2033, %v2034
    %v2037 = vsub.f32 %v2026, %v2035
    %v2038 = vsub.f32 %v2027, %v2036
    %v2039 = vmul.f32 %v2037, %v2037
    %v2040 = vmul.f32 %v2038, %v2038
    %v2041 = vsel %vm196, %v2039, 0.0
    %2042 = vadd.xlane.f32.xlu0 %v2041
    %v2043 = vpop.xlane.xlu0 %2042
    %v2044 = vsel %vm196, %v2040, 0.0
    %2045 = vadd.xlane.f32.xlu0 %v2044
    %v2046 = vpop.xlane.xlu0 %2045
    %v2047 = vmul.f32 %v2043, %v2034
    %v2048 = vmul.f32 %v2046, %v2034
    %v2049 = vadd.f32 %v2047, 1e-05
    %v2050 = vadd.f32 %v2048, 1e-05
    %v2051 = vrsqrt.pop %v2049
    %v2052 = vrsqrt.pop %v2050
    %v2053 = vmul.f32 %v2037, %v2051
    %v2054 = vmul.f32 %v2038, %v2052
    %v2055 = vlaneseq
    %v2056 = vshrl.u32 %v2055, 7
    %v2057 = vsub.s32 0, %v2056
    %v2058 = vrot.slane %v181, %v2057
    %v2059 = vmul.f32 %v2053, %v2058
    %v2060 = vmul.f32 %v2054, %v2058
    %v2061 = vlaneseq
    %v2062 = vshrl.u32 %v2061, 7
    %v2063 = vsub.s32 0, %v2062
    %v2064 = vrot.slane %v182, %v2063
    %v2065 = vadd.f32 %v2059, %v2064
    %v2066 = vadd.f32 %v2060, %v2064
    %v2067 = vadd.f32 %v2065, %v171
    %v2068 = vadd.f32 %v2066, %v172
    %v2069 = vld [vmem:[%s10] sm:$0xff]
    %v2070 = vld [vmem:[%s10 + $0x8] sm:$0xff]
    %v2071 = vld [vmem:[%s10 + $0x10] sm:$0xff]
    %v2072 = vld [vmem:[%s10 + $0x18] sm:$0xff]
    %v2073 = vld [vmem:[#allocation2] sm:$0x1]
    %v2075 = vlaneseq
    %v2076 = vshrl.u32 %v2075, 7
    %v2077 = vsub.s32 0, %v2076
    %v2078 = vrot.slane %v2073, %v2077
    %v2081 = vsel %vm196, %v2067, 0
    %v2084 = vsel %vm196, %v2068, 0
    %2086 = vmatprep.subr.mxu0 0.0
    %2087 = vmatpush1.msra.mxu0 %v2069
    %2088 = vmatprep.subr.mxu0 0.0
    %2089 = vmatpush1.msra.mxu0 %v2070
    %2090 = vmatprep.subr.mxu0 0.0
    %2091 = vmatpush1.msra.mxu0 %v2071
    %2092 = vmatprep.subr.mxu0 0.0
    %2093 = vmatpush1.msra.mxu0 %v2072
    %2094 = vmatprep.subr.mxu0 0.0
    %2095 = vmatpush1.msra.mxu0 0.0
    %2096 = vmatprep.subr.mxu0 0.0
    %2097 = vmatpush1.msra.mxu0 0.0
    %2098 = vmatprep.subr.mxu0 0.0
    %2099 = vmatpush1.msra.mxu0 0.0
    %2100 = vmatprep.subr.mxu0 0.0
    %2101 = vmatpush1.msra.mxu0 0.0
    %2102 = vmatprep.subr.mxu0 0.0
    %2103 = vmatpush1.msra.mxu0 0.0
    %2104 = vmatprep.subr.mxu0 0.0
    %2105 = vmatpush1.msra.mxu0 0.0
    %2106 = vmatprep.subr.mxu0 0.0
    %2107 = vmatpush1.msra.mxu0 0.0
    %2108 = vmatprep.subr.mxu0 0.0
    %2109 = vmatpush1.msra.mxu0 0.0
    %2110 = vmatprep.subr.mxu0 0.0
    %2111 = vmatpush1.msra.mxu0 0.0
    %2112 = vmatprep.subr.mxu0 0.0
    %2113 = vmatpush1.msra.mxu0 0.0
    %2114 = vmatprep.subr.mxu0 0.0
    %2115 = vmatpush1.msra.mxu0 0.0
    %2116 = vmatprep.subr.mxu0 0.0
    %2117 = vmatpush1.msra.mxu0 0.0
    %2118 = vmatprep.subr.mxu0 0.0
    %2119 = vmatpush1.msra.mxu0 0.0
    %2120 = vmatprep.subr.mxu0 0.0
    %2121 = vmatpush1.msra.mxu0 0.0
    %2122 = vmatprep.subr.mxu0 0.0
    %2123 = vmatpush1.msra.mxu0 0.0
    %2124 = vmatprep.subr.mxu0 0.0
    %2125 = vmatpush1.msra.mxu0 0.0
    %2126 = vmatprep.subr.mxu0 0.0
    %2127 = vmatpush1.msra.mxu0 0.0
    %2128 = vmatprep.subr.mxu0 0.0
    %2129 = vmatpush1.msra.mxu0 0.0
    %2130 = vmatprep.subr.mxu0 0.0
    %2131 = vmatpush1.msra.mxu0 0.0
    %2132 = vmatprep.subr.mxu0 0.0
    %2133 = vmatpush1.msra.mxu0 0.0
    %2134 = vmatprep.subr.mxu0 0.0
    %2135 = vmatpush1.msra.mxu0 0.0
    %2136 = vmatprep.subr.mxu0 0.0
    %2137 = vmatpush1.msra.mxu0 0.0
    %2138 = vmatprep.subr.mxu0 0.0
    %2139 = vmatpush1.msra.mxu0 0.0
    %2140 = vmatprep.subr.mxu0 0.0
    %2141 = vmatpush1.msra.mxu0 0.0
    %2142 = vmatprep.subr.mxu0 0.0
    %2143 = vmatpush1.msra.mxu0 0.0
    %2144 = vmatprep.subr.mxu0 0.0
    %2145 = vmatpush1.msra.mxu0 0.0
    %2146 = vmatprep.subr.mxu0 0.0
    %2147 = vmatpush1.msra.mxu0 0.0
    %2148 = vmatprep.subr.mxu0 0.0
    %2149 = vmatpush1.msra.mxu0 0.0
    %2150 = vmatprep.mubr.f32.mxu0 0.0
    %2151 = vmatmul.mubr.f32.gmra.mrb[0].mxu0 %v2081
    %v2152 = vpop.f32.mrb[0].mxu0
    %v2153 = vadd.f32 %v2078, %v2152
    %v2154 = vpop.f32.mrb[0].mxu0
    %2155 = vmatprep.mubr.f32.mxu0 0.0
    %2156 = vmatmul.mubr.f32.gmra.mrb[0].mxu0 %v2084
    %v2157 = vpop.f32.mrb[0].mxu0
    %v2158 = vadd.f32 %v2078, %v2157
    %v2159 = vpop.f32.mrb[0].mxu0
    %2160 = vdwg.mxu0
    %v2161 = vld [vmem:[%s12] sm:$0xff]
    %v2162 = vld [vmem:[%s12 + $0x8] sm:$0xff]
    %v2163 = vld [vmem:[%s12 + $0x10] sm:$0xff]
    %v2164 = vld [vmem:[%s12 + $0x18] sm:$0xff]
    %v2165 = vld [vmem:[#allocation4] sm:$0x1]
    %v2167 = vlaneseq
    %v2168 = vshrl.u32 %v2167, 7
    %v2169 = vsub.s32 0, %v2168
    %v2170 = vrot.slane %v2165, %v2169
    %v2173 = vsel %vm196, %v177, 0
    %v2176 = vsel %vm196, %v178, 0
    %v2179 = vsel %vm196, %v179, 0
    %v2182 = vsel %vm196, %v180, 0
    %2184 = vmatprep.subr.mxu0 0.0
    %2185 = vmatpush1.msra.mxu0 %v2161
    %2186 = vmatprep.subr.mxu0 0.0
    %2187 = vmatpush1.msra.mxu0 %v2162
    %2188 = vmatprep.subr.mxu0 0.0
    %2189 = vmatpush1.msra.mxu0 %v2163
    %2190 = vmatprep.subr.mxu0 0.0
    %2191 = vmatpush1.msra.mxu0 %v2164
    %2192 = vmatprep.subr.mxu0 0.0
    %2193 = vmatpush1.msra.mxu0 0.0
    %2194 = vmatprep.subr.mxu0 0.0
    %2195 = vmatpush1.msra.mxu0 0.0
    %2196 = vmatprep.subr.mxu0 0.0
    %2197 = vmatpush1.msra.mxu0 0.0
    %2198 = vmatprep.subr.mxu0 0.0
    %2199 = vmatpush1.msra.mxu0 0.0
    %2200 = vmatprep.subr.mxu0 0.0
    %2201 = vmatpush1.msra.mxu0 0.0
    %2202 = vmatprep.subr.mxu0 0.0
    %2203 = vmatpush1.msra.mxu0 0.0
    %2204 = vmatprep.subr.mxu0 0.0
    %2205 = vmatpush1.msra.mxu0 0.0
    %2206 = vmatprep.subr.mxu0 0.0
    %2207 = vmatpush1.msra.mxu0 0.0
    %2208 = vmatprep.subr.mxu0 0.0
    %2209 = vmatpush1.msra.mxu0 0.0
    %2210 = vmatprep.subr.mxu0 0.0
    %2211 = vmatpush1.msra.mxu0 0.0
    %2212 = vmatprep.subr.mxu0 0.0
    %2213 = vmatpush1.msra.mxu0 0.0
    %2214 = vmatprep.subr.mxu0 0.0
    %2215 = vmatpush1.msra.mxu0 0.0
    %2216 = vmatprep.subr.mxu0 0.0
    %2217 = vmatpush1.msra.mxu0 0.0
    %2218 = vmatprep.subr.mxu0 0.0
    %2219 = vmatpush1.msra.mxu0 0.0
    %2220 = vmatprep.subr.mxu0 0.0
    %2221 = vmatpush1.msra.mxu0 0.0
    %2222 = vmatprep.subr.mxu0 0.0
    %2223 = vmatpush1.msra.mxu0 0.0
    %2224 = vmatprep.subr.mxu0 0.0
    %2225 = vmatpush1.msra.mxu0 0.0
    %2226 = vmatprep.subr.mxu0 0.0
    %2227 = vmatpush1.msra.mxu0 0.0
    %2228 = vmatprep.subr.mxu0 0.0
    %2229 = vmatpush1.msra.mxu0 0.0
    %2230 = vmatprep.subr.mxu0 0.0
    %2231 = vmatpush1.msra.mxu0 0.0
    %2232 = vmatprep.subr.mxu0 0.0
    %2233 = vmatpush1.msra.mxu0 0.0
    %2234 = vmatprep.subr.mxu0 0.0
    %2235 = vmatpush1.msra.mxu0 0.0
    %2236 = vmatprep.subr.mxu0 0.0
    %2237 = vmatpush1.msra.mxu0 0.0
    %2238 = vmatprep.subr.mxu0 0.0
    %2239 = vmatpush1.msra.mxu0 0.0
    %2240 = vmatprep.subr.mxu0 0.0
    %2241 = vmatpush1.msra.mxu0 0.0
    %2242 = vmatprep.subr.mxu0 0.0
    %2243 = vmatpush1.msra.mxu0 0.0
    %2244 = vmatprep.subr.mxu0 0.0
    %2245 = vmatpush1.msra.mxu0 0.0
    %2246 = vmatprep.subr.mxu0 0.0
    %2247 = vmatpush1.msra.mxu0 0.0
    %2248 = vmatprep.mubr.f32.mxu0 0.0
    %2249 = vmatmul.mubr.f32.gmra.mrb[0].mxu0 %v2173
    %v2250 = vpop.f32.mrb[0].mxu0
    %v2251 = vadd.f32 %v2170, %v2250
    %v2252 = vpop.f32.mrb[0].mxu0
    %2253 = vmatprep.mubr.f32.mxu0 0.0
    %2254 = vmatmul.mubr.f32.gmra.mrb[0].mxu0 %v2176
    %v2255 = vpop.f32.mrb[0].mxu0
    %v2256 = vadd.f32 %v2170, %v2255
    %v2257 = vpop.f32.mrb[0].mxu0
    %2258 = vmatprep.mubr.f32.mxu0 0.0
    %2259 = vmatmul.mubr.f32.gmra.mrb[0].mxu0 %v2179
    %v2260 = vpop.f32.mrb[0].mxu0
    %v2261 = vadd.f32 %v2170, %v2260
    %v2262 = vpop.f32.mrb[0].mxu0
    %2263 = vmatprep.mubr.f32.mxu0 0.0
    %2264 = vmatmul.mubr.f32.gmra.mrb[0].mxu0 %v2182
    %v2265 = vpop.f32.mrb[0].mxu0
    %v2266 = vadd.f32 %v2170, %v2265
    %v2267 = vpop.f32.mrb[0].mxu0
    %2268 = vdwg.mxu0
    %v2269 = vld [vmem:[%s14] sm:$0xff]
    %v2270 = vld [vmem:[%s14 + $0x8] sm:$0xff]
    %v2271 = vld [vmem:[%s14 + $0x10] sm:$0xff]
    %v2272 = vld [vmem:[%s14 + $0x18] sm:$0xff]
    %v2273 = vld [vmem:[#allocation6] sm:$0x1]
    %v2275 = vlaneseq
    %v2276 = vshrl.u32 %v2275, 7
    %v2277 = vsub.s32 0, %v2276
    %v2278 = vrot.slane %v2273, %v2277
    %v2281 = vsel %vm196, %v167, 0
    %v2284 = vsel %vm196, %v168, 0
    %v2287 = vsel %vm196, %v169, 0
    %v2290 = vsel %vm196, %v170, 0
    %2292 = vmatprep.subr.mxu0 0.0
    %2293 = vmatpush1.msra.mxu0 %v2269
    %2294 = vmatprep.subr.mxu0 0.0
    %2295 = vmatpush1.msra.mxu0 %v2270
    %2296 = vmatprep.subr.mxu0 0.0
    %2297 = vmatpush1.msra.mxu0 %v2271
    %2298 = vmatprep.subr.mxu0 0.0
    %2299 = vmatpush1.msra.mxu0 %v2272
    %2300 = vmatprep.subr.mxu0 0.0
    %2301 = vmatpush1.msra.mxu0 0.0
    %2302 = vmatprep.subr.mxu0 0.0
    %2303 = vmatpush1.msra.mxu0 0.0
    %2304 = vmatprep.subr.mxu0 0.0
    %2305 = vmatpush1.msra.mxu0 0.0
    %2306 = vmatprep.subr.mxu0 0.0
    %2307 = vmatpush1.msra.mxu0 0.0
    %2308 = vmatprep.subr.mxu0 0.0
    %2309 = vmatpush1.msra.mxu0 0.0
    %2310 = vmatprep.subr.mxu0 0.0
    %2311 = vmatpush1.msra.mxu0 0.0
    %2312 = vmatprep.subr.mxu0 0.0
    %2313 = vmatpush1.msra.mxu0 0.0
    %2314 = vmatprep.subr.mxu0 0.0
    %2315 = vmatpush1.msra.mxu0 0.0
    %2316 = vmatprep.subr.mxu0 0.0
    %2317 = vmatpush1.msra.mxu0 0.0
    %2318 = vmatprep.subr.mxu0 0.0
    %2319 = vmatpush1.msra.mxu0 0.0
    %2320 = vmatprep.subr.mxu0 0.0
    %2321 = vmatpush1.msra.mxu0 0.0
    %2322 = vmatprep.subr.mxu0 0.0
    %2323 = vmatpush1.msra.mxu0 0.0
    %2324 = vmatprep.subr.mxu0 0.0
    %2325 = vmatpush1.msra.mxu0 0.0
    %2326 = vmatprep.subr.mxu0 0.0
    %2327 = vmatpush1.msra.mxu0 0.0
    %2328 = vmatprep.subr.mxu0 0.0
    %2329 = vmatpush1.msra.mxu0 0.0
    %2330 = vmatprep.subr.mxu0 0.0
    %2331 = vmatpush1.msra.mxu0 0.0
    %2332 = vmatprep.subr.mxu0 0.0
    %2333 = vmatpush1.msra.mxu0 0.0
    %2334 = vmatprep.subr.mxu0 0.0
    %2335 = vmatpush1.msra.mxu0 0.0
    %2336 = vmatprep.subr.mxu0 0.0
    %2337 = vmatpush1.msra.mxu0 0.0
    %2338 = vmatprep.subr.mxu0 0.0
    %2339 = vmatpush1.msra.mxu0 0.0
    %2340 = vmatprep.subr.mxu0 0.0
    %2341 = vmatpush1.msra.mxu0 0.0
    %2342 = vmatprep.subr.mxu0 0.0
    %2343 = vmatpush1.msra.mxu0 0.0
    %2344 = vmatprep.subr.mxu0 0.0
    %2345 = vmatpush1.msra.mxu0 0.0
    %2346 = vmatprep.subr.mxu0 0.0
    %2347 = vmatpush1.msra.mxu0 0.0
    %2348 = vmatprep.subr.mxu0 0.0
    %2349 = vmatpush1.msra.mxu0 0.0
    %2350 = vmatprep.subr.mxu0 0.0
    %2351 = vmatpush1.msra.mxu0 0.0
    %2352 = vmatprep.subr.mxu0 0.0
    %2353 = vmatpush1.msra.mxu0 0.0
    %2354 = vmatprep.subr.mxu0 0.0
    %2355 = vmatpush1.msra.mxu0 0.0
    %2356 = vmatprep.mubr.f32.mxu0 0.0
    %2357 = vmatmul.mubr.f32.gmra.mrb[0].mxu0 %v2281
    %v2358 = vpop.f32.mrb[0].mxu0
    %v2359 = vadd.f32 %v2278, %v2358
    %v2360 = vpop.f32.mrb[0].mxu0
    %2361 = vmatprep.mubr.f32.mxu0 0.0
    %2362 = vmatmul.mubr.f32.gmra.mrb[0].mxu0 %v2284
    %v2363 = vpop.f32.mrb[0].mxu0
    %v2364 = vadd.f32 %v2278, %v2363
    %v2365 = vpop.f32.mrb[0].mxu0
    %2366 = vmatprep.mubr.f32.mxu0 0.0
    %2367 = vmatmul.mubr.f32.gmra.mrb[0].mxu0 %v2287
    %v2368 = vpop.f32.mrb[0].mxu0
    %v2369 = vadd.f32 %v2278, %v2368
    %v2370 = vpop.f32.mrb[0].mxu0
    %2371 = vmatprep.mubr.f32.mxu0 0.0
    %2372 = vmatmul.mubr.f32.gmra.mrb[0].mxu0 %v2290
    %v2373 = vpop.f32.mrb[0].mxu0
    %v2374 = vadd.f32 %v2278, %v2373
    %v2375 = vpop.f32.mrb[0].mxu0
    %2376 = vdwg.mxu0
    %v2377 = vld [vmem:[#allocation7] sm:$0xff]
    %v2378 = vld [vmem:[#allocation7 + $0x8] sm:$0xff]
    %v2379 = vld [vmem:[#allocation7 + $0x10] sm:$0xff]
    %v2380 = vld [vmem:[#allocation7 + $0x18] sm:$0xff]
    %v2381 = vld [vmem:[#allocation9] sm:$0x1]
    %v2383 = vsel %vm378, %v2153, 0
    %v2386 = vsel %vm378, %v2251, 0
    %v2389 = vsel %vm378, %v2256, 0
    %2391 = vmatprep.subr.mxu0 0.0
    %2392 = vmatpush1.xpose.msra.mxu0 %v2386
    %2393 = vmatprep.subr.mxu0 0.0
    %2394 = vmatpush1.xpose.msra.mxu0 %v2389
    %2395 = vmatprep.subr.mxu0 0.0
    %2396 = vmatpush1.xpose.msra.mxu0 0.0
    %2397 = vmatprep.subr.mxu0 0.0
    %2398 = vmatpush1.xpose.msra.mxu0 0.0
    %2399 = vmatprep.subr.mxu0 0.0
    %2400 = vmatpush1.xpose.msra.mxu0 0.0
    %2401 = vmatprep.subr.mxu0 0.0
    %2402 = vmatpush1.xpose.msra.mxu0 0.0
    %2403 = vmatprep.subr.mxu0 0.0
    %2404 = vmatpush1.xpose.msra.mxu0 0.0
    %2405 = vmatprep.subr.mxu0 0.0
    %2406 = vmatpush1.xpose.msra.mxu0 0.0
    %2407 = vmatprep.subr.mxu0 0.0
    %2408 = vmatpush1.xpose.msra.mxu0 0.0
    %2409 = vmatprep.subr.mxu0 0.0
    %2410 = vmatpush1.xpose.msra.mxu0 0.0
    %2411 = vmatprep.subr.mxu0 0.0
    %2412 = vmatpush1.xpose.msra.mxu0 0.0
    %2413 = vmatprep.subr.mxu0 0.0
    %2414 = vmatpush1.xpose.msra.mxu0 0.0
    %2415 = vmatprep.subr.mxu0 0.0
    %2416 = vmatpush1.xpose.msra.mxu0 0.0
    %2417 = vmatprep.subr.mxu0 0.0
    %2418 = vmatpush1.xpose.msra.mxu0 0.0
    %2419 = vmatprep.subr.mxu0 0.0
    %2420 = vmatpush1.xpose.msra.mxu0 0.0
    %2421 = vmatprep.subr.mxu0 0.0
    %2422 = vmatpush1.xpose.msra.mxu0 0.0
    %2423 = vmatprep.subr.mxu0 0.0
    %2424 = vmatpush1.xpose.msra.mxu0 0.0
    %2425 = vmatprep.subr.mxu0 0.0
    %2426 = vmatpush1.xpose.msra.mxu0 0.0
    %2427 = vmatprep.subr.mxu0 0.0
    %2428 = vmatpush1.xpose.msra.mxu0 0.0
    %2429 = vmatprep.subr.mxu0 0.0
    %2430 = vmatpush1.xpose.msra.mxu0 0.0
    %2431 = vmatprep.subr.mxu0 0.0
    %2432 = vmatpush1.xpose.msra.mxu0 0.0
    %2433 = vmatprep.subr.mxu0 0.0
    %2434 = vmatpush1.xpose.msra.mxu0 0.0
    %2435 = vmatprep.subr.mxu0 0.0
    %2436 = vmatpush1.xpose.msra.mxu0 0.0
    %2437 = vmatprep.subr.mxu0 0.0
    %2438 = vmatpush1.xpose.msra.mxu0 0.0
    %2439 = vmatprep.subr.mxu0 0.0
    %2440 = vmatpush1.xpose.msra.mxu0 0.0
    %2441 = vmatprep.subr.mxu0 0.0
    %2442 = vmatpush1.xpose.msra.mxu0 0.0
    %2443 = vmatprep.subr.mxu0 0.0
    %2444 = vmatpush1.xpose.msra.mxu0 0.0
    %2445 = vmatprep.subr.mxu0 0.0
    %2446 = vmatpush1.xpose.msra.mxu0 0.0
    %2447 = vmatprep.subr.mxu0 0.0
    %2448 = vmatpush1.xpose.msra.mxu0 0.0
    %2449 = vmatprep.subr.mxu0 0.0
    %2450 = vmatpush1.xpose.msra.mxu0 0.0
    %2451 = vmatprep.subr.mxu0 0.0
    %2452 = vmatpush1.xpose.msra.mxu0 0.0
    %2453 = vmatprep.subr.mxu0 0.0
    %2454 = vmatpush1.xpose.msra.mxu0 0.0
    %2455 = vmatprep.mubr.f32.mxu0 0.0
    %2456 = vmatmul.mubr.f32.gmra.mrb[0].mxu0 %v2383
    %v2457 = vpop.f32.mrb[0].mxu0
    %v2458 = vadd.f32 0.0, %v2457
    %v2459 = vpop.f32.mrb[0].mxu0
    %2460 = vdwg.mxu0
    %v2462 = vsel %vm378, %v2158, 0
    %v2465 = vsel %vm378, %v2261, 0
    %v2468 = vsel %vm378, %v2266, 0
    %2470 = vmatprep.subr.mxu0 0.0
    %2471 = vmatpush1.xpose.msra.mxu0 %v2465
    %2472 = vmatprep.subr.mxu0 0.0
    %2473 = vmatpush1.xpose.msra.mxu0 %v2468
    %2474 = vmatprep.subr.mxu0 0.0
    %2475 = vmatpush1.xpose.msra.mxu0 0.0
    %2476 = vmatprep.subr.mxu0 0.0
    %2477 = vmatpush1.xpose.msra.mxu0 0.0
    %2478 = vmatprep.subr.mxu0 0.0
    %2479 = vmatpush1.xpose.msra.mxu0 0.0
    %2480 = vmatprep.subr.mxu0 0.0
    %2481 = vmatpush1.xpose.msra.mxu0 0.0
    %2482 = vmatprep.subr.mxu0 0.0
    %2483 = vmatpush1.xpose.msra.mxu0 0.0
    %2484 = vmatprep.subr.mxu0 0.0
    %2485 = vmatpush1.xpose.msra.mxu0 0.0
    %2486 = vmatprep.subr.mxu0 0.0
    %2487 = vmatpush1.xpose.msra.mxu0 0.0
    %2488 = vmatprep.subr.mxu0 0.0
    %2489 = vmatpush1.xpose.msra.mxu0 0.0
    %2490 = vmatprep.subr.mxu0 0.0
    %2491 = vmatpush1.xpose.msra.mxu0 0.0
    %2492 = vmatprep.subr.mxu0 0.0
    %2493 = vmatpush1.xpose.msra.mxu0 0.0
    %2494 = vmatprep.subr.mxu0 0.0
    %2495 = vmatpush1.xpose.msra.mxu0 0.0
    %2496 = vmatprep.subr.mxu0 0.0
    %2497 = vmatpush1.xpose.msra.mxu0 0.0
    %2498 = vmatprep.subr.mxu0 0.0
    %2499 = vmatpush1.xpose.msra.mxu0 0.0
    %2500 = vmatprep.subr.mxu0 0.0
    %2501 = vmatpush1.xpose.msra.mxu0 0.0
    %2502 = vmatprep.subr.mxu0 0.0
    %2503 = vmatpush1.xpose.msra.mxu0 0.0
    %2504 = vmatprep.subr.mxu0 0.0
    %2505 = vmatpush1.xpose.msra.mxu0 0.0
    %2506 = vmatprep.subr.mxu0 0.0
    %2507 = vmatpush1.xpose.msra.mxu0 0.0
    %2508 = vmatprep.subr.mxu0 0.0
    %2509 = vmatpush1.xpose.msra.mxu0 0.0
    %2510 = vmatprep.subr.mxu0 0.0
    %2511 = vmatpush1.xpose.msra.mxu0 0.0
    %2512 = vmatprep.subr.mxu0 0.0
    %2513 = vmatpush1.xpose.msra.mxu0 0.0
    %2514 = vmatprep.subr.mxu0 0.0
    %2515 = vmatpush1.xpose.msra.mxu0 0.0
    %2516 = vmatprep.subr.mxu0 0.0
    %2517 = vmatpush1.xpose.msra.mxu0 0.0
    %2518 = vmatprep.subr.mxu0 0.0
    %2519 = vmatpush1.xpose.msra.mxu0 0.0
    %2520 = vmatprep.subr.mxu0 0.0
    %2521 = vmatpush1.xpose.msra.mxu0 0.0
    %2522 = vmatprep.subr.mxu0 0.0
    %2523 = vmatpush1.xpose.msra.mxu0 0.0
    %2524 = vmatprep.subr.mxu0 0.0
    %2525 = vmatpush1.xpose.msra.mxu0 0.0
    %2526 = vmatprep.subr.mxu0 0.0
    %2527 = vmatpush1.xpose.msra.mxu0 0.0
    %2528 = vmatprep.subr.mxu0 0.0
    %2529 = vmatpush1.xpose.msra.mxu0 0.0
    %2530 = vmatprep.subr.mxu0 0.0
    %2531 = vmatpush1.xpose.msra.mxu0 0.0
    %2532 = vmatprep.subr.mxu0 0.0
    %2533 = vmatpush1.xpose.msra.mxu0 0.0
    %2534 = vmatprep.mubr.f32.mxu0 0.0
    %2535 = vmatmul.mubr.f32.gmra.mrb[0].mxu0 %v2462
    %v2536 = vpop.f32.mrb[0].mxu0
    %v2537 = vadd.f32 0.0, %v2536
    %v2538 = vpop.f32.mrb[0].mxu0
    %2539 = vdwg.mxu0
    %vm2540 = vcmask 130048
    %v2541 = vsel %vm2540, %v2458, -inf
    %2542 = vmax.xlane.f32.xlu0 %v2541
    %v2543 = vpop.xlane.xlu0 %2542
    %v2544 = vsel %vm2540, %v2537, -inf
    %2545 = vmax.xlane.f32.xlu0 %v2544
    %v2546 = vpop.xlane.xlu0 %2545
    %v2547 = vsub.f32 %v2458, %v2543
    %v2548 = vsub.f32 %v2537, %v2546
    %v2549 = vmul.f32 %v2547, 1.442695
    %v2550 = vpow.pop %v2549
    %v2551 = vmul.f32 %v2548, 1.442695
    %v2552 = vpow.pop %v2551
    %v2553 = vsel %vm2540, %v2550, 0.0
    %2554 = vadd.xlane.f32.xlu0 %v2553
    %v2555 = vpop.xlane.xlu0 %2554
    %v2556 = vsel %vm2540, %v2552, 0.0
    %2557 = vadd.xlane.f32.xlu0 %v2556
    %v2558 = vpop.xlane.xlu0 %2557
    %v2559 = vrcp.pop %v2555
    %v2560 = vrcp.pop %v2558
    %v2561 = vmul.f32 %v2550, %v2559
    %v2562 = vmul.f32 %v2552, %v2560
    %v2564 = vsel %vm2540, %v2561, 0
    %2566 = vmatprep.subr.mxu0 0.0
    %2567 = vmatpush1.msra.mxu0 %v2359
    %2568 = vmatprep.subr.mxu0 0.0
    %2569 = vmatpush1.msra.mxu0 %v2364
    %2570 = vmatprep.subr.mxu0 0.0
    %2571 = vmatpush1.msra.mxu0 0.0
    %2572 = vmatprep.subr.mxu0 0.0
    %2573 = vmatpush1.msra.mxu0 0.0
    %2574 = vmatprep.subr.mxu0 0.0
    %2575 = vmatpush1.msra.mxu0 0.0
    %2576 = vmatprep.subr.mxu0 0.0
    %2577 = vmatpush1.msra.mxu0 0.0
    %2578 = vmatprep.subr.mxu0 0.0
    %2579 = vmatpush1.msra.mxu0 0.0
    %2580 = vmatprep.subr.mxu0 0.0
    %2581 = vmatpush1.msra.mxu0 0.0
    %2582 = vmatprep.subr.mxu0 0.0
    %2583 = vmatpush1.msra.mxu0 0.0
    %2584 = vmatprep.subr.mxu0 0.0
    %2585 = vmatpush1.msra.mxu0 0.0
    %2586 = vmatprep.subr.mxu0 0.0
    %2587 = vmatpush1.msra.mxu0 0.0
    %2588 = vmatprep.subr.mxu0 0.0
    %2589 = vmatpush1.msra.mxu0 0.0
    %2590 = vmatprep.subr.mxu0 0.0
    %2591 = vmatpush1.msra.mxu0 0.0
    %2592 = vmatprep.subr.mxu0 0.0
    %2593 = vmatpush1.msra.mxu0 0.0
    %2594 = vmatprep.subr.mxu0 0.0
    %2595 = vmatpush1.msra.mxu0 0.0
    %2596 = vmatprep.subr.mxu0 0.0
    %2597 = vmatpush1.msra.mxu0 0.0
    %2598 = vmatprep.subr.mxu0 0.0
    %2599 = vmatpush1.msra.mxu0 0.0
    %2600 = vmatprep.subr.mxu0 0.0
    %2601 = vmatpush1.msra.mxu0 0.0
    %2602 = vmatprep.subr.mxu0 0.0
    %2603 = vmatpush1.msra.mxu0 0.0
    %2604 = vmatprep.subr.mxu0 0.0
    %2605 = vmatpush1.msra.mxu0 0.0
    %2606 = vmatprep.subr.mxu0 0.0
    %2607 = vmatpush1.msra.mxu0 0.0
    %2608 = vmatprep.subr.mxu0 0.0
    %2609 = vmatpush1.msra.mxu0 0.0
    %2610 = vmatprep.subr.mxu0 0.0
    %2611 = vmatpush1.msra.mxu0 0.0
    %2612 = vmatprep.subr.mxu0 0.0
    %2613 = vmatpush1.msra.mxu0 0.0
    %2614 = vmatprep.subr.mxu0 0.0
    %2615 = vmatpush1.msra.mxu0 0.0
    %2616 = vmatprep.subr.mxu0 0.0
    %2617 = vmatpush1.msra.mxu0 0.0
    %2618 = vmatprep.subr.mxu0 0.0
    %2619 = vmatpush1.msra.mxu0 0.0
    %2620 = vmatprep.subr.mxu0 0.0
    %2621 = vmatpush1.msra.mxu0 0.0
    %2622 = vmatprep.subr.mxu0 0.0
    %2623 = vmatpush1.msra.mxu0 0.0
    %2624 = vmatprep.subr.mxu0 0.0
    %2625 = vmatpush1.msra.mxu0 0.0
    %2626 = vmatprep.subr.mxu0 0.0
    %2627 = vmatpush1.msra.mxu0 0.0
    %2628 = vmatprep.subr.mxu0 0.0
    %2629 = vmatpush1.msra.mxu0 0.0
    %2630 = vmatprep.mubr.f32.mxu0 0.0
    %2631 = vmatmul.mubr.f32.gmra.mrb[0].mxu0 %v2564
    %v2632 = vpop.f32.mrb[0].mxu0
    %v2633 = vadd.f32 0.0, %v2632
    %v2634 = vpop.f32.mrb[0].mxu0
    %2635 = vdwg.mxu0
    %v2637 = vsel %vm2540, %v2562, 0
    %2639 = vmatprep.subr.mxu0 0.0
    %2640 = vmatpush1.msra.mxu0 %v2369
    %2641 = vmatprep.subr.mxu0 0.0
    %2642 = vmatpush1.msra.mxu0 %v2374
    %2643 = vmatprep.subr.mxu0 0.0
    %2644 = vmatpush1.msra.mxu0 0.0
    %2645 = vmatprep.subr.mxu0 0.0
    %2646 = vmatpush1.msra.mxu0 0.0
    %2647 = vmatprep.subr.mxu0 0.0
    %2648 = vmatpush1.msra.mxu0 0.0
    %2649 = vmatprep.subr.mxu0 0.0
    %2650 = vmatpush1.msra.mxu0 0.0
    %2651 = vmatprep.subr.mxu0 0.0
    %2652 = vmatpush1.msra.mxu0 0.0
    %2653 = vmatprep.subr.mxu0 0.0
    %2654 = vmatpush1.msra.mxu0 0.0
    %2655 = vmatprep.subr.mxu0 0.0
    %2656 = vmatpush1.msra.mxu0 0.0
    %2657 = vmatprep.subr.mxu0 0.0
    %2658 = vmatpush1.msra.mxu0 0.0
    %2659 = vmatprep.subr.mxu0 0.0
    %2660 = vmatpush1.msra.mxu0 0.0
    %2661 = vmatprep.subr.mxu0 0.0
    %2662 = vmatpush1.msra.mxu0 0.0
    %2663 = vmatprep.subr.mxu0 0.0
    %2664 = vmatpush1.msra.mxu0 0.0
    %2665 = vmatprep.subr.mxu0 0.0
    %2666 = vmatpush1.msra.mxu0 0.0
    %2667 = vmatprep.subr.mxu0 0.0
    %2668 = vmatpush1.msra.mxu0 0.0
    %2669 = vmatprep.subr.mxu0 0.0
    %2670 = vmatpush1.msra.mxu0 0.0
    %2671 = vmatprep.subr.mxu0 0.0
    %2672 = vmatpush1.msra.mxu0 0.0
    %2673 = vmatprep.subr.mxu0 0.0
    %2674 = vmatpush1.msra.mxu0 0.0
    %2675 = vmatprep.subr.mxu0 0.0
    %2676 = vmatpush1.msra.mxu0 0.0
    %2677 = vmatprep.subr.mxu0 0.0
    %2678 = vmatpush1.msra.mxu0 0.0
    %2679 = vmatprep.subr.mxu0 0.0
    %2680 = vmatpush1.msra.mxu0 0.0
    %2681 = vmatprep.subr.mxu0 0.0
    %2682 = vmatpush1.msra.mxu0 0.0
    %2683 = vmatprep.subr.mxu0 0.0
    %2684 = vmatpush1.msra.mxu0 0.0
    %2685 = vmatprep.subr.mxu0 0.0
    %2686 = vmatpush1.msra.mxu0 0.0
    %2687 = vmatprep.subr.mxu0 0.0
    %2688 = vmatpush1.msra.mxu0 0.0
    %2689 = vmatprep.subr.mxu0 0.0
    %2690 = vmatpush1.msra.mxu0 0.0
    %2691 = vmatprep.subr.mxu0 0.0
    %2692 = vmatpush1.msra.mxu0 0.0
    %2693 = vmatprep.subr.mxu0 0.0
    %2694 = vmatpush1.msra.mxu0 0.0
    %2695 = vmatprep.subr.mxu0 0.0
    %2696 = vmatpush1.msra.mxu0 0.0
    %2697 = vmatprep.subr.mxu0 0.0
    %2698 = vmatpush1.msra.mxu0 0.0
    %2699 = vmatprep.subr.mxu0 0.0
    %2700 = vmatpush1.msra.mxu0 0.0
    %2701 = vmatprep.subr.mxu0 0.0
    %2702 = vmatpush1.msra.mxu0 0.0
    %2703 = vmatprep.mubr.f32.mxu0 0.0
    %2704 = vmatmul.mubr.f32.gmra.mrb[0].mxu0 %v2637
    %v2705 = vpop.f32.mrb[0].mxu0
    %v2706 = vadd.f32 0.0, %v2705
    %v2707 = vpop.f32.mrb[0].mxu0
    %2708 = vdwg.mxu0
    %2709 = vrot.lane.b32.xlu0 %v2153, 120
    %v2710 = vpop.permute.xlu0 %2709
    %2711 = vrot.lane.b32.xlu0 %v2251, 120
    %v2712 = vpop.permute.xlu0 %2711
    %2713 = vrot.lane.b32.xlu0 %v2256, 120
    %v2714 = vpop.permute.xlu0 %2713
    %v2715 = vsel %vm378, %v2710, 0
    %v2717 = vsel %vm378, %v2712, 0
    %v2719 = vsel %vm378, %v2714, 0
    %2721 = vmatprep.subr.mxu0 0.0
    %2722 = vmatpush1.xpose.msra.mxu0 %v2717
    %2723 = vmatprep.subr.mxu0 0.0
    %2724 = vmatpush1.xpose.msra.mxu0 %v2719
    %2725 = vmatprep.subr.mxu0 0.0
    %2726 = vmatpush1.xpose.msra.mxu0 0.0
    %2727 = vmatprep.subr.mxu0 0.0
    %2728 = vmatpush1.xpose.msra.mxu0 0.0
    %2729 = vmatprep.subr.mxu0 0.0
    %2730 = vmatpush1.xpose.msra.mxu0 0.0
    %2731 = vmatprep.subr.mxu0 0.0
    %2732 = vmatpush1.xpose.msra.mxu0 0.0
    %2733 = vmatprep.subr.mxu0 0.0
    %2734 = vmatpush1.xpose.msra.mxu0 0.0
    %2735 = vmatprep.subr.mxu0 0.0
    %2736 = vmatpush1.xpose.msra.mxu0 0.0
    %2737 = vmatprep.subr.mxu0 0.0
    %2738 = vmatpush1.xpose.msra.mxu0 0.0
    %2739 = vmatprep.subr.mxu0 0.0
    %2740 = vmatpush1.xpose.msra.mxu0 0.0
    %2741 = vmatprep.subr.mxu0 0.0
    %2742 = vmatpush1.xpose.msra.mxu0 0.0
    %2743 = vmatprep.subr.mxu0 0.0
    %2744 = vmatpush1.xpose.msra.mxu0 0.0
    %2745 = vmatprep.subr.mxu0 0.0
    %2746 = vmatpush1.xpose.msra.mxu0 0.0
    %2747 = vmatprep.subr.mxu0 0.0
    %2748 = vmatpush1.xpose.msra.mxu0 0.0
    %2749 = vmatprep.subr.mxu0 0.0
    %2750 = vmatpush1.xpose.msra.mxu0 0.0
    %2751 = vmatprep.subr.mxu0 0.0
    %2752 = vmatpush1.xpose.msra.mxu0 0.0
    %2753 = vmatprep.subr.mxu0 0.0
    %2754 = vmatpush1.xpose.msra.mxu0 0.0
    %2755 = vmatprep.subr.mxu0 0.0
    %2756 = vmatpush1.xpose.msra.mxu0 0.0
    %2757 = vmatprep.subr.mxu0 0.0
    %2758 = vmatpush1.xpose.msra.mxu0 0.0
    %2759 = vmatprep.subr.mxu0 0.0
    %2760 = vmatpush1.xpose.msra.mxu0 0.0
    %2761 = vmatprep.subr.mxu0 0.0
    %2762 = vmatpush1.xpose.msra.mxu0 0.0
    %2763 = vmatprep.subr.mxu0 0.0
    %2764 = vmatpush1.xpose.msra.mxu0 0.0
    %2765 = vmatprep.subr.mxu0 0.0
    %2766 = vmatpush1.xpose.msra.mxu0 0.0
    %2767 = vmatprep.subr.mxu0 0.0
    %2768 = vmatpush1.xpose.msra.mxu0 0.0
    %2769 = vmatprep.subr.mxu0 0.0
    %2770 = vmatpush1.xpose.msra.mxu0 0.0
    %2771 = vmatprep.subr.mxu0 0.0
    %2772 = vmatpush1.xpose.msra.mxu0 0.0
    %2773 = vmatprep.subr.mxu0 0.0
    %2774 = vmatpush1.xpose.msra.mxu0 0.0
    %2775 = vmatprep.subr.mxu0 0.0
    %2776 = vmatpush1.xpose.msra.mxu0 0.0
    %2777 = vmatprep.subr.mxu0 0.0
    %2778 = vmatpush1.xpose.msra.mxu0 0.0
    %2779 = vmatprep.subr.mxu0 0.0
    %2780 = vmatpush1.xpose.msra.mxu0 0.0
    %2781 = vmatprep.subr.mxu0 0.0
    %2782 = vmatpush1.xpose.msra.mxu0 0.0
    %2783 = vmatprep.subr.mxu0 0.0
    %2784 = vmatpush1.xpose.msra.mxu0 0.0
    %2785 = vmatprep.mubr.f32.mxu0 0.0
    %2786 = vmatmul.mubr.f32.gmra.mrb[0].mxu0 %v2715
    %v2787 = vpop.f32.mrb[0].mxu0
    %v2788 = vadd.f32 0.0, %v2787
    %v2789 = vpop.f32.mrb[0].mxu0
    %2790 = vdwg.mxu0
    %2791 = vrot.lane.b32.xlu0 %v2158, 120
    %v2792 = vpop.permute.xlu0 %2791
    %2793 = vrot.lane.b32.xlu0 %v2261, 120
    %v2794 = vpop.permute.xlu0 %2793
    %2795 = vrot.lane.b32.xlu0 %v2266, 120
    %v2796 = vpop.permute.xlu0 %2795
    %v2797 = vsel %vm378, %v2792, 0
    %v2799 = vsel %vm378, %v2794, 0
    %v2801 = vsel %vm378, %v2796, 0
    %2803 = vmatprep.subr.mxu0 0.0
    %2804 = vmatpush1.xpose.msra.mxu0 %v2799
    %2805 = vmatprep.subr.mxu0 0.0
    %2806 = vmatpush1.xpose.msra.mxu0 %v2801
    %2807 = vmatprep.subr.mxu0 0.0
    %2808 = vmatpush1.xpose.msra.mxu0 0.0
    %2809 = vmatprep.subr.mxu0 0.0
    %2810 = vmatpush1.xpose.msra.mxu0 0.0
    %2811 = vmatprep.subr.mxu0 0.0
    %2812 = vmatpush1.xpose.msra.mxu0 0.0
    %2813 = vmatprep.subr.mxu0 0.0
    %2814 = vmatpush1.xpose.msra.mxu0 0.0
    %2815 = vmatprep.subr.mxu0 0.0
    %2816 = vmatpush1.xpose.msra.mxu0 0.0
    %2817 = vmatprep.subr.mxu0 0.0
    %2818 = vmatpush1.xpose.msra.mxu0 0.0
    %2819 = vmatprep.subr.mxu0 0.0
    %2820 = vmatpush1.xpose.msra.mxu0 0.0
    %2821 = vmatprep.subr.mxu0 0.0
    %2822 = vmatpush1.xpose.msra.mxu0 0.0
    %2823 = vmatprep.subr.mxu0 0.0
    %2824 = vmatpush1.xpose.msra.mxu0 0.0
    %2825 = vmatprep.subr.mxu0 0.0
    %2826 = vmatpush1.xpose.msra.mxu0 0.0
    %2827 = vmatprep.subr.mxu0 0.0
    %2828 = vmatpush1.xpose.msra.mxu0 0.0
    %2829 = vmatprep.subr.mxu0 0.0
    %2830 = vmatpush1.xpose.msra.mxu0 0.0
    %2831 = vmatprep.subr.mxu0 0.0
    %2832 = vmatpush1.xpose.msra.mxu0 0.0
    %2833 = vmatprep.subr.mxu0 0.0
    %2834 = vmatpush1.xpose.msra.mxu0 0.0
    %2835 = vmatprep.subr.mxu0 0.0
    %2836 = vmatpush1.xpose.msra.mxu0 0.0
    %2837 = vmatprep.subr.mxu0 0.0
    %2838 = vmatpush1.xpose.msra.mxu0 0.0
    %2839 = vmatprep.subr.mxu0 0.0
    %2840 = vmatpush1.xpose.msra.mxu0 0.0
    %2841 = vmatprep.subr.mxu0 0.0
    %2842 = vmatpush1.xpose.msra.mxu0 0.0
    %2843 = vmatprep.subr.mxu0 0.0
    %2844 = vmatpush1.xpose.msra.mxu0 0.0
    %2845 = vmatprep.subr.mxu0 0.0
    %2846 = vmatpush1.xpose.msra.mxu0 0.0
    %2847 = vmatprep.subr.mxu0 0.0
    %2848 = vmatpush1.xpose.msra.mxu0 0.0
    %2849 = vmatprep.subr.mxu0 0.0
    %2850 = vmatpush1.xpose.msra.mxu0 0.0
    %2851 = vmatprep.subr.mxu0 0.0
    %2852 = vmatpush1.xpose.msra.mxu0 0.0
    %2853 = vmatprep.subr.mxu0 0.0
    %2854 = vmatpush1.xpose.msra.mxu0 0.0
    %2855 = vmatprep.subr.mxu0 0.0
    %2856 = vmatpush1.xpose.msra.mxu0 0.0
    %2857 = vmatprep.subr.mxu0 0.0
    %2858 = vmatpush1.xpose.msra.mxu0 0.0
    %2859 = vmatprep.subr.mxu0 0.0
    %2860 = vmatpush1.xpose.msra.mxu0 0.0
    %2861 = vmatprep.subr.mxu0 0.0
    %2862 = vmatpush1.xpose.msra.mxu0 0.0
    %2863 = vmatprep.subr.mxu0 0.0
    %2864 = vmatpush1.xpose.msra.mxu0 0.0
    %2865 = vmatprep.subr.mxu0 0.0
    %2866 = vmatpush1.xpose.msra.mxu0 0.0
    %2867 = vmatprep.mubr.f32.mxu0 0.0
    %2868 = vmatmul.mubr.f32.gmra.mrb[0].mxu0 %v2797
    %v2869 = vpop.f32.mrb[0].mxu0
    %v2870 = vadd.f32 0.0, %v2869
    %v2871 = vpop.f32.mrb[0].mxu0
    %2872 = vdwg.mxu0
    %v2873 = vsel %vm2540, %v2788, -inf
    %2874 = vmax.xlane.f32.xlu0 %v2873
    %v2875 = vpop.xlane.xlu0 %2874
    %v2876 = vsel %vm2540, %v2870, -inf
    %2877 = vmax.xlane.f32.xlu0 %v2876
    %v2878 = vpop.xlane.xlu0 %2877
    %v2879 = vsub.f32 %v2788, %v2875
    %v2880 = vsub.f32 %v2870, %v2878
    %v2881 = vmul.f32 %v2879, 1.442695
    %v2882 = vpow.pop %v2881
    %v2883 = vmul.f32 %v2880, 1.442695
    %v2884 = vpow.pop %v2883
    %v2885 = vsel %vm2540, %v2882, 0.0
    %2886 = vadd.xlane.f32.xlu0 %v2885
    %v2887 = vpop.xlane.xlu0 %2886
    %v2888 = vsel %vm2540, %v2884, 0.0
    %2889 = vadd.xlane.f32.xlu0 %v2888
    %v2890 = vpop.xlane.xlu0 %2889
    %v2891 = vrcp.pop %v2887
    %v2892 = vrcp.pop %v2890
    %v2893 = vmul.f32 %v2882, %v2891
    %v2894 = vmul.f32 %v2884, %v2892
    %2897 = vrot.lane.b32.xlu0 %v2359, 120
    %v2898 = vpop.permute.xlu0 %2897
    %2899 = vrot.lane.b32.xlu0 %v2364, 120
    %v2900 = vpop.permute.xlu0 %2899
    %v2904 = vsel %vm2540, %v2893, 0
    %2906 = vmatprep.subr.mxu0 0.0
    %2907 = vmatpush1.msra.mxu0 %v2898
    %2908 = vmatprep.subr.mxu0 0.0
    %2909 = vmatpush1.msra.mxu0 %v2900
    %2910 = vmatprep.subr.mxu0 0.0
    %2911 = vmatpush1.msra.mxu0 0.0
    %2912 = vmatprep.subr.mxu0 0.0
    %2913 = vmatpush1.msra.mxu0 0.0
    %2914 = vmatprep.subr.mxu0 0.0
    %2915 = vmatpush1.msra.mxu0 0.0
    %2916 = vmatprep.subr.mxu0 0.0
    %2917 = vmatpush1.msra.mxu0 0.0
    %2918 = vmatprep.subr.mxu0 0.0
    %2919 = vmatpush1.msra.mxu0 0.0
    %2920 = vmatprep.subr.mxu0 0.0
    %2921 = vmatpush1.msra.mxu0 0.0
    %2922 = vmatprep.subr.mxu0 0.0
    %2923 = vmatpush1.msra.mxu0 0.0
    %2924 = vmatprep.subr.mxu0 0.0
    %2925 = vmatpush1.msra.mxu0 0.0
    %2926 = vmatprep.subr.mxu0 0.0
    %2927 = vmatpush1.msra.mxu0 0.0
    %2928 = vmatprep.subr.mxu0 0.0
    %2929 = vmatpush1.msra.mxu0 0.0
    %2930 = vmatprep.subr.mxu0 0.0
    %2931 = vmatpush1.msra.mxu0 0.0
    %2932 = vmatprep.subr.mxu0 0.0
    %2933 = vmatpush1.msra.mxu0 0.0
    %2934 = vmatprep.subr.mxu0 0.0
    %2935 = vmatpush1.msra.mxu0 0.0
    %2936 = vmatprep.subr.mxu0 0.0
    %2937 = vmatpush1.msra.mxu0 0.0
    %2938 = vmatprep.subr.mxu0 0.0
    %2939 = vmatpush1.msra.mxu0 0.0
    %2940 = vmatprep.subr.mxu0 0.0
    %2941 = vmatpush1.msra.mxu0 0.0
    %2942 = vmatprep.subr.mxu0 0.0
    %2943 = vmatpush1.msra.mxu0 0.0
    %2944 = vmatprep.subr.mxu0 0.0
    %2945 = vmatpush1.msra.mxu0 0.0
    %2946 = vmatprep.subr.mxu0 0.0
    %2947 = vmatpush1.msra.mxu0 0.0
    %2948 = vmatprep.subr.mxu0 0.0
    %2949 = vmatpush1.msra.mxu0 0.0
    %2950 = vmatprep.subr.mxu0 0.0
    %2951 = vmatpush1.msra.mxu0 0.0
    %2952 = vmatprep.subr.mxu0 0.0
    %2953 = vmatpush1.msra.mxu0 0.0
    %2954 = vmatprep.subr.mxu0 0.0
    %2955 = vmatpush1.msra.mxu0 0.0
    %2956 = vmatprep.subr.mxu0 0.0
    %2957 = vmatpush1.msra.mxu0 0.0
    %2958 = vmatprep.subr.mxu0 0.0
    %2959 = vmatpush1.msra.mxu0 0.0
    %2960 = vmatprep.subr.mxu0 0.0
    %2961 = vmatpush1.msra.mxu0 0.0
    %2962 = vmatprep.subr.mxu0 0.0
    %2963 = vmatpush1.msra.mxu0 0.0
    %2964 = vmatprep.subr.mxu0 0.0
    %2965 = vmatpush1.msra.mxu0 0.0
    %2966 = vmatprep.subr.mxu0 0.0
    %2967 = vmatpush1.msra.mxu0 0.0
    %2968 = vmatprep.subr.mxu0 0.0
    %2969 = vmatpush1.msra.mxu0 0.0
    %2970 = vmatprep.mubr.f32.mxu0 0.0
    %2971 = vmatmul.mubr.f32.gmra.mrb[0].mxu0 %v2904
    %v2972 = vpop.f32.mrb[0].mxu0
    %v2973 = vadd.f32 0.0, %v2972
    %v2974 = vpop.f32.mrb[0].mxu0
    %2975 = vdwg.mxu0
    %2978 = vrot.lane.b32.xlu0 %v2369, 120
    %v2979 = vpop.permute.xlu0 %2978
    %2980 = vrot.lane.b32.xlu0 %v2374, 120
    %v2981 = vpop.permute.xlu0 %2980
    %v2985 = vsel %vm2540, %v2894, 0
    %2987 = vmatprep.subr.mxu0 0.0
    %2988 = vmatpush1.msra.mxu0 %v2979
    %2989 = vmatprep.subr.mxu0 0.0
    %2990 = vmatpush1.msra.mxu0 %v2981
    %2991 = vmatprep.subr.mxu0 0.0
    %2992 = vmatpush1.msra.mxu0 0.0
    %2993 = vmatprep.subr.mxu0 0.0
    %2994 = vmatpush1.msra.mxu0 0.0
    %2995 = vmatprep.subr.mxu0 0.0
    %2996 = vmatpush1.msra.mxu0 0.0
    %2997 = vmatprep.subr.mxu0 0.0
    %2998 = vmatpush1.msra.mxu0 0.0
    %2999 = vmatprep.subr.mxu0 0.0
    %3000 = vmatpush1.msra.mxu0 0.0
    %3001 = vmatprep.subr.mxu0 0.0
    %3002 = vmatpush1.msra.mxu0 0.0
    %3003 = vmatprep.subr.mxu0 0.0
    %3004 = vmatpush1.msra.mxu0 0.0
    %3005 = vmatprep.subr.mxu0 0.0
    %3006 = vmatpush1.msra.mxu0 0.0
    %3007 = vmatprep.subr.mxu0 0.0
    %3008 = vmatpush1.msra.mxu0 0.0
    %3009 = vmatprep.subr.mxu0 0.0
    %3010 = vmatpush1.msra.mxu0 0.0
    %3011 = vmatprep.subr.mxu0 0.0
    %3012 = vmatpush1.msra.mxu0 0.0
    %3013 = vmatprep.subr.mxu0 0.0
    %3014 = vmatpush1.msra.mxu0 0.0
    %3015 = vmatprep.subr.mxu0 0.0
    %3016 = vmatpush1.msra.mxu0 0.0
    %3017 = vmatprep.subr.mxu0 0.0
    %3018 = vmatpush1.msra.mxu0 0.0
    %3019 = vmatprep.subr.mxu0 0.0
    %3020 = vmatpush1.msra.mxu0 0.0
    %3021 = vmatprep.subr.mxu0 0.0
    %3022 = vmatpush1.msra.mxu0 0.0
    %3023 = vmatprep.subr.mxu0 0.0
    %3024 = vmatpush1.msra.mxu0 0.0
    %3025 = vmatprep.subr.mxu0 0.0
    %3026 = vmatpush1.msra.mxu0 0.0
    %3027 = vmatprep.subr.mxu0 0.0
    %3028 = vmatpush1.msra.mxu0 0.0
    %3029 = vmatprep.subr.mxu0 0.0
    %3030 = vmatpush1.msra.mxu0 0.0
    %3031 = vmatprep.subr.mxu0 0.0
    %3032 = vmatpush1.msra.mxu0 0.0
    %3033 = vmatprep.subr.mxu0 0.0
    %3034 = vmatpush1.msra.mxu0 0.0
    %3035 = vmatprep.subr.mxu0 0.0
    %3036 = vmatpush1.msra.mxu0 0.0
    %3037 = vmatprep.subr.mxu0 0.0
    %3038 = vmatpush1.msra.mxu0 0.0
    %3039 = vmatprep.subr.mxu0 0.0
    %3040 = vmatpush1.msra.mxu0 0.0
    %3041 = vmatprep.subr.mxu0 0.0
    %3042 = vmatpush1.msra.mxu0 0.0
    %3043 = vmatprep.subr.mxu0 0.0
    %3044 = vmatpush1.msra.mxu0 0.0
    %3045 = vmatprep.subr.mxu0 0.0
    %3046 = vmatpush1.msra.mxu0 0.0
    %3047 = vmatprep.subr.mxu0 0.0
    %3048 = vmatpush1.msra.mxu0 0.0
    %3049 = vmatprep.subr.mxu0 0.0
    %3050 = vmatpush1.msra.mxu0 0.0
    %3051 = vmatprep.mubr.f32.mxu0 0.0
    %3052 = vmatmul.mubr.f32.gmra.mrb[0].mxu0 %v2985
    %v3053 = vpop.f32.mrb[0].mxu0
    %v3054 = vadd.f32 0.0, %v3053
    %v3055 = vpop.f32.mrb[0].mxu0
    %3056 = vdwg.mxu0
    %v3058 = vsel %vm378, %v2973, 0
    %v3061 = vsel %vm378, %v3054, 0
    %3063 = vmatprep.subr.mxu0 0.0
    %3064 = vmatpush1.msra.mxu0 %v2378
    %3065 = vmatprep.subr.mxu0 0.0
    %3066 = vmatpush1.msra.mxu0 0.0
    %3067 = vmatprep.subr.mxu0 0.0
    %3068 = vmatpush1.msra.mxu0 0.0
    %3069 = vmatprep.subr.mxu0 0.0
    %3070 = vmatpush1.msra.mxu0 0.0
    %3071 = vmatprep.subr.mxu0 0.0
    %3072 = vmatpush1.msra.mxu0 0.0
    %3073 = vmatprep.subr.mxu0 0.0
    %3074 = vmatpush1.msra.mxu0 0.0
    %3075 = vmatprep.subr.mxu0 0.0
    %3076 = vmatpush1.msra.mxu0 0.0
    %3077 = vmatprep.subr.mxu0 0.0
    %3078 = vmatpush1.msra.mxu0 0.0
    %3079 = vmatprep.subr.mxu0 0.0
    %3080 = vmatpush1.msra.mxu0 0.0
    %3081 = vmatprep.subr.mxu0 0.0
    %3082 = vmatpush1.msra.mxu0 0.0
    %3083 = vmatprep.subr.mxu0 0.0
    %3084 = vmatpush1.msra.mxu0 0.0
    %3085 = vmatprep.subr.mxu0 0.0
    %3086 = vmatpush1.msra.mxu0 0.0
    %3087 = vmatprep.subr.mxu0 0.0
    %3088 = vmatpush1.msra.mxu0 0.0
    %3089 = vmatprep.subr.mxu0 0.0
    %3090 = vmatpush1.msra.mxu0 0.0
    %3091 = vmatprep.subr.mxu0 0.0
    %3092 = vmatpush1.msra.mxu0 0.0
    %3093 = vmatprep.subr.mxu0 0.0
    %3094 = vmatpush1.msra.mxu0 0.0
    %3095 = vmatprep.subr.mxu0 0.0
    %3096 = vmatpush1.msra.mxu0 0.0
    %3097 = vmatprep.subr.mxu0 0.0
    %3098 = vmatpush1.msra.mxu0 0.0
    %3099 = vmatprep.subr.mxu0 0.0
    %3100 = vmatpush1.msra.mxu0 0.0
    %3101 = vmatprep.subr.mxu0 0.0
    %3102 = vmatpush1.msra.mxu0 0.0
    %3103 = vmatprep.subr.mxu0 0.0
    %3104 = vmatpush1.msra.mxu0 0.0
    %3105 = vmatprep.subr.mxu0 0.0
    %3106 = vmatpush1.msra.mxu0 0.0
    %3107 = vmatprep.subr.mxu0 0.0
    %3108 = vmatpush1.msra.mxu0 0.0
    %3109 = vmatprep.subr.mxu0 0.0
    %3110 = vmatpush1.msra.mxu0 0.0
    %3111 = vmatprep.subr.mxu0 0.0
    %3112 = vmatpush1.msra.mxu0 0.0
    %3113 = vmatprep.subr.mxu0 0.0
    %3114 = vmatpush1.msra.mxu0 0.0
    %3115 = vmatprep.subr.mxu0 0.0
    %3116 = vmatpush1.msra.mxu0 0.0
    %3117 = vmatprep.subr.mxu0 0.0
    %3118 = vmatpush1.msra.mxu0 0.0
    %3119 = vmatprep.subr.mxu0 0.0
    %3120 = vmatpush1.msra.mxu0 0.0
    %3121 = vmatprep.subr.mxu0 0.0
    %3122 = vmatpush1.msra.mxu0 0.0
    %3123 = vmatprep.subr.mxu0 0.0
    %3124 = vmatpush1.msra.mxu0 0.0
    %3125 = vmatprep.subr.mxu0 0.0
    %3126 = vmatpush1.msra.mxu0 0.0
    %3127 = vmatprep.mubr.f32.mxu0 0.0
    %3128 = vmatmul.mubr.f32.gmra.mrb[0].mxu0 %v3058
    %v3129 = vpop.f32.mrb[0].mxu0
    %v3130 = vadd.f32 0.0, %v3129
    %v3131 = vpop.f32.mrb[0].mxu0
    %3132 = vmatprep.mubr.f32.mxu0 0.0
    %3133 = vmatmul.mubr.f32.gmra.mrb[0].mxu0 %v3061
    %v3134 = vpop.f32.mrb[0].mxu0
    %v3135 = vadd.f32 0.0, %v3134
    %v3136 = vpop.f32.mrb[0].mxu0
    %3137 = vdwg.mxu0
    %v3139 = vsel %vm378, %v2633, 0
    %v3142 = vsel %vm378, %v2706, 0
    %3144 = vmatprep.subr.mxu0 0.0
    %3145 = vmatpush1.msra.mxu0 %v2377
    %3146 = vmatprep.subr.mxu0 0.0
    %3147 = vmatpush1.msra.mxu0 0.0
    %3148 = vmatprep.subr.mxu0 0.0
    %3149 = vmatpush1.msra.mxu0 0.0
    %3150 = vmatprep.subr.mxu0 0.0
    %3151 = vmatpush1.msra.mxu0 0.0
    %3152 = vmatprep.subr.mxu0 0.0
    %3153 = vmatpush1.msra.mxu0 0.0
    %3154 = vmatprep.subr.mxu0 0.0
    %3155 = vmatpush1.msra.mxu0 0.0
    %3156 = vmatprep.subr.mxu0 0.0
    %3157 = vmatpush1.msra.mxu0 0.0
    %3158 = vmatprep.subr.mxu0 0.0
    %3159 = vmatpush1.msra.mxu0 0.0
    %3160 = vmatprep.subr.mxu0 0.0
    %3161 = vmatpush1.msra.mxu0 0.0
    %3162 = vmatprep.subr.mxu0 0.0
    %3163 = vmatpush1.msra.mxu0 0.0
    %3164 = vmatprep.subr.mxu0 0.0
    %3165 = vmatpush1.msra.mxu0 0.0
    %3166 = vmatprep.subr.mxu0 0.0
    %3167 = vmatpush1.msra.mxu0 0.0
    %3168 = vmatprep.subr.mxu0 0.0
    %3169 = vmatpush1.msra.mxu0 0.0
    %3170 = vmatprep.subr.mxu0 0.0
    %3171 = vmatpush1.msra.mxu0 0.0
    %3172 = vmatprep.subr.mxu0 0.0
    %3173 = vmatpush1.msra.mxu0 0.0
    %3174 = vmatprep.subr.mxu0 0.0
    %3175 = vmatpush1.msra.mxu0 0.0
    %3176 = vmatprep.subr.mxu0 0.0
    %3177 = vmatpush1.msra.mxu0 0.0
    %3178 = vmatprep.subr.mxu0 0.0
    %3179 = vmatpush1.msra.mxu0 0.0
    %3180 = vmatprep.subr.mxu0 0.0
    %3181 = vmatpush1.msra.mxu0 0.0
    %3182 = vmatprep.subr.mxu0 0.0
    %3183 = vmatpush1.msra.mxu0 0.0
    %3184 = vmatprep.subr.mxu0 0.0
    %3185 = vmatpush1.msra.mxu0 0.0
    %3186 = vmatprep.subr.mxu0 0.0
    %3187 = vmatpush1.msra.mxu0 0.0
    %3188 = vmatprep.subr.mxu0 0.0
    %3189 = vmatpush1.msra.mxu0 0.0
    %3190 = vmatprep.subr.mxu0 0.0
    %3191 = vmatpush1.msra.mxu0 0.0
    %3192 = vmatprep.subr.mxu0 0.0
    %3193 = vmatpush1.msra.mxu0 0.0
    %3194 = vmatprep.subr.mxu0 0.0
    %3195 = vmatpush1.msra.mxu0 0.0
    %3196 = vmatprep.subr.mxu0 0.0
    %3197 = vmatpush1.msra.mxu0 0.0
    %3198 = vmatprep.subr.mxu0 0.0
    %3199 = vmatpush1.msra.mxu0 0.0
    %3200 = vmatprep.subr.mxu0 0.0
    %3201 = vmatpush1.msra.mxu0 0.0
    %3202 = vmatprep.subr.mxu0 0.0
    %3203 = vmatpush1.msra.mxu0 0.0
    %3204 = vmatprep.subr.mxu0 0.0
    %3205 = vmatpush1.msra.mxu0 0.0
    %3206 = vmatprep.subr.mxu0 0.0
    %3207 = vmatpush1.msra.mxu0 0.0
    %3208 = vmatprep.mubr.f32.mxu0 0.0
    %3209 = vmatmul.mubr.f32.gmra.mrb[0].mxu0 %v3139
    %v3210 = vpop.f32.mrb[0].mxu0
    %v3211 = vadd.f32 %v3130, %v3210
    %v3212 = vpop.f32.mrb[0].mxu0
    %3213 = vmatprep.mubr.f32.mxu0 0.0
    %3214 = vmatmul.mubr.f32.gmra.mrb[0].mxu0 %v3142
    %v3215 = vpop.f32.mrb[0].mxu0
    %v3216 = vadd.f32 %v3135, %v3215
    %v3217 = vpop.f32.mrb[0].mxu0
    %3218 = vdwg.mxu0
    %3219 = vrot.lane.b32.xlu0 %v2153, 112
    %v3220 = vpop.permute.xlu0 %3219
    %3221 = vrot.lane.b32.xlu0 %v2251, 112
    %v3222 = vpop.permute.xlu0 %3221
    %3223 = vrot.lane.b32.xlu0 %v2256, 112
    %v3224 = vpop.permute.xlu0 %3223
    %v3225 = vsel %vm378, %v3220, 0
    %v3227 = vsel %vm378, %v3222, 0
    %v3229 = vsel %vm378, %v3224, 0
    %3231 = vmatprep.subr.mxu0 0.0
    %3232 = vmatpush1.xpose.msra.mxu0 %v3227
    %3233 = vmatprep.subr.mxu0 0.0
    %3234 = vmatpush1.xpose.msra.mxu0 %v3229
    %3235 = vmatprep.subr.mxu0 0.0
    %3236 = vmatpush1.xpose.msra.mxu0 0.0
    %3237 = vmatprep.subr.mxu0 0.0
    %3238 = vmatpush1.xpose.msra.mxu0 0.0
    %3239 = vmatprep.subr.mxu0 0.0
    %3240 = vmatpush1.xpose.msra.mxu0 0.0
    %3241 = vmatprep.subr.mxu0 0.0
    %3242 = vmatpush1.xpose.msra.mxu0 0.0
    %3243 = vmatprep.subr.mxu0 0.0
    %3244 = vmatpush1.xpose.msra.mxu0 0.0
    %3245 = vmatprep.subr.mxu0 0.0
    %3246 = vmatpush1.xpose.msra.mxu0 0.0
    %3247 = vmatprep.subr.mxu0 0.0
    %3248 = vmatpush1.xpose.msra.mxu0 0.0
    %3249 = vmatprep.subr.mxu0 0.0
    %3250 = vmatpush1.xpose.msra.mxu0 0.0
    %3251 = vmatprep.subr.mxu0 0.0
    %3252 = vmatpush1.xpose.msra.mxu0 0.0
    %3253 = vmatprep.subr.mxu0 0.0
    %3254 = vmatpush1.xpose.msra.mxu0 0.0
    %3255 = vmatprep.subr.mxu0 0.0
    %3256 = vmatpush1.xpose.msra.mxu0 0.0
    %3257 = vmatprep.subr.mxu0 0.0
    %3258 = vmatpush1.xpose.msra.mxu0 0.0
    %3259 = vmatprep.subr.mxu0 0.0
    %3260 = vmatpush1.xpose.msra.mxu0 0.0
    %3261 = vmatprep.subr.mxu0 0.0
    %3262 = vmatpush1.xpose.msra.mxu0 0.0
    %3263 = vmatprep.subr.mxu0 0.0
    %3264 = vmatpush1.xpose.msra.mxu0 0.0
    %3265 = vmatprep.subr.mxu0 0.0
    %3266 = vmatpush1.xpose.msra.mxu0 0.0
    %3267 = vmatprep.subr.mxu0 0.0
    %3268 = vmatpush1.xpose.msra.mxu0 0.0
    %3269 = vmatprep.subr.mxu0 0.0
    %3270 = vmatpush1.xpose.msra.mxu0 0.0
    %3271 = vmatprep.subr.mxu0 0.0
    %3272 = vmatpush1.xpose.msra.mxu0 0.0
    %3273 = vmatprep.subr.mxu0 0.0
    %3274 = vmatpush1.xpose.msra.mxu0 0.0
    %3275 = vmatprep.subr.mxu0 0.0
    %3276 = vmatpush1.xpose.msra.mxu0 0.0
    %3277 = vmatprep.subr.mxu0 0.0
    %3278 = vmatpush1.xpose.msra.mxu0 0.0
    %3279 = vmatprep.subr.mxu0 0.0
    %3280 = vmatpush1.xpose.msra.mxu0 0.0
    %3281 = vmatprep.subr.mxu0 0.0
    %3282 = vmatpush1.xpose.msra.mxu0 0.0
    %3283 = vmatprep.subr.mxu0 0.0
    %3284 = vmatpush1.xpose.msra.mxu0 0.0
    %3285 = vmatprep.subr.mxu0 0.0
    %3286 = vmatpush1.xpose.msra.mxu0 0.0
    %3287 = vmatprep.subr.mxu0 0.0
    %3288 = vmatpush1.xpose.msra.mxu0 0.0
    %3289 = vmatprep.subr.mxu0 0.0
    %3290 = vmatpush1.xpose.msra.mxu0 0.0
    %3291 = vmatprep.subr.mxu0 0.0
    %3292 = vmatpush1.xpose.msra.mxu0 0.0
    %3293 = vmatprep.subr.mxu0 0.0
    %3294 = vmatpush1.xpose.msra.mxu0 0.0
    %3295 = vmatprep.mubr.f32.mxu0 0.0
    %3296 = vmatmul.mubr.f32.gmra.mrb[0].mxu0 %v3225
    %v3297 = vpop.f32.mrb[0].mxu0
    %v3298 = vadd.f32 0.0, %v3297
    %v3299 = vpop.f32.mrb[0].mxu0
    %3300 = vdwg.mxu0
    %3301 = vrot.lane.b32.xlu0 %v2158, 112
    %v3302 = vpop.permute.xlu0 %3301
    %3303 = vrot.lane.b32.xlu0 %v2261, 112
    %v3304 = vpop.permute.xlu0 %3303
    %3305 = vrot.lane.b32.xlu0 %v2266, 112
    %v3306 = vpop.permute.xlu0 %3305
    %v3307 = vsel %vm378, %v3302, 0
    %v3309 = vsel %vm378, %v3304, 0
    %v3311 = vsel %vm378, %v3306, 0
    %3313 = vmatprep.subr.mxu0 0.0
    %3314 = vmatpush1.xpose.msra.mxu0 %v3309
    %3315 = vmatprep.subr.mxu0 0.0
    %3316 = vmatpush1.xpose.msra.mxu0 %v3311
    %3317 = vmatprep.subr.mxu0 0.0
    %3318 = vmatpush1.xpose.msra.mxu0 0.0
    %3319 = vmatprep.subr.mxu0 0.0
    %3320 = vmatpush1.xpose.msra.mxu0 0.0
    %3321 = vmatprep.subr.mxu0 0.0
    %3322 = vmatpush1.xpose.msra.mxu0 0.0
    %3323 = vmatprep.subr.mxu0 0.0
    %3324 = vmatpush1.xpose.msra.mxu0 0.0
    %3325 = vmatprep.subr.mxu0 0.0
    %3326 = vmatpush1.xpose.msra.mxu0 0.0
    %3327 = vmatprep.subr.mxu0 0.0
    %3328 = vmatpush1.xpose.msra.mxu0 0.0
    %3329 = vmatprep.subr.mxu0 0.0
    %3330 = vmatpush1.xpose.msra.mxu0 0.0
    %3331 = vmatprep.subr.mxu0 0.0
    %3332 = vmatpush1.xpose.msra.mxu0 0.0
    %3333 = vmatprep.subr.mxu0 0.0
    %3334 = vmatpush1.xpose.msra.mxu0 0.0
    %3335 = vmatprep.subr.mxu0 0.0
    %3336 = vmatpush1.xpose.msra.mxu0 0.0
    %3337 = vmatprep.subr.mxu0 0.0
    %3338 = vmatpush1.xpose.msra.mxu0 0.0
    %3339 = vmatprep.subr.mxu0 0.0
    %3340 = vmatpush1.xpose.msra.mxu0 0.0
    %3341 = vmatprep.subr.mxu0 0.0
    %3342 = vmatpush1.xpose.msra.mxu0 0.0
    %3343 = vmatprep.subr.mxu0 0.0
    %3344 = vmatpush1.xpose.msra.mxu0 0.0
    %3345 = vmatprep.subr.mxu0 0.0
    %3346 = vmatpush1.xpose.msra.mxu0 0.0
    %3347 = vmatprep.subr.mxu0 0.0
    %3348 = vmatpush1.xpose.msra.mxu0 0.0
    %3349 = vmatprep.subr.mxu0 0.0
    %3350 = vmatpush1.xpose.msra.mxu0 0.0
    %3351 = vmatprep.subr.mxu0 0.0
    %3352 = vmatpush1.xpose.msra.mxu0 0.0
    %3353 = vmatprep.subr.mxu0 0.0
    %3354 = vmatpush1.xpose.msra.mxu0 0.0
    %3355 = vmatprep.subr.mxu0 0.0
    %3356 = vmatpush1.xpose.msra.mxu0 0.0
    %3357 = vmatprep.subr.mxu0 0.0
    %3358 = vmatpush1.xpose.msra.mxu0 0.0
    %3359 = vmatprep.subr.mxu0 0.0
    %3360 = vmatpush1.xpose.msra.mxu0 0.0
    %3361 = vmatprep.subr.mxu0 0.0
    %3362 = vmatpush1.xpose.msra.mxu0 0.0
    %3363 = vmatprep.subr.mxu0 0.0
    %3364 = vmatpush1.xpose.msra.mxu0 0.0
    %3365 = vmatprep.subr.mxu0 0.0
    %3366 = vmatpush1.xpose.msra.mxu0 0.0
    %3367 = vmatprep.subr.mxu0 0.0
    %3368 = vmatpush1.xpose.msra.mxu0 0.0
    %3369 = vmatprep.subr.mxu0 0.0
    %3370 = vmatpush1.xpose.msra.mxu0 0.0
    %3371 = vmatprep.subr.mxu0 0.0
    %3372 = vmatpush1.xpose.msra.mxu0 0.0
    %3373 = vmatprep.subr.mxu0 0.0
    %3374 = vmatpush1.xpose.msra.mxu0 0.0
    %3375 = vmatprep.subr.mxu0 0.0
    %3376 = vmatpush1.xpose.msra.mxu0 0.0
    %3377 = vmatprep.mubr.f32.mxu0 0.0
    %3378 = vmatmul.mubr.f32.gmra.mrb[0].mxu0 %v3307
    %v3379 = vpop.f32.mrb[0].mxu0
    %v3380 = vadd.f32 0.0, %v3379
    %v3381 = vpop.f32.mrb[0].mxu0
    %3382 = vdwg.mxu0
    %v3383 = vsel %vm2540, %v3298, -inf
    %3384 = vmax.xlane.f32.xlu0 %v3383
    %v3385 = vpop.xlane.xlu0 %3384
    %v3386 = vsel %vm2540, %v3380, -inf
    %3387 = vmax.xlane.f32.xlu0 %v3386
    %v3388 = vpop.xlane.xlu0 %3387
    %v3389 = vsub.f32 %v3298, %v3385
    %v3390 = vsub.f32 %v3380, %v3388
    %v3391 = vmul.f32 %v3389, 1.442695
    %v3392 = vpow.pop %v3391
    %v3393 = vmul.f32 %v3390, 1.442695
    %v3394 = vpow.pop %v3393
    %v3395 = vsel %vm2540, %v3392, 0.0
    %3396 = vadd.xlane.f32.xlu0 %v3395
    %v3397 = vpop.xlane.xlu0 %3396
    %v3398 = vsel %vm2540, %v3394, 0.0
    %3399 = vadd.xlane.f32.xlu0 %v3398
    %v3400 = vpop.xlane.xlu0 %3399
    %v3401 = vrcp.pop %v3397
    %v3402 = vrcp.pop %v3400
    %v3403 = vmul.f32 %v3392, %v3401
    %v3404 = vmul.f32 %v3394, %v3402
    %3405 = vrot.lane.b32.xlu0 %v2359, 112
    %v3406 = vpop.permute.xlu0 %3405
    %3407 = vrot.lane.b32.xlu0 %v2364, 112
    %v3408 = vpop.permute.xlu0 %3407
    %v3412 = vsel %vm2540, %v3403, 0
    %3414 = vmatprep.subr.mxu0 0.0
    %3415 = vmatpush1.msra.mxu0 %v3406
    %3416 = vmatprep.subr.mxu0 0.0
    %3417 = vmatpush1.msra.mxu0 %v3408
    %3418 = vmatprep.subr.mxu0 0.0
    %3419 = vmatpush1.msra.mxu0 0.0
    %3420 = vmatprep.subr.mxu0 0.0
    %3421 = vmatpush1.msra.mxu0 0.0
    %3422 = vmatprep.subr.mxu0 0.0
    %3423 = vmatpush1.msra.mxu0 0.0
    %3424 = vmatprep.subr.mxu0 0.0
    %3425 = vmatpush1.msra.mxu0 0.0
    %3426 = vmatprep.subr.mxu0 0.0
    %3427 = vmatpush1.msra.mxu0 0.0
    %3428 = vmatprep.subr.mxu0 0.0
    %3429 = vmatpush1.msra.mxu0 0.0
    %3430 = vmatprep.subr.mxu0 0.0
    %3431 = vmatpush1.msra.mxu0 0.0
    %3432 = vmatprep.subr.mxu0 0.0
    %3433 = vmatpush1.msra.mxu0 0.0
    %3434 = vmatprep.subr.mxu0 0.0
    %3435 = vmatpush1.msra.mxu0 0.0
    %3436 = vmatprep.subr.mxu0 0.0
    %3437 = vmatpush1.msra.mxu0 0.0
    %3438 = vmatprep.subr.mxu0 0.0
    %3439 = vmatpush1.msra.mxu0 0.0
    %3440 = vmatprep.subr.mxu0 0.0
    %3441 = vmatpush1.msra.mxu0 0.0
    %3442 = vmatprep.subr.mxu0 0.0
    %3443 = vmatpush1.msra.mxu0 0.0
    %3444 = vmatprep.subr.mxu0 0.0
    %3445 = vmatpush1.msra.mxu0 0.0
    %3446 = vmatprep.subr.mxu0 0.0
    %3447 = vmatpush1.msra.mxu0 0.0
    %3448 = vmatprep.subr.mxu0 0.0
    %3449 = vmatpush1.msra.mxu0 0.0
    %3450 = vmatprep.subr.mxu0 0.0
    %3451 = vmatpush1.msra.mxu0 0.0
    %3452 = vmatprep.subr.mxu0 0.0
    %3453 = vmatpush1.msra.mxu0 0.0
    %3454 = vmatprep.subr.mxu0 0.0
    %3455 = vmatpush1.msra.mxu0 0.0
    %3456 = vmatprep.subr.mxu0 0.0
    %3457 = vmatpush1.msra.mxu0 0.0
    %3458 = vmatprep.subr.mxu0 0.0
    %3459 = vmatpush1.msra.mxu0 0.0
    %3460 = vmatprep.subr.mxu0 0.0
    %3461 = vmatpush1.msra.mxu0 0.0
    %3462 = vmatprep.subr.mxu0 0.0
    %3463 = vmatpush1.msra.mxu0 0.0
    %3464 = vmatprep.subr.mxu0 0.0
    %3465 = vmatpush1.msra.mxu0 0.0
    %3466 = vmatprep.subr.mxu0 0.0
    %3467 = vmatpush1.msra.mxu0 0.0
    %3468 = vmatprep.subr.mxu0 0.0
    %3469 = vmatpush1.msra.mxu0 0.0
    %3470 = vmatprep.subr.mxu0 0.0
    %3471 = vmatpush1.msra.mxu0 0.0
    %3472 = vmatprep.subr.mxu0 0.0
    %3473 = vmatpush1.msra.mxu0 0.0
    %3474 = vmatprep.subr.mxu0 0.0
    %3475 = vmatpush1.msra.mxu0 0.0
    %3476 = vmatprep.subr.mxu0 0.0
    %3477 = vmatpush1.msra.mxu0 0.0
    %3478 = vmatprep.mubr.f32.mxu0 0.0
    %3479 = vmatmul.mubr.f32.gmra.mrb[0].mxu0 %v3412
    %v3480 = vpop.f32.mrb[0].mxu0
    %v3481 = vadd.f32 0.0, %v3480
    %v3482 = vpop.f32.mrb[0].mxu0
    %3483 = vdwg.mxu0
    %3484 = vrot.lane.b32.xlu0 %v2369, 112
    %v3485 = vpop.permute.xlu0 %3484
    %3486 = vrot.lane.b32.xlu0 %v2374, 112
    %v3487 = vpop.permute.xlu0 %3486
    %v3491 = vsel %vm2540, %v3404, 0
    %3493 = vmatprep.subr.mxu0 0.0
    %3494 = vmatpush1.msra.mxu0 %v3485
    %3495 = vmatprep.subr.mxu0 0.0
    %3496 = vmatpush1.msra.mxu0 %v3487
    %3497 = vmatprep.subr.mxu0 0.0
    %3498 = vmatpush1.msra.mxu0 0.0
    %3499 = vmatprep.subr.mxu0 0.0
    %3500 = vmatpush1.msra.mxu0 0.0
    %3501 = vmatprep.subr.mxu0 0.0
    %3502 = vmatpush1.msra.mxu0 0.0
    %3503 = vmatprep.subr.mxu0 0.0
    %3504 = vmatpush1.msra.mxu0 0.0
    %3505 = vmatprep.subr.mxu0 0.0
    %3506 = vmatpush1.msra.mxu0 0.0
    %3507 = vmatprep.subr.mxu0 0.0
    %3508 = vmatpush1.msra.mxu0 0.0
    %3509 = vmatprep.subr.mxu0 0.0
    %3510 = vmatpush1.msra.mxu0 0.0
    %3511 = vmatprep.subr.mxu0 0.0
    %3512 = vmatpush1.msra.mxu0 0.0
    %3513 = vmatprep.subr.mxu0 0.0
    %3514 = vmatpush1.msra.mxu0 0.0
    %3515 = vmatprep.subr.mxu0 0.0
    %3516 = vmatpush1.msra.mxu0 0.0
    %3517 = vmatprep.subr.mxu0 0.0
    %3518 = vmatpush1.msra.mxu0 0.0
    %3519 = vmatprep.subr.mxu0 0.0
    %3520 = vmatpush1.msra.mxu0 0.0
    %3521 = vmatprep.subr.mxu0 0.0
    %3522 = vmatpush1.msra.mxu0 0.0
    %3523 = vmatprep.subr.mxu0 0.0
    %3524 = vmatpush1.msra.mxu0 0.0
    %3525 = vmatprep.subr.mxu0 0.0
    %3526 = vmatpush1.msra.mxu0 0.0
    %3527 = vmatprep.subr.mxu0 0.0
    %3528 = vmatpush1.msra.mxu0 0.0
    %3529 = vmatprep.subr.mxu0 0.0
    %3530 = vmatpush1.msra.mxu0 0.0
    %3531 = vmatprep.subr.mxu0 0.0
    %3532 = vmatpush1.msra.mxu0 0.0
    %3533 = vmatprep.subr.mxu0 0.0
    %3534 = vmatpush1.msra.mxu0 0.0
    %3535 = vmatprep.subr.mxu0 0.0
    %3536 = vmatpush1.msra.mxu0 0.0
    %3537 = vmatprep.subr.mxu0 0.0
    %3538 = vmatpush1.msra.mxu0 0.0
    %3539 = vmatprep.subr.mxu0 0.0
    %3540 = vmatpush1.msra.mxu0 0.0
    %3541 = vmatprep.subr.mxu0 0.0
    %3542 = vmatpush1.msra.mxu0 0.0
    %3543 = vmatprep.subr.mxu0 0.0
    %3544 = vmatpush1.msra.mxu0 0.0
    %3545 = vmatprep.subr.mxu0 0.0
    %3546 = vmatpush1.msra.mxu0 0.0
    %3547 = vmatprep.subr.mxu0 0.0
    %3548 = vmatpush1.msra.mxu0 0.0
    %3549 = vmatprep.subr.mxu0 0.0
    %3550 = vmatpush1.msra.mxu0 0.0
    %3551 = vmatprep.subr.mxu0 0.0
    %3552 = vmatpush1.msra.mxu0 0.0
    %3553 = vmatprep.subr.mxu0 0.0
    %3554 = vmatpush1.msra.mxu0 0.0
    %3555 = vmatprep.subr.mxu0 0.0
    %3556 = vmatpush1.msra.mxu0 0.0
    %3557 = vmatprep.mubr.f32.mxu0 0.0
    %3558 = vmatmul.mubr.f32.gmra.mrb[0].mxu0 %v3491
    %v3559 = vpop.f32.mrb[0].mxu0
    %v3560 = vadd.f32 0.0, %v3559
    %v3561 = vpop.f32.mrb[0].mxu0
    %3562 = vdwg.mxu0
    %v3564 = vsel %vm378, %v3481, 0
    %v3567 = vsel %vm378, %v3560, 0
    %3569 = vmatprep.subr.mxu0 0.0
    %3570 = vmatpush1.msra.mxu0 %v2379
    %3571 = vmatprep.subr.mxu0 0.0
    %3572 = vmatpush1.msra.mxu0 0.0
    %3573 = vmatprep.subr.mxu0 0.0
    %3574 = vmatpush1.msra.mxu0 0.0
    %3575 = vmatprep.subr.mxu0 0.0
    %3576 = vmatpush1.msra.mxu0 0.0
    %3577 = vmatprep.subr.mxu0 0.0
    %3578 = vmatpush1.msra.mxu0 0.0
    %3579 = vmatprep.subr.mxu0 0.0
    %3580 = vmatpush1.msra.mxu0 0.0
    %3581 = vmatprep.subr.mxu0 0.0
    %3582 = vmatpush1.msra.mxu0 0.0
    %3583 = vmatprep.subr.mxu0 0.0
    %3584 = vmatpush1.msra.mxu0 0.0
    %3585 = vmatprep.subr.mxu0 0.0
    %3586 = vmatpush1.msra.mxu0 0.0
    %3587 = vmatprep.subr.mxu0 0.0
    %3588 = vmatpush1.msra.mxu0 0.0
    %3589 = vmatprep.subr.mxu0 0.0
    %3590 = vmatpush1.msra.mxu0 0.0
    %3591 = vmatprep.subr.mxu0 0.0
    %3592 = vmatpush1.msra.mxu0 0.0
    %3593 = vmatprep.subr.mxu0 0.0
    %3594 = vmatpush1.msra.mxu0 0.0
    %3595 = vmatprep.subr.mxu0 0.0
    %3596 = vmatpush1.msra.mxu0 0.0
    %3597 = vmatprep.subr.mxu0 0.0
    %3598 = vmatpush1.msra.mxu0 0.0
    %3599 = vmatprep.subr.mxu0 0.0
    %3600 = vmatpush1.msra.mxu0 0.0
    %3601 = vmatprep.subr.mxu0 0.0
    %3602 = vmatpush1.msra.mxu0 0.0
    %3603 = vmatprep.subr.mxu0 0.0
    %3604 = vmatpush1.msra.mxu0 0.0
    %3605 = vmatprep.subr.mxu0 0.0
    %3606 = vmatpush1.msra.mxu0 0.0
    %3607 = vmatprep.subr.mxu0 0.0
    %3608 = vmatpush1.msra.mxu0 0.0
    %3609 = vmatprep.subr.mxu0 0.0
    %3610 = vmatpush1.msra.mxu0 0.0
    %3611 = vmatprep.subr.mxu0 0.0
    %3612 = vmatpush1.msra.mxu0 0.0
    %3613 = vmatprep.subr.mxu0 0.0
    %3614 = vmatpush1.msra.mxu0 0.0
    %3615 = vmatprep.subr.mxu0 0.0
    %3616 = vmatpush1.msra.mxu0 0.0
    %3617 = vmatprep.subr.mxu0 0.0
    %3618 = vmatpush1.msra.mxu0 0.0
    %3619 = vmatprep.subr.mxu0 0.0
    %3620 = vmatpush1.msra.mxu0 0.0
    %3621 = vmatprep.subr.mxu0 0.0
    %3622 = vmatpush1.msra.mxu0 0.0
    %3623 = vmatprep.subr.mxu0 0.0
    %3624 = vmatpush1.msra.mxu0 0.0
    %3625 = vmatprep.subr.mxu0 0.0
    %3626 = vmatpush1.msra.mxu0 0.0
    %3627 = vmatprep.subr.mxu0 0.0
    %3628 = vmatpush1.msra.mxu0 0.0
    %3629 = vmatprep.subr.mxu0 0.0
    %3630 = vmatpush1.msra.mxu0 0.0
    %3631 = vmatprep.subr.mxu0 0.0
    %3632 = vmatpush1.msra.mxu0 0.0
    %3633 = vmatprep.mubr.f32.mxu0 0.0
    %3634 = vmatmul.mubr.f32.gmra.mrb[0].mxu0 %v3564
    %v3635 = vpop.f32.mrb[0].mxu0
    %v3636 = vadd.f32 0.0, %v3635
    %v3637 = vpop.f32.mrb[0].mxu0
    %3638 = vmatprep.mubr.f32.mxu0 0.0
    %3639 = vmatmul.mubr.f32.gmra.mrb[0].mxu0 %v3567
    %v3640 = vpop.f32.mrb[0].mxu0
    %v3641 = vadd.f32 0.0, %v3640
    %v3642 = vpop.f32.mrb[0].mxu0
    %3643 = vdwg.mxu0
    %v3644 = vadd.f32 %v3211, %v3636
    %v3645 = vadd.f32 %v3216, %v3641
    %3646 = vrot.lane.b32.xlu0 %v2153, 104
    %v3647 = vpop.permute.xlu0 %3646
    %3648 = vrot.lane.b32.xlu0 %v2251, 104
    %v3649 = vpop.permute.xlu0 %3648
    %3650 = vrot.lane.b32.xlu0 %v2256, 104
    %v3651 = vpop.permute.xlu0 %3650
    %v3652 = vsel %vm378, %v3647, 0
    %v3654 = vsel %vm378, %v3649, 0
    %v3656 = vsel %vm378, %v3651, 0
    %3658 = vmatprep.subr.mxu0 0.0
    %3659 = vmatpush1.xpose.msra.mxu0 %v3654
    %3660 = vmatprep.subr.mxu0 0.0
    %3661 = vmatpush1.xpose.msra.mxu0 %v3656
    %3662 = vmatprep.subr.mxu0 0.0
    %3663 = vmatpush1.xpose.msra.mxu0 0.0
    %3664 = vmatprep.subr.mxu0 0.0
    %3665 = vmatpush1.xpose.msra.mxu0 0.0
    %3666 = vmatprep.subr.mxu0 0.0
    %3667 = vmatpush1.xpose.msra.mxu0 0.0
    %3668 = vmatprep.subr.mxu0 0.0
    %3669 = vmatpush1.xpose.msra.mxu0 0.0
    %3670 = vmatprep.subr.mxu0 0.0
    %3671 = vmatpush1.xpose.msra.mxu0 0.0
    %3672 = vmatprep.subr.mxu0 0.0
    %3673 = vmatpush1.xpose.msra.mxu0 0.0
    %3674 = vmatprep.subr.mxu0 0.0
    %3675 = vmatpush1.xpose.msra.mxu0 0.0
    %3676 = vmatprep.subr.mxu0 0.0
    %3677 = vmatpush1.xpose.msra.mxu0 0.0
    %3678 = vmatprep.subr.mxu0 0.0
    %3679 = vmatpush1.xpose.msra.mxu0 0.0
    %3680 = vmatprep.subr.mxu0 0.0
    %3681 = vmatpush1.xpose.msra.mxu0 0.0
    %3682 = vmatprep.subr.mxu0 0.0
    %3683 = vmatpush1.xpose.msra.mxu0 0.0
    %3684 = vmatprep.subr.mxu0 0.0
    %3685 = vmatpush1.xpose.msra.mxu0 0.0
    %3686 = vmatprep.subr.mxu0 0.0
    %3687 = vmatpush1.xpose.msra.mxu0 0.0
    %3688 = vmatprep.subr.mxu0 0.0
    %3689 = vmatpush1.xpose.msra.mxu0 0.0
    %3690 = vmatprep.subr.mxu0 0.0
    %3691 = vmatpush1.xpose.msra.mxu0 0.0
    %3692 = vmatprep.subr.mxu0 0.0
    %3693 = vmatpush1.xpose.msra.mxu0 0.0
    %3694 = vmatprep.subr.mxu0 0.0
    %3695 = vmatpush1.xpose.msra.mxu0 0.0
    %3696 = vmatprep.subr.mxu0 0.0
    %3697 = vmatpush1.xpose.msra.mxu0 0.0
    %3698 = vmatprep.subr.mxu0 0.0
    %3699 = vmatpush1.xpose.msra.mxu0 0.0
    %3700 = vmatprep.subr.mxu0 0.0
    %3701 = vmatpush1.xpose.msra.mxu0 0.0
    %3702 = vmatprep.subr.mxu0 0.0
    %3703 = vmatpush1.xpose.msra.mxu0 0.0
    %3704 = vmatprep.subr.mxu0 0.0
    %3705 = vmatpush1.xpose.msra.mxu0 0.0
    %3706 = vmatprep.subr.mxu0 0.0
    %3707 = vmatpush1.xpose.msra.mxu0 0.0
    %3708 = vmatprep.subr.mxu0 0.0
    %3709 = vmatpush1.xpose.msra.mxu0 0.0
    %3710 = vmatprep.subr.mxu0 0.0
    %3711 = vmatpush1.xpose.msra.mxu0 0.0
    %3712 = vmatprep.subr.mxu0 0.0
    %3713 = vmatpush1.xpose.msra.mxu0 0.0
    %3714 = vmatprep.subr.mxu0 0.0
    %3715 = vmatpush1.xpose.msra.mxu0 0.0
    %3716 = vmatprep.subr.mxu0 0.0
    %3717 = vmatpush1.xpose.msra.mxu0 0.0
    %3718 = vmatprep.subr.mxu0 0.0
    %3719 = vmatpush1.xpose.msra.mxu0 0.0
    %3720 = vmatprep.subr.mxu0 0.0
    %3721 = vmatpush1.xpose.msra.mxu0 0.0
    %3722 = vmatprep.mubr.f32.mxu0 0.0
    %3723 = vmatmul.mubr.f32.gmra.mrb[0].mxu0 %v3652
    %v3724 = vpop.f32.mrb[0].mxu0
    %v3725 = vadd.f32 0.0, %v3724
    %v3726 = vpop.f32.mrb[0].mxu0
    %3727 = vdwg.mxu0
    %3728 = vrot.lane.b32.xlu0 %v2158, 104
    %v3729 = vpop.permute.xlu0 %3728
    %3730 = vrot.lane.b32.xlu0 %v2261, 104
    %v3731 = vpop.permute.xlu0 %3730
    %3732 = vrot.lane.b32.xlu0 %v2266, 104
    %v3733 = vpop.permute.xlu0 %3732
    %v3734 = vsel %vm378, %v3729, 0
    %v3736 = vsel %vm378, %v3731, 0
    %v3738 = vsel %vm378, %v3733, 0
    %3740 = vmatprep.subr.mxu0 0.0
    %3741 = vmatpush1.xpose.msra.mxu0 %v3736
    %3742 = vmatprep.subr.mxu0 0.0
    %3743 = vmatpush1.xpose.msra.mxu0 %v3738
    %3744 = vmatprep.subr.mxu0 0.0
    %3745 = vmatpush1.xpose.msra.mxu0 0.0
    %3746 = vmatprep.subr.mxu0 0.0
    %3747 = vmatpush1.xpose.msra.mxu0 0.0
    %3748 = vmatprep.subr.mxu0 0.0
    %3749 = vmatpush1.xpose.msra.mxu0 0.0
    %3750 = vmatprep.subr.mxu0 0.0
    %3751 = vmatpush1.xpose.msra.mxu0 0.0
    %3752 = vmatprep.subr.mxu0 0.0
    %3753 = vmatpush1.xpose.msra.mxu0 0.0
    %3754 = vmatprep.subr.mxu0 0.0
    %3755 = vmatpush1.xpose.msra.mxu0 0.0
    %3756 = vmatprep.subr.mxu0 0.0
    %3757 = vmatpush1.xpose.msra.mxu0 0.0
    %3758 = vmatprep.subr.mxu0 0.0
    %3759 = vmatpush1.xpose.msra.mxu0 0.0
    %3760 = vmatprep.subr.mxu0 0.0
    %3761 = vmatpush1.xpose.msra.mxu0 0.0
    %3762 = vmatprep.subr.mxu0 0.0
    %3763 = vmatpush1.xpose.msra.mxu0 0.0
    %3764 = vmatprep.subr.mxu0 0.0
    %3765 = vmatpush1.xpose.msra.mxu0 0.0
    %3766 = vmatprep.subr.mxu0 0.0
    %3767 = vmatpush1.xpose.msra.mxu0 0.0
    %3768 = vmatprep.subr.mxu0 0.0
    %3769 = vmatpush1.xpose.msra.mxu0 0.0
    %3770 = vmatprep.subr.mxu0 0.0
    %3771 = vmatpush1.xpose.msra.mxu0 0.0
    %3772 = vmatprep.subr.mxu0 0.0
    %3773 = vmatpush1.xpose.msra.mxu0 0.0
    %3774 = vmatprep.subr.mxu0 0.0
    %3775 = vmatpush1.xpose.msra.mxu0 0.0
    %3776 = vmatprep.subr.mxu0 0.0
    %3777 = vmatpush1.xpose.msra.mxu0 0.0
    %3778 = vmatprep.subr.mxu0 0.0
    %3779 = vmatpush1.xpose.msra.mxu0 0.0
    %3780 = vmatprep.subr.mxu0 0.0
    %3781 = vmatpush1.xpose.msra.mxu0 0.0
    %3782 = vmatprep.subr.mxu0 0.0
    %3783 = vmatpush1.xpose.msra.mxu0 0.0
    %3784 = vmatprep.subr.mxu0 0.0
    %3785 = vmatpush1.xpose.msra.mxu0 0.0
    %3786 = vmatprep.subr.mxu0 0.0
    %3787 = vmatpush1.xpose.msra.mxu0 0.0
    %3788 = vmatprep.subr.mxu0 0.0
    %3789 = vmatpush1.xpose.msra.mxu0 0.0
    %3790 = vmatprep.subr.mxu0 0.0
    %3791 = vmatpush1.xpose.msra.mxu0 0.0
    %3792 = vmatprep.subr.mxu0 0.0
    %3793 = vmatpush1.xpose.msra.mxu0 0.0
    %3794 = vmatprep.subr.mxu0 0.0
    %3795 = vmatpush1.xpose.msra.mxu0 0.0
    %3796 = vmatprep.subr.mxu0 0.0
    %3797 = vmatpush1.xpose.msra.mxu0 0.0
    %3798 = vmatprep.subr.mxu0 0.0
    %3799 = vmatpush1.xpose.msra.mxu0 0.0
    %3800 = vmatprep.subr.mxu0 0.0
    %3801 = vmatpush1.xpose.msra.mxu0 0.0
    %3802 = vmatprep.subr.mxu0 0.0
    %3803 = vmatpush1.xpose.msra.mxu0 0.0
    %3804 = vmatprep.mubr.f32.mxu0 0.0
    %3805 = vmatmul.mubr.f32.gmra.mrb[0].mxu0 %v3734
    %v3806 = vpop.f32.mrb[0].mxu0
    %v3807 = vadd.f32 0.0, %v3806
    %v3808 = vpop.f32.mrb[0].mxu0
    %3809 = vdwg.mxu0
    %v3810 = vsel %vm2540, %v3725, -inf
    %3811 = vmax.xlane.f32.xlu0 %v3810
    %v3812 = vpop.xlane.xlu0 %3811
    %v3813 = vsel %vm2540, %v3807, -inf
    %3814 = vmax.xlane.f32.xlu0 %v3813
    %v3815 = vpop.xlane.xlu0 %3814
    %v3816 = vsub.f32 %v3725, %v3812
    %v3817 = vsub.f32 %v3807, %v3815
    %v3818 = vmul.f32 %v3816, 1.442695
    %v3819 = vpow.pop %v3818
    %v3820 = vmul.f32 %v3817, 1.442695
    %v3821 = vpow.pop %v3820
    %v3822 = vsel %vm2540, %v3819, 0.0
    %3823 = vadd.xlane.f32.xlu0 %v3822
    %v3824 = vpop.xlane.xlu0 %3823
    %v3825 = vsel %vm2540, %v3821, 0.0
    %3826 = vadd.xlane.f32.xlu0 %v3825
    %v3827 = vpop.xlane.xlu0 %3826
    %v3828 = vrcp.pop %v3824
    %v3829 = vrcp.pop %v3827
    %v3830 = vmul.f32 %v3819, %v3828
    %v3831 = vmul.f32 %v3821, %v3829
    %3832 = vrot.lane.b32.xlu0 %v2359, 104
    %v3833 = vpop.permute.xlu0 %3832
    %3834 = vrot.lane.b32.xlu0 %v2364, 104
    %v3835 = vpop.permute.xlu0 %3834
    %v3839 = vsel %vm2540, %v3830, 0
    %3841 = vmatprep.subr.mxu0 0.0
    %3842 = vmatpush1.msra.mxu0 %v3833
    %3843 = vmatprep.subr.mxu0 0.0
    %3844 = vmatpush1.msra.mxu0 %v3835
    %3845 = vmatprep.subr.mxu0 0.0
    %3846 = vmatpush1.msra.mxu0 0.0
    %3847 = vmatprep.subr.mxu0 0.0
    %3848 = vmatpush1.msra.mxu0 0.0
    %3849 = vmatprep.subr.mxu0 0.0
    %3850 = vmatpush1.msra.mxu0 0.0
    %3851 = vmatprep.subr.mxu0 0.0
    %3852 = vmatpush1.msra.mxu0 0.0
    %3853 = vmatprep.subr.mxu0 0.0
    %3854 = vmatpush1.msra.mxu0 0.0
    %3855 = vmatprep.subr.mxu0 0.0
    %3856 = vmatpush1.msra.mxu0 0.0
    %3857 = vmatprep.subr.mxu0 0.0
    %3858 = vmatpush1.msra.mxu0 0.0
    %3859 = vmatprep.subr.mxu0 0.0
    %3860 = vmatpush1.msra.mxu0 0.0
    %3861 = vmatprep.subr.mxu0 0.0
    %3862 = vmatpush1.msra.mxu0 0.0
    %3863 = vmatprep.subr.mxu0 0.0
    %3864 = vmatpush1.msra.mxu0 0.0
    %3865 = vmatprep.subr.mxu0 0.0
    %3866 = vmatpush1.msra.mxu0 0.0
    %3867 = vmatprep.subr.mxu0 0.0
    %3868 = vmatpush1.msra.mxu0 0.0
    %3869 = vmatprep.subr.mxu0 0.0
    %3870 = vmatpush1.msra.mxu0 0.0
    %3871 = vmatprep.subr.mxu0 0.0
    %3872 = vmatpush1.msra.mxu0 0.0
    %3873 = vmatprep.subr.mxu0 0.0
    %3874 = vmatpush1.msra.mxu0 0.0
    %3875 = vmatprep.subr.mxu0 0.0
    %3876 = vmatpush1.msra.mxu0 0.0
    %3877 = vmatprep.subr.mxu0 0.0
    %3878 = vmatpush1.msra.mxu0 0.0
    %3879 = vmatprep.subr.mxu0 0.0
    %3880 = vmatpush1.msra.mxu0 0.0
    %3881 = vmatprep.subr.mxu0 0.0
    %3882 = vmatpush1.msra.mxu0 0.0
    %3883 = vmatprep.subr.mxu0 0.0
    %3884 = vmatpush1.msra.mxu0 0.0
    %3885 = vmatprep.subr.mxu0 0.0
    %3886 = vmatpush1.msra.mxu0 0.0
    %3887 = vmatprep.subr.mxu0 0.0
    %3888 = vmatpush1.msra.mxu0 0.0
    %3889 = vmatprep.subr.mxu0 0.0
    %3890 = vmatpush1.msra.mxu0 0.0
    %3891 = vmatprep.subr.mxu0 0.0
    %3892 = vmatpush1.msra.mxu0 0.0
    %3893 = vmatprep.subr.mxu0 0.0
    %3894 = vmatpush1.msra.mxu0 0.0
    %3895 = vmatprep.subr.mxu0 0.0
    %3896 = vmatpush1.msra.mxu0 0.0
    %3897 = vmatprep.subr.mxu0 0.0
    %3898 = vmatpush1.msra.mxu0 0.0
    %3899 = vmatprep.subr.mxu0 0.0
    %3900 = vmatpush1.msra.mxu0 0.0
    %3901 = vmatprep.subr.mxu0 0.0
    %3902 = vmatpush1.msra.mxu0 0.0
    %3903 = vmatprep.subr.mxu0 0.0
    %3904 = vmatpush1.msra.mxu0 0.0
    %3905 = vmatprep.mubr.f32.mxu0 0.0
    %3906 = vmatmul.mubr.f32.gmra.mrb[0].mxu0 %v3839
    %v3907 = vpop.f32.mrb[0].mxu0
    %v3908 = vadd.f32 0.0, %v3907
    %v3909 = vpop.f32.mrb[0].mxu0
    %3910 = vdwg.mxu0
    %3911 = vrot.lane.b32.xlu0 %v2369, 104
    %v3912 = vpop.permute.xlu0 %3911
    %3913 = vrot.lane.b32.xlu0 %v2374, 104
    %v3914 = vpop.permute.xlu0 %3913
    %v3918 = vsel %vm2540, %v3831, 0
    %3920 = vmatprep.subr.mxu0 0.0
    %3921 = vmatpush1.msra.mxu0 %v3912
    %3922 = vmatprep.subr.mxu0 0.0
    %3923 = vmatpush1.msra.mxu0 %v3914
    %3924 = vmatprep.subr.mxu0 0.0
    %3925 = vmatpush1.msra.mxu0 0.0
    %3926 = vmatprep.subr.mxu0 0.0
    %3927 = vmatpush1.msra.mxu0 0.0
    %3928 = vmatprep.subr.mxu0 0.0
    %3929 = vmatpush1.msra.mxu0 0.0
    %3930 = vmatprep.subr.mxu0 0.0
    %3931 = vmatpush1.msra.mxu0 0.0
    %3932 = vmatprep.subr.mxu0 0.0
    %3933 = vmatpush1.msra.mxu0 0.0
    %3934 = vmatprep.subr.mxu0 0.0
    %3935 = vmatpush1.msra.mxu0 0.0
    %3936 = vmatprep.subr.mxu0 0.0
    %3937 = vmatpush1.msra.mxu0 0.0
    %3938 = vmatprep.subr.mxu0 0.0
    %3939 = vmatpush1.msra.mxu0 0.0
    %3940 = vmatprep.subr.mxu0 0.0
    %3941 = vmatpush1.msra.mxu0 0.0
    %3942 = vmatprep.subr.mxu0 0.0
    %3943 = vmatpush1.msra.mxu0 0.0
    %3944 = vmatprep.subr.mxu0 0.0
    %3945 = vmatpush1.msra.mxu0 0.0
    %3946 = vmatprep.subr.mxu0 0.0
    %3947 = vmatpush1.msra.mxu0 0.0
    %3948 = vmatprep.subr.mxu0 0.0
    %3949 = vmatpush1.msra.mxu0 0.0
    %3950 = vmatprep.subr.mxu0 0.0
    %3951 = vmatpush1.msra.mxu0 0.0
    %3952 = vmatprep.subr.mxu0 0.0
    %3953 = vmatpush1.msra.mxu0 0.0
    %3954 = vmatprep.subr.mxu0 0.0
    %3955 = vmatpush1.msra.mxu0 0.0
    %3956 = vmatprep.subr.mxu0 0.0
    %3957 = vmatpush1.msra.mxu0 0.0
    %3958 = vmatprep.subr.mxu0 0.0
    %3959 = vmatpush1.msra.mxu0 0.0
    %3960 = vmatprep.subr.mxu0 0.0
    %3961 = vmatpush1.msra.mxu0 0.0
    %3962 = vmatprep.subr.mxu0 0.0
    %3963 = vmatpush1.msra.mxu0 0.0
    %3964 = vmatprep.subr.mxu0 0.0
    %3965 = vmatpush1.msra.mxu0 0.0
    %3966 = vmatprep.subr.mxu0 0.0
    %3967 = vmatpush1.msra.mxu0 0.0
    %3968 = vmatprep.subr.mxu0 0.0
    %3969 = vmatpush1.msra.mxu0 0.0
    %3970 = vmatprep.subr.mxu0 0.0
    %3971 = vmatpush1.msra.mxu0 0.0
    %3972 = vmatprep.subr.mxu0 0.0
    %3973 = vmatpush1.msra.mxu0 0.0
    %3974 = vmatprep.subr.mxu0 0.0
    %3975 = vmatpush1.msra.mxu0 0.0
    %3976 = vmatprep.subr.mxu0 0.0
    %3977 = vmatpush1.msra.mxu0 0.0
    %3978 = vmatprep.subr.mxu0 0.0
    %3979 = vmatpush1.msra.mxu0 0.0
    %3980 = vmatprep.subr.mxu0 0.0
    %3981 = vmatpush1.msra.mxu0 0.0
    %3982 = vmatprep.subr.mxu0 0.0
    %3983 = vmatpush1.msra.mxu0 0.0
    %3984 = vmatprep.mubr.f32.mxu0 0.0
    %3985 = vmatmul.mubr.f32.gmra.mrb[0].mxu0 %v3918
    %v3986 = vpop.f32.mrb[0].mxu0
    %v3987 = vadd.f32 0.0, %v3986
    %v3988 = vpop.f32.mrb[0].mxu0
    %3989 = vdwg.mxu0
    %v3991 = vsel %vm378, %v3908, 0
    %v3994 = vsel %vm378, %v3987, 0
    %3996 = vmatprep.subr.mxu0 0.0
    %3997 = vmatpush1.msra.mxu0 %v2380
    %3998 = vmatprep.subr.mxu0 0.0
    %3999 = vmatpush1.msra.mxu0 0.0
    %4000 = vmatprep.subr.mxu0 0.0
    %4001 = vmatpush1.msra.mxu0 0.0
    %4002 = vmatprep.subr.mxu0 0.0
    %4003 = vmatpush1.msra.mxu0 0.0
    %4004 = vmatprep.subr.mxu0 0.0
    %4005 = vmatpush1.msra.mxu0 0.0
    %4006 = vmatprep.subr.mxu0 0.0
    %4007 = vmatpush1.msra.mxu0 0.0
    %4008 = vmatprep.subr.mxu0 0.0
    %4009 = vmatpush1.msra.mxu0 0.0
    %4010 = vmatprep.subr.mxu0 0.0
    %4011 = vmatpush1.msra.mxu0 0.0
    %4012 = vmatprep.subr.mxu0 0.0
    %4013 = vmatpush1.msra.mxu0 0.0
    %4014 = vmatprep.subr.mxu0 0.0
    %4015 = vmatpush1.msra.mxu0 0.0
    %4016 = vmatprep.subr.mxu0 0.0
    %4017 = vmatpush1.msra.mxu0 0.0
    %4018 = vmatprep.subr.mxu0 0.0
    %4019 = vmatpush1.msra.mxu0 0.0
    %4020 = vmatprep.subr.mxu0 0.0
    %4021 = vmatpush1.msra.mxu0 0.0
    %4022 = vmatprep.subr.mxu0 0.0
    %4023 = vmatpush1.msra.mxu0 0.0
    %4024 = vmatprep.subr.mxu0 0.0
    %4025 = vmatpush1.msra.mxu0 0.0
    %4026 = vmatprep.subr.mxu0 0.0
    %4027 = vmatpush1.msra.mxu0 0.0
    %4028 = vmatprep.subr.mxu0 0.0
    %4029 = vmatpush1.msra.mxu0 0.0
    %4030 = vmatprep.subr.mxu0 0.0
    %4031 = vmatpush1.msra.mxu0 0.0
    %4032 = vmatprep.subr.mxu0 0.0
    %4033 = vmatpush1.msra.mxu0 0.0
    %4034 = vmatprep.subr.mxu0 0.0
    %4035 = vmatpush1.msra.mxu0 0.0
    %4036 = vmatprep.subr.mxu0 0.0
    %4037 = vmatpush1.msra.mxu0 0.0
    %4038 = vmatprep.subr.mxu0 0.0
    %4039 = vmatpush1.msra.mxu0 0.0
    %4040 = vmatprep.subr.mxu0 0.0
    %4041 = vmatpush1.msra.mxu0 0.0
    %4042 = vmatprep.subr.mxu0 0.0
    %4043 = vmatpush1.msra.mxu0 0.0
    %4044 = vmatprep.subr.mxu0 0.0
    %4045 = vmatpush1.msra.mxu0 0.0
    %4046 = vmatprep.subr.mxu0 0.0
    %4047 = vmatpush1.msra.mxu0 0.0
    %4048 = vmatprep.subr.mxu0 0.0
    %4049 = vmatpush1.msra.mxu0 0.0
    %4050 = vmatprep.subr.mxu0 0.0
    %4051 = vmatpush1.msra.mxu0 0.0
    %4052 = vmatprep.subr.mxu0 0.0
    %4053 = vmatpush1.msra.mxu0 0.0
    %4054 = vmatprep.subr.mxu0 0.0
    %4055 = vmatpush1.msra.mxu0 0.0
    %4056 = vmatprep.subr.mxu0 0.0
    %4057 = vmatpush1.msra.mxu0 0.0
    %4058 = vmatprep.subr.mxu0 0.0
    %4059 = vmatpush1.msra.mxu0 0.0
    %4060 = vmatprep.mubr.f32.mxu0 0.0
    %4061 = vmatmul.mubr.f32.gmra.mrb[0].mxu0 %v3991
    %v4062 = vpop.f32.mrb[0].mxu0
    %v4063 = vadd.f32 0.0, %v4062
    %v4064 = vpop.f32.mrb[0].mxu0
    %4065 = vmatprep.mubr.f32.mxu0 0.0
    %4066 = vmatmul.mubr.f32.gmra.mrb[0].mxu0 %v3994
    %v4067 = vpop.f32.mrb[0].mxu0
    %v4068 = vadd.f32 0.0, %v4067
    %v4069 = vpop.f32.mrb[0].mxu0
    %4070 = vdwg.mxu0
    %v4071 = vadd.f32 %v3644, %v4063
    %v4072 = vadd.f32 %v3645, %v4068
    %v4074 = vlaneseq
    %v4075 = vshrl.u32 %v4074, 7
    %v4076 = vsub.s32 0, %v4075
    %v4077 = vrot.slane %v2381, %v4076
    %v4079 = vadd.f32 %v4071, %v4077
    %v4080 = vadd.f32 %v4072, %v4077
    %v4081 = vadd.f32 %v2065, %v4079
    %v4082 = vadd.f32 %v2066, %v4080
    %v4083 = vsel %vm196, %v4081, 0.0
    %4084 = vadd.xlane.f32.xlu0 %v4083
    %v4085 = vpop.xlane.xlu0 %4084
    %v4086 = vsel %vm196, %v4082, 0.0
    %4087 = vadd.xlane.f32.xlu0 %v4086
    %v4088 = vpop.xlane.xlu0 %4087
    %v4089 = vmul.f32 %v4085, %v2034
    %v4090 = vmul.f32 %v4088, %v2034
    %v4091 = vsub.f32 %v4081, %v4089
    %v4092 = vsub.f32 %v4082, %v4090
    %v4093 = vmul.f32 %v4091, %v4091
    %v4094 = vmul.f32 %v4092, %v4092
    %v4095 = vsel %vm196, %v4093, 0.0
    %4096 = vadd.xlane.f32.xlu0 %v4095
    %v4097 = vpop.xlane.xlu0 %4096
    %v4098 = vsel %vm196, %v4094, 0.0
    %4099 = vadd.xlane.f32.xlu0 %v4098
    %v4100 = vpop.xlane.xlu0 %4099
    %v4101 = vmul.f32 %v4097, %v2034
    %v4102 = vmul.f32 %v4100, %v2034
    %v4103 = vadd.f32 %v4101, 1e-05
    %v4104 = vadd.f32 %v4102, 1e-05
    %v4105 = vrsqrt.pop %v4103
    %v4106 = vrsqrt.pop %v4104
    %v4107 = vmul.f32 %v4091, %v4105
    %v4108 = vmul.f32 %v4092, %v4106
    %v4109 = vlaneseq
    %v4110 = vshrl.u32 %v4109, 7
    %v4111 = vsub.s32 1, %v4110
    %v4112 = vrot.slane %v181, %v4111
    %v4113 = vmul.f32 %v4107, %v4112
    %v4114 = vmul.f32 %v4108, %v4112
    %v4115 = vlaneseq
    %v4116 = vshrl.u32 %v4115, 7
    %v4117 = vsub.s32 1, %v4116
    %v4118 = vrot.slane %v182, %v4117
    %v4119 = vadd.f32 %v4113, %v4118
    %v4120 = vadd.f32 %v4114, %v4118
    %v4121 = vld [vmem:[#allocation10] sm:$0xff]
    %v4122 = vld [vmem:[#allocation10 + $0x8] sm:$0xff]
    %v4123 = vld [vmem:[#allocation10 + $0x10] sm:$0xff]
    %v4124 = vld [vmem:[#allocation10 + $0x18] sm:$0xff]
    %v4125 = vld [vmem:[%s19] sm:$0x1]
    %v4127 = vlaneseq
    %v4128 = vshrl.u32 %v4127, 7
    %v4129 = vsub.s32 0, %v4128
    %v4130 = vrot.slane %v4125, %v4129
    %v4133 = vsel %vm196, %v4119, 0
    %v4136 = vsel %vm196, %v4120, 0
    %4138 = vmatprep.subr.mxu0 0.0
    %4139 = vmatpush1.msra.mxu0 %v4121
    %4140 = vmatprep.subr.mxu0 0.0
    %4141 = vmatpush1.msra.mxu0 %v4122
    %4142 = vmatprep.subr.mxu0 0.0
    %4143 = vmatpush1.msra.mxu0 %v4123
    %4144 = vmatprep.subr.mxu0 0.0
    %4145 = vmatpush1.msra.mxu0 %v4124
    %4146 = vmatprep.subr.mxu0 0.0
    %4147 = vmatpush1.msra.mxu0 0.0
    %4148 = vmatprep.subr.mxu0 0.0
    %4149 = vmatpush1.msra.mxu0 0.0
    %4150 = vmatprep.subr.mxu0 0.0
    %4151 = vmatpush1.msra.mxu0 0.0
    %4152 = vmatprep.subr.mxu0 0.0
    %4153 = vmatpush1.msra.mxu0 0.0
    %4154 = vmatprep.subr.mxu0 0.0
    %4155 = vmatpush1.msra.mxu0 0.0
    %4156 = vmatprep.subr.mxu0 0.0
    %4157 = vmatpush1.msra.mxu0 0.0
    %4158 = vmatprep.subr.mxu0 0.0
    %4159 = vmatpush1.msra.mxu0 0.0
    %4160 = vmatprep.subr.mxu0 0.0
    %4161 = vmatpush1.msra.mxu0 0.0
    %4162 = vmatprep.subr.mxu0 0.0
    %4163 = vmatpush1.msra.mxu0 0.0
    %4164 = vmatprep.subr.mxu0 0.0
    %4165 = vmatpush1.msra.mxu0 0.0
    %4166 = vmatprep.subr.mxu0 0.0
    %4167 = vmatpush1.msra.mxu0 0.0
    %4168 = vmatprep.subr.mxu0 0.0
    %4169 = vmatpush1.msra.mxu0 0.0
    %4170 = vmatprep.subr.mxu0 0.0
    %4171 = vmatpush1.msra.mxu0 0.0
    %4172 = vmatprep.subr.mxu0 0.0
    %4173 = vmatpush1.msra.mxu0 0.0
    %4174 = vmatprep.subr.mxu0 0.0
    %4175 = vmatpush1.msra.mxu0 0.0
    %4176 = vmatprep.subr.mxu0 0.0
    %4177 = vmatpush1.msra.mxu0 0.0
    %4178 = vmatprep.subr.mxu0 0.0
    %4179 = vmatpush1.msra.mxu0 0.0
    %4180 = vmatprep.subr.mxu0 0.0
    %4181 = vmatpush1.msra.mxu0 0.0
    %4182 = vmatprep.subr.mxu0 0.0
    %4183 = vmatpush1.msra.mxu0 0.0
    %4184 = vmatprep.subr.mxu0 0.0
    %4185 = vmatpush1.msra.mxu0 0.0
    %4186 = vmatprep.subr.mxu0 0.0
    %4187 = vmatpush1.msra.mxu0 0.0
    %4188 = vmatprep.subr.mxu0 0.0
    %4189 = vmatpush1.msra.mxu0 0.0
    %4190 = vmatprep.subr.mxu0 0.0
    %4191 = vmatpush1.msra.mxu0 0.0
    %4192 = vmatprep.subr.mxu0 0.0
    %4193 = vmatpush1.msra.mxu0 0.0
    %4194 = vmatprep.subr.mxu0 0.0
    %4195 = vmatpush1.msra.mxu0 0.0
    %4196 = vmatprep.subr.mxu0 0.0
    %4197 = vmatpush1.msra.mxu0 0.0
    %4198 = vmatprep.subr.mxu0 0.0
    %4199 = vmatpush1.msra.mxu0 0.0
    %4200 = vmatprep.subr.mxu0 0.0
    %4201 = vmatpush1.msra.mxu0 0.0
    %4202 = vmatprep.mubr.f32.mxu0 0.0
    %4203 = vmatmul.mubr.f32.gmra.mrb[0].mxu0 %v4133
    %v4204 = vpop.f32.mrb[0].mxu0
    %v4205 = vadd.f32 %v4130, %v4204
    %v4206 = vpop.f32.mrb[0].mxu0
    %4207 = vmatprep.mubr.f32.mxu0 0.0
    %4208 = vmatmul.mubr.f32.gmra.mrb[0].mxu0 %v4136
    %v4209 = vpop.f32.mrb[0].mxu0
    %v4210 = vadd.f32 %v4130, %v4209
    %v4211 = vpop.f32.mrb[0].mxu0
    %4212 = vdwg.mxu0
    %v4213 = vmax.f32 %v4205, 0.0
    %v4214 = vmax.f32 %v4210, 0.0
    %v4215 = vld [vmem:[%s20] sm:$0xff]
    %v4216 = vld [vmem:[%s20 + $0x8] sm:$0xff]
    %v4217 = vld [vmem:[%s20 + $0x10] sm:$0xff]
    %v4218 = vld [vmem:[%s20 + $0x18] sm:$0xff]
    %v4219 = vld [vmem:[%s20 + $0x20] sm:$0xff]
    %v4220 = vld [vmem:[%s20 + $0x28] sm:$0xff]
    %v4221 = vld [vmem:[%s20 + $0x30] sm:$0xff]
    %v4222 = vld [vmem:[%s20 + $0x38] sm:$0xff]
    %v4223 = vld [vmem:[%s21] sm:$0x1]
    %v4225 = vlaneseq
    %v4226 = vshrl.u32 %v4225, 7
    %v4227 = vsub.s32 0, %v4226
    %v4228 = vrot.slane %v4223, %v4227
    %vm4230 = vcmask 523264
    %v4232 = vsel %vm4230, %v4213, 0
    %v4235 = vsel %vm4230, %v4214, 0
    %4237 = vmatprep.subr.mxu0 0.0
    %4238 = vmatpush1.msra.mxu0 %v4215
    %4239 = vmatprep.subr.mxu0 0.0
    %4240 = vmatpush1.msra.mxu0 %v4216
    %4241 = vmatprep.subr.mxu0 0.0
    %4242 = vmatpush1.msra.mxu0 %v4217
    %4243 = vmatprep.subr.mxu0 0.0
    %4244 = vmatpush1.msra.mxu0 %v4218
    %4245 = vmatprep.subr.mxu0 0.0
    %4246 = vmatpush1.msra.mxu0 %v4219
    %4247 = vmatprep.subr.mxu0 0.0
    %4248 = vmatpush1.msra.mxu0 %v4220
    %4249 = vmatprep.subr.mxu0 0.0
    %4250 = vmatpush1.msra.mxu0 %v4221
    %4251 = vmatprep.subr.mxu0 0.0
    %4252 = vmatpush1.msra.mxu0 %v4222
    %4253 = vmatprep.subr.mxu0 0.0
    %4254 = vmatpush1.msra.mxu0 0.0
    %4255 = vmatprep.subr.mxu0 0.0
    %4256 = vmatpush1.msra.mxu0 0.0
    %4257 = vmatprep.subr.mxu0 0.0
    %4258 = vmatpush1.msra.mxu0 0.0
    %4259 = vmatprep.subr.mxu0 0.0
    %4260 = vmatpush1.msra.mxu0 0.0
    %4261 = vmatprep.subr.mxu0 0.0
    %4262 = vmatpush1.msra.mxu0 0.0
    %4263 = vmatprep.subr.mxu0 0.0
    %4264 = vmatpush1.msra.mxu0 0.0
    %4265 = vmatprep.subr.mxu0 0.0
    %4266 = vmatpush1.msra.mxu0 0.0
    %4267 = vmatprep.subr.mxu0 0.0
    %4268 = vmatpush1.msra.mxu0 0.0
    %4269 = vmatprep.subr.mxu0 0.0
    %4270 = vmatpush1.msra.mxu0 0.0
    %4271 = vmatprep.subr.mxu0 0.0
    %4272 = vmatpush1.msra.mxu0 0.0
    %4273 = vmatprep.subr.mxu0 0.0
    %4274 = vmatpush1.msra.mxu0 0.0
    %4275 = vmatprep.subr.mxu0 0.0
    %4276 = vmatpush1.msra.mxu0 0.0
    %4277 = vmatprep.subr.mxu0 0.0
    %4278 = vmatpush1.msra.mxu0 0.0
    %4279 = vmatprep.subr.mxu0 0.0
    %4280 = vmatpush1.msra.mxu0 0.0
    %4281 = vmatprep.subr.mxu0 0.0
    %4282 = vmatpush1.msra.mxu0 0.0
    %4283 = vmatprep.subr.mxu0 0.0
    %4284 = vmatpush1.msra.mxu0 0.0
    %4285 = vmatprep.subr.mxu0 0.0
    %4286 = vmatpush1.msra.mxu0 0.0
    %4287 = vmatprep.subr.mxu0 0.0
    %4288 = vmatpush1.msra.mxu0 0.0
    %4289 = vmatprep.subr.mxu0 0.0
    %4290 = vmatpush1.msra.mxu0 0.0
    %4291 = vmatprep.subr.mxu0 0.0
    %4292 = vmatpush1.msra.mxu0 0.0
    %4293 = vmatprep.subr.mxu0 0.0
    %4294 = vmatpush1.msra.mxu0 0.0
    %4295 = vmatprep.subr.mxu0 0.0
    %4296 = vmatpush1.msra.mxu0 0.0
    %4297 = vmatprep.subr.mxu0 0.0
    %4298 = vmatpush1.msra.mxu0 0.0
    %4299 = vmatprep.subr.mxu0 0.0
    %4300 = vmatpush1.msra.mxu0 0.0
    %4301 = vmatprep.mubr.f32.mxu0 0.0
    %4302 = vmatmul.mubr.f32.gmra.mrb[0].mxu0 %v4232
    %v4303 = vpop.f32.mrb[0].mxu0
    %v4304 = vadd.f32 %v4228, %v4303
    %v4305 = vpop.f32.mrb[0].mxu0
    %4306 = vmatprep.mubr.f32.mxu0 0.0
    %4307 = vmatmul.mubr.f32.gmra.mrb[0].mxu0 %v4235
    %v4308 = vpop.f32.mrb[0].mxu0
    %v4309 = vadd.f32 %v4228, %v4308
    %v4310 = vpop.f32.mrb[0].mxu0
    %4311 = vdwg.mxu0
    %v4312 = vadd.f32 %v4119, %v4304
    %v4313 = vadd.f32 %v4120, %v4309
    %v4314 = vsel %vm196, %v4312, 0.0
    %4315 = vadd.xlane.f32.xlu0 %v4314
    %v4316 = vpop.xlane.xlu0 %4315
    %v4317 = vsel %vm196, %v4313, 0.0
    %4318 = vadd.xlane.f32.xlu0 %v4317
    %v4319 = vpop.xlane.xlu0 %4318
    %v4320 = vmul.f32 %v4316, %v2034
    %v4321 = vmul.f32 %v4319, %v2034
    %v4322 = vsub.f32 %v4312, %v4320
    %v4323 = vsub.f32 %v4313, %v4321
    %v4324 = vmul.f32 %v4322, %v4322
    %v4325 = vmul.f32 %v4323, %v4323
    %v4326 = vsel %vm196, %v4324, 0.0
    %4327 = vadd.xlane.f32.xlu0 %v4326
    %v4328 = vpop.xlane.xlu0 %4327
    %v4329 = vsel %vm196, %v4325, 0.0
    %4330 = vadd.xlane.f32.xlu0 %v4329
    %v4331 = vpop.xlane.xlu0 %4330
    %v4332 = vmul.f32 %v4328, %v2034
    %v4333 = vmul.f32 %v4331, %v2034
    %v4334 = vadd.f32 %v4332, 1e-05
    %v4335 = vadd.f32 %v4333, 1e-05
    %v4336 = vrsqrt.pop %v4334
    %v4337 = vrsqrt.pop %v4335
    %v4338 = vmul.f32 %v4322, %v4336
    %v4339 = vmul.f32 %v4323, %v4337
    %v4340 = vlaneseq
    %v4341 = vshrl.u32 %v4340, 7
    %v4342 = vsub.s32 2, %v4341
    %v4343 = vrot.slane %v181, %v4342
    %v4344 = vmul.f32 %v4338, %v4343
    %v4345 = vmul.f32 %v4339, %v4343
    %v4346 = vlaneseq
    %v4347 = vshrl.u32 %v4346, 7
    %v4348 = vsub.s32 2, %v4347
    %v4349 = vrot.slane %v182, %v4348
    %v4350 = vadd.f32 %v4344, %v4349
    %v4351 = vadd.f32 %v4345, %v4349
    %v4352 = vld [vmem:[%s24] sm:$0x1]
    %v4353 = vld [vmem:[%s25] sm:$0x1]
    %v4354 = vsel %vm196, %v4350, 0.0
    %4355 = vadd.xlane.f32.xlu0 %v4354
    %v4356 = vpop.xlane.xlu0 %4355
    %v4357 = vsel %vm196, %v4351, 0.0
    %4358 = vadd.xlane.f32.xlu0 %v4357
    %v4359 = vpop.xlane.xlu0 %4358
    %v4360 = vmul.f32 %v4356, %v2034
    %v4361 = vmul.f32 %v4359, %v2034
    %v4362 = vsub.f32 %v4350, %v4360
    %v4363 = vsub.f32 %v4351, %v4361
    %v4364 = vmul.f32 %v4362, %v4362
    %v4365 = vmul.f32 %v4363, %v4363
    %v4366 = vsel %vm196, %v4364, 0.0
    %4367 = vadd.xlane.f32.xlu0 %v4366
    %v4368 = vpop.xlane.xlu0 %4367
    %v4369 = vsel %vm196, %v4365, 0.0
    %4370 = vadd.xlane.f32.xlu0 %v4369
    %v4371 = vpop.xlane.xlu0 %4370
    %v4372 = vmul.f32 %v4368, %v2034
    %v4373 = vmul.f32 %v4371, %v2034
    %v4374 = vadd.f32 %v4372, 1e-05
    %v4375 = vadd.f32 %v4373, 1e-05
    %v4376 = vrsqrt.pop %v4374
    %v4377 = vrsqrt.pop %v4375
    %v4378 = vmul.f32 %v4362, %v4376
    %v4379 = vmul.f32 %v4363, %v4377
    %v4381 = vlaneseq
    %v4382 = vshrl.u32 %v4381, 7
    %v4383 = vsub.s32 0, %v4382
    %v4384 = vrot.slane %v4352, %v4383
    %v4386 = vmul.f32 %v4378, %v4384
    %v4387 = vmul.f32 %v4379, %v4384
    %v4389 = vlaneseq
    %v4390 = vshrl.u32 %v4389, 7
    %v4391 = vsub.s32 0, %v4390
    %v4392 = vrot.slane %v4353, %v4391
    %v4394 = vadd.f32 %v4386, %v4392
    %v4395 = vadd.f32 %v4387, %v4392
    %4396 = vst.msk [vmem:[%s26] sm:$0xff] %vm196, %v4394
    %4397 = vst.msk [vmem:[%s26 + $0x8] sm:$0xff] %vm196, %v4395
    %s4398 = scalar_lea.vmem %s22, 4
    %v4399 = vld [vmem:[%s4398] sm:$0x7]
    %s4400 = scalar_lea.vmem %s23, 4
    %v4401 = vld [vmem:[%s4400] sm:$0x7]
    %v4402 = vadd.f32 %v4350, %v171
    %v4403 = vadd.f32 %v4351, %v172
    %s4404 = scalar_lea.vmem %s4, 32
    %v4405 = vld [vmem:[%s4404] sm:$0xff]
    %v4406 = vld [vmem:[%s4404 + $0x8] sm:$0xff]
    %v4407 = vld [vmem:[%s4404 + $0x10] sm:$0xff]
    %v4408 = vld [vmem:[%s4404 + $0x18] sm:$0xff]
    %s4409 = scalar_lea.vmem %s5, 1
    %v4410 = vld [vmem:[%s4409] sm:$0x1]
    %v4412 = vlaneseq
    %v4413 = vshrl.u32 %v4412, 7
    %v4414 = vsub.s32 0, %v4413
    %v4415 = vrot.slane %v4410, %v4414
    %v4418 = vsel %vm196, %v4402, 0
    %v4421 = vsel %vm196, %v4403, 0
    %4423 = vmatprep.subr.mxu0 0.0
    %4424 = vmatpush1.msra.mxu0 %v4405
    %4425 = vmatprep.subr.mxu0 0.0
    %4426 = vmatpush1.msra.mxu0 %v4406
    %4427 = vmatprep.subr.mxu0 0.0
    %4428 = vmatpush1.msra.mxu0 %v4407
    %4429 = vmatprep.subr.mxu0 0.0
    %4430 = vmatpush1.msra.mxu0 %v4408
    %4431 = vmatprep.subr.mxu0 0.0
    %4432 = vmatpush1.msra.mxu0 0.0
    %4433 = vmatprep.subr.mxu0 0.0
    %4434 = vmatpush1.msra.mxu0 0.0
    %4435 = vmatprep.subr.mxu0 0.0
    %4436 = vmatpush1.msra.mxu0 0.0
    %4437 = vmatprep.subr.mxu0 0.0
    %4438 = vmatpush1.msra.mxu0 0.0
    %4439 = vmatprep.subr.mxu0 0.0
    %4440 = vmatpush1.msra.mxu0 0.0
    %4441 = vmatprep.subr.mxu0 0.0
    %4442 = vmatpush1.msra.mxu0 0.0
    %4443 = vmatprep.subr.mxu0 0.0
    %4444 = vmatpush1.msra.mxu0 0.0
    %4445 = vmatprep.subr.mxu0 0.0
    %4446 = vmatpush1.msra.mxu0 0.0
    %4447 = vmatprep.subr.mxu0 0.0
    %4448 = vmatpush1.msra.mxu0 0.0
    %4449 = vmatprep.subr.mxu0 0.0
    %4450 = vmatpush1.msra.mxu0 0.0
    %4451 = vmatprep.subr.mxu0 0.0
    %4452 = vmatpush1.msra.mxu0 0.0
    %4453 = vmatprep.subr.mxu0 0.0
    %4454 = vmatpush1.msra.mxu0 0.0
    %4455 = vmatprep.subr.mxu0 0.0
    %4456 = vmatpush1.msra.mxu0 0.0
    %4457 = vmatprep.subr.mxu0 0.0
    %4458 = vmatpush1.msra.mxu0 0.0
    %4459 = vmatprep.subr.mxu0 0.0
    %4460 = vmatpush1.msra.mxu0 0.0
    %4461 = vmatprep.subr.mxu0 0.0
    %4462 = vmatpush1.msra.mxu0 0.0
    %4463 = vmatprep.subr.mxu0 0.0
    %4464 = vmatpush1.msra.mxu0 0.0
    %4465 = vmatprep.subr.mxu0 0.0
    %4466 = vmatpush1.msra.mxu0 0.0
    %4467 = vmatprep.subr.mxu0 0.0
    %4468 = vmatpush1.msra.mxu0 0.0
    %4469 = vmatprep.subr.mxu0 0.0
    %4470 = vmatpush1.msra.mxu0 0.0
    %4471 = vmatprep.subr.mxu0 0.0
    %4472 = vmatpush1.msra.mxu0 0.0
    %4473 = vmatprep.subr.mxu0 0.0
    %4474 = vmatpush1.msra.mxu0 0.0
    %4475 = vmatprep.subr.mxu0 0.0
    %4476 = vmatpush1.msra.mxu0 0.0
    %4477 = vmatprep.subr.mxu0 0.0
    %4478 = vmatpush1.msra.mxu0 0.0
    %4479 = vmatprep.subr.mxu0 0.0
    %4480 = vmatpush1.msra.mxu0 0.0
    %4481 = vmatprep.subr.mxu0 0.0
    %4482 = vmatpush1.msra.mxu0 0.0
    %4483 = vmatprep.subr.mxu0 0.0
    %4484 = vmatpush1.msra.mxu0 0.0
    %4485 = vmatprep.subr.mxu0 0.0
    %4486 = vmatpush1.msra.mxu0 0.0
    %4487 = vmatprep.mubr.f32.mxu0 0.0
    %4488 = vmatmul.mubr.f32.gmra.mrb[0].mxu0 %v4418
    %v4489 = vpop.f32.mrb[0].mxu0
    %v4490 = vadd.f32 %v4415, %v4489
    %v4491 = vpop.f32.mrb[0].mxu0
    %4492 = vmatprep.mubr.f32.mxu0 0.0
    %4493 = vmatmul.mubr.f32.gmra.mrb[0].mxu0 %v4421
    %v4494 = vpop.f32.mrb[0].mxu0
    %v4495 = vadd.f32 %v4415, %v4494
    %v4496 = vpop.f32.mrb[0].mxu0
    %4497 = vdwg.mxu0
    %s4498 = scalar_lea.vmem %s6, 32
    %v4499 = vld [vmem:[%s4498] sm:$0xff]
    %v4500 = vld [vmem:[%s4498 + $0x8] sm:$0xff]
    %v4501 = vld [vmem:[%s4498 + $0x10] sm:$0xff]
    %v4502 = vld [vmem:[%s4498 + $0x18] sm:$0xff]
    %s4503 = scalar_lea.vmem %s7, 1
    %v4504 = vld [vmem:[%s4503] sm:$0x1]
    %v4506 = vlaneseq
    %v4507 = vshrl.u32 %v4506, 7
    %v4508 = vsub.s32 0, %v4507
    %v4509 = vrot.slane %v4504, %v4508
    %v4512 = vsel %vm196, %v4350, 0
    %v4515 = vsel %vm196, %v4351, 0
    %4517 = vmatprep.subr.mxu0 0.0
    %4518 = vmatpush1.msra.mxu0 %v4499
    %4519 = vmatprep.subr.mxu0 0.0
    %4520 = vmatpush1.msra.mxu0 %v4500
    %4521 = vmatprep.subr.mxu0 0.0
    %4522 = vmatpush1.msra.mxu0 %v4501
    %4523 = vmatprep.subr.mxu0 0.0
    %4524 = vmatpush1.msra.mxu0 %v4502
    %4525 = vmatprep.subr.mxu0 0.0
    %4526 = vmatpush1.msra.mxu0 0.0
    %4527 = vmatprep.subr.mxu0 0.0
    %4528 = vmatpush1.msra.mxu0 0.0
    %4529 = vmatprep.subr.mxu0 0.0
    %4530 = vmatpush1.msra.mxu0 0.0
    %4531 = vmatprep.subr.mxu0 0.0
    %4532 = vmatpush1.msra.mxu0 0.0
    %4533 = vmatprep.subr.mxu0 0.0
    %4534 = vmatpush1.msra.mxu0 0.0
    %4535 = vmatprep.subr.mxu0 0.0
    %4536 = vmatpush1.msra.mxu0 0.0
    %4537 = vmatprep.subr.mxu0 0.0
    %4538 = vmatpush1.msra.mxu0 0.0
    %4539 = vmatprep.subr.mxu0 0.0
    %4540 = vmatpush1.msra.mxu0 0.0
    %4541 = vmatprep.subr.mxu0 0.0
    %4542 = vmatpush1.msra.mxu0 0.0
    %4543 = vmatprep.subr.mxu0 0.0
    %4544 = vmatpush1.msra.mxu0 0.0
    %4545 = vmatprep.subr.mxu0 0.0
    %4546 = vmatpush1.msra.mxu0 0.0
    %4547 = vmatprep.subr.mxu0 0.0
    %4548 = vmatpush1.msra.mxu0 0.0
    %4549 = vmatprep.subr.mxu0 0.0
    %4550 = vmatpush1.msra.mxu0 0.0
    %4551 = vmatprep.subr.mxu0 0.0
    %4552 = vmatpush1.msra.mxu0 0.0
    %4553 = vmatprep.subr.mxu0 0.0
    %4554 = vmatpush1.msra.mxu0 0.0
    %4555 = vmatprep.subr.mxu0 0.0
    %4556 = vmatpush1.msra.mxu0 0.0
    %4557 = vmatprep.subr.mxu0 0.0
    %4558 = vmatpush1.msra.mxu0 0.0
    %4559 = vmatprep.subr.mxu0 0.0
    %4560 = vmatpush1.msra.mxu0 0.0
    %4561 = vmatprep.subr.mxu0 0.0
    %4562 = vmatpush1.msra.mxu0 0.0
    %4563 = vmatprep.subr.mxu0 0.0
    %4564 = vmatpush1.msra.mxu0 0.0
    %4565 = vmatprep.subr.mxu0 0.0
    %4566 = vmatpush1.msra.mxu0 0.0
    %4567 = vmatprep.subr.mxu0 0.0
    %4568 = vmatpush1.msra.mxu0 0.0
    %4569 = vmatprep.subr.mxu0 0.0
    %4570 = vmatpush1.msra.mxu0 0.0
    %4571 = vmatprep.subr.mxu0 0.0
    %4572 = vmatpush1.msra.mxu0 0.0
    %4573 = vmatprep.subr.mxu0 0.0
    %4574 = vmatpush1.msra.mxu0 0.0
    %4575 = vmatprep.subr.mxu0 0.0
    %4576 = vmatpush1.msra.mxu0 0.0
    %4577 = vmatprep.subr.mxu0 0.0
    %4578 = vmatpush1.msra.mxu0 0.0
    %4579 = vmatprep.subr.mxu0 0.0
    %4580 = vmatpush1.msra.mxu0 0.0
    %4581 = vmatprep.mubr.f32.mxu0 0.0
    %4582 = vmatmul.mubr.f32.gmra.mrb[0].mxu0 %v4512
    %v4583 = vpop.f32.mrb[0].mxu0
    %v4584 = vadd.f32 %v4509, %v4583
    %v4585 = vpop.f32.mrb[0].mxu0
    %4586 = vmatprep.mubr.f32.mxu0 0.0
    %4587 = vmatmul.mubr.f32.gmra.mrb[0].mxu0 %v4515
    %v4588 = vpop.f32.mrb[0].mxu0
    %v4589 = vadd.f32 %v4509, %v4588
    %v4590 = vpop.f32.mrb[0].mxu0
    %4591 = vdwg.mxu0
    %s4592 = scalar_lea.vmem %s8, 32
    %v4593 = vld [vmem:[%s4592] sm:$0xff]
    %v4594 = vld [vmem:[%s4592 + $0x8] sm:$0xff]
    %v4595 = vld [vmem:[%s4592 + $0x10] sm:$0xff]
    %v4596 = vld [vmem:[%s4592 + $0x18] sm:$0xff]
    %s4597 = scalar_lea.vmem %s9, 1
    %v4598 = vld [vmem:[%s4597] sm:$0x1]
    %4600 = vrot.lane.b32.xlu0 %v4490, 96
    %v4601 = vpop.permute.xlu0 %4600
    %v4602 = vsel %vm378, %v4490, 0
    %v4604 = vsel %vm378, %v4601, 0
    %4606 = vmatprep.subr.mxu0 0.0
    %4607 = vmatpush1.xpose.msra.mxu0 %v4604
    %4608 = vmatprep.subr.mxu0 0.0
    %4609 = vmatpush1.xpose.msra.mxu0 0.0
    %4610 = vmatprep.subr.mxu0 0.0
    %4611 = vmatpush1.xpose.msra.mxu0 0.0
    %4612 = vmatprep.subr.mxu0 0.0
    %4613 = vmatpush1.xpose.msra.mxu0 0.0
    %4614 = vmatprep.subr.mxu0 0.0
    %4615 = vmatpush1.xpose.msra.mxu0 0.0
    %4616 = vmatprep.subr.mxu0 0.0
    %4617 = vmatpush1.xpose.msra.mxu0 0.0
    %4618 = vmatprep.subr.mxu0 0.0
    %4619 = vmatpush1.xpose.msra.mxu0 0.0
    %4620 = vmatprep.subr.mxu0 0.0
    %4621 = vmatpush1.xpose.msra.mxu0 0.0
    %4622 = vmatprep.subr.mxu0 0.0
    %4623 = vmatpush1.xpose.msra.mxu0 0.0
    %4624 = vmatprep.subr.mxu0 0.0
    %4625 = vmatpush1.xpose.msra.mxu0 0.0
    %4626 = vmatprep.subr.mxu0 0.0
    %4627 = vmatpush1.xpose.msra.mxu0 0.0
    %4628 = vmatprep.subr.mxu0 0.0
    %4629 = vmatpush1.xpose.msra.mxu0 0.0
    %4630 = vmatprep.subr.mxu0 0.0
    %4631 = vmatpush1.xpose.msra.mxu0 0.0
    %4632 = vmatprep.subr.mxu0 0.0
    %4633 = vmatpush1.xpose.msra.mxu0 0.0
    %4634 = vmatprep.subr.mxu0 0.0
    %4635 = vmatpush1.xpose.msra.mxu0 0.0
    %4636 = vmatprep.subr.mxu0 0.0
    %4637 = vmatpush1.xpose.msra.mxu0 0.0
    %4638 = vmatprep.subr.mxu0 0.0
    %4639 = vmatpush1.xpose.msra.mxu0 0.0
    %4640 = vmatprep.subr.mxu0 0.0
    %4641 = vmatpush1.xpose.msra.mxu0 0.0
    %4642 = vmatprep.subr.mxu0 0.0
    %4643 = vmatpush1.xpose.msra.mxu0 0.0
    %4644 = vmatprep.subr.mxu0 0.0
    %4645 = vmatpush1.xpose.msra.mxu0 0.0
    %4646 = vmatprep.subr.mxu0 0.0
    %4647 = vmatpush1.xpose.msra.mxu0 0.0
    %4648 = vmatprep.subr.mxu0 0.0
    %4649 = vmatpush1.xpose.msra.mxu0 0.0
    %4650 = vmatprep.subr.mxu0 0.0
    %4651 = vmatpush1.xpose.msra.mxu0 0.0
    %4652 = vmatprep.subr.mxu0 0.0
    %4653 = vmatpush1.xpose.msra.mxu0 0.0
    %4654 = vmatprep.subr.mxu0 0.0
    %4655 = vmatpush1.xpose.msra.mxu0 0.0
    %4656 = vmatprep.subr.mxu0 0.0
    %4657 = vmatpush1.xpose.msra.mxu0 0.0
    %4658 = vmatprep.subr.mxu0 0.0
    %4659 = vmatpush1.xpose.msra.mxu0 0.0
    %4660 = vmatprep.subr.mxu0 0.0
    %4661 = vmatpush1.xpose.msra.mxu0 0.0
    %4662 = vmatprep.subr.mxu0 0.0
    %4663 = vmatpush1.xpose.msra.mxu0 0.0
    %4664 = vmatprep.subr.mxu0 0.0
    %4665 = vmatpush1.xpose.msra.mxu0 0.0
    %4666 = vmatprep.subr.mxu0 0.0
    %4667 = vmatpush1.xpose.msra.mxu0 0.0
    %4668 = vmatprep.subr.mxu0 0.0
    %4669 = vmatpush1.xpose.msra.mxu0 0.0
    %4670 = vmatprep.mubr.f32.mxu0 0.0
    %4671 = vmatmul.mubr.f32.gmra.mrb[0].mxu0 %v4602
    %v4672 = vpop.f32.mrb[0].mxu0
    %v4673 = vadd.f32 0.0, %v4672
    %v4674 = vpop.f32.mrb[0].mxu0
    %4675 = vdwg.mxu0
    %4677 = vrot.lane.b32.xlu0 %v4495, 96
    %v4678 = vpop.permute.xlu0 %4677
    %v4679 = vsel %vm378, %v4495, 0
    %v4681 = vsel %vm378, %v4678, 0
    %4683 = vmatprep.subr.mxu0 0.0
    %4684 = vmatpush1.xpose.msra.mxu0 %v4681
    %4685 = vmatprep.subr.mxu0 0.0
    %4686 = vmatpush1.xpose.msra.mxu0 0.0
    %4687 = vmatprep.subr.mxu0 0.0
    %4688 = vmatpush1.xpose.msra.mxu0 0.0
    %4689 = vmatprep.subr.mxu0 0.0
    %4690 = vmatpush1.xpose.msra.mxu0 0.0
    %4691 = vmatprep.subr.mxu0 0.0
    %4692 = vmatpush1.xpose.msra.mxu0 0.0
    %4693 = vmatprep.subr.mxu0 0.0
    %4694 = vmatpush1.xpose.msra.mxu0 0.0
    %4695 = vmatprep.subr.mxu0 0.0
    %4696 = vmatpush1.xpose.msra.mxu0 0.0
    %4697 = vmatprep.subr.mxu0 0.0
    %4698 = vmatpush1.xpose.msra.mxu0 0.0
    %4699 = vmatprep.subr.mxu0 0.0
    %4700 = vmatpush1.xpose.msra.mxu0 0.0
    %4701 = vmatprep.subr.mxu0 0.0
    %4702 = vmatpush1.xpose.msra.mxu0 0.0
    %4703 = vmatprep.subr.mxu0 0.0
    %4704 = vmatpush1.xpose.msra.mxu0 0.0
    %4705 = vmatprep.subr.mxu0 0.0
    %4706 = vmatpush1.xpose.msra.mxu0 0.0
    %4707 = vmatprep.subr.mxu0 0.0
    %4708 = vmatpush1.xpose.msra.mxu0 0.0
    %4709 = vmatprep.subr.mxu0 0.0
    %4710 = vmatpush1.xpose.msra.mxu0 0.0
    %4711 = vmatprep.subr.mxu0 0.0
    %4712 = vmatpush1.xpose.msra.mxu0 0.0
    %4713 = vmatprep.subr.mxu0 0.0
    %4714 = vmatpush1.xpose.msra.mxu0 0.0
    %4715 = vmatprep.subr.mxu0 0.0
    %4716 = vmatpush1.xpose.msra.mxu0 0.0
    %4717 = vmatprep.subr.mxu0 0.0
    %4718 = vmatpush1.xpose.msra.mxu0 0.0
    %4719 = vmatprep.subr.mxu0 0.0
    %4720 = vmatpush1.xpose.msra.mxu0 0.0
    %4721 = vmatprep.subr.mxu0 0.0
    %4722 = vmatpush1.xpose.msra.mxu0 0.0
    %4723 = vmatprep.subr.mxu0 0.0
    %4724 = vmatpush1.xpose.msra.mxu0 0.0
    %4725 = vmatprep.subr.mxu0 0.0
    %4726 = vmatpush1.xpose.msra.mxu0 0.0
    %4727 = vmatprep.subr.mxu0 0.0
    %4728 = vmatpush1.xpose.msra.mxu0 0.0
    %4729 = vmatprep.subr.mxu0 0.0
    %4730 = vmatpush1.xpose.msra.mxu0 0.0
    %4731 = vmatprep.subr.mxu0 0.0
    %4732 = vmatpush1.xpose.msra.mxu0 0.0
    %4733 = vmatprep.subr.mxu0 0.0
    %4734 = vmatpush1.xpose.msra.mxu0 0.0
    %4735 = vmatprep.subr.mxu0 0.0
    %4736 = vmatpush1.xpose.msra.mxu0 0.0
    %4737 = vmatprep.subr.mxu0 0.0
    %4738 = vmatpush1.xpose.msra.mxu0 0.0
    %4739 = vmatprep.subr.mxu0 0.0
    %4740 = vmatpush1.xpose.msra.mxu0 0.0
    %4741 = vmatprep.subr.mxu0 0.0
    %4742 = vmatpush1.xpose.msra.mxu0 0.0
    %4743 = vmatprep.subr.mxu0 0.0
    %4744 = vmatpush1.xpose.msra.mxu0 0.0
    %4745 = vmatprep.subr.mxu0 0.0
    %4746 = vmatpush1.xpose.msra.mxu0 0.0
    %4747 = vmatprep.mubr.f32.mxu0 0.0
    %4748 = vmatmul.mubr.f32.gmra.mrb[0].mxu0 %v4679
    %v4749 = vpop.f32.mrb[0].mxu0
    %v4750 = vadd.f32 0.0, %v4749
    %v4751 = vpop.f32.mrb[0].mxu0
    %4752 = vdwg.mxu0
    %v4753 = vsel %vm378, %v4673, -inf
    %4754 = vmax.xlane.f32.xlu0 %v4753
    %v4755 = vpop.xlane.xlu0 %4754
    %v4756 = vsel %vm378, %v4750, -inf
    %4757 = vmax.xlane.f32.xlu0 %v4756
    %v4758 = vpop.xlane.xlu0 %4757
    %v4759 = vsub.f32 %v4673, %v4755
    %v4760 = vsub.f32 %v4750, %v4758
    %v4761 = vmul.f32 %v4759, 1.442695
    %v4762 = vpow.pop %v4761
    %v4763 = vmul.f32 %v4760, 1.442695
    %v4764 = vpow.pop %v4763
    %v4765 = vsel %vm378, %v4762, 0.0
    %4766 = vadd.xlane.f32.xlu0 %v4765
    %v4767 = vpop.xlane.xlu0 %4766
    %v4768 = vsel %vm378, %v4764, 0.0
    %4769 = vadd.xlane.f32.xlu0 %v4768
    %v4770 = vpop.xlane.xlu0 %4769
    %v4771 = vrcp.pop %v4767
    %v4772 = vrcp.pop %v4770
    %v4773 = vmul.f32 %v4762, %v4771
    %v4774 = vmul.f32 %v4764, %v4772
    %v4776 = vsel %vm378, %v4773, 0
    %4778 = vmatprep.subr.mxu0 0.0
    %4779 = vmatpush1.msra.mxu0 %v4584
    %4780 = vmatprep.subr.mxu0 0.0
    %4781 = vmatpush1.msra.mxu0 0.0
    %4782 = vmatprep.subr.mxu0 0.0
    %4783 = vmatpush1.msra.mxu0 0.0
    %4784 = vmatprep.subr.mxu0 0.0
    %4785 = vmatpush1.msra.mxu0 0.0
    %4786 = vmatprep.subr.mxu0 0.0
    %4787 = vmatpush1.msra.mxu0 0.0
    %4788 = vmatprep.subr.mxu0 0.0
    %4789 = vmatpush1.msra.mxu0 0.0
    %4790 = vmatprep.subr.mxu0 0.0
    %4791 = vmatpush1.msra.mxu0 0.0
    %4792 = vmatprep.subr.mxu0 0.0
    %4793 = vmatpush1.msra.mxu0 0.0
    %4794 = vmatprep.subr.mxu0 0.0
    %4795 = vmatpush1.msra.mxu0 0.0
    %4796 = vmatprep.subr.mxu0 0.0
    %4797 = vmatpush1.msra.mxu0 0.0
    %4798 = vmatprep.subr.mxu0 0.0
    %4799 = vmatpush1.msra.mxu0 0.0
    %4800 = vmatprep.subr.mxu0 0.0
    %4801 = vmatpush1.msra.mxu0 0.0
    %4802 = vmatprep.subr.mxu0 0.0
    %4803 = vmatpush1.msra.mxu0 0.0
    %4804 = vmatprep.subr.mxu0 0.0
    %4805 = vmatpush1.msra.mxu0 0.0
    %4806 = vmatprep.subr.mxu0 0.0
    %4807 = vmatpush1.msra.mxu0 0.0
    %4808 = vmatprep.subr.mxu0 0.0
    %4809 = vmatpush1.msra.mxu0 0.0
    %4810 = vmatprep.subr.mxu0 0.0
    %4811 = vmatpush1.msra.mxu0 0.0
    %4812 = vmatprep.subr.mxu0 0.0
    %4813 = vmatpush1.msra.mxu0 0.0
    %4814 = vmatprep.subr.mxu0 0.0
    %4815 = vmatpush1.msra.mxu0 0.0
    %4816 = vmatprep.subr.mxu0 0.0
    %4817 = vmatpush1.msra.mxu0 0.0
    %4818 = vmatprep.subr.mxu0 0.0
    %4819 = vmatpush1.msra.mxu0 0.0
    %4820 = vmatprep.subr.mxu0 0.0
    %4821 = vmatpush1.msra.mxu0 0.0
    %4822 = vmatprep.subr.mxu0 0.0
    %4823 = vmatpush1.msra.mxu0 0.0
    %4824 = vmatprep.subr.mxu0 0.0
    %4825 = vmatpush1.msra.mxu0 0.0
    %4826 = vmatprep.subr.mxu0 0.0
    %4827 = vmatpush1.msra.mxu0 0.0
    %4828 = vmatprep.subr.mxu0 0.0
    %4829 = vmatpush1.msra.mxu0 0.0
    %4830 = vmatprep.subr.mxu0 0.0
    %4831 = vmatpush1.msra.mxu0 0.0
    %4832 = vmatprep.subr.mxu0 0.0
    %4833 = vmatpush1.msra.mxu0 0.0
    %4834 = vmatprep.subr.mxu0 0.0
    %4835 = vmatpush1.msra.mxu0 0.0
    %4836 = vmatprep.subr.mxu0 0.0
    %4837 = vmatpush1.msra.mxu0 0.0
    %4838 = vmatprep.subr.mxu0 0.0
    %4839 = vmatpush1.msra.mxu0 0.0
    %4840 = vmatprep.subr.mxu0 0.0
    %4841 = vmatpush1.msra.mxu0 0.0
    %4842 = vmatprep.mubr.f32.mxu0 0.0
    %4843 = vmatmul.mubr.f32.gmra.mrb[0].mxu0 %v4776
    %v4844 = vpop.f32.mrb[0].mxu0
    %v4845 = vadd.f32 0.0, %v4844
    %v4846 = vpop.f32.mrb[0].mxu0
    %4847 = vdwg.mxu0
    %v4849 = vsel %vm378, %v4774, 0
    %4851 = vmatprep.subr.mxu0 0.0
    %4852 = vmatpush1.msra.mxu0 %v4589
    %4853 = vmatprep.subr.mxu0 0.0
    %4854 = vmatpush1.msra.mxu0 0.0
    %4855 = vmatprep.subr.mxu0 0.0
    %4856 = vmatpush1.msra.mxu0 0.0
    %4857 = vmatprep.subr.mxu0 0.0
    %4858 = vmatpush1.msra.mxu0 0.0
    %4859 = vmatprep.subr.mxu0 0.0
    %4860 = vmatpush1.msra.mxu0 0.0
    %4861 = vmatprep.subr.mxu0 0.0
    %4862 = vmatpush1.msra.mxu0 0.0
    %4863 = vmatprep.subr.mxu0 0.0
    %4864 = vmatpush1.msra.mxu0 0.0
    %4865 = vmatprep.subr.mxu0 0.0
    %4866 = vmatpush1.msra.mxu0 0.0
    %4867 = vmatprep.subr.mxu0 0.0
    %4868 = vmatpush1.msra.mxu0 0.0
    %4869 = vmatprep.subr.mxu0 0.0
    %4870 = vmatpush1.msra.mxu0 0.0
    %4871 = vmatprep.subr.mxu0 0.0
    %4872 = vmatpush1.msra.mxu0 0.0
    %4873 = vmatprep.subr.mxu0 0.0
    %4874 = vmatpush1.msra.mxu0 0.0
    %4875 = vmatprep.subr.mxu0 0.0
    %4876 = vmatpush1.msra.mxu0 0.0
    %4877 = vmatprep.subr.mxu0 0.0
    %4878 = vmatpush1.msra.mxu0 0.0
    %4879 = vmatprep.subr.mxu0 0.0
    %4880 = vmatpush1.msra.mxu0 0.0
    %4881 = vmatprep.subr.mxu0 0.0
    %4882 = vmatpush1.msra.mxu0 0.0
    %4883 = vmatprep.subr.mxu0 0.0
    %4884 = vmatpush1.msra.mxu0 0.0
    %4885 = vmatprep.subr.mxu0 0.0
    %4886 = vmatpush1.msra.mxu0 0.0
    %4887 = vmatprep.subr.mxu0 0.0
    %4888 = vmatpush1.msra.mxu0 0.0
    %4889 = vmatprep.subr.mxu0 0.0
    %4890 = vmatpush1.msra.mxu0 0.0
    %4891 = vmatprep.subr.mxu0 0.0
    %4892 = vmatpush1.msra.mxu0 0.0
    %4893 = vmatprep.subr.mxu0 0.0
    %4894 = vmatpush1.msra.mxu0 0.0
    %4895 = vmatprep.subr.mxu0 0.0
    %4896 = vmatpush1.msra.mxu0 0.0
    %4897 = vmatprep.subr.mxu0 0.0
    %4898 = vmatpush1.msra.mxu0 0.0
    %4899 = vmatprep.subr.mxu0 0.0
    %4900 = vmatpush1.msra.mxu0 0.0
    %4901 = vmatprep.subr.mxu0 0.0
    %4902 = vmatpush1.msra.mxu0 0.0
    %4903 = vmatprep.subr.mxu0 0.0
    %4904 = vmatpush1.msra.mxu0 0.0
    %4905 = vmatprep.subr.mxu0 0.0
    %4906 = vmatpush1.msra.mxu0 0.0
    %4907 = vmatprep.subr.mxu0 0.0
    %4908 = vmatpush1.msra.mxu0 0.0
    %4909 = vmatprep.subr.mxu0 0.0
    %4910 = vmatpush1.msra.mxu0 0.0
    %4911 = vmatprep.subr.mxu0 0.0
    %4912 = vmatpush1.msra.mxu0 0.0
    %4913 = vmatprep.subr.mxu0 0.0
    %4914 = vmatpush1.msra.mxu0 0.0
    %4915 = vmatprep.mubr.f32.mxu0 0.0
    %4916 = vmatmul.mubr.f32.gmra.mrb[0].mxu0 %v4849
    %v4917 = vpop.f32.mrb[0].mxu0
    %v4918 = vadd.f32 0.0, %v4917
    %v4919 = vpop.f32.mrb[0].mxu0
    %4920 = vdwg.mxu0
    %4921 = vrot.lane.b32.xlu0 %v4490, 120
    %v4922 = vpop.permute.xlu0 %4921
    %4923 = vrot.lane.b32.xlu0 %v4490, 88
    %v4924 = vpop.permute.xlu0 %4923
    %v4925 = vsel %vm378, %v4922, 0
    %v4927 = vsel %vm378, %v4924, 0
    %4929 = vmatprep.subr.mxu0 0.0
    %4930 = vmatpush1.xpose.msra.mxu0 %v4927
    %4931 = vmatprep.subr.mxu0 0.0
    %4932 = vmatpush1.xpose.msra.mxu0 0.0
    %4933 = vmatprep.subr.mxu0 0.0
    %4934 = vmatpush1.xpose.msra.mxu0 0.0
    %4935 = vmatprep.subr.mxu0 0.0
    %4936 = vmatpush1.xpose.msra.mxu0 0.0
    %4937 = vmatprep.subr.mxu0 0.0
    %4938 = vmatpush1.xpose.msra.mxu0 0.0
    %4939 = vmatprep.subr.mxu0 0.0
    %4940 = vmatpush1.xpose.msra.mxu0 0.0
    %4941 = vmatprep.subr.mxu0 0.0
    %4942 = vmatpush1.xpose.msra.mxu0 0.0
    %4943 = vmatprep.subr.mxu0 0.0
    %4944 = vmatpush1.xpose.msra.mxu0 0.0
    %4945 = vmatprep.subr.mxu0 0.0
    %4946 = vmatpush1.xpose.msra.mxu0 0.0
    %4947 = vmatprep.subr.mxu0 0.0
    %4948 = vmatpush1.xpose.msra.mxu0 0.0
    %4949 = vmatprep.subr.mxu0 0.0
    %4950 = vmatpush1.xpose.msra.mxu0 0.0
    %4951 = vmatprep.subr.mxu0 0.0
    %4952 = vmatpush1.xpose.msra.mxu0 0.0
    %4953 = vmatprep.subr.mxu0 0.0
    %4954 = vmatpush1.xpose.msra.mxu0 0.0
    %4955 = vmatprep.subr.mxu0 0.0
    %4956 = vmatpush1.xpose.msra.mxu0 0.0
    %4957 = vmatprep.subr.mxu0 0.0
    %4958 = vmatpush1.xpose.msra.mxu0 0.0
    %4959 = vmatprep.subr.mxu0 0.0
    %4960 = vmatpush1.xpose.msra.mxu0 0.0
    %4961 = vmatprep.subr.mxu0 0.0
    %4962 = vmatpush1.xpose.msra.mxu0 0.0
    %4963 = vmatprep.subr.mxu0 0.0
    %4964 = vmatpush1.xpose.msra.mxu0 0.0
    %4965 = vmatprep.subr.mxu0 0.0
    %4966 = vmatpush1.xpose.msra.mxu0 0.0
    %4967 = vmatprep.subr.mxu0 0.0
    %4968 = vmatpush1.xpose.msra.mxu0 0.0
    %4969 = vmatprep.subr.mxu0 0.0
    %4970 = vmatpush1.xpose.msra.mxu0 0.0
    %4971 = vmatprep.subr.mxu0 0.0
    %4972 = vmatpush1.xpose.msra.mxu0 0.0
    %4973 = vmatprep.subr.mxu0 0.0
    %4974 = vmatpush1.xpose.msra.mxu0 0.0
    %4975 = vmatprep.subr.mxu0 0.0
    %4976 = vmatpush1.xpose.msra.mxu0 0.0
    %4977 = vmatprep.subr.mxu0 0.0
    %4978 = vmatpush1.xpose.msra.mxu0 0.0
    %4979 = vmatprep.subr.mxu0 0.0
    %4980 = vmatpush1.xpose.msra.mxu0 0.0
    %4981 = vmatprep.subr.mxu0 0.0
    %4982 = vmatpush1.xpose.msra.mxu0 0.0
    %4983 = vmatprep.subr.mxu0 0.0
    %4984 = vmatpush1.xpose.msra.mxu0 0.0
    %4985 = vmatprep.subr.mxu0 0.0
    %4986 = vmatpush1.xpose.msra.mxu0 0.0
    %4987 = vmatprep.subr.mxu0 0.0
    %4988 = vmatpush1.xpose.msra.mxu0 0.0
    %4989 = vmatprep.subr.mxu0 0.0
    %4990 = vmatpush1.xpose.msra.mxu0 0.0
    %4991 = vmatprep.subr.mxu0 0.0
    %4992 = vmatpush1.xpose.msra.mxu0 0.0
    %4993 = vmatprep.mubr.f32.mxu0 0.0
    %4994 = vmatmul.mubr.f32.gmra.mrb[0].mxu0 %v4925
    %v4995 = vpop.f32.mrb[0].mxu0
    %v4996 = vadd.f32 0.0, %v4995
    %v4997 = vpop.f32.mrb[0].mxu0
    %4998 = vdwg.mxu0
    %4999 = vrot.lane.b32.xlu0 %v4495, 120
    %v5000 = vpop.permute.xlu0 %4999
    %5001 = vrot.lane.b32.xlu0 %v4495, 88
    %v5002 = vpop.permute.xlu0 %5001
    %v5003 = vsel %vm378, %v5000, 0
    %v5005 = vsel %vm378, %v5002, 0
    %5007 = vmatprep.subr.mxu0 0.0
    %5008 = vmatpush1.xpose.msra.mxu0 %v5005
    %5009 = vmatprep.subr.mxu0 0.0
    %5010 = vmatpush1.xpose.msra.mxu0 0.0
    %5011 = vmatprep.subr.mxu0 0.0
    %5012 = vmatpush1.xpose.msra.mxu0 0.0
    %5013 = vmatprep.subr.mxu0 0.0
    %5014 = vmatpush1.xpose.msra.mxu0 0.0
    %5015 = vmatprep.subr.mxu0 0.0
    %5016 = vmatpush1.xpose.msra.mxu0 0.0
    %5017 = vmatprep.subr.mxu0 0.0
    %5018 = vmatpush1.xpose.msra.mxu0 0.0
    %5019 = vmatprep.subr.mxu0 0.0
    %5020 = vmatpush1.xpose.msra.mxu0 0.0
    %5021 = vmatprep.subr.mxu0 0.0
    %5022 = vmatpush1.xpose.msra.mxu0 0.0
    %5023 = vmatprep.subr.mxu0 0.0
    %5024 = vmatpush1.xpose.msra.mxu0 0.0
    %5025 = vmatprep.subr.mxu0 0.0
    %5026 = vmatpush1.xpose.msra.mxu0 0.0
    %5027 = vmatprep.subr.mxu0 0.0
    %5028 = vmatpush1.xpose.msra.mxu0 0.0
    %5029 = vmatprep.subr.mxu0 0.0
    %5030 = vmatpush1.xpose.msra.mxu0 0.0
    %5031 = vmatprep.subr.mxu0 0.0
    %5032 = vmatpush1.xpose.msra.mxu0 0.0
    %5033 = vmatprep.subr.mxu0 0.0
    %5034 = vmatpush1.xpose.msra.mxu0 0.0
    %5035 = vmatprep.subr.mxu0 0.0
    %5036 = vmatpush1.xpose.msra.mxu0 0.0
    %5037 = vmatprep.subr.mxu0 0.0
    %5038 = vmatpush1.xpose.msra.mxu0 0.0
    %5039 = vmatprep.subr.mxu0 0.0
    %5040 = vmatpush1.xpose.msra.mxu0 0.0
    %5041 = vmatprep.subr.mxu0 0.0
    %5042 = vmatpush1.xpose.msra.mxu0 0.0
    %5043 = vmatprep.subr.mxu0 0.0
    %5044 = vmatpush1.xpose.msra.mxu0 0.0
    %5045 = vmatprep.subr.mxu0 0.0
    %5046 = vmatpush1.xpose.msra.mxu0 0.0
    %5047 = vmatprep.subr.mxu0 0.0
    %5048 = vmatpush1.xpose.msra.mxu0 0.0
    %5049 = vmatprep.subr.mxu0 0.0
    %5050 = vmatpush1.xpose.msra.mxu0 0.0
    %5051 = vmatprep.subr.mxu0 0.0
    %5052 = vmatpush1.xpose.msra.mxu0 0.0
    %5053 = vmatprep.subr.mxu0 0.0
    %5054 = vmatpush1.xpose.msra.mxu0 0.0
    %5055 = vmatprep.subr.mxu0 0.0
    %5056 = vmatpush1.xpose.msra.mxu0 0.0
    %5057 = vmatprep.subr.mxu0 0.0
    %5058 = vmatpush1.xpose.msra.mxu0 0.0
    %5059 = vmatprep.subr.mxu0 0.0
    %5060 = vmatpush1.xpose.msra.mxu0 0.0
    %5061 = vmatprep.subr.mxu0 0.0
    %5062 = vmatpush1.xpose.msra.mxu0 0.0
    %5063 = vmatprep.subr.mxu0 0.0
    %5064 = vmatpush1.xpose.msra.mxu0 0.0
    %5065 = vmatprep.subr.mxu0 0.0
    %5066 = vmatpush1.xpose.msra.mxu0 0.0
    %5067 = vmatprep.subr.mxu0 0.0
    %5068 = vmatpush1.xpose.msra.mxu0 0.0
    %5069 = vmatprep.subr.mxu0 0.0
    %5070 = vmatpush1.xpose.msra.mxu0 0.0
    %5071 = vmatprep.mubr.f32.mxu0 0.0
    %5072 = vmatmul.mubr.f32.gmra.mrb[0].mxu0 %v5003
    %v5073 = vpop.f32.mrb[0].mxu0
    %v5074 = vadd.f32 0.0, %v5073
    %v5075 = vpop.f32.mrb[0].mxu0
    %5076 = vdwg.mxu0
    %v5077 = vsel %vm378, %v4996, -inf
    %5078 = vmax.xlane.f32.xlu0 %v5077
    %v5079 = vpop.xlane.xlu0 %5078
    %v5080 = vsel %vm378, %v5074, -inf
    %5081 = vmax.xlane.f32.xlu0 %v5080
    %v5082 = vpop.xlane.xlu0 %5081
    %v5083 = vsub.f32 %v4996, %v5079
    %v5084 = vsub.f32 %v5074, %v5082
    %v5085 = vmul.f32 %v5083, 1.442695
    %v5086 = vpow.pop %v5085
    %v5087 = vmul.f32 %v5084, 1.442695
    %v5088 = vpow.pop %v5087
    %v5089 = vsel %vm378, %v5086, 0.0
    %5090 = vadd.xlane.f32.xlu0 %v5089
    %v5091 = vpop.xlane.xlu0 %5090
    %v5092 = vsel %vm378, %v5088, 0.0
    %5093 = vadd.xlane.f32.xlu0 %v5092
    %v5094 = vpop.xlane.xlu0 %5093
    %v5095 = vrcp.pop %v5091
    %v5096 = vrcp.pop %v5094
    %v5097 = vmul.f32 %v5086, %v5095
    %v5098 = vmul.f32 %v5088, %v5096
    %5100 = vrot.lane.b32.xlu0 %v4584, 120
    %v5101 = vpop.permute.xlu0 %5100
    %v5104 = vsel %vm378, %v5097, 0
    %5106 = vmatprep.subr.mxu0 0.0
    %5107 = vmatpush1.msra.mxu0 %v5101
    %5108 = vmatprep.subr.mxu0 0.0
    %5109 = vmatpush1.msra.mxu0 0.0
    %5110 = vmatprep.subr.mxu0 0.0
    %5111 = vmatpush1.msra.mxu0 0.0
    %5112 = vmatprep.subr.mxu0 0.0
    %5113 = vmatpush1.msra.mxu0 0.0
    %5114 = vmatprep.subr.mxu0 0.0
    %5115 = vmatpush1.msra.mxu0 0.0
    %5116 = vmatprep.subr.mxu0 0.0
    %5117 = vmatpush1.msra.mxu0 0.0
    %5118 = vmatprep.subr.mxu0 0.0
    %5119 = vmatpush1.msra.mxu0 0.0
    %5120 = vmatprep.subr.mxu0 0.0
    %5121 = vmatpush1.msra.mxu0 0.0
    %5122 = vmatprep.subr.mxu0 0.0
    %5123 = vmatpush1.msra.mxu0 0.0
    %5124 = vmatprep.subr.mxu0 0.0
    %5125 = vmatpush1.msra.mxu0 0.0
    %5126 = vmatprep.subr.mxu0 0.0
    %5127 = vmatpush1.msra.mxu0 0.0
    %5128 = vmatprep.subr.mxu0 0.0
    %5129 = vmatpush1.msra.mxu0 0.0
    %5130 = vmatprep.subr.mxu0 0.0
    %5131 = vmatpush1.msra.mxu0 0.0
    %5132 = vmatprep.subr.mxu0 0.0
    %5133 = vmatpush1.msra.mxu0 0.0
    %5134 = vmatprep.subr.mxu0 0.0
    %5135 = vmatpush1.msra.mxu0 0.0
    %5136 = vmatprep.subr.mxu0 0.0
    %5137 = vmatpush1.msra.mxu0 0.0
    %5138 = vmatprep.subr.mxu0 0.0
    %5139 = vmatpush1.msra.mxu0 0.0
    %5140 = vmatprep.subr.mxu0 0.0
    %5141 = vmatpush1.msra.mxu0 0.0
    %5142 = vmatprep.subr.mxu0 0.0
    %5143 = vmatpush1.msra.mxu0 0.0
    %5144 = vmatprep.subr.mxu0 0.0
    %5145 = vmatpush1.msra.mxu0 0.0
    %5146 = vmatprep.subr.mxu0 0.0
    %5147 = vmatpush1.msra.mxu0 0.0
    %5148 = vmatprep.subr.mxu0 0.0
    %5149 = vmatpush1.msra.mxu0 0.0
    %5150 = vmatprep.subr.mxu0 0.0
    %5151 = vmatpush1.msra.mxu0 0.0
    %5152 = vmatprep.subr.mxu0 0.0
    %5153 = vmatpush1.msra.mxu0 0.0
    %5154 = vmatprep.subr.mxu0 0.0
    %5155 = vmatpush1.msra.mxu0 0.0
    %5156 = vmatprep.subr.mxu0 0.0
    %5157 = vmatpush1.msra.mxu0 0.0
    %5158 = vmatprep.subr.mxu0 0.0
    %5159 = vmatpush1.msra.mxu0 0.0
    %5160 = vmatprep.subr.mxu0 0.0
    %5161 = vmatpush1.msra.mxu0 0.0
    %5162 = vmatprep.subr.mxu0 0.0
    %5163 = vmatpush1.msra.mxu0 0.0
    %5164 = vmatprep.subr.mxu0 0.0
    %5165 = vmatpush1.msra.mxu0 0.0
    %5166 = vmatprep.subr.mxu0 0.0
    %5167 = vmatpush1.msra.mxu0 0.0
    %5168 = vmatprep.subr.mxu0 0.0
    %5169 = vmatpush1.msra.mxu0 0.0
    %5170 = vmatprep.mubr.f32.mxu0 0.0
    %5171 = vmatmul.mubr.f32.gmra.mrb[0].mxu0 %v5104
    %v5172 = vpop.f32.mrb[0].mxu0
    %v5173 = vadd.f32 0.0, %v5172
    %v5174 = vpop.f32.mrb[0].mxu0
    %5175 = vdwg.mxu0
    %5177 = vrot.lane.b32.xlu0 %v4589, 120
    %v5178 = vpop.permute.xlu0 %5177
    %v5181 = vsel %vm378, %v5098, 0
    %5183 = vmatprep.subr.mxu0 0.0
    %5184 = vmatpush1.msra.mxu0 %v5178
    %5185 = vmatprep.subr.mxu0 0.0
    %5186 = vmatpush1.msra.mxu0 0.0
    %5187 = vmatprep.subr.mxu0 0.0
    %5188 = vmatpush1.msra.mxu0 0.0
    %5189 = vmatprep.subr.mxu0 0.0
    %5190 = vmatpush1.msra.mxu0 0.0
    %5191 = vmatprep.subr.mxu0 0.0
    %5192 = vmatpush1.msra.mxu0 0.0
    %5193 = vmatprep.subr.mxu0 0.0
    %5194 = vmatpush1.msra.mxu0 0.0
    %5195 = vmatprep.subr.mxu0 0.0
    %5196 = vmatpush1.msra.mxu0 0.0
    %5197 = vmatprep.subr.mxu0 0.0
    %5198 = vmatpush1.msra.mxu0 0.0
    %5199 = vmatprep.subr.mxu0 0.0
    %5200 = vmatpush1.msra.mxu0 0.0
    %5201 = vmatprep.subr.mxu0 0.0
    %5202 = vmatpush1.msra.mxu0 0.0
    %5203 = vmatprep.subr.mxu0 0.0
    %5204 = vmatpush1.msra.mxu0 0.0
    %5205 = vmatprep.subr.mxu0 0.0
    %5206 = vmatpush1.msra.mxu0 0.0
    %5207 = vmatprep.subr.mxu0 0.0
    %5208 = vmatpush1.msra.mxu0 0.0
    %5209 = vmatprep.subr.mxu0 0.0
    %5210 = vmatpush1.msra.mxu0 0.0
    %5211 = vmatprep.subr.mxu0 0.0
    %5212 = vmatpush1.msra.mxu0 0.0
    %5213 = vmatprep.subr.mxu0 0.0
    %5214 = vmatpush1.msra.mxu0 0.0
    %5215 = vmatprep.subr.mxu0 0.0
    %5216 = vmatpush1.msra.mxu0 0.0
    %5217 = vmatprep.subr.mxu0 0.0
    %5218 = vmatpush1.msra.mxu0 0.0
    %5219 = vmatprep.subr.mxu0 0.0
    %5220 = vmatpush1.msra.mxu0 0.0
    %5221 = vmatprep.subr.mxu0 0.0
    %5222 = vmatpush1.msra.mxu0 0.0
    %5223 = vmatprep.subr.mxu0 0.0
    %5224 = vmatpush1.msra.mxu0 0.0
    %5225 = vmatprep.subr.mxu0 0.0
    %5226 = vmatpush1.msra.mxu0 0.0
    %5227 = vmatprep.subr.mxu0 0.0
    %5228 = vmatpush1.msra.mxu0 0.0
    %5229 = vmatprep.subr.mxu0 0.0
    %5230 = vmatpush1.msra.mxu0 0.0
    %5231 = vmatprep.subr.mxu0 0.0
    %5232 = vmatpush1.msra.mxu0 0.0
    %5233 = vmatprep.subr.mxu0 0.0
    %5234 = vmatpush1.msra.mxu0 0.0
    %5235 = vmatprep.subr.mxu0 0.0
    %5236 = vmatpush1.msra.mxu0 0.0
    %5237 = vmatprep.subr.mxu0 0.0
    %5238 = vmatpush1.msra.mxu0 0.0
    %5239 = vmatprep.subr.mxu0 0.0
    %5240 = vmatpush1.msra.mxu0 0.0
    %5241 = vmatprep.subr.mxu0 0.0
    %5242 = vmatpush1.msra.mxu0 0.0
    %5243 = vmatprep.subr.mxu0 0.0
    %5244 = vmatpush1.msra.mxu0 0.0
    %5245 = vmatprep.subr.mxu0 0.0
    %5246 = vmatpush1.msra.mxu0 0.0
    %5247 = vmatprep.mubr.f32.mxu0 0.0
    %5248 = vmatmul.mubr.f32.gmra.mrb[0].mxu0 %v5181
    %v5249 = vpop.f32.mrb[0].mxu0
    %v5250 = vadd.f32 0.0, %v5249
    %v5251 = vpop.f32.mrb[0].mxu0
    %5252 = vdwg.mxu0
    %v5254 = vsel %vm378, %v5173, 0
    %v5257 = vsel %vm378, %v5250, 0
    %5259 = vmatprep.subr.mxu0 0.0
    %5260 = vmatpush1.msra.mxu0 %v4594
    %5261 = vmatprep.subr.mxu0 0.0
    %5262 = vmatpush1.msra.mxu0 0.0
    %5263 = vmatprep.subr.mxu0 0.0
    %5264 = vmatpush1.msra.mxu0 0.0
    %5265 = vmatprep.subr.mxu0 0.0
    %5266 = vmatpush1.msra.mxu0 0.0
    %5267 = vmatprep.subr.mxu0 0.0
    %5268 = vmatpush1.msra.mxu0 0.0
    %5269 = vmatprep.subr.mxu0 0.0
    %5270 = vmatpush1.msra.mxu0 0.0
    %5271 = vmatprep.subr.mxu0 0.0
    %5272 = vmatpush1.msra.mxu0 0.0
    %5273 = vmatprep.subr.mxu0 0.0
    %5274 = vmatpush1.msra.mxu0 0.0
    %5275 = vmatprep.subr.mxu0 0.0
    %5276 = vmatpush1.msra.mxu0 0.0
    %5277 = vmatprep.subr.mxu0 0.0
    %5278 = vmatpush1.msra.mxu0 0.0
    %5279 = vmatprep.subr.mxu0 0.0
    %5280 = vmatpush1.msra.mxu0 0.0
    %5281 = vmatprep.subr.mxu0 0.0
    %5282 = vmatpush1.msra.mxu0 0.0
    %5283 = vmatprep.subr.mxu0 0.0
    %5284 = vmatpush1.msra.mxu0 0.0
    %5285 = vmatprep.subr.mxu0 0.0
    %5286 = vmatpush1.msra.mxu0 0.0
    %5287 = vmatprep.subr.mxu0 0.0
    %5288 = vmatpush1.msra.mxu0 0.0
    %5289 = vmatprep.subr.mxu0 0.0
    %5290 = vmatpush1.msra.mxu0 0.0
    %5291 = vmatprep.subr.mxu0 0.0
    %5292 = vmatpush1.msra.mxu0 0.0
    %5293 = vmatprep.subr.mxu0 0.0
    %5294 = vmatpush1.msra.mxu0 0.0
    %5295 = vmatprep.subr.mxu0 0.0
    %5296 = vmatpush1.msra.mxu0 0.0
    %5297 = vmatprep.subr.mxu0 0.0
    %5298 = vmatpush1.msra.mxu0 0.0
    %5299 = vmatprep.subr.mxu0 0.0
    %5300 = vmatpush1.msra.mxu0 0.0
    %5301 = vmatprep.subr.mxu0 0.0
    %5302 = vmatpush1.msra.mxu0 0.0
    %5303 = vmatprep.subr.mxu0 0.0
    %5304 = vmatpush1.msra.mxu0 0.0
    %5305 = vmatprep.subr.mxu0 0.0
    %5306 = vmatpush1.msra.mxu0 0.0
    %5307 = vmatprep.subr.mxu0 0.0
    %5308 = vmatpush1.msra.mxu0 0.0
    %5309 = vmatprep.subr.mxu0 0.0
    %5310 = vmatpush1.msra.mxu0 0.0
    %5311 = vmatprep.subr.mxu0 0.0
    %5312 = vmatpush1.msra.mxu0 0.0
    %5313 = vmatprep.subr.mxu0 0.0
    %5314 = vmatpush1.msra.mxu0 0.0
    %5315 = vmatprep.subr.mxu0 0.0
    %5316 = vmatpush1.msra.mxu0 0.0
    %5317 = vmatprep.subr.mxu0 0.0
    %5318 = vmatpush1.msra.mxu0 0.0
    %5319 = vmatprep.subr.mxu0 0.0
    %5320 = vmatpush1.msra.mxu0 0.0
    %5321 = vmatprep.subr.mxu0 0.0
    %5322 = vmatpush1.msra.mxu0 0.0
    %5323 = vmatprep.mubr.f32.mxu0 0.0
    %5324 = vmatmul.mubr.f32.gmra.mrb[0].mxu0 %v5254
    %v5325 = vpop.f32.mrb[0].mxu0
    %v5326 = vadd.f32 0.0, %v5325
    %v5327 = vpop.f32.mrb[0].mxu0
    %5328 = vmatprep.mubr.f32.mxu0 0.0
    %5329 = vmatmul.mubr.f32.gmra.mrb[0].mxu0 %v5257
    %v5330 = vpop.f32.mrb[0].mxu0
    %v5331 = vadd.f32 0.0, %v5330
    %v5332 = vpop.f32.mrb[0].mxu0
    %5333 = vdwg.mxu0
    %v5335 = vsel %vm378, %v4845, 0
    %v5338 = vsel %vm378, %v4918, 0
    %5340 = vmatprep.subr.mxu0 0.0
    %5341 = vmatpush1.msra.mxu0 %v4593
    %5342 = vmatprep.subr.mxu0 0.0
    %5343 = vmatpush1.msra.mxu0 0.0
    %5344 = vmatprep.subr.mxu0 0.0
    %5345 = vmatpush1.msra.mxu0 0.0
    %5346 = vmatprep.subr.mxu0 0.0
    %5347 = vmatpush1.msra.mxu0 0.0
    %5348 = vmatprep.subr.mxu0 0.0
    %5349 = vmatpush1.msra.mxu0 0.0
    %5350 = vmatprep.subr.mxu0 0.0
    %5351 = vmatpush1.msra.mxu0 0.0
    %5352 = vmatprep.subr.mxu0 0.0
    %5353 = vmatpush1.msra.mxu0 0.0
    %5354 = vmatprep.subr.mxu0 0.0
    %5355 = vmatpush1.msra.mxu0 0.0
    %5356 = vmatprep.subr.mxu0 0.0
    %5357 = vmatpush1.msra.mxu0 0.0
    %5358 = vmatprep.subr.mxu0 0.0
    %5359 = vmatpush1.msra.mxu0 0.0
    %5360 = vmatprep.subr.mxu0 0.0
    %5361 = vmatpush1.msra.mxu0 0.0
    %5362 = vmatprep.subr.mxu0 0.0
    %5363 = vmatpush1.msra.mxu0 0.0
    %5364 = vmatprep.subr.mxu0 0.0
    %5365 = vmatpush1.msra.mxu0 0.0
    %5366 = vmatprep.subr.mxu0 0.0
    %5367 = vmatpush1.msra.mxu0 0.0
    %5368 = vmatprep.subr.mxu0 0.0
    %5369 = vmatpush1.msra.mxu0 0.0
    %5370 = vmatprep.subr.mxu0 0.0
    %5371 = vmatpush1.msra.mxu0 0.0
    %5372 = vmatprep.subr.mxu0 0.0
    %5373 = vmatpush1.msra.mxu0 0.0
    %5374 = vmatprep.subr.mxu0 0.0
    %5375 = vmatpush1.msra.mxu0 0.0
    %5376 = vmatprep.subr.mxu0 0.0
    %5377 = vmatpush1.msra.mxu0 0.0
    %5378 = vmatprep.subr.mxu0 0.0
    %5379 = vmatpush1.msra.mxu0 0.0
    %5380 = vmatprep.subr.mxu0 0.0
    %5381 = vmatpush1.msra.mxu0 0.0
    %5382 = vmatprep.subr.mxu0 0.0
    %5383 = vmatpush1.msra.mxu0 0.0
    %5384 = vmatprep.subr.mxu0 0.0
    %5385 = vmatpush1.msra.mxu0 0.0
    %5386 = vmatprep.subr.mxu0 0.0
    %5387 = vmatpush1.msra.mxu0 0.0
    %5388 = vmatprep.subr.mxu0 0.0
    %5389 = vmatpush1.msra.mxu0 0.0
    %5390 = vmatprep.subr.mxu0 0.0
    %5391 = vmatpush1.msra.mxu0 0.0
    %5392 = vmatprep.subr.mxu0 0.0
    %5393 = vmatpush1.msra.mxu0 0.0
    %5394 = vmatprep.subr.mxu0 0.0
    %5395 = vmatpush1.msra.mxu0 0.0
    %5396 = vmatprep.subr.mxu0 0.0
    %5397 = vmatpush1.msra.mxu0 0.0
    %5398 = vmatprep.subr.mxu0 0.0
    %5399 = vmatpush1.msra.mxu0 0.0
    %5400 = vmatprep.subr.mxu0 0.0
    %5401 = vmatpush1.msra.mxu0 0.0
    %5402 = vmatprep.subr.mxu0 0.0
    %5403 = vmatpush1.msra.mxu0 0.0
    %5404 = vmatprep.mubr.f32.mxu0 0.0
    %5405 = vmatmul.mubr.f32.gmra.mrb[0].mxu0 %v5335
    %v5406 = vpop.f32.mrb[0].mxu0
    %v5407 = vadd.f32 %v5326, %v5406
    %v5408 = vpop.f32.mrb[0].mxu0
    %5409 = vmatprep.mubr.f32.mxu0 0.0
    %5410 = vmatmul.mubr.f32.gmra.mrb[0].mxu0 %v5338
    %v5411 = vpop.f32.mrb[0].mxu0
    %v5412 = vadd.f32 %v5331, %v5411
    %v5413 = vpop.f32.mrb[0].mxu0
    %5414 = vdwg.mxu0
    %5415 = vrot.lane.b32.xlu0 %v4490, 112
    %v5416 = vpop.permute.xlu0 %5415
    %5417 = vrot.lane.b32.xlu0 %v4490, 80
    %v5418 = vpop.permute.xlu0 %5417
    %v5419 = vsel %vm378, %v5416, 0
    %v5421 = vsel %vm378, %v5418, 0
    %5423 = vmatprep.subr.mxu0 0.0
    %5424 = vmatpush1.xpose.msra.mxu0 %v5421
    %5425 = vmatprep.subr.mxu0 0.0
    %5426 = vmatpush1.xpose.msra.mxu0 0.0
    %5427 = vmatprep.subr.mxu0 0.0
    %5428 = vmatpush1.xpose.msra.mxu0 0.0
    %5429 = vmatprep.subr.mxu0 0.0
    %5430 = vmatpush1.xpose.msra.mxu0 0.0
    %5431 = vmatprep.subr.mxu0 0.0
    %5432 = vmatpush1.xpose.msra.mxu0 0.0
    %5433 = vmatprep.subr.mxu0 0.0
    %5434 = vmatpush1.xpose.msra.mxu0 0.0
    %5435 = vmatprep.subr.mxu0 0.0
    %5436 = vmatpush1.xpose.msra.mxu0 0.0
    %5437 = vmatprep.subr.mxu0 0.0
    %5438 = vmatpush1.xpose.msra.mxu0 0.0
    %5439 = vmatprep.subr.mxu0 0.0
    %5440 = vmatpush1.xpose.msra.mxu0 0.0
    %5441 = vmatprep.subr.mxu0 0.0
    %5442 = vmatpush1.xpose.msra.mxu0 0.0
    %5443 = vmatprep.subr.mxu0 0.0
    %5444 = vmatpush1.xpose.msra.mxu0 0.0
    %5445 = vmatprep.subr.mxu0 0.0
    %5446 = vmatpush1.xpose.msra.mxu0 0.0
    %5447 = vmatprep.subr.mxu0 0.0
    %5448 = vmatpush1.xpose.msra.mxu0 0.0
    %5449 = vmatprep.subr.mxu0 0.0
    %5450 = vmatpush1.xpose.msra.mxu0 0.0
    %5451 = vmatprep.subr.mxu0 0.0
    %5452 = vmatpush1.xpose.msra.mxu0 0.0
    %5453 = vmatprep.subr.mxu0 0.0
    %5454 = vmatpush1.xpose.msra.mxu0 0.0
    %5455 = vmatprep.subr.mxu0 0.0
    %5456 = vmatpush1.xpose.msra.mxu0 0.0
    %5457 = vmatprep.subr.mxu0 0.0
    %5458 = vmatpush1.xpose.msra.mxu0 0.0
    %5459 = vmatprep.subr.mxu0 0.0
    %5460 = vmatpush1.xpose.msra.mxu0 0.0
    %5461 = vmatprep.subr.mxu0 0.0
    %5462 = vmatpush1.xpose.msra.mxu0 0.0
    %5463 = vmatprep.subr.mxu0 0.0
    %5464 = vmatpush1.xpose.msra.mxu0 0.0
    %5465 = vmatprep.subr.mxu0 0.0
    %5466 = vmatpush1.xpose.msra.mxu0 0.0
    %5467 = vmatprep.subr.mxu0 0.0
    %5468 = vmatpush1.xpose.msra.mxu0 0.0
    %5469 = vmatprep.subr.mxu0 0.0
    %5470 = vmatpush1.xpose.msra.mxu0 0.0
    %5471 = vmatprep.subr.mxu0 0.0
    %5472 = vmatpush1.xpose.msra.mxu0 0.0
    %5473 = vmatprep.subr.mxu0 0.0
    %5474 = vmatpush1.xpose.msra.mxu0 0.0
    %5475 = vmatprep.subr.mxu0 0.0
    %5476 = vmatpush1.xpose.msra.mxu0 0.0
    %5477 = vmatprep.subr.mxu0 0.0
    %5478 = vmatpush1.xpose.msra.mxu0 0.0
    %5479 = vmatprep.subr.mxu0 0.0
    %5480 = vmatpush1.xpose.msra.mxu0 0.0
    %5481 = vmatprep.subr.mxu0 0.0
    %5482 = vmatpush1.xpose.msra.mxu0 0.0
    %5483 = vmatprep.subr.mxu0 0.0
    %5484 = vmatpush1.xpose.msra.mxu0 0.0
    %5485 = vmatprep.subr.mxu0 0.0
    %5486 = vmatpush1.xpose.msra.mxu0 0.0
    %5487 = vmatprep.mubr.f32.mxu0 0.0
    %5488 = vmatmul.mubr.f32.gmra.mrb[0].mxu0 %v5419
    %v5489 = vpop.f32.mrb[0].mxu0
    %v5490 = vadd.f32 0.0, %v5489
    %v5491 = vpop.f32.mrb[0].mxu0
    %5492 = vdwg.mxu0
    %5493 = vrot.lane.b32.xlu0 %v4495, 112
    %v5494 = vpop.permute.xlu0 %5493
    %5495 = vrot.lane.b32.xlu0 %v4495, 80
    %v5496 = vpop.permute.xlu0 %5495
    %v5497 = vsel %vm378, %v5494, 0
    %v5499 = vsel %vm378, %v5496, 0
    %5501 = vmatprep.subr.mxu0 0.0
    %5502 = vmatpush1.xpose.msra.mxu0 %v5499
    %5503 = vmatprep.subr.mxu0 0.0
    %5504 = vmatpush1.xpose.msra.mxu0 0.0
    %5505 = vmatprep.subr.mxu0 0.0
    %5506 = vmatpush1.xpose.msra.mxu0 0.0
    %5507 = vmatprep.subr.mxu0 0.0
    %5508 = vmatpush1.xpose.msra.mxu0 0.0
    %5509 = vmatprep.subr.mxu0 0.0
    %5510 = vmatpush1.xpose.msra.mxu0 0.0
    %5511 = vmatprep.subr.mxu0 0.0
    %5512 = vmatpush1.xpose.msra.mxu0 0.0
    %5513 = vmatprep.subr.mxu0 0.0
    %5514 = vmatpush1.xpose.msra.mxu0 0.0
    %5515 = vmatprep.subr.mxu0 0.0
    %5516 = vmatpush1.xpose.msra.mxu0 0.0
    %5517 = vmatprep.subr.mxu0 0.0
    %5518 = vmatpush1.xpose.msra.mxu0 0.0
    %5519 = vmatprep.subr.mxu0 0.0
    %5520 = vmatpush1.xpose.msra.mxu0 0.0
    %5521 = vmatprep.subr.mxu0 0.0
    %5522 = vmatpush1.xpose.msra.mxu0 0.0
    %5523 = vmatprep.subr.mxu0 0.0
    %5524 = vmatpush1.xpose.msra.mxu0 0.0
    %5525 = vmatprep.subr.mxu0 0.0
    %5526 = vmatpush1.xpose.msra.mxu0 0.0
    %5527 = vmatprep.subr.mxu0 0.0
    %5528 = vmatpush1.xpose.msra.mxu0 0.0
    %5529 = vmatprep.subr.mxu0 0.0
    %5530 = vmatpush1.xpose.msra.mxu0 0.0
    %5531 = vmatprep.subr.mxu0 0.0
    %5532 = vmatpush1.xpose.msra.mxu0 0.0
    %5533 = vmatprep.subr.mxu0 0.0
    %5534 = vmatpush1.xpose.msra.mxu0 0.0
    %5535 = vmatprep.subr.mxu0 0.0
    %5536 = vmatpush1.xpose.msra.mxu0 0.0
    %5537 = vmatprep.subr.mxu0 0.0
    %5538 = vmatpush1.xpose.msra.mxu0 0.0
    %5539 = vmatprep.subr.mxu0 0.0
    %5540 = vmatpush1.xpose.msra.mxu0 0.0
    %5541 = vmatprep.subr.mxu0 0.0
    %5542 = vmatpush1.xpose.msra.mxu0 0.0
    %5543 = vmatprep.subr.mxu0 0.0
    %5544 = vmatpush1.xpose.msra.mxu0 0.0
    %5545 = vmatprep.subr.mxu0 0.0
    %5546 = vmatpush1.xpose.msra.mxu0 0.0
    %5547 = vmatprep.subr.mxu0 0.0
    %5548 = vmatpush1.xpose.msra.mxu0 0.0
    %5549 = vmatprep.subr.mxu0 0.0
    %5550 = vmatpush1.xpose.msra.mxu0 0.0
    %5551 = vmatprep.subr.mxu0 0.0
    %5552 = vmatpush1.xpose.msra.mxu0 0.0
    %5553 = vmatprep.subr.mxu0 0.0
    %5554 = vmatpush1.xpose.msra.mxu0 0.0
    %5555 = vmatprep.subr.mxu0 0.0
    %5556 = vmatpush1.xpose.msra.mxu0 0.0
    %5557 = vmatprep.subr.mxu0 0.0
    %5558 = vmatpush1.xpose.msra.mxu0 0.0
    %5559 = vmatprep.subr.mxu0 0.0
    %5560 = vmatpush1.xpose.msra.mxu0 0.0
    %5561 = vmatprep.subr.mxu0 0.0
    %5562 = vmatpush1.xpose.msra.mxu0 0.0
    %5563 = vmatprep.subr.mxu0 0.0
    %5564 = vmatpush1.xpose.msra.mxu0 0.0
    %5565 = vmatprep.mubr.f32.mxu0 0.0
    %5566 = vmatmul.mubr.f32.gmra.mrb[0].mxu0 %v5497
    %v5567 = vpop.f32.mrb[0].mxu0
    %v5568 = vadd.f32 0.0, %v5567
    %v5569 = vpop.f32.mrb[0].mxu0
    %5570 = vdwg.mxu0
    %v5571 = vsel %vm378, %v5490, -inf
    %5572 = vmax.xlane.f32.xlu0 %v5571
    %v5573 = vpop.xlane.xlu0 %5572
    %v5574 = vsel %vm378, %v5568, -inf
    %5575 = vmax.xlane.f32.xlu0 %v5574
    %v5576 = vpop.xlane.xlu0 %5575
    %v5577 = vsub.f32 %v5490, %v5573
    %v5578 = vsub.f32 %v5568, %v5576
    %v5579 = vmul.f32 %v5577, 1.442695
    %v5580 = vpow.pop %v5579
    %v5581 = vmul.f32 %v5578, 1.442695
    %v5582 = vpow.pop %v5581
    %v5583 = vsel %vm378, %v5580, 0.0
    %5584 = vadd.xlane.f32.xlu0 %v5583
    %v5585 = vpop.xlane.xlu0 %5584
    %v5586 = vsel %vm378, %v5582, 0.0
    %5587 = vadd.xlane.f32.xlu0 %v5586
    %v5588 = vpop.xlane.xlu0 %5587
    %v5589 = vrcp.pop %v5585
    %v5590 = vrcp.pop %v5588
    %v5591 = vmul.f32 %v5580, %v5589
    %v5592 = vmul.f32 %v5582, %v5590
    %5593 = vrot.lane.b32.xlu0 %v4584, 112
    %v5594 = vpop.permute.xlu0 %5593
    %v5597 = vsel %vm378, %v5591, 0
    %5599 = vmatprep.subr.mxu0 0.0
    %5600 = vmatpush1.msra.mxu0 %v5594
    %5601 = vmatprep.subr.mxu0 0.0
    %5602 = vmatpush1.msra.mxu0 0.0
    %5603 = vmatprep.subr.mxu0 0.0
    %5604 = vmatpush1.msra.mxu0 0.0
    %5605 = vmatprep.subr.mxu0 0.0
    %5606 = vmatpush1.msra.mxu0 0.0
    %5607 = vmatprep.subr.mxu0 0.0
    %5608 = vmatpush1.msra.mxu0 0.0
    %5609 = vmatprep.subr.mxu0 0.0
    %5610 = vmatpush1.msra.mxu0 0.0
    %5611 = vmatprep.subr.mxu0 0.0
    %5612 = vmatpush1.msra.mxu0 0.0
    %5613 = vmatprep.subr.mxu0 0.0
    %5614 = vmatpush1.msra.mxu0 0.0
    %5615 = vmatprep.subr.mxu0 0.0
    %5616 = vmatpush1.msra.mxu0 0.0
    %5617 = vmatprep.subr.mxu0 0.0
    %5618 = vmatpush1.msra.mxu0 0.0
    %5619 = vmatprep.subr.mxu0 0.0
    %5620 = vmatpush1.msra.mxu0 0.0
    %5621 = vmatprep.subr.mxu0 0.0
    %5622 = vmatpush1.msra.mxu0 0.0
    %5623 = vmatprep.subr.mxu0 0.0
    %5624 = vmatpush1.msra.mxu0 0.0
    %5625 = vmatprep.subr.mxu0 0.0
    %5626 = vmatpush1.msra.mxu0 0.0
    %5627 = vmatprep.subr.mxu0 0.0
    %5628 = vmatpush1.msra.mxu0 0.0
    %5629 = vmatprep.subr.mxu0 0.0
    %5630 = vmatpush1.msra.mxu0 0.0
    %5631 = vmatprep.subr.mxu0 0.0
    %5632 = vmatpush1.msra.mxu0 0.0
    %5633 = vmatprep.subr.mxu0 0.0
    %5634 = vmatpush1.msra.mxu0 0.0
    %5635 = vmatprep.subr.mxu0 0.0
    %5636 = vmatpush1.msra.mxu0 0.0
    %5637 = vmatprep.subr.mxu0 0.0
    %5638 = vmatpush1.msra.mxu0 0.0
    %5639 = vmatprep.subr.mxu0 0.0
    %5640 = vmatpush1.msra.mxu0 0.0
    %5641 = vmatprep.subr.mxu0 0.0
    %5642 = vmatpush1.msra.mxu0 0.0
    %5643 = vmatprep.subr.mxu0 0.0
    %5644 = vmatpush1.msra.mxu0 0.0
    %5645 = vmatprep.subr.mxu0 0.0
    %5646 = vmatpush1.msra.mxu0 0.0
    %5647 = vmatprep.subr.mxu0 0.0
    %5648 = vmatpush1.msra.mxu0 0.0
    %5649 = vmatprep.subr.mxu0 0.0
    %5650 = vmatpush1.msra.mxu0 0.0
    %5651 = vmatprep.subr.mxu0 0.0
    %5652 = vmatpush1.msra.mxu0 0.0
    %5653 = vmatprep.subr.mxu0 0.0
    %5654 = vmatpush1.msra.mxu0 0.0
    %5655 = vmatprep.subr.mxu0 0.0
    %5656 = vmatpush1.msra.mxu0 0.0
    %5657 = vmatprep.subr.mxu0 0.0
    %5658 = vmatpush1.msra.mxu0 0.0
    %5659 = vmatprep.subr.mxu0 0.0
    %5660 = vmatpush1.msra.mxu0 0.0
    %5661 = vmatprep.subr.mxu0 0.0
    %5662 = vmatpush1.msra.mxu0 0.0
    %5663 = vmatprep.mubr.f32.mxu0 0.0
    %5664 = vmatmul.mubr.f32.gmra.mrb[0].mxu0 %v5597
    %v5665 = vpop.f32.mrb[0].mxu0
    %v5666 = vadd.f32 0.0, %v5665
    %v5667 = vpop.f32.mrb[0].mxu0
    %5668 = vdwg.mxu0
    %5669 = vrot.lane.b32.xlu0 %v4589, 112
    %v5670 = vpop.permute.xlu0 %5669
    %v5673 = vsel %vm378, %v5592, 0
    %5675 = vmatprep.subr.mxu0 0.0
    %5676 = vmatpush1.msra.mxu0 %v5670
    %5677 = vmatprep.subr.mxu0 0.0
    %5678 = vmatpush1.msra.mxu0 0.0
    %5679 = vmatprep.subr.mxu0 0.0
    %5680 = vmatpush1.msra.mxu0 0.0
    %5681 = vmatprep.subr.mxu0 0.0
    %5682 = vmatpush1.msra.mxu0 0.0
    %5683 = vmatprep.subr.mxu0 0.0
    %5684 = vmatpush1.msra.mxu0 0.0
    %5685 = vmatprep.subr.mxu0 0.0
    %5686 = vmatpush1.msra.mxu0 0.0
    %5687 = vmatprep.subr.mxu0 0.0
    %5688 = vmatpush1.msra.mxu0 0.0
    %5689 = vmatprep.subr.mxu0 0.0
    %5690 = vmatpush1.msra.mxu0 0.0
    %5691 = vmatprep.subr.mxu0 0.0
    %5692 = vmatpush1.msra.mxu0 0.0
    %5693 = vmatprep.subr.mxu0 0.0
    %5694 = vmatpush1.msra.mxu0 0.0
    %5695 = vmatprep.subr.mxu0 0.0
    %5696 = vmatpush1.msra.mxu0 0.0
    %5697 = vmatprep.subr.mxu0 0.0
    %5698 = vmatpush1.msra.mxu0 0.0
    %5699 = vmatprep.subr.mxu0 0.0
    %5700 = vmatpush1.msra.mxu0 0.0
    %5701 = vmatprep.subr.mxu0 0.0
    %5702 = vmatpush1.msra.mxu0 0.0
    %5703 = vmatprep.subr.mxu0 0.0
    %5704 = vmatpush1.msra.mxu0 0.0
    %5705 = vmatprep.subr.mxu0 0.0
    %5706 = vmatpush1.msra.mxu0 0.0
    %5707 = vmatprep.subr.mxu0 0.0
    %5708 = vmatpush1.msra.mxu0 0.0
    %5709 = vmatprep.subr.mxu0 0.0
    %5710 = vmatpush1.msra.mxu0 0.0
    %5711 = vmatprep.subr.mxu0 0.0
    %5712 = vmatpush1.msra.mxu0 0.0
    %5713 = vmatprep.subr.mxu0 0.0
    %5714 = vmatpush1.msra.mxu0 0.0
    %5715 = vmatprep.subr.mxu0 0.0
    %5716 = vmatpush1.msra.mxu0 0.0
    %5717 = vmatprep.subr.mxu0 0.0
    %5718 = vmatpush1.msra.mxu0 0.0
    %5719 = vmatprep.subr.mxu0 0.0
    %5720 = vmatpush1.msra.mxu0 0.0
    %5721 = vmatprep.subr.mxu0 0.0
    %5722 = vmatpush1.msra.mxu0 0.0
    %5723 = vmatprep.subr.mxu0 0.0
    %5724 = vmatpush1.msra.mxu0 0.0
    %5725 = vmatprep.subr.mxu0 0.0
    %5726 = vmatpush1.msra.mxu0 0.0
    %5727 = vmatprep.subr.mxu0 0.0
    %5728 = vmatpush1.msra.mxu0 0.0
    %5729 = vmatprep.subr.mxu0 0.0
    %5730 = vmatpush1.msra.mxu0 0.0
    %5731 = vmatprep.subr.mxu0 0.0
    %5732 = vmatpush1.msra.mxu0 0.0
    %5733 = vmatprep.subr.mxu0 0.0
    %5734 = vmatpush1.msra.mxu0 0.0
    %5735 = vmatprep.subr.mxu0 0.0
    %5736 = vmatpush1.msra.mxu0 0.0
    %5737 = vmatprep.subr.mxu0 0.0
    %5738 = vmatpush1.msra.mxu0 0.0
    %5739 = vmatprep.mubr.f32.mxu0 0.0
    %5740 = vmatmul.mubr.f32.gmra.mrb[0].mxu0 %v5673
    %v5741 = vpop.f32.mrb[0].mxu0
    %v5742 = vadd.f32 0.0, %v5741
    %v5743 = vpop.f32.mrb[0].mxu0
    %5744 = vdwg.mxu0
    %v5746 = vsel %vm378, %v5666, 0
    %v5749 = vsel %vm378, %v5742, 0
    %5751 = vmatprep.subr.mxu0 0.0
    %5752 = vmatpush1.msra.mxu0 %v4595
    %5753 = vmatprep.subr.mxu0 0.0
    %5754 = vmatpush1.msra.mxu0 0.0
    %5755 = vmatprep.subr.mxu0 0.0
    %5756 = vmatpush1.msra.mxu0 0.0
    %5757 = vmatprep.subr.mxu0 0.0
    %5758 = vmatpush1.msra.mxu0 0.0
    %5759 = vmatprep.subr.mxu0 0.0
    %5760 = vmatpush1.msra.mxu0 0.0
    %5761 = vmatprep.subr.mxu0 0.0
    %5762 = vmatpush1.msra.mxu0 0.0
    %5763 = vmatprep.subr.mxu0 0.0
    %5764 = vmatpush1.msra.mxu0 0.0
    %5765 = vmatprep.subr.mxu0 0.0
    %5766 = vmatpush1.msra.mxu0 0.0
    %5767 = vmatprep.subr.mxu0 0.0
    %5768 = vmatpush1.msra.mxu0 0.0
    %5769 = vmatprep.subr.mxu0 0.0
    %5770 = vmatpush1.msra.mxu0 0.0
    %5771 = vmatprep.subr.mxu0 0.0
    %5772 = vmatpush1.msra.mxu0 0.0
    %5773 = vmatprep.subr.mxu0 0.0
    %5774 = vmatpush1.msra.mxu0 0.0
    %5775 = vmatprep.subr.mxu0 0.0
    %5776 = vmatpush1.msra.mxu0 0.0
    %5777 = vmatprep.subr.mxu0 0.0
    %5778 = vmatpush1.msra.mxu0 0.0
    %5779 = vmatprep.subr.mxu0 0.0
    %5780 = vmatpush1.msra.mxu0 0.0
    %5781 = vmatprep.subr.mxu0 0.0
    %5782 = vmatpush1.msra.mxu0 0.0
    %5783 = vmatprep.subr.mxu0 0.0
    %5784 = vmatpush1.msra.mxu0 0.0
    %5785 = vmatprep.subr.mxu0 0.0
    %5786 = vmatpush1.msra.mxu0 0.0
    %5787 = vmatprep.subr.mxu0 0.0
    %5788 = vmatpush1.msra.mxu0 0.0
    %5789 = vmatprep.subr.mxu0 0.0
    %5790 = vmatpush1.msra.mxu0 0.0
    %5791 = vmatprep.subr.mxu0 0.0
    %5792 = vmatpush1.msra.mxu0 0.0
    %5793 = vmatprep.subr.mxu0 0.0
    %5794 = vmatpush1.msra.mxu0 0.0
    %5795 = vmatprep.subr.mxu0 0.0
    %5796 = vmatpush1.msra.mxu0 0.0
    %5797 = vmatprep.subr.mxu0 0.0
    %5798 = vmatpush1.msra.mxu0 0.0
    %5799 = vmatprep.subr.mxu0 0.0
    %5800 = vmatpush1.msra.mxu0 0.0
    %5801 = vmatprep.subr.mxu0 0.0
    %5802 = vmatpush1.msra.mxu0 0.0
    %5803 = vmatprep.subr.mxu0 0.0
    %5804 = vmatpush1.msra.mxu0 0.0
    %5805 = vmatprep.subr.mxu0 0.0
    %5806 = vmatpush1.msra.mxu0 0.0
    %5807 = vmatprep.subr.mxu0 0.0
    %5808 = vmatpush1.msra.mxu0 0.0
    %5809 = vmatprep.subr.mxu0 0.0
    %5810 = vmatpush1.msra.mxu0 0.0
    %5811 = vmatprep.subr.mxu0 0.0
    %5812 = vmatpush1.msra.mxu0 0.0
    %5813 = vmatprep.subr.mxu0 0.0
    %5814 = vmatpush1.msra.mxu0 0.0
    %5815 = vmatprep.mubr.f32.mxu0 0.0
    %5816 = vmatmul.mubr.f32.gmra.mrb[0].mxu0 %v5746
    %v5817 = vpop.f32.mrb[0].mxu0
    %v5818 = vadd.f32 0.0, %v5817
    %v5819 = vpop.f32.mrb[0].mxu0
    %5820 = vmatprep.mubr.f32.mxu0 0.0
    %5821 = vmatmul.mubr.f32.gmra.mrb[0].mxu0 %v5749
    %v5822 = vpop.f32.mrb[0].mxu0
    %v5823 = vadd.f32 0.0, %v5822
    %v5824 = vpop.f32.mrb[0].mxu0
    %5825 = vdwg.mxu0
    %v5826 = vadd.f32 %v5407, %v5818
    %v5827 = vadd.f32 %v5412, %v5823
    %5828 = vrot.lane.b32.xlu0 %v4490, 104
    %v5829 = vpop.permute.xlu0 %5828
    %5830 = vrot.lane.b32.xlu0 %v4490, 72
    %v5831 = vpop.permute.xlu0 %5830
    %v5832 = vsel %vm378, %v5829, 0
    %v5834 = vsel %vm378, %v5831, 0
    %5836 = vmatprep.subr.mxu0 0.0
    %5837 = vmatpush1.xpose.msra.mxu0 %v5834
    %5838 = vmatprep.subr.mxu0 0.0
    %5839 = vmatpush1.xpose.msra.mxu0 0.0
    %5840 = vmatprep.subr.mxu0 0.0
    %5841 = vmatpush1.xpose.msra.mxu0 0.0
    %5842 = vmatprep.subr.mxu0 0.0
    %5843 = vmatpush1.xpose.msra.mxu0 0.0
    %5844 = vmatprep.subr.mxu0 0.0
    %5845 = vmatpush1.xpose.msra.mxu0 0.0
    %5846 = vmatprep.subr.mxu0 0.0
    %5847 = vmatpush1.xpose.msra.mxu0 0.0
    %5848 = vmatprep.subr.mxu0 0.0
    %5849 = vmatpush1.xpose.msra.mxu0 0.0
    %5850 = vmatprep.subr.mxu0 0.0
    %5851 = vmatpush1.xpose.msra.mxu0 0.0
    %5852 = vmatprep.subr.mxu0 0.0
    %5853 = vmatpush1.xpose.msra.mxu0 0.0
    %5854 = vmatprep.subr.mxu0 0.0
    %5855 = vmatpush1.xpose.msra.mxu0 0.0
    %5856 = vmatprep.subr.mxu0 0.0
    %5857 = vmatpush1.xpose.msra.mxu0 0.0
    %5858 = vmatprep.subr.mxu0 0.0
    %5859 = vmatpush1.xpose.msra.mxu0 0.0
    %5860 = vmatprep.subr.mxu0 0.0
    %5861 = vmatpush1.xpose.msra.mxu0 0.0
    %5862 = vmatprep.subr.mxu0 0.0
    %5863 = vmatpush1.xpose.msra.mxu0 0.0
    %5864 = vmatprep.subr.mxu0 0.0
    %5865 = vmatpush1.xpose.msra.mxu0 0.0
    %5866 = vmatprep.subr.mxu0 0.0
    %5867 = vmatpush1.xpose.msra.mxu0 0.0
    %5868 = vmatprep.subr.mxu0 0.0
    %5869 = vmatpush1.xpose.msra.mxu0 0.0
    %5870 = vmatprep.subr.mxu0 0.0
    %5871 = vmatpush1.xpose.msra.mxu0 0.0
    %5872 = vmatprep.subr.mxu0 0.0
    %5873 = vmatpush1.xpose.msra.mxu0 0.0
    %5874 = vmatprep.subr.mxu0 0.0
    %5875 = vmatpush1.xpose.msra.mxu0 0.0
    %5876 = vmatprep.subr.mxu0 0.0
    %5877 = vmatpush1.xpose.msra.mxu0 0.0
    %5878 = vmatprep.subr.mxu0 0.0
    %5879 = vmatpush1.xpose.msra.mxu0 0.0
    %5880 = vmatprep.subr.mxu0 0.0
    %5881 = vmatpush1.xpose.msra.mxu0 0.0
    %5882 = vmatprep.subr.mxu0 0.0
    %5883 = vmatpush1.xpose.msra.mxu0 0.0
    %5884 = vmatprep.subr.mxu0 0.0
    %5885 = vmatpush1.xpose.msra.mxu0 0.0
    %5886 = vmatprep.subr.mxu0 0.0
    %5887 = vmatpush1.xpose.msra.mxu0 0.0
    %5888 = vmatprep.subr.mxu0 0.0
    %5889 = vmatpush1.xpose.msra.mxu0 0.0
    %5890 = vmatprep.subr.mxu0 0.0
    %5891 = vmatpush1.xpose.msra.mxu0 0.0
    %5892 = vmatprep.subr.mxu0 0.0
    %5893 = vmatpush1.xpose.msra.mxu0 0.0
    %5894 = vmatprep.subr.mxu0 0.0
    %5895 = vmatpush1.xpose.msra.mxu0 0.0
    %5896 = vmatprep.subr.mxu0 0.0
    %5897 = vmatpush1.xpose.msra.mxu0 0.0
    %5898 = vmatprep.subr.mxu0 0.0
    %5899 = vmatpush1.xpose.msra.mxu0 0.0
    %5900 = vmatprep.mubr.f32.mxu0 0.0
    %5901 = vmatmul.mubr.f32.gmra.mrb[0].mxu0 %v5832
    %v5902 = vpop.f32.mrb[0].mxu0
    %v5903 = vadd.f32 0.0, %v5902
    %v5904 = vpop.f32.mrb[0].mxu0
    %5905 = vdwg.mxu0
    %5906 = vrot.lane.b32.xlu0 %v4495, 104
    %v5907 = vpop.permute.xlu0 %5906
    %5908 = vrot.lane.b32.xlu0 %v4495, 72
    %v5909 = vpop.permute.xlu0 %5908
    %v5910 = vsel %vm378, %v5907, 0
    %v5912 = vsel %vm378, %v5909, 0
    %5914 = vmatprep.subr.mxu0 0.0
    %5915 = vmatpush1.xpose.msra.mxu0 %v5912
    %5916 = vmatprep.subr.mxu0 0.0
    %5917 = vmatpush1.xpose.msra.mxu0 0.0
    %5918 = vmatprep.subr.mxu0 0.0
    %5919 = vmatpush1.xpose.msra.mxu0 0.0
    %5920 = vmatprep.subr.mxu0 0.0
    %5921 = vmatpush1.xpose.msra.mxu0 0.0
    %5922 = vmatprep.subr.mxu0 0.0
    %5923 = vmatpush1.xpose.msra.mxu0 0.0
    %5924 = vmatprep.subr.mxu0 0.0
    %5925 = vmatpush1.xpose.msra.mxu0 0.0
    %5926 = vmatprep.subr.mxu0 0.0
    %5927 = vmatpush1.xpose.msra.mxu0 0.0
    %5928 = vmatprep.subr.mxu0 0.0
    %5929 = vmatpush1.xpose.msra.mxu0 0.0
    %5930 = vmatprep.subr.mxu0 0.0
    %5931 = vmatpush1.xpose.msra.mxu0 0.0
    %5932 = vmatprep.subr.mxu0 0.0
    %5933 = vmatpush1.xpose.msra.mxu0 0.0
    %5934 = vmatprep.subr.mxu0 0.0
    %5935 = vmatpush1.xpose.msra.mxu0 0.0
    %5936 = vmatprep.subr.mxu0 0.0
    %5937 = vmatpush1.xpose.msra.mxu0 0.0
    %5938 = vmatprep.subr.mxu0 0.0
    %5939 = vmatpush1.xpose.msra.mxu0 0.0
    %5940 = vmatprep.subr.mxu0 0.0
    %5941 = vmatpush1.xpose.msra.mxu0 0.0
    %5942 = vmatprep.subr.mxu0 0.0
    %5943 = vmatpush1.xpose.msra.mxu0 0.0
    %5944 = vmatprep.subr.mxu0 0.0
    %5945 = vmatpush1.xpose.msra.mxu0 0.0
    %5946 = vmatprep.subr.mxu0 0.0
    %5947 = vmatpush1.xpose.msra.mxu0 0.0
    %5948 = vmatprep.subr.mxu0 0.0
    %5949 = vmatpush1.xpose.msra.mxu0 0.0
    %5950 = vmatprep.subr.mxu0 0.0
    %5951 = vmatpush1.xpose.msra.mxu0 0.0
    %5952 = vmatprep.subr.mxu0 0.0
    %5953 = vmatpush1.xpose.msra.mxu0 0.0
    %5954 = vmatprep.subr.mxu0 0.0
    %5955 = vmatpush1.xpose.msra.mxu0 0.0
    %5956 = vmatprep.subr.mxu0 0.0
    %5957 = vmatpush1.xpose.msra.mxu0 0.0
    %5958 = vmatprep.subr.mxu0 0.0
    %5959 = vmatpush1.xpose.msra.mxu0 0.0
    %5960 = vmatprep.subr.mxu0 0.0
    %5961 = vmatpush1.xpose.msra.mxu0 0.0
    %5962 = vmatprep.subr.mxu0 0.0
    %5963 = vmatpush1.xpose.msra.mxu0 0.0
    %5964 = vmatprep.subr.mxu0 0.0
    %5965 = vmatpush1.xpose.msra.mxu0 0.0
    %5966 = vmatprep.subr.mxu0 0.0
    %5967 = vmatpush1.xpose.msra.mxu0 0.0
    %5968 = vmatprep.subr.mxu0 0.0
    %5969 = vmatpush1.xpose.msra.mxu0 0.0
    %5970 = vmatprep.subr.mxu0 0.0
    %5971 = vmatpush1.xpose.msra.mxu0 0.0
    %5972 = vmatprep.subr.mxu0 0.0
    %5973 = vmatpush1.xpose.msra.mxu0 0.0
    %5974 = vmatprep.subr.mxu0 0.0
    %5975 = vmatpush1.xpose.msra.mxu0 0.0
    %5976 = vmatprep.subr.mxu0 0.0
    %5977 = vmatpush1.xpose.msra.mxu0 0.0
    %5978 = vmatprep.mubr.f32.mxu0 0.0
    %5979 = vmatmul.mubr.f32.gmra.mrb[0].mxu0 %v5910
    %v5980 = vpop.f32.mrb[0].mxu0
    %v5981 = vadd.f32 0.0, %v5980
    %v5982 = vpop.f32.mrb[0].mxu0
    %5983 = vdwg.mxu0
    %v5984 = vsel %vm378, %v5903, -inf
    %5985 = vmax.xlane.f32.xlu0 %v5984
    %v5986 = vpop.xlane.xlu0 %5985
    %v5987 = vsel %vm378, %v5981, -inf
    %5988 = vmax.xlane.f32.xlu0 %v5987
    %v5989 = vpop.xlane.xlu0 %5988
    %v5990 = vsub.f32 %v5903, %v5986
    %v5991 = vsub.f32 %v5981, %v5989
    %v5992 = vmul.f32 %v5990, 1.442695
    %v5993 = vpow.pop %v5992
    %v5994 = vmul.f32 %v5991, 1.442695
    %v5995 = vpow.pop %v5994
    %v5996 = vsel %vm378, %v5993, 0.0
    %5997 = vadd.xlane.f32.xlu0 %v5996
    %v5998 = vpop.xlane.xlu0 %5997
    %v5999 = vsel %vm378, %v5995, 0.0
    %6000 = vadd.xlane.f32.xlu0 %v5999
    %v6001 = vpop.xlane.xlu0 %6000
    %v6002 = vrcp.pop %v5998
    %v6003 = vrcp.pop %v6001
    %v6004 = vmul.f32 %v5993, %v6002
    %v6005 = vmul.f32 %v5995, %v6003
    %6006 = vrot.lane.b32.xlu0 %v4584, 104
    %v6007 = vpop.permute.xlu0 %6006
    %v6010 = vsel %vm378, %v6004, 0
    %6012 = vmatprep.subr.mxu0 0.0
    %6013 = vmatpush1.msra.mxu0 %v6007
    %6014 = vmatprep.subr.mxu0 0.0
    %6015 = vmatpush1.msra.mxu0 0.0
    %6016 = vmatprep.subr.mxu0 0.0
    %6017 = vmatpush1.msra.mxu0 0.0
    %6018 = vmatprep.subr.mxu0 0.0
    %6019 = vmatpush1.msra.mxu0 0.0
    %6020 = vmatprep.subr.mxu0 0.0
    %6021 = vmatpush1.msra.mxu0 0.0
    %6022 = vmatprep.subr.mxu0 0.0
    %6023 = vmatpush1.msra.mxu0 0.0
    %6024 = vmatprep.subr.mxu0 0.0
    %6025 = vmatpush1.msra.mxu0 0.0
    %6026 = vmatprep.subr.mxu0 0.0
    %6027 = vmatpush1.msra.mxu0 0.0
    %6028 = vmatprep.subr.mxu0 0.0
    %6029 = vmatpush1.msra.mxu0 0.0
    %6030 = vmatprep.subr.mxu0 0.0
    %6031 = vmatpush1.msra.mxu0 0.0
    %6032 = vmatprep.subr.mxu0 0.0
    %6033 = vmatpush1.msra.mxu0 0.0
    %6034 = vmatprep.subr.mxu0 0.0
    %6035 = vmatpush1.msra.mxu0 0.0
    %6036 = vmatprep.subr.mxu0 0.0
    %6037 = vmatpush1.msra.mxu0 0.0
    %6038 = vmatprep.subr.mxu0 0.0
    %6039 = vmatpush1.msra.mxu0 0.0
    %6040 = vmatprep.subr.mxu0 0.0
    %6041 = vmatpush1.msra.mxu0 0.0
    %6042 = vmatprep.subr.mxu0 0.0
    %6043 = vmatpush1.msra.mxu0 0.0
    %6044 = vmatprep.subr.mxu0 0.0
    %6045 = vmatpush1.msra.mxu0 0.0
    %6046 = vmatprep.subr.mxu0 0.0
    %6047 = vmatpush1.msra.mxu0 0.0
    %6048 = vmatprep.subr.mxu0 0.0
    %6049 = vmatpush1.msra.mxu0 0.0
    %6050 = vmatprep.subr.mxu0 0.0
    %6051 = vmatpush1.msra.mxu0 0.0
    %6052 = vmatprep.subr.mxu0 0.0
    %6053 = vmatpush1.msra.mxu0 0.0
    %6054 = vmatprep.subr.mxu0 0.0
    %6055 = vmatpush1.msra.mxu0 0.0
    %6056 = vmatprep.subr.mxu0 0.0
    %6057 = vmatpush1.msra.mxu0 0.0
    %6058 = vmatprep.subr.mxu0 0.0
    %6059 = vmatpush1.msra.mxu0 0.0
    %6060 = vmatprep.subr.mxu0 0.0
    %6061 = vmatpush1.msra.mxu0 0.0
    %6062 = vmatprep.subr.mxu0 0.0
    %6063 = vmatpush1.msra.mxu0 0.0
    %6064 = vmatprep.subr.mxu0 0.0
    %6065 = vmatpush1.msra.mxu0 0.0
    %6066 = vmatprep.subr.mxu0 0.0
    %6067 = vmatpush1.msra.mxu0 0.0
    %6068 = vmatprep.subr.mxu0 0.0
    %6069 = vmatpush1.msra.mxu0 0.0
    %6070 = vmatprep.subr.mxu0 0.0
    %6071 = vmatpush1.msra.mxu0 0.0
    %6072 = vmatprep.subr.mxu0 0.0
    %6073 = vmatpush1.msra.mxu0 0.0
    %6074 = vmatprep.subr.mxu0 0.0
    %6075 = vmatpush1.msra.mxu0 0.0
    %6076 = vmatprep.mubr.f32.mxu0 0.0
    %6077 = vmatmul.mubr.f32.gmra.mrb[0].mxu0 %v6010
    %v6078 = vpop.f32.mrb[0].mxu0
    %v6079 = vadd.f32 0.0, %v6078
    %v6080 = vpop.f32.mrb[0].mxu0
    %6081 = vdwg.mxu0
    %6082 = vrot.lane.b32.xlu0 %v4589, 104
    %v6083 = vpop.permute.xlu0 %6082
    %v6086 = vsel %vm378, %v6005, 0
    %6088 = vmatprep.subr.mxu0 0.0
    %6089 = vmatpush1.msra.mxu0 %v6083
    %6090 = vmatprep.subr.mxu0 0.0
    %6091 = vmatpush1.msra.mxu0 0.0
    %6092 = vmatprep.subr.mxu0 0.0
    %6093 = vmatpush1.msra.mxu0 0.0
    %6094 = vmatprep.subr.mxu0 0.0
    %6095 = vmatpush1.msra.mxu0 0.0
    %6096 = vmatprep.subr.mxu0 0.0
    %6097 = vmatpush1.msra.mxu0 0.0
    %6098 = vmatprep.subr.mxu0 0.0
    %6099 = vmatpush1.msra.mxu0 0.0
    %6100 = vmatprep.subr.mxu0 0.0
    %6101 = vmatpush1.msra.mxu0 0.0
    %6102 = vmatprep.subr.mxu0 0.0
    %6103 = vmatpush1.msra.mxu0 0.0
    %6104 = vmatprep.subr.mxu0 0.0
    %6105 = vmatpush1.msra.mxu0 0.0
    %6106 = vmatprep.subr.mxu0 0.0
    %6107 = vmatpush1.msra.mxu0 0.0
    %6108 = vmatprep.subr.mxu0 0.0
    %6109 = vmatpush1.msra.mxu0 0.0
    %6110 = vmatprep.subr.mxu0 0.0
    %6111 = vmatpush1.msra.mxu0 0.0
    %6112 = vmatprep.subr.mxu0 0.0
    %6113 = vmatpush1.msra.mxu0 0.0
    %6114 = vmatprep.subr.mxu0 0.0
    %6115 = vmatpush1.msra.mxu0 0.0
    %6116 = vmatprep.subr.mxu0 0.0
    %6117 = vmatpush1.msra.mxu0 0.0
    %6118 = vmatprep.subr.mxu0 0.0
    %6119 = vmatpush1.msra.mxu0 0.0
    %6120 = vmatprep.subr.mxu0 0.0
    %6121 = vmatpush1.msra.mxu0 0.0
    %6122 = vmatprep.subr.mxu0 0.0
    %6123 = vmatpush1.msra.mxu0 0.0
    %6124 = vmatprep.subr.mxu0 0.0
    %6125 = vmatpush1.msra.mxu0 0.0
    %6126 = vmatprep.subr.mxu0 0.0
    %6127 = vmatpush1.msra.mxu0 0.0
    %6128 = vmatprep.subr.mxu0 0.0
    %6129 = vmatpush1.msra.mxu0 0.0
    %6130 = vmatprep.subr.mxu0 0.0
    %6131 = vmatpush1.msra.mxu0 0.0
    %6132 = vmatprep.subr.mxu0 0.0
    %6133 = vmatpush1.msra.mxu0 0.0
    %6134 = vmatprep.subr.mxu0 0.0
    %6135 = vmatpush1.msra.mxu0 0.0
    %6136 = vmatprep.subr.mxu0 0.0
    %6137 = vmatpush1.msra.mxu0 0.0
    %6138 = vmatprep.subr.mxu0 0.0
    %6139 = vmatpush1.msra.mxu0 0.0
    %6140 = vmatprep.subr.mxu0 0.0
    %6141 = vmatpush1.msra.mxu0 0.0
    %6142 = vmatprep.subr.mxu0 0.0
    %6143 = vmatpush1.msra.mxu0 0.0
    %6144 = vmatprep.subr.mxu0 0.0
    %6145 = vmatpush1.msra.mxu0 0.0
    %6146 = vmatprep.subr.mxu0 0.0
    %6147 = vmatpush1.msra.mxu0 0.0
    %6148 = vmatprep.subr.mxu0 0.0
    %6149 = vmatpush1.msra.mxu0 0.0
    %6150 = vmatprep.subr.mxu0 0.0
    %6151 = vmatpush1.msra.mxu0 0.0
    %6152 = vmatprep.mubr.f32.mxu0 0.0
    %6153 = vmatmul.mubr.f32.gmra.mrb[0].mxu0 %v6086
    %v6154 = vpop.f32.mrb[0].mxu0
    %v6155 = vadd.f32 0.0, %v6154
    %v6156 = vpop.f32.mrb[0].mxu0
    %6157 = vdwg.mxu0
    %v6159 = vsel %vm378, %v6079, 0
    %v6162 = vsel %vm378, %v6155, 0
    %6164 = vmatprep.subr.mxu0 0.0
    %6165 = vmatpush1.msra.mxu0 %v4596
    %6166 = vmatprep.subr.mxu0 0.0
    %6167 = vmatpush1.msra.mxu0 0.0
    %6168 = vmatprep.subr.mxu0 0.0
    %6169 = vmatpush1.msra.mxu0 0.0
    %6170 = vmatprep.subr.mxu0 0.0
    %6171 = vmatpush1.msra.mxu0 0.0
    %6172 = vmatprep.subr.mxu0 0.0
    %6173 = vmatpush1.msra.mxu0 0.0
    %6174 = vmatprep.subr.mxu0 0.0
    %6175 = vmatpush1.msra.mxu0 0.0
    %6176 = vmatprep.subr.mxu0 0.0
    %6177 = vmatpush1.msra.mxu0 0.0
    %6178 = vmatprep.subr.mxu0 0.0
    %6179 = vmatpush1.msra.mxu0 0.0
    %6180 = vmatprep.subr.mxu0 0.0
    %6181 = vmatpush1.msra.mxu0 0.0
    %6182 = vmatprep.subr.mxu0 0.0
    %6183 = vmatpush1.msra.mxu0 0.0
    %6184 = vmatprep.subr.mxu0 0.0
    %6185 = vmatpush1.msra.mxu0 0.0
    %6186 = vmatprep.subr.mxu0 0.0
    %6187 = vmatpush1.msra.mxu0 0.0
    %6188 = vmatprep.subr.mxu0 0.0
    %6189 = vmatpush1.msra.mxu0 0.0
    %6190 = vmatprep.subr.mxu0 0.0
    %6191 = vmatpush1.msra.mxu0 0.0
    %6192 = vmatprep.subr.mxu0 0.0
    %6193 = vmatpush1.msra.mxu0 0.0
    %6194 = vmatprep.subr.mxu0 0.0
    %6195 = vmatpush1.msra.mxu0 0.0
    %6196 = vmatprep.subr.mxu0 0.0
    %6197 = vmatpush1.msra.mxu0 0.0
    %6198 = vmatprep.subr.mxu0 0.0
    %6199 = vmatpush1.msra.mxu0 0.0
    %6200 = vmatprep.subr.mxu0 0.0
    %6201 = vmatpush1.msra.mxu0 0.0
    %6202 = vmatprep.subr.mxu0 0.0
    %6203 = vmatpush1.msra.mxu0 0.0
    %6204 = vmatprep.subr.mxu0 0.0
    %6205 = vmatpush1.msra.mxu0 0.0
    %6206 = vmatprep.subr.mxu0 0.0
    %6207 = vmatpush1.msra.mxu0 0.0
    %6208 = vmatprep.subr.mxu0 0.0
    %6209 = vmatpush1.msra.mxu0 0.0
    %6210 = vmatprep.subr.mxu0 0.0
    %6211 = vmatpush1.msra.mxu0 0.0
    %6212 = vmatprep.subr.mxu0 0.0
    %6213 = vmatpush1.msra.mxu0 0.0
    %6214 = vmatprep.subr.mxu0 0.0
    %6215 = vmatpush1.msra.mxu0 0.0
    %6216 = vmatprep.subr.mxu0 0.0
    %6217 = vmatpush1.msra.mxu0 0.0
    %6218 = vmatprep.subr.mxu0 0.0
    %6219 = vmatpush1.msra.mxu0 0.0
    %6220 = vmatprep.subr.mxu0 0.0
    %6221 = vmatpush1.msra.mxu0 0.0
    %6222 = vmatprep.subr.mxu0 0.0
    %6223 = vmatpush1.msra.mxu0 0.0
    %6224 = vmatprep.subr.mxu0 0.0
    %6225 = vmatpush1.msra.mxu0 0.0
    %6226 = vmatprep.subr.mxu0 0.0
    %6227 = vmatpush1.msra.mxu0 0.0
    %6228 = vmatprep.mubr.f32.mxu0 0.0
    %6229 = vmatmul.mubr.f32.gmra.mrb[0].mxu0 %v6159
    %v6230 = vpop.f32.mrb[0].mxu0
    %v6231 = vadd.f32 0.0, %v6230
    %v6232 = vpop.f32.mrb[0].mxu0
    %6233 = vmatprep.mubr.f32.mxu0 0.0
    %6234 = vmatmul.mubr.f32.gmra.mrb[0].mxu0 %v6162
    %v6235 = vpop.f32.mrb[0].mxu0
    %v6236 = vadd.f32 0.0, %v6235
    %v6237 = vpop.f32.mrb[0].mxu0
    %6238 = vdwg.mxu0
    %v6239 = vadd.f32 %v5826, %v6231
    %v6240 = vadd.f32 %v5827, %v6236
    %v6242 = vlaneseq
    %v6243 = vshrl.u32 %v6242, 7
    %v6244 = vsub.s32 0, %v6243
    %v6245 = vrot.slane %v4598, %v6244
    %v6247 = vadd.f32 %v6239, %v6245
    %v6248 = vadd.f32 %v6240, %v6245
    %v6249 = vadd.f32 %v4350, %v6247
    %v6250 = vadd.f32 %v4351, %v6248
    %v6251 = vsel %vm196, %v6249, 0.0
    %6252 = vadd.xlane.f32.xlu0 %v6251
    %v6253 = vpop.xlane.xlu0 %6252
    %v6254 = vsel %vm196, %v6250, 0.0
    %6255 = vadd.xlane.f32.xlu0 %v6254
    %v6256 = vpop.xlane.xlu0 %6255
    %v6257 = vmul.f32 %v6253, %v2034
    %v6258 = vmul.f32 %v6256, %v2034
    %v6259 = vsub.f32 %v6249, %v6257
    %v6260 = vsub.f32 %v6250, %v6258
    %v6261 = vmul.f32 %v6259, %v6259
    %v6262 = vmul.f32 %v6260, %v6260
    %v6263 = vsel %vm196, %v6261, 0.0
    %6264 = vadd.xlane.f32.xlu0 %v6263
    %v6265 = vpop.xlane.xlu0 %6264
    %v6266 = vsel %vm196, %v6262, 0.0
    %6267 = vadd.xlane.f32.xlu0 %v6266
    %v6268 = vpop.xlane.xlu0 %6267
    %v6269 = vmul.f32 %v6265, %v2034
    %v6270 = vmul.f32 %v6268, %v2034
    %v6271 = vadd.f32 %v6269, 1e-05
    %v6272 = vadd.f32 %v6270, 1e-05
    %v6273 = vrsqrt.pop %v6271
    %v6274 = vrsqrt.pop %v6272
    %v6275 = vmul.f32 %v6259, %v6273
    %v6276 = vmul.f32 %v6260, %v6274
    %v6277 = vlaneseq
    %v6278 = vshrl.u32 %v6277, 7
    %v6279 = vsub.s32 0, %v6278
    %v6280 = vrot.slane %v4399, %v6279
    %v6281 = vmul.f32 %v6275, %v6280
    %v6282 = vmul.f32 %v6276, %v6280
    %v6283 = vlaneseq
    %v6284 = vshrl.u32 %v6283, 7
    %v6285 = vsub.s32 0, %v6284
    %v6286 = vrot.slane %v4401, %v6285
    %v6287 = vadd.f32 %v6281, %v6286
    %v6288 = vadd.f32 %v6282, %v6286
    %v6289 = vadd.f32 %v6287, %v171
    %v6290 = vadd.f32 %v6288, %v172
    %s6291 = scalar_lea.vmem %s10, 32
    %v6292 = vld [vmem:[%s6291] sm:$0xff]
    %v6293 = vld [vmem:[%s6291 + $0x8] sm:$0xff]
    %v6294 = vld [vmem:[%s6291 + $0x10] sm:$0xff]
    %v6295 = vld [vmem:[%s6291 + $0x18] sm:$0xff]
    %s6296 = scalar_lea.vmem [#allocation2], 1
    %v6297 = vld [vmem:[%s6296] sm:$0x1]
    %v6299 = vlaneseq
    %v6300 = vshrl.u32 %v6299, 7
    %v6301 = vsub.s32 0, %v6300
    %v6302 = vrot.slane %v6297, %v6301
    %v6305 = vsel %vm196, %v6289, 0
    %v6308 = vsel %vm196, %v6290, 0
    %6310 = vmatprep.subr.mxu0 0.0
    %6311 = vmatpush1.msra.mxu0 %v6292
    %6312 = vmatprep.subr.mxu0 0.0
    %6313 = vmatpush1.msra.mxu0 %v6293
    %6314 = vmatprep.subr.mxu0 0.0
    %6315 = vmatpush1.msra.mxu0 %v6294
    %6316 = vmatprep.subr.mxu0 0.0
    %6317 = vmatpush1.msra.mxu0 %v6295
    %6318 = vmatprep.subr.mxu0 0.0
    %6319 = vmatpush1.msra.mxu0 0.0
    %6320 = vmatprep.subr.mxu0 0.0
    %6321 = vmatpush1.msra.mxu0 0.0
    %6322 = vmatprep.subr.mxu0 0.0
    %6323 = vmatpush1.msra.mxu0 0.0
    %6324 = vmatprep.subr.mxu0 0.0
    %6325 = vmatpush1.msra.mxu0 0.0
    %6326 = vmatprep.subr.mxu0 0.0
    %6327 = vmatpush1.msra.mxu0 0.0
    %6328 = vmatprep.subr.mxu0 0.0
    %6329 = vmatpush1.msra.mxu0 0.0
    %6330 = vmatprep.subr.mxu0 0.0
    %6331 = vmatpush1.msra.mxu0 0.0
    %6332 = vmatprep.subr.mxu0 0.0
    %6333 = vmatpush1.msra.mxu0 0.0
    %6334 = vmatprep.subr.mxu0 0.0
    %6335 = vmatpush1.msra.mxu0 0.0
    %6336 = vmatprep.subr.mxu0 0.0
    %6337 = vmatpush1.msra.mxu0 0.0
    %6338 = vmatprep.subr.mxu0 0.0
    %6339 = vmatpush1.msra.mxu0 0.0
    %6340 = vmatprep.subr.mxu0 0.0
    %6341 = vmatpush1.msra.mxu0 0.0
    %6342 = vmatprep.subr.mxu0 0.0
    %6343 = vmatpush1.msra.mxu0 0.0
    %6344 = vmatprep.subr.mxu0 0.0
    %6345 = vmatpush1.msra.mxu0 0.0
    %6346 = vmatprep.subr.mxu0 0.0
    %6347 = vmatpush1.msra.mxu0 0.0
    %6348 = vmatprep.subr.mxu0 0.0
    %6349 = vmatpush1.msra.mxu0 0.0
    %6350 = vmatprep.subr.mxu0 0.0
    %6351 = vmatpush1.msra.mxu0 0.0
    %6352 = vmatprep.subr.mxu0 0.0
    %6353 = vmatpush1.msra.mxu0 0.0
    %6354 = vmatprep.subr.mxu0 0.0
    %6355 = vmatpush1.msra.mxu0 0.0
    %6356 = vmatprep.subr.mxu0 0.0
    %6357 = vmatpush1.msra.mxu0 0.0
    %6358 = vmatprep.subr.mxu0 0.0
    %6359 = vmatpush1.msra.mxu0 0.0
    %6360 = vmatprep.subr.mxu0 0.0
    %6361 = vmatpush1.msra.mxu0 0.0
    %6362 = vmatprep.subr.mxu0 0.0
    %6363 = vmatpush1.msra.mxu0 0.0
    %6364 = vmatprep.subr.mxu0 0.0
    %6365 = vmatpush1.msra.mxu0 0.0
    %6366 = vmatprep.subr.mxu0 0.0
    %6367 = vmatpush1.msra.mxu0 0.0
    %6368 = vmatprep.subr.mxu0 0.0
    %6369 = vmatpush1.msra.mxu0 0.0
    %6370 = vmatprep.subr.mxu0 0.0
    %6371 = vmatpush1.msra.mxu0 0.0
    %6372 = vmatprep.subr.mxu0 0.0
    %6373 = vmatpush1.msra.mxu0 0.0
    %6374 = vmatprep.mubr.f32.mxu0 0.0
    %6375 = vmatmul.mubr.f32.gmra.mrb[0].mxu0 %v6305
    %v6376 = vpop.f32.mrb[0].mxu0
    %v6377 = vadd.f32 %v6302, %v6376
    %v6378 = vpop.f32.mrb[0].mxu0
    %6379 = vmatprep.mubr.f32.mxu0 0.0
    %6380 = vmatmul.mubr.f32.gmra.mrb[0].mxu0 %v6308
    %v6381 = vpop.f32.mrb[0].mxu0
    %v6382 = vadd.f32 %v6302, %v6381
    %v6383 = vpop.f32.mrb[0].mxu0
    %6384 = vdwg.mxu0
    %s6385 = scalar_lea.vmem %s12, 32
    %v6386 = vld [vmem:[%s6385] sm:$0xff]
    %v6387 = vld [vmem:[%s6385 + $0x8] sm:$0xff]
    %v6388 = vld [vmem:[%s6385 + $0x10] sm:$0xff]
    %v6389 = vld [vmem:[%s6385 + $0x18] sm:$0xff]
    %s6390 = scalar_lea.vmem [#allocation4], 1
    %v6391 = vld [vmem:[%s6390] sm:$0x1]
    %v6393 = vlaneseq
    %v6394 = vshrl.u32 %v6393, 7
    %v6395 = vsub.s32 0, %v6394
    %v6396 = vrot.slane %v6391, %v6395
    %6398 = vmatprep.subr.mxu0 0.0
    %6399 = vmatpush1.msra.mxu0 %v6386
    %6400 = vmatprep.subr.mxu0 0.0
    %6401 = vmatpush1.msra.mxu0 %v6387
    %6402 = vmatprep.subr.mxu0 0.0
    %6403 = vmatpush1.msra.mxu0 %v6388
    %6404 = vmatprep.subr.mxu0 0.0
    %6405 = vmatpush1.msra.mxu0 %v6389
    %6406 = vmatprep.subr.mxu0 0.0
    %6407 = vmatpush1.msra.mxu0 0.0
    %6408 = vmatprep.subr.mxu0 0.0
    %6409 = vmatpush1.msra.mxu0 0.0
    %6410 = vmatprep.subr.mxu0 0.0
    %6411 = vmatpush1.msra.mxu0 0.0
    %6412 = vmatprep.subr.mxu0 0.0
    %6413 = vmatpush1.msra.mxu0 0.0
    %6414 = vmatprep.subr.mxu0 0.0
    %6415 = vmatpush1.msra.mxu0 0.0
    %6416 = vmatprep.subr.mxu0 0.0
    %6417 = vmatpush1.msra.mxu0 0.0
    %6418 = vmatprep.subr.mxu0 0.0
    %6419 = vmatpush1.msra.mxu0 0.0
    %6420 = vmatprep.subr.mxu0 0.0
    %6421 = vmatpush1.msra.mxu0 0.0
    %6422 = vmatprep.subr.mxu0 0.0
    %6423 = vmatpush1.msra.mxu0 0.0
    %6424 = vmatprep.subr.mxu0 0.0
    %6425 = vmatpush1.msra.mxu0 0.0
    %6426 = vmatprep.subr.mxu0 0.0
    %6427 = vmatpush1.msra.mxu0 0.0
    %6428 = vmatprep.subr.mxu0 0.0
    %6429 = vmatpush1.msra.mxu0 0.0
    %6430 = vmatprep.subr.mxu0 0.0
    %6431 = vmatpush1.msra.mxu0 0.0
    %6432 = vmatprep.subr.mxu0 0.0
    %6433 = vmatpush1.msra.mxu0 0.0
    %6434 = vmatprep.subr.mxu0 0.0
    %6435 = vmatpush1.msra.mxu0 0.0
    %6436 = vmatprep.subr.mxu0 0.0
    %6437 = vmatpush1.msra.mxu0 0.0
    %6438 = vmatprep.subr.mxu0 0.0
    %6439 = vmatpush1.msra.mxu0 0.0
    %6440 = vmatprep.subr.mxu0 0.0
    %6441 = vmatpush1.msra.mxu0 0.0
    %6442 = vmatprep.subr.mxu0 0.0
    %6443 = vmatpush1.msra.mxu0 0.0
    %6444 = vmatprep.subr.mxu0 0.0
    %6445 = vmatpush1.msra.mxu0 0.0
    %6446 = vmatprep.subr.mxu0 0.0
    %6447 = vmatpush1.msra.mxu0 0.0
    %6448 = vmatprep.subr.mxu0 0.0
    %6449 = vmatpush1.msra.mxu0 0.0
    %6450 = vmatprep.subr.mxu0 0.0
    %6451 = vmatpush1.msra.mxu0 0.0
    %6452 = vmatprep.subr.mxu0 0.0
    %6453 = vmatpush1.msra.mxu0 0.0
    %6454 = vmatprep.subr.mxu0 0.0
    %6455 = vmatpush1.msra.mxu0 0.0
    %6456 = vmatprep.subr.mxu0 0.0
    %6457 = vmatpush1.msra.mxu0 0.0
    %6458 = vmatprep.subr.mxu0 0.0
    %6459 = vmatpush1.msra.mxu0 0.0
    %6460 = vmatprep.subr.mxu0 0.0
    %6461 = vmatpush1.msra.mxu0 0.0
    %6462 = vmatprep.mubr.f32.mxu0 0.0
    %6463 = vmatmul.mubr.f32.gmra.mrb[0].mxu0 %v2173
    %v6464 = vpop.f32.mrb[0].mxu0
    %v6465 = vadd.f32 %v6396, %v6464
    %v6466 = vpop.f32.mrb[0].mxu0
    %6467 = vmatprep.mubr.f32.mxu0 0.0
    %6468 = vmatmul.mubr.f32.gmra.mrb[0].mxu0 %v2176
    %v6469 = vpop.f32.mrb[0].mxu0
    %v6470 = vadd.f32 %v6396, %v6469
    %v6471 = vpop.f32.mrb[0].mxu0
    %6472 = vmatprep.mubr.f32.mxu0 0.0
    %6473 = vmatmul.mubr.f32.gmra.mrb[0].mxu0 %v2179
    %v6474 = vpop.f32.mrb[0].mxu0
    %v6475 = vadd.f32 %v6396, %v6474
    %v6476 = vpop.f32.mrb[0].mxu0
    %6477 = vmatprep.mubr.f32.mxu0 0.0
    %6478 = vmatmul.mubr.f32.gmra.mrb[0].mxu0 %v2182
    %v6479 = vpop.f32.mrb[0].mxu0
    %v6480 = vadd.f32 %v6396, %v6479
    %v6481 = vpop.f32.mrb[0].mxu0
    %6482 = vdwg.mxu0
    %s6483 = scalar_lea.vmem %s14, 32
    %v6484 = vld [vmem:[%s6483] sm:$0xff]
    %v6485 = vld [vmem:[%s6483 + $0x8] sm:$0xff]
    %v6486 = vld [vmem:[%s6483 + $0x10] sm:$0xff]
    %v6487 = vld [vmem:[%s6483 + $0x18] sm:$0xff]
    %s6488 = scalar_lea.vmem [#allocation6], 1
    %v6489 = vld [vmem:[%s6488] sm:$0x1]
    %v6491 = vlaneseq
    %v6492 = vshrl.u32 %v6491, 7
    %v6493 = vsub.s32 0, %v6492
    %v6494 = vrot.slane %v6489, %v6493
    %6496 = vmatprep.subr.mxu0 0.0
    %6497 = vmatpush1.msra.mxu0 %v6484
    %6498 = vmatprep.subr.mxu0 0.0
    %6499 = vmatpush1.msra.mxu0 %v6485
    %6500 = vmatprep.subr.mxu0 0.0
    %6501 = vmatpush1.msra.mxu0 %v6486
    %6502 = vmatprep.subr.mxu0 0.0
    %6503 = vmatpush1.msra.mxu0 %v6487
    %6504 = vmatprep.subr.mxu0 0.0
    %6505 = vmatpush1.msra.mxu0 0.0
    %6506 = vmatprep.subr.mxu0 0.0
    %6507 = vmatpush1.msra.mxu0 0.0
    %6508 = vmatprep.subr.mxu0 0.0
    %6509 = vmatpush1.msra.mxu0 0.0
    %6510 = vmatprep.subr.mxu0 0.0
    %6511 = vmatpush1.msra.mxu0 0.0
    %6512 = vmatprep.subr.mxu0 0.0
    %6513 = vmatpush1.msra.mxu0 0.0
    %6514 = vmatprep.subr.mxu0 0.0
    %6515 = vmatpush1.msra.mxu0 0.0
    %6516 = vmatprep.subr.mxu0 0.0
    %6517 = vmatpush1.msra.mxu0 0.0
    %6518 = vmatprep.subr.mxu0 0.0
    %6519 = vmatpush1.msra.mxu0 0.0
    %6520 = vmatprep.subr.mxu0 0.0
    %6521 = vmatpush1.msra.mxu0 0.0
    %6522 = vmatprep.subr.mxu0 0.0
    %6523 = vmatpush1.msra.mxu0 0.0
    %6524 = vmatprep.subr.mxu0 0.0
    %6525 = vmatpush1.msra.mxu0 0.0
    %6526 = vmatprep.subr.mxu0 0.0
    %6527 = vmatpush1.msra.mxu0 0.0
    %6528 = vmatprep.subr.mxu0 0.0
    %6529 = vmatpush1.msra.mxu0 0.0
    %6530 = vmatprep.subr.mxu0 0.0
    %6531 = vmatpush1.msra.mxu0 0.0
    %6532 = vmatprep.subr.mxu0 0.0
    %6533 = vmatpush1.msra.mxu0 0.0
    %6534 = vmatprep.subr.mxu0 0.0
    %6535 = vmatpush1.msra.mxu0 0.0
    %6536 = vmatprep.subr.mxu0 0.0
    %6537 = vmatpush1.msra.mxu0 0.0
    %6538 = vmatprep.subr.mxu0 0.0
    %6539 = vmatpush1.msra.mxu0 0.0
    %6540 = vmatprep.subr.mxu0 0.0
    %6541 = vmatpush1.msra.mxu0 0.0
    %6542 = vmatprep.subr.mxu0 0.0
    %6543 = vmatpush1.msra.mxu0 0.0
    %6544 = vmatprep.subr.mxu0 0.0
    %6545 = vmatpush1.msra.mxu0 0.0
    %6546 = vmatprep.subr.mxu0 0.0
    %6547 = vmatpush1.msra.mxu0 0.0
    %6548 = vmatprep.subr.mxu0 0.0
    %6549 = vmatpush1.msra.mxu0 0.0
    %6550 = vmatprep.subr.mxu0 0.0
    %6551 = vmatpush1.msra.mxu0 0.0
    %6552 = vmatprep.subr.mxu0 0.0
    %6553 = vmatpush1.msra.mxu0 0.0
    %6554 = vmatprep.subr.mxu0 0.0
    %6555 = vmatpush1.msra.mxu0 0.0
    %6556 = vmatprep.subr.mxu0 0.0
    %6557 = vmatpush1.msra.mxu0 0.0
    %6558 = vmatprep.subr.mxu0 0.0
    %6559 = vmatpush1.msra.mxu0 0.0
    %6560 = vmatprep.mubr.f32.mxu0 0.0
    %6561 = vmatmul.mubr.f32.gmra.mrb[0].mxu0 %v2281
    %v6562 = vpop.f32.mrb[0].mxu0
    %v6563 = vadd.f32 %v6494, %v6562
    %v6564 = vpop.f32.mrb[0].mxu0
    %6565 = vmatprep.mubr.f32.mxu0 0.0
    %6566 = vmatmul.mubr.f32.gmra.mrb[0].mxu0 %v2284
    %v6567 = vpop.f32.mrb[0].mxu0
    %v6568 = vadd.f32 %v6494, %v6567
    %v6569 = vpop.f32.mrb[0].mxu0
    %6570 = vmatprep.mubr.f32.mxu0 0.0
    %6571 = vmatmul.mubr.f32.gmra.mrb[0].mxu0 %v2287
    %v6572 = vpop.f32.mrb[0].mxu0
    %v6573 = vadd.f32 %v6494, %v6572
    %v6574 = vpop.f32.mrb[0].mxu0
    %6575 = vmatprep.mubr.f32.mxu0 0.0
    %6576 = vmatmul.mubr.f32.gmra.mrb[0].mxu0 %v2290
    %v6577 = vpop.f32.mrb[0].mxu0
    %v6578 = vadd.f32 %v6494, %v6577
    %v6579 = vpop.f32.mrb[0].mxu0
    %6580 = vdwg.mxu0
    %s6581 = scalar_lea.vmem [#allocation7], 32
    %v6582 = vld [vmem:[%s6581] sm:$0xff]
    %v6583 = vld [vmem:[%s6581 + $0x8] sm:$0xff]
    %v6584 = vld [vmem:[%s6581 + $0x10] sm:$0xff]
    %v6585 = vld [vmem:[%s6581 + $0x18] sm:$0xff]
    %s6586 = scalar_lea.vmem [#allocation9], 1
    %v6587 = vld [vmem:[%s6586] sm:$0x1]
    %v6589 = vsel %vm378, %v6377, 0
    %v6592 = vsel %vm378, %v6465, 0
    %v6595 = vsel %vm378, %v6470, 0
    %6597 = vmatprep.subr.mxu0 0.0
    %6598 = vmatpush1.xpose.msra.mxu0 %v6592
    %6599 = vmatprep.subr.mxu0 0.0
    %6600 = vmatpush1.xpose.msra.mxu0 %v6595
    %6601 = vmatprep.subr.mxu0 0.0
    %6602 = vmatpush1.xpose.msra.mxu0 0.0
    %6603 = vmatprep.subr.mxu0 0.0
    %6604 = vmatpush1.xpose.msra.mxu0 0.0
    %6605 = vmatprep.subr.mxu0 0.0
    %6606 = vmatpush1.xpose.msra.mxu0 0.0
    %6607 = vmatprep.subr.mxu0 0.0
    %6608 = vmatpush1.xpose.msra.mxu0 0.0
    %6609 = vmatprep.subr.mxu0 0.0
    %6610 = vmatpush1.xpose.msra.mxu0 0.0
    %6611 = vmatprep.subr.mxu0 0.0
    %6612 = vmatpush1.xpose.msra.mxu0 0.0
    %6613 = vmatprep.subr.mxu0 0.0
    %6614 = vmatpush1.xpose.msra.mxu0 0.0
    %6615 = vmatprep.subr.mxu0 0.0
    %6616 = vmatpush1.xpose.msra.mxu0 0.0
    %6617 = vmatprep.subr.mxu0 0.0
    %6618 = vmatpush1.xpose.msra.mxu0 0.0
    %6619 = vmatprep.subr.mxu0 0.0
    %6620 = vmatpush1.xpose.msra.mxu0 0.0
    %6621 = vmatprep.subr.mxu0 0.0
    %6622 = vmatpush1.xpose.msra.mxu0 0.0
    %6623 = vmatprep.subr.mxu0 0.0
    %6624 = vmatpush1.xpose.msra.mxu0 0.0
    %6625 = vmatprep.subr.mxu0 0.0
    %6626 = vmatpush1.xpose.msra.mxu0 0.0
    %6627 = vmatprep.subr.mxu0 0.0
    %6628 = vmatpush1.xpose.msra.mxu0 0.0
    %6629 = vmatprep.subr.mxu0 0.0
    %6630 = vmatpush1.xpose.msra.mxu0 0.0
    %6631 = vmatprep.subr.mxu0 0.0
    %6632 = vmatpush1.xpose.msra.mxu0 0.0
    %6633 = vmatprep.subr.mxu0 0.0
    %6634 = vmatpush1.xpose.msra.mxu0 0.0
    %6635 = vmatprep.subr.mxu0 0.0
    %6636 = vmatpush1.xpose.msra.mxu0 0.0
    %6637 = vmatprep.subr.mxu0 0.0
    %6638 = vmatpush1.xpose.msra.mxu0 0.0
    %6639 = vmatprep.subr.mxu0 0.0
    %6640 = vmatpush1.xpose.msra.mxu0 0.0
    %6641 = vmatprep.subr.mxu0 0.0
    %6642 = vmatpush1.xpose.msra.mxu0 0.0
    %6643 = vmatprep.subr.mxu0 0.0
    %6644 = vmatpush1.xpose.msra.mxu0 0.0
    %6645 = vmatprep.subr.mxu0 0.0
    %6646 = vmatpush1.xpose.msra.mxu0 0.0
    %6647 = vmatprep.subr.mxu0 0.0
    %6648 = vmatpush1.xpose.msra.mxu0 0.0
    %6649 = vmatprep.subr.mxu0 0.0
    %6650 = vmatpush1.xpose.msra.mxu0 0.0
    %6651 = vmatprep.subr.mxu0 0.0
    %6652 = vmatpush1.xpose.msra.mxu0 0.0
    %6653 = vmatprep.subr.mxu0 0.0
    %6654 = vmatpush1.xpose.msra.mxu0 0.0
    %6655 = vmatprep.subr.mxu0 0.0
    %6656 = vmatpush1.xpose.msra.mxu0 0.0
    %6657 = vmatprep.subr.mxu0 0.0
    %6658 = vmatpush1.xpose.msra.mxu0 0.0
    %6659 = vmatprep.subr.mxu0 0.0
    %6660 = vmatpush1.xpose.msra.mxu0 0.0
    %6661 = vmatprep.mubr.f32.mxu0 0.0
    %6662 = vmatmul.mubr.f32.gmra.mrb[0].mxu0 %v6589
    %v6663 = vpop.f32.mrb[0].mxu0
    %v6664 = vadd.f32 0.0, %v6663
    %v6665 = vpop.f32.mrb[0].mxu0
    %6666 = vdwg.mxu0
    %v6668 = vsel %vm378, %v6382, 0
    %v6671 = vsel %vm378, %v6475, 0
    %v6674 = vsel %vm378, %v6480, 0
    %6676 = vmatprep.subr.mxu0 0.0
    %6677 = vmatpush1.xpose.msra.mxu0 %v6671
    %6678 = vmatprep.subr.mxu0 0.0
    %6679 = vmatpush1.xpose.msra.mxu0 %v6674
    %6680 = vmatprep.subr.mxu0 0.0
    %6681 = vmatpush1.xpose.msra.mxu0 0.0
    %6682 = vmatprep.subr.mxu0 0.0
    %6683 = vmatpush1.xpose.msra.mxu0 0.0
    %6684 = vmatprep.subr.mxu0 0.0
    %6685 = vmatpush1.xpose.msra.mxu0 0.0
    %6686 = vmatprep.subr.mxu0 0.0
    %6687 = vmatpush1.xpose.msra.mxu0 0.0
    %6688 = vmatprep.subr.mxu0 0.0
    %6689 = vmatpush1.xpose.msra.mxu0 0.0
    %6690 = vmatprep.subr.mxu0 0.0
    %6691 = vmatpush1.xpose.msra.mxu0 0.0
    %6692 = vmatprep.subr.mxu0 0.0
    %6693 = vmatpush1.xpose.msra.mxu0 0.0
    %6694 = vmatprep.subr.mxu0 0.0
    %6695 = vmatpush1.xpose.msra.mxu0 0.0
    %6696 = vmatprep.subr.mxu0 0.0
    %6697 = vmatpush1.xpose.msra.mxu0 0.0
    %6698 = vmatprep.subr.mxu0 0.0
    %6699 = vmatpush1.xpose.msra.mxu0 0.0
    %6700 = vmatprep.subr.mxu0 0.0
    %6701 = vmatpush1.xpose.msra.mxu0 0.0
    %6702 = vmatprep.subr.mxu0 0.0
    %6703 = vmatpush1.xpose.msra.mxu0 0.0
    %6704 = vmatprep.subr.mxu0 0.0
    %6705 = vmatpush1.xpose.msra.mxu0 0.0
    %6706 = vmatprep.subr.mxu0 0.0
    %6707 = vmatpush1.xpose.msra.mxu0 0.0
    %6708 = vmatprep.subr.mxu0 0.0
    %6709 = vmatpush1.xpose.msra.mxu0 0.0
    %6710 = vmatprep.subr.mxu0 0.0
    %6711 = vmatpush1.xpose.msra.mxu0 0.0
    %6712 = vmatprep.subr.mxu0 0.0
    %6713 = vmatpush1.xpose.msra.mxu0 0.0
    %6714 = vmatprep.subr.mxu0 0.0
    %6715 = vmatpush1.xpose.msra.mxu0 0.0
    %6716 = vmatprep.subr.mxu0 0.0
    %6717 = vmatpush1.xpose.msra.mxu0 0.0
    %6718 = vmatprep.subr.mxu0 0.0
    %6719 = vmatpush1.xpose.msra.mxu0 0.0
    %6720 = vmatprep.subr.mxu0 0.0
    %6721 = vmatpush1.xpose.msra.mxu0 0.0
    %6722 = vmatprep.subr.mxu0 0.0
    %6723 = vmatpush1.xpose.msra.mxu0 0.0
    %6724 = vmatprep.subr.mxu0 0.0
    %6725 = vmatpush1.xpose.msra.mxu0 0.0
    %6726 = vmatprep.subr.mxu0 0.0
    %6727 = vmatpush1.xpose.msra.mxu0 0.0
    %6728 = vmatprep.subr.mxu0 0.0
    %6729 = vmatpush1.xpose.msra.mxu0 0.0
    %6730 = vmatprep.subr.mxu0 0.0
    %6731 = vmatpush1.xpose.msra.mxu0 0.0
    %6732 = vmatprep.subr.mxu0 0.0
    %6733 = vmatpush1.xpose.msra.mxu0 0.0
    %6734 = vmatprep.subr.mxu0 0.0
    %6735 = vmatpush1.xpose.msra.mxu0 0.0
    %6736 = vmatprep.subr.mxu0 0.0
    %6737 = vmatpush1.xpose.msra.mxu0 0.0
    %6738 = vmatprep.subr.mxu0 0.0
    %6739 = vmatpush1.xpose.msra.mxu0 0.0
    %6740 = vmatprep.mubr.f32.mxu0 0.0
    %6741 = vmatmul.mubr.f32.gmra.mrb[0].mxu0 %v6668
    %v6742 = vpop.f32.mrb[0].mxu0
    %v6743 = vadd.f32 0.0, %v6742
    %v6744 = vpop.f32.mrb[0].mxu0
    %6745 = vdwg.mxu0
    %v6746 = vsel %vm2540, %v6664, -inf
    %6747 = vmax.xlane.f32.xlu0 %v6746
    %v6748 = vpop.xlane.xlu0 %6747
    %v6749 = vsel %vm2540, %v6743, -inf
    %6750 = vmax.xlane.f32.xlu0 %v6749
    %v6751 = vpop.xlane.xlu0 %6750
    %v6752 = vsub.f32 %v6664, %v6748
    %v6753 = vsub.f32 %v6743, %v6751
    %v6754 = vmul.f32 %v6752, 1.442695
    %v6755 = vpow.pop %v6754
    %v6756 = vmul.f32 %v6753, 1.442695
    %v6757 = vpow.pop %v6756
    %v6758 = vsel %vm2540, %v6755, 0.0
    %6759 = vadd.xlane.f32.xlu0 %v6758
    %v6760 = vpop.xlane.xlu0 %6759
    %v6761 = vsel %vm2540, %v6757, 0.0
    %6762 = vadd.xlane.f32.xlu0 %v6761
    %v6763 = vpop.xlane.xlu0 %6762
    %v6764 = vrcp.pop %v6760
    %v6765 = vrcp.pop %v6763
    %v6766 = vmul.f32 %v6755, %v6764
    %v6767 = vmul.f32 %v6757, %v6765
    %v6769 = vsel %vm2540, %v6766, 0
    %6771 = vmatprep.subr.mxu0 0.0
    %6772 = vmatpush1.msra.mxu0 %v6563
    %6773 = vmatprep.subr.mxu0 0.0
    %6774 = vmatpush1.msra.mxu0 %v6568
    %6775 = vmatprep.subr.mxu0 0.0
    %6776 = vmatpush1.msra.mxu0 0.0
    %6777 = vmatprep.subr.mxu0 0.0
    %6778 = vmatpush1.msra.mxu0 0.0
    %6779 = vmatprep.subr.mxu0 0.0
    %6780 = vmatpush1.msra.mxu0 0.0
    %6781 = vmatprep.subr.mxu0 0.0
    %6782 = vmatpush1.msra.mxu0 0.0
    %6783 = vmatprep.subr.mxu0 0.0
    %6784 = vmatpush1.msra.mxu0 0.0
    %6785 = vmatprep.subr.mxu0 0.0
    %6786 = vmatpush1.msra.mxu0 0.0
    %6787 = vmatprep.subr.mxu0 0.0
    %6788 = vmatpush1.msra.mxu0 0.0
    %6789 = vmatprep.subr.mxu0 0.0
    %6790 = vmatpush1.msra.mxu0 0.0
    %6791 = vmatprep.subr.mxu0 0.0
    %6792 = vmatpush1.msra.mxu0 0.0
    %6793 = vmatprep.subr.mxu0 0.0
    %6794 = vmatpush1.msra.mxu0 0.0
    %6795 = vmatprep.subr.mxu0 0.0
    %6796 = vmatpush1.msra.mxu0 0.0
    %6797 = vmatprep.subr.mxu0 0.0
    %6798 = vmatpush1.msra.mxu0 0.0
    %6799 = vmatprep.subr.mxu0 0.0
    %6800 = vmatpush1.msra.mxu0 0.0
    %6801 = vmatprep.subr.mxu0 0.0
    %6802 = vmatpush1.msra.mxu0 0.0
    %6803 = vmatprep.subr.mxu0 0.0
    %6804 = vmatpush1.msra.mxu0 0.0
    %6805 = vmatprep.subr.mxu0 0.0
    %6806 = vmatpush1.msra.mxu0 0.0
    %6807 = vmatprep.subr.mxu0 0.0
    %6808 = vmatpush1.msra.mxu0 0.0
    %6809 = vmatprep.subr.mxu0 0.0
    %6810 = vmatpush1.msra.mxu0 0.0
    %6811 = vmatprep.subr.mxu0 0.0
    %6812 = vmatpush1.msra.mxu0 0.0
    %6813 = vmatprep.subr.mxu0 0.0
    %6814 = vmatpush1.msra.mxu0 0.0
    %6815 = vmatprep.subr.mxu0 0.0
    %6816 = vmatpush1.msra.mxu0 0.0
    %6817 = vmatprep.subr.mxu0 0.0
    %6818 = vmatpush1.msra.mxu0 0.0
    %6819 = vmatprep.subr.mxu0 0.0
    %6820 = vmatpush1.msra.mxu0 0.0
    %6821 = vmatprep.subr.mxu0 0.0
    %6822 = vmatpush1.msra.mxu0 0.0
    %6823 = vmatprep.subr.mxu0 0.0
    %6824 = vmatpush1.msra.mxu0 0.0
    %6825 = vmatprep.subr.mxu0 0.0
    %6826 = vmatpush1.msra.mxu0 0.0
    %6827 = vmatprep.subr.mxu0 0.0
    %6828 = vmatpush1.msra.mxu0 0.0
    %6829 = vmatprep.subr.mxu0 0.0
    %6830 = vmatpush1.msra.mxu0 0.0
    %6831 = vmatprep.subr.mxu0 0.0
    %6832 = vmatpush1.msra.mxu0 0.0
    %6833 = vmatprep.subr.mxu0 0.0
    %6834 = vmatpush1.msra.mxu0 0.0
    %6835 = vmatprep.mubr.f32.mxu0 0.0
    %6836 = vmatmul.mubr.f32.gmra.mrb[0].mxu0 %v6769
    %v6837 = vpop.f32.mrb[0].mxu0
    %v6838 = vadd.f32 0.0, %v6837
    %v6839 = vpop.f32.mrb[0].mxu0
    %6840 = vdwg.mxu0
    %v6842 = vsel %vm2540, %v6767, 0
    %6844 = vmatprep.subr.mxu0 0.0
    %6845 = vmatpush1.msra.mxu0 %v6573
    %6846 = vmatprep.subr.mxu0 0.0
    %6847 = vmatpush1.msra.mxu0 %v6578
    %6848 = vmatprep.subr.mxu0 0.0
    %6849 = vmatpush1.msra.mxu0 0.0
    %6850 = vmatprep.subr.mxu0 0.0
    %6851 = vmatpush1.msra.mxu0 0.0
    %6852 = vmatprep.subr.mxu0 0.0
    %6853 = vmatpush1.msra.mxu0 0.0
    %6854 = vmatprep.subr.mxu0 0.0
    %6855 = vmatpush1.msra.mxu0 0.0
    %6856 = vmatprep.subr.mxu0 0.0
    %6857 = vmatpush1.msra.mxu0 0.0
    %6858 = vmatprep.subr.mxu0 0.0
    %6859 = vmatpush1.msra.mxu0 0.0
    %6860 = vmatprep.subr.mxu0 0.0
    %6861 = vmatpush1.msra.mxu0 0.0
    %6862 = vmatprep.subr.mxu0 0.0
    %6863 = vmatpush1.msra.mxu0 0.0
    %6864 = vmatprep.subr.mxu0 0.0
    %6865 = vmatpush1.msra.mxu0 0.0
    %6866 = vmatprep.subr.mxu0 0.0
    %6867 = vmatpush1.msra.mxu0 0.0
    %6868 = vmatprep.subr.mxu0 0.0
    %6869 = vmatpush1.msra.mxu0 0.0
    %6870 = vmatprep.subr.mxu0 0.0
    %6871 = vmatpush1.msra.mxu0 0.0
    %6872 = vmatprep.subr.mxu0 0.0
    %6873 = vmatpush1.msra.mxu0 0.0
    %6874 = vmatprep.subr.mxu0 0.0
    %6875 = vmatpush1.msra.mxu0 0.0
    %6876 = vmatprep.subr.mxu0 0.0
    %6877 = vmatpush1.msra.mxu0 0.0
    %6878 = vmatprep.subr.mxu0 0.0
    %6879 = vmatpush1.msra.mxu0 0.0
    %6880 = vmatprep.subr.mxu0 0.0
    %6881 = vmatpush1.msra.mxu0 0.0
    %6882 = vmatprep.subr.mxu0 0.0
    %6883 = vmatpush1.msra.mxu0 0.0
    %6884 = vmatprep.subr.mxu0 0.0
    %6885 = vmatpush1.msra.mxu0 0.0
    %6886 = vmatprep.subr.mxu0 0.0
    %6887 = vmatpush1.msra.mxu0 0.0
    %6888 = vmatprep.subr.mxu0 0.0
    %6889 = vmatpush1.msra.mxu0 0.0
    %6890 = vmatprep.subr.mxu0 0.0
    %6891 = vmatpush1.msra.mxu0 0.0
    %6892 = vmatprep.subr.mxu0 0.0
    %6893 = vmatpush1.msra.mxu0 0.0
    %6894 = vmatprep.subr.mxu0 0.0
    %6895 = vmatpush1.msra.mxu0 0.0
    %6896 = vmatprep.subr.mxu0 0.0
    %6897 = vmatpush1.msra.mxu0 0.0
    %6898 = vmatprep.subr.mxu0 0.0
    %6899 = vmatpush1.msra.mxu0 0.0
    %6900 = vmatprep.subr.mxu0 0.0
    %6901 = vmatpush1.msra.mxu0 0.0
    %6902 = vmatprep.subr.mxu0 0.0
    %6903 = vmatpush1.msra.mxu0 0.0
    %6904 = vmatprep.subr.mxu0 0.0
    %6905 = vmatpush1.msra.mxu0 0.0
    %6906 = vmatprep.subr.mxu0 0.0
    %6907 = vmatpush1.msra.mxu0 0.0
    %6908 = vmatprep.mubr.f32.mxu0 0.0
    %6909 = vmatmul.mubr.f32.gmra.mrb[0].mxu0 %v6842
    %v6910 = vpop.f32.mrb[0].mxu0
    %v6911 = vadd.f32 0.0, %v6910
    %v6912 = vpop.f32.mrb[0].mxu0
    %6913 = vdwg.mxu0
    %6914 = vrot.lane.b32.xlu0 %v6377, 120
    %v6915 = vpop.permute.xlu0 %6914
    %6916 = vrot.lane.b32.xlu0 %v6465, 120
    %v6917 = vpop.permute.xlu0 %6916
    %6918 = vrot.lane.b32.xlu0 %v6470, 120
    %v6919 = vpop.permute.xlu0 %6918
    %v6920 = vsel %vm378, %v6915, 0
    %v6922 = vsel %vm378, %v6917, 0
    %v6924 = vsel %vm378, %v6919, 0
    %6926 = vmatprep.subr.mxu0 0.0
    %6927 = vmatpush1.xpose.msra.mxu0 %v6922
    %6928 = vmatprep.subr.mxu0 0.0
    %6929 = vmatpush1.xpose.msra.mxu0 %v6924
    %6930 = vmatprep.subr.mxu0 0.0
    %6931 = vmatpush1.xpose.msra.mxu0 0.0
    %6932 = vmatprep.subr.mxu0 0.0
    %6933 = vmatpush1.xpose.msra.mxu0 0.0
    %6934 = vmatprep.subr.mxu0 0.0
    %6935 = vmatpush1.xpose.msra.mxu0 0.0
    %6936 = vmatprep.subr.mxu0 0.0
    %6937 = vmatpush1.xpose.msra.mxu0 0.0
    %6938 = vmatprep.subr.mxu0 0.0
    %6939 = vmatpush1.xpose.msra.mxu0 0.0
    %6940 = vmatprep.subr.mxu0 0.0
    %6941 = vmatpush1.xpose.msra.mxu0 0.0
    %6942 = vmatprep.subr.mxu0 0.0
    %6943 = vmatpush1.xpose.msra.mxu0 0.0
    %6944 = vmatprep.subr.mxu0 0.0
    %6945 = vmatpush1.xpose.msra.mxu0 0.0
    %6946 = vmatprep.subr.mxu0 0.0
    %6947 = vmatpush1.xpose.msra.mxu0 0.0
    %6948 = vmatprep.subr.mxu0 0.0
    %6949 = vmatpush1.xpose.msra.mxu0 0.0
    %6950 = vmatprep.subr.mxu0 0.0
    %6951 = vmatpush1.xpose.msra.mxu0 0.0
    %6952 = vmatprep.subr.mxu0 0.0
    %6953 = vmatpush1.xpose.msra.mxu0 0.0
    %6954 = vmatprep.subr.mxu0 0.0
    %6955 = vmatpush1.xpose.msra.mxu0 0.0
    %6956 = vmatprep.subr.mxu0 0.0
    %6957 = vmatpush1.xpose.msra.mxu0 0.0
    %6958 = vmatprep.subr.mxu0 0.0
    %6959 = vmatpush1.xpose.msra.mxu0 0.0
    %6960 = vmatprep.subr.mxu0 0.0
    %6961 = vmatpush1.xpose.msra.mxu0 0.0
    %6962 = vmatprep.subr.mxu0 0.0
    %6963 = vmatpush1.xpose.msra.mxu0 0.0
    %6964 = vmatprep.subr.mxu0 0.0
    %6965 = vmatpush1.xpose.msra.mxu0 0.0
    %6966 = vmatprep.subr.mxu0 0.0
    %6967 = vmatpush1.xpose.msra.mxu0 0.0
    %6968 = vmatprep.subr.mxu0 0.0
    %6969 = vmatpush1.xpose.msra.mxu0 0.0
    %6970 = vmatprep.subr.mxu0 0.0
    %6971 = vmatpush1.xpose.msra.mxu0 0.0
    %6972 = vmatprep.subr.mxu0 0.0
    %6973 = vmatpush1.xpose.msra.mxu0 0.0
    %6974 = vmatprep.subr.mxu0 0.0
    %6975 = vmatpush1.xpose.msra.mxu0 0.0
    %6976 = vmatprep.subr.mxu0 0.0
    %6977 = vmatpush1.xpose.msra.mxu0 0.0
    %6978 = vmatprep.subr.mxu0 0.0
    %6979 = vmatpush1.xpose.msra.mxu0 0.0
    %6980 = vmatprep.subr.mxu0 0.0
    %6981 = vmatpush1.xpose.msra.mxu0 0.0
    %6982 = vmatprep.subr.mxu0 0.0
    %6983 = vmatpush1.xpose.msra.mxu0 0.0
    %6984 = vmatprep.subr.mxu0 0.0
    %6985 = vmatpush1.xpose.msra.mxu0 0.0
    %6986 = vmatprep.subr.mxu0 0.0
    %6987 = vmatpush1.xpose.msra.mxu0 0.0
    %6988 = vmatprep.subr.mxu0 0.0
    %6989 = vmatpush1.xpose.msra.mxu0 0.0
    %6990 = vmatprep.mubr.f32.mxu0 0.0
    %6991 = vmatmul.mubr.f32.gmra.mrb[0].mxu0 %v6920
    %v6992 = vpop.f32.mrb[0].mxu0
    %v6993 = vadd.f32 0.0, %v6992
    %v6994 = vpop.f32.mrb[0].mxu0
    %6995 = vdwg.mxu0
    %6996 = vrot.lane.b32.xlu0 %v6382, 120
    %v6997 = vpop.permute.xlu0 %6996
    %6998 = vrot.lane.b32.xlu0 %v6475, 120
    %v6999 = vpop.permute.xlu0 %6998
    %7000 = vrot.lane.b32.xlu0 %v6480, 120
    %v7001 = vpop.permute.xlu0 %7000
    %v7002 = vsel %vm378, %v6997, 0
    %v7004 = vsel %vm378, %v6999, 0
    %v7006 = vsel %vm378, %v7001, 0
    %7008 = vmatprep.subr.mxu0 0.0
    %7009 = vmatpush1.xpose.msra.mxu0 %v7004
    %7010 = vmatprep.subr.mxu0 0.0
    %7011 = vmatpush1.xpose.msra.mxu0 %v7006
    %7012 = vmatprep.subr.mxu0 0.0
    %7013 = vmatpush1.xpose.msra.mxu0 0.0
    %7014 = vmatprep.subr.mxu0 0.0
    %7015 = vmatpush1.xpose.msra.mxu0 0.0
    %7016 = vmatprep.subr.mxu0 0.0
    %7017 = vmatpush1.xpose.msra.mxu0 0.0
    %7018 = vmatprep.subr.mxu0 0.0
    %7019 = vmatpush1.xpose.msra.mxu0 0.0
    %7020 = vmatprep.subr.mxu0 0.0
    %7021 = vmatpush1.xpose.msra.mxu0 0.0
    %7022 = vmatprep.subr.mxu0 0.0
    %7023 = vmatpush1.xpose.msra.mxu0 0.0
    %7024 = vmatprep.subr.mxu0 0.0
    %7025 = vmatpush1.xpose.msra.mxu0 0.0
    %7026 = vmatprep.subr.mxu0 0.0
    %7027 = vmatpush1.xpose.msra.mxu0 0.0
    %7028 = vmatprep.subr.mxu0 0.0
    %7029 = vmatpush1.xpose.msra.mxu0 0.0
    %7030 = vmatprep.subr.mxu0 0.0
    %7031 = vmatpush1.xpose.msra.mxu0 0.0
    %7032 = vmatprep.subr.mxu0 0.0
    %7033 = vmatpush1.xpose.msra.mxu0 0.0
    %7034 = vmatprep.subr.mxu0 0.0
    %7035 = vmatpush1.xpose.msra.mxu0 0.0
    %7036 = vmatprep.subr.mxu0 0.0
    %7037 = vmatpush1.xpose.msra.mxu0 0.0
    %7038 = vmatprep.subr.mxu0 0.0
    %7039 = vmatpush1.xpose.msra.mxu0 0.0
    %7040 = vmatprep.subr.mxu0 0.0
    %7041 = vmatpush1.xpose.msra.mxu0 0.0
    %7042 = vmatprep.subr.mxu0 0.0
    %7043 = vmatpush1.xpose.msra.mxu0 0.0
    %7044 = vmatprep.subr.mxu0 0.0
    %7045 = vmatpush1.xpose.msra.mxu0 0.0
    %7046 = vmatprep.subr.mxu0 0.0
    %7047 = vmatpush1.xpose.msra.mxu0 0.0
    %7048 = vmatprep.subr.mxu0 0.0
    %7049 = vmatpush1.xpose.msra.mxu0 0.0
    %7050 = vmatprep.subr.mxu0 0.0
    %7051 = vmatpush1.xpose.msra.mxu0 0.0
    %7052 = vmatprep.subr.mxu0 0.0
    %7053 = vmatpush1.xpose.msra.mxu0 0.0
    %7054 = vmatprep.subr.mxu0 0.0
    %7055 = vmatpush1.xpose.msra.mxu0 0.0
    %7056 = vmatprep.subr.mxu0 0.0
    %7057 = vmatpush1.xpose.msra.mxu0 0.0
    %7058 = vmatprep.subr.mxu0 0.0
    %7059 = vmatpush1.xpose.msra.mxu0 0.0
    %7060 = vmatprep.subr.mxu0 0.0
    %7061 = vmatpush1.xpose.msra.mxu0 0.0
    %7062 = vmatprep.subr.mxu0 0.0
    %7063 = vmatpush1.xpose.msra.mxu0 0.0
    %7064 = vmatprep.subr.mxu0 0.0
    %7065 = vmatpush1.xpose.msra.mxu0 0.0
    %7066 = vmatprep.subr.mxu0 0.0
    %7067 = vmatpush1.xpose.msra.mxu0 0.0
    %7068 = vmatprep.subr.mxu0 0.0
    %7069 = vmatpush1.xpose.msra.mxu0 0.0
    %7070 = vmatprep.subr.mxu0 0.0
    %7071 = vmatpush1.xpose.msra.mxu0 0.0
    %7072 = vmatprep.mubr.f32.mxu0 0.0
    %7073 = vmatmul.mubr.f32.gmra.mrb[0].mxu0 %v7002
    %v7074 = vpop.f32.mrb[0].mxu0
    %v7075 = vadd.f32 0.0, %v7074
    %v7076 = vpop.f32.mrb[0].mxu0
    %7077 = vdwg.mxu0
    %v7078 = vsel %vm2540, %v6993, -inf
    %7079 = vmax.xlane.f32.xlu0 %v7078
    %v7080 = vpop.xlane.xlu0 %7079
    %v7081 = vsel %vm2540, %v7075, -inf
    %7082 = vmax.xlane.f32.xlu0 %v7081
    %v7083 = vpop.xlane.xlu0 %7082
    %v7084 = vsub.f32 %v6993, %v7080
    %v7085 = vsub.f32 %v7075, %v7083
    %v7086 = vmul.f32 %v7084, 1.442695
    %v7087 = vpow.pop %v7086
    %v7088 = vmul.f32 %v7085, 1.442695
    %v7089 = vpow.pop %v7088
    %v7090 = vsel %vm2540, %v7087, 0.0
    %7091 = vadd.xlane.f32.xlu0 %v7090
    %v7092 = vpop.xlane.xlu0 %7091
    %v7093 = vsel %vm2540, %v7089, 0.0
    %7094 = vadd.xlane.f32.xlu0 %v7093
    %v7095 = vpop.xlane.xlu0 %7094
    %v7096 = vrcp.pop %v7092
    %v7097 = vrcp.pop %v7095
    %v7098 = vmul.f32 %v7087, %v7096
    %v7099 = vmul.f32 %v7089, %v7097
    %7102 = vrot.lane.b32.xlu0 %v6563, 120
    %v7103 = vpop.permute.xlu0 %7102
    %7104 = vrot.lane.b32.xlu0 %v6568, 120
    %v7105 = vpop.permute.xlu0 %7104
    %v7109 = vsel %vm2540, %v7098, 0
    %7111 = vmatprep.subr.mxu0 0.0
    %7112 = vmatpush1.msra.mxu0 %v7103
    %7113 = vmatprep.subr.mxu0 0.0
    %7114 = vmatpush1.msra.mxu0 %v7105
    %7115 = vmatprep.subr.mxu0 0.0
    %7116 = vmatpush1.msra.mxu0 0.0
    %7117 = vmatprep.subr.mxu0 0.0
    %7118 = vmatpush1.msra.mxu0 0.0
    %7119 = vmatprep.subr.mxu0 0.0
    %7120 = vmatpush1.msra.mxu0 0.0
    %7121 = vmatprep.subr.mxu0 0.0
    %7122 = vmatpush1.msra.mxu0 0.0
    %7123 = vmatprep.subr.mxu0 0.0
    %7124 = vmatpush1.msra.mxu0 0.0
    %7125 = vmatprep.subr.mxu0 0.0
    %7126 = vmatpush1.msra.mxu0 0.0
    %7127 = vmatprep.subr.mxu0 0.0
    %7128 = vmatpush1.msra.mxu0 0.0
    %7129 = vmatprep.subr.mxu0 0.0
    %7130 = vmatpush1.msra.mxu0 0.0
    %7131 = vmatprep.subr.mxu0 0.0
    %7132 = vmatpush1.msra.mxu0 0.0
    %7133 = vmatprep.subr.mxu0 0.0
    %7134 = vmatpush1.msra.mxu0 0.0
    %7135 = vmatprep.subr.mxu0 0.0
    %7136 = vmatpush1.msra.mxu0 0.0
    %7137 = vmatprep.subr.mxu0 0.0
    %7138 = vmatpush1.msra.mxu0 0.0
    %7139 = vmatprep.subr.mxu0 0.0
    %7140 = vmatpush1.msra.mxu0 0.0
    %7141 = vmatprep.subr.mxu0 0.0
    %7142 = vmatpush1.msra.mxu0 0.0
    %7143 = vmatprep.subr.mxu0 0.0
    %7144 = vmatpush1.msra.mxu0 0.0
    %7145 = vmatprep.subr.mxu0 0.0
    %7146 = vmatpush1.msra.mxu0 0.0
    %7147 = vmatprep.subr.mxu0 0.0
    %7148 = vmatpush1.msra.mxu0 0.0
    %7149 = vmatprep.subr.mxu0 0.0
    %7150 = vmatpush1.msra.mxu0 0.0
    %7151 = vmatprep.subr.mxu0 0.0
    %7152 = vmatpush1.msra.mxu0 0.0
    %7153 = vmatprep.subr.mxu0 0.0
    %7154 = vmatpush1.msra.mxu0 0.0
    %7155 = vmatprep.subr.mxu0 0.0
    %7156 = vmatpush1.msra.mxu0 0.0
    %7157 = vmatprep.subr.mxu0 0.0
    %7158 = vmatpush1.msra.mxu0 0.0
    %7159 = vmatprep.subr.mxu0 0.0
    %7160 = vmatpush1.msra.mxu0 0.0
    %7161 = vmatprep.subr.mxu0 0.0
    %7162 = vmatpush1.msra.mxu0 0.0
    %7163 = vmatprep.subr.mxu0 0.0
    %7164 = vmatpush1.msra.mxu0 0.0
    %7165 = vmatprep.subr.mxu0 0.0
    %7166 = vmatpush1.msra.mxu0 0.0
    %7167 = vmatprep.subr.mxu0 0.0
    %7168 = vmatpush1.msra.mxu0 0.0
    %7169 = vmatprep.subr.mxu0 0.0
    %7170 = vmatpush1.msra.mxu0 0.0
    %7171 = vmatprep.subr.mxu0 0.0
    %7172 = vmatpush1.msra.mxu0 0.0
    %7173 = vmatprep.subr.mxu0 0.0
    %7174 = vmatpush1.msra.mxu0 0.0
    %7175 = vmatprep.mubr.f32.mxu0 0.0
    %7176 = vmatmul.mubr.f32.gmra.mrb[0].mxu0 %v7109
    %v7177 = vpop.f32.mrb[0].mxu0
    %v7178 = vadd.f32 0.0, %v7177
    %v7179 = vpop.f32.mrb[0].mxu0
    %7180 = vdwg.mxu0
    %7183 = vrot.lane.b32.xlu0 %v6573, 120
    %v7184 = vpop.permute.xlu0 %7183
    %7185 = vrot.lane.b32.xlu0 %v6578, 120
    %v7186 = vpop.permute.xlu0 %7185
    %v7190 = vsel %vm2540, %v7099, 0
    %7192 = vmatprep.subr.mxu0 0.0
    %7193 = vmatpush1.msra.mxu0 %v7184
    %7194 = vmatprep.subr.mxu0 0.0
    %7195 = vmatpush1.msra.mxu0 %v7186
    %7196 = vmatprep.subr.mxu0 0.0
    %7197 = vmatpush1.msra.mxu0 0.0
    %7198 = vmatprep.subr.mxu0 0.0
    %7199 = vmatpush1.msra.mxu0 0.0
    %7200 = vmatprep.subr.mxu0 0.0
    %7201 = vmatpush1.msra.mxu0 0.0
    %7202 = vmatprep.subr.mxu0 0.0
    %7203 = vmatpush1.msra.mxu0 0.0
    %7204 = vmatprep.subr.mxu0 0.0
    %7205 = vmatpush1.msra.mxu0 0.0
    %7206 = vmatprep.subr.mxu0 0.0
    %7207 = vmatpush1.msra.mxu0 0.0
    %7208 = vmatprep.subr.mxu0 0.0
    %7209 = vmatpush1.msra.mxu0 0.0
    %7210 = vmatprep.subr.mxu0 0.0
    %7211 = vmatpush1.msra.mxu0 0.0
    %7212 = vmatprep.subr.mxu0 0.0
    %7213 = vmatpush1.msra.mxu0 0.0
    %7214 = vmatprep.subr.mxu0 0.0
    %7215 = vmatpush1.msra.mxu0 0.0
    %7216 = vmatprep.subr.mxu0 0.0
    %7217 = vmatpush1.msra.mxu0 0.0
    %7218 = vmatprep.subr.mxu0 0.0
    %7219 = vmatpush1.msra.mxu0 0.0
    %7220 = vmatprep.subr.mxu0 0.0
    %7221 = vmatpush1.msra.mxu0 0.0
    %7222 = vmatprep.subr.mxu0 0.0
    %7223 = vmatpush1.msra.mxu0 0.0
    %7224 = vmatprep.subr.mxu0 0.0
    %7225 = vmatpush1.msra.mxu0 0.0
    %7226 = vmatprep.subr.mxu0 0.0
    %7227 = vmatpush1.msra.mxu0 0.0
    %7228 = vmatprep.subr.mxu0 0.0
    %7229 = vmatpush1.msra.mxu0 0.0
    %7230 = vmatprep.subr.mxu0 0.0
    %7231 = vmatpush1.msra.mxu0 0.0
    %7232 = vmatprep.subr.mxu0 0.0
    %7233 = vmatpush1.msra.mxu0 0.0
    %7234 = vmatprep.subr.mxu0 0.0
    %7235 = vmatpush1.msra.mxu0 0.0
    %7236 = vmatprep.subr.mxu0 0.0
    %7237 = vmatpush1.msra.mxu0 0.0
    %7238 = vmatprep.subr.mxu0 0.0
    %7239 = vmatpush1.msra.mxu0 0.0
    %7240 = vmatprep.subr.mxu0 0.0
    %7241 = vmatpush1.msra.mxu0 0.0
    %7242 = vmatprep.subr.mxu0 0.0
    %7243 = vmatpush1.msra.mxu0 0.0
    %7244 = vmatprep.subr.mxu0 0.0
    %7245 = vmatpush1.msra.mxu0 0.0
    %7246 = vmatprep.subr.mxu0 0.0
    %7247 = vmatpush1.msra.mxu0 0.0
    %7248 = vmatprep.subr.mxu0 0.0
    %7249 = vmatpush1.msra.mxu0 0.0
    %7250 = vmatprep.subr.mxu0 0.0
    %7251 = vmatpush1.msra.mxu0 0.0
    %7252 = vmatprep.subr.mxu0 0.0
    %7253 = vmatpush1.msra.mxu0 0.0
    %7254 = vmatprep.subr.mxu0 0.0
    %7255 = vmatpush1.msra.mxu0 0.0
    %7256 = vmatprep.mubr.f32.mxu0 0.0
    %7257 = vmatmul.mubr.f32.gmra.mrb[0].mxu0 %v7190
    %v7258 = vpop.f32.mrb[0].mxu0
    %v7259 = vadd.f32 0.0, %v7258
    %v7260 = vpop.f32.mrb[0].mxu0
    %7261 = vdwg.mxu0
    %v7263 = vsel %vm378, %v7178, 0
    %v7266 = vsel %vm378, %v7259, 0
    %7268 = vmatprep.subr.mxu0 0.0
    %7269 = vmatpush1.msra.mxu0 %v6583
    %7270 = vmatprep.subr.mxu0 0.0
    %7271 = vmatpush1.msra.mxu0 0.0
    %7272 = vmatprep.subr.mxu0 0.0
    %7273 = vmatpush1.msra.mxu0 0.0
    %7274 = vmatprep.subr.mxu0 0.0
    %7275 = vmatpush1.msra.mxu0 0.0
    %7276 = vmatprep.subr.mxu0 0.0
    %7277 = vmatpush1.msra.mxu0 0.0
    %7278 = vmatprep.subr.mxu0 0.0
    %7279 = vmatpush1.msra.mxu0 0.0
    %7280 = vmatprep.subr.mxu0 0.0
    %7281 = vmatpush1.msra.mxu0 0.0
    %7282 = vmatprep.subr.mxu0 0.0
    %7283 = vmatpush1.msra.mxu0 0.0
    %7284 = vmatprep.subr.mxu0 0.0
    %7285 = vmatpush1.msra.mxu0 0.0
    %7286 = vmatprep.subr.mxu0 0.0
    %7287 = vmatpush1.msra.mxu0 0.0
    %7288 = vmatprep.subr.mxu0 0.0
    %7289 = vmatpush1.msra.mxu0 0.0
    %7290 = vmatprep.subr.mxu0 0.0
    %7291 = vmatpush1.msra.mxu0 0.0
    %7292 = vmatprep.subr.mxu0 0.0
    %7293 = vmatpush1.msra.mxu0 0.0
    %7294 = vmatprep.subr.mxu0 0.0
    %7295 = vmatpush1.msra.mxu0 0.0
    %7296 = vmatprep.subr.mxu0 0.0
    %7297 = vmatpush1.msra.mxu0 0.0
    %7298 = vmatprep.subr.mxu0 0.0
    %7299 = vmatpush1.msra.mxu0 0.0
    %7300 = vmatprep.subr.mxu0 0.0
    %7301 = vmatpush1.msra.mxu0 0.0
    %7302 = vmatprep.subr.mxu0 0.0
    %7303 = vmatpush1.msra.mxu0 0.0
    %7304 = vmatprep.subr.mxu0 0.0
    %7305 = vmatpush1.msra.mxu0 0.0
    %7306 = vmatprep.subr.mxu0 0.0
    %7307 = vmatpush1.msra.mxu0 0.0
    %7308 = vmatprep.subr.mxu0 0.0
    %7309 = vmatpush1.msra.mxu0 0.0
    %7310 = vmatprep.subr.mxu0 0.0
    %7311 = vmatpush1.msra.mxu0 0.0
    %7312 = vmatprep.subr.mxu0 0.0
    %7313 = vmatpush1.msra.mxu0 0.0
    %7314 = vmatprep.subr.mxu0 0.0
    %7315 = vmatpush1.msra.mxu0 0.0
    %7316 = vmatprep.subr.mxu0 0.0
    %7317 = vmatpush1.msra.mxu0 0.0
    %7318 = vmatprep.subr.mxu0 0.0
    %7319 = vmatpush1.msra.mxu0 0.0
    %7320 = vmatprep.subr.mxu0 0.0
    %7321 = vmatpush1.msra.mxu0 0.0
    %7322 = vmatprep.subr.mxu0 0.0
    %7323 = vmatpush1.msra.mxu0 0.0
    %7324 = vmatprep.subr.mxu0 0.0
    %7325 = vmatpush1.msra.mxu0 0.0
    %7326 = vmatprep.subr.mxu0 0.0
    %7327 = vmatpush1.msra.mxu0 0.0
    %7328 = vmatprep.subr.mxu0 0.0
    %7329 = vmatpush1.msra.mxu0 0.0
    %7330 = vmatprep.subr.mxu0 0.0
    %7331 = vmatpush1.msra.mxu0 0.0
    %7332 = vmatprep.mubr.f32.mxu0 0.0
    %7333 = vmatmul.mubr.f32.gmra.mrb[0].mxu0 %v7263
    %v7334 = vpop.f32.mrb[0].mxu0
    %v7335 = vadd.f32 0.0, %v7334
    %v7336 = vpop.f32.mrb[0].mxu0
    %7337 = vmatprep.mubr.f32.mxu0 0.0
    %7338 = vmatmul.mubr.f32.gmra.mrb[0].mxu0 %v7266
    %v7339 = vpop.f32.mrb[0].mxu0
    %v7340 = vadd.f32 0.0, %v7339
    %v7341 = vpop.f32.mrb[0].mxu0
    %7342 = vdwg.mxu0
    %v7344 = vsel %vm378, %v6838, 0
    %v7347 = vsel %vm378, %v6911, 0
    %7349 = vmatprep.subr.mxu0 0.0
    %7350 = vmatpush1.msra.mxu0 %v6582
    %7351 = vmatprep.subr.mxu0 0.0
    %7352 = vmatpush1.msra.mxu0 0.0
    %7353 = vmatprep.subr.mxu0 0.0
    %7354 = vmatpush1.msra.mxu0 0.0
    %7355 = vmatprep.subr.mxu0 0.0
    %7356 = vmatpush1.msra.mxu0 0.0
    %7357 = vmatprep.subr.mxu0 0.0
    %7358 = vmatpush1.msra.mxu0 0.0
    %7359 = vmatprep.subr.mxu0 0.0
    %7360 = vmatpush1.msra.mxu0 0.0
    %7361 = vmatprep.subr.mxu0 0.0
    %7362 = vmatpush1.msra.mxu0 0.0
    %7363 = vmatprep.subr.mxu0 0.0
    %7364 = vmatpush1.msra.mxu0 0.0
    %7365 = vmatprep.subr.mxu0 0.0
    %7366 = vmatpush1.msra.mxu0 0.0
    %7367 = vmatprep.subr.mxu0 0.0
    %7368 = vmatpush1.msra.mxu0 0.0
    %7369 = vmatprep.subr.mxu0 0.0
    %7370 = vmatpush1.msra.mxu0 0.0
    %7371 = vmatprep.subr.mxu0 0.0
    %7372 = vmatpush1.msra.mxu0 0.0
    %7373 = vmatprep.subr.mxu0 0.0
    %7374 = vmatpush1.msra.mxu0 0.0
    %7375 = vmatprep.subr.mxu0 0.0
    %7376 = vmatpush1.msra.mxu0 0.0
    %7377 = vmatprep.subr.mxu0 0.0
    %7378 = vmatpush1.msra.mxu0 0.0
    %7379 = vmatprep.subr.mxu0 0.0
    %7380 = vmatpush1.msra.mxu0 0.0
    %7381 = vmatprep.subr.mxu0 0.0
    %7382 = vmatpush1.msra.mxu0 0.0
    %7383 = vmatprep.subr.mxu0 0.0
    %7384 = vmatpush1.msra.mxu0 0.0
    %7385 = vmatprep.subr.mxu0 0.0
    %7386 = vmatpush1.msra.mxu0 0.0
    %7387 = vmatprep.subr.mxu0 0.0
    %7388 = vmatpush1.msra.mxu0 0.0
    %7389 = vmatprep.subr.mxu0 0.0
    %7390 = vmatpush1.msra.mxu0 0.0
    %7391 = vmatprep.subr.mxu0 0.0
    %7392 = vmatpush1.msra.mxu0 0.0
    %7393 = vmatprep.subr.mxu0 0.0
    %7394 = vmatpush1.msra.mxu0 0.0
    %7395 = vmatprep.subr.mxu0 0.0
    %7396 = vmatpush1.msra.mxu0 0.0
    %7397 = vmatprep.subr.mxu0 0.0
    %7398 = vmatpush1.msra.mxu0 0.0
    %7399 = vmatprep.subr.mxu0 0.0
    %7400 = vmatpush1.msra.mxu0 0.0
    %7401 = vmatprep.subr.mxu0 0.0
    %7402 = vmatpush1.msra.mxu0 0.0
    %7403 = vmatprep.subr.mxu0 0.0
    %7404 = vmatpush1.msra.mxu0 0.0
    %7405 = vmatprep.subr.mxu0 0.0
    %7406 = vmatpush1.msra.mxu0 0.0
    %7407 = vmatprep.subr.mxu0 0.0
    %7408 = vmatpush1.msra.mxu0 0.0
    %7409 = vmatprep.subr.mxu0 0.0
    %7410 = vmatpush1.msra.mxu0 0.0
    %7411 = vmatprep.subr.mxu0 0.0
    %7412 = vmatpush1.msra.mxu0 0.0
    %7413 = vmatprep.mubr.f32.mxu0 0.0
    %7414 = vmatmul.mubr.f32.gmra.mrb[0].mxu0 %v7344
    %v7415 = vpop.f32.mrb[0].mxu0
    %v7416 = vadd.f32 %v7335, %v7415
    %v7417 = vpop.f32.mrb[0].mxu0
    %7418 = vmatprep.mubr.f32.mxu0 0.0
    %7419 = vmatmul.mubr.f32.gmra.mrb[0].mxu0 %v7347
    %v7420 = vpop.f32.mrb[0].mxu0
    %v7421 = vadd.f32 %v7340, %v7420
    %v7422 = vpop.f32.mrb[0].mxu0
    %7423 = vdwg.mxu0
    %7424 = vrot.lane.b32.xlu0 %v6377, 112
    %v7425 = vpop.permute.xlu0 %7424
    %7426 = vrot.lane.b32.xlu0 %v6465, 112
    %v7427 = vpop.permute.xlu0 %7426
    %7428 = vrot.lane.b32.xlu0 %v6470, 112
    %v7429 = vpop.permute.xlu0 %7428
    %v7430 = vsel %vm378, %v7425, 0
    %v7432 = vsel %vm378, %v7427, 0
    %v7434 = vsel %vm378, %v7429, 0
    %7436 = vmatprep.subr.mxu0 0.0
    %7437 = vmatpush1.xpose.msra.mxu0 %v7432
    %7438 = vmatprep.subr.mxu0 0.0
    %7439 = vmatpush1.xpose.msra.mxu0 %v7434
    %7440 = vmatprep.subr.mxu0 0.0
    %7441 = vmatpush1.xpose.msra.mxu0 0.0
    %7442 = vmatprep.subr.mxu0 0.0
    %7443 = vmatpush1.xpose.msra.mxu0 0.0
    %7444 = vmatprep.subr.mxu0 0.0
    %7445 = vmatpush1.xpose.msra.mxu0 0.0
    %7446 = vmatprep.subr.mxu0 0.0
    %7447 = vmatpush1.xpose.msra.mxu0 0.0
    %7448 = vmatprep.subr.mxu0 0.0
    %7449 = vmatpush1.xpose.msra.mxu0 0.0
    %7450 = vmatprep.subr.mxu0 0.0
    %7451 = vmatpush1.xpose.msra.mxu0 0.0
    %7452 = vmatprep.subr.mxu0 0.0
    %7453 = vmatpush1.xpose.msra.mxu0 0.0
    %7454 = vmatprep.subr.mxu0 0.0
    %7455 = vmatpush1.xpose.msra.mxu0 0.0
    %7456 = vmatprep.subr.mxu0 0.0
    %7457 = vmatpush1.xpose.msra.mxu0 0.0
    %7458 = vmatprep.subr.mxu0 0.0
    %7459 = vmatpush1.xpose.msra.mxu0 0.0
    %7460 = vmatprep.subr.mxu0 0.0
    %7461 = vmatpush1.xpose.msra.mxu0 0.0
    %7462 = vmatprep.subr.mxu0 0.0
    %7463 = vmatpush1.xpose.msra.mxu0 0.0
    %7464 = vmatprep.subr.mxu0 0.0
    %7465 = vmatpush1.xpose.msra.mxu0 0.0
    %7466 = vmatprep.subr.mxu0 0.0
    %7467 = vmatpush1.xpose.msra.mxu0 0.0
    %7468 = vmatprep.subr.mxu0 0.0
    %7469 = vmatpush1.xpose.msra.mxu0 0.0
    %7470 = vmatprep.subr.mxu0 0.0
    %7471 = vmatpush1.xpose.msra.mxu0 0.0
    %7472 = vmatprep.subr.mxu0 0.0
    %7473 = vmatpush1.xpose.msra.mxu0 0.0
    %7474 = vmatprep.subr.mxu0 0.0
    %7475 = vmatpush1.xpose.msra.mxu0 0.0
    %7476 = vmatprep.subr.mxu0 0.0
    %7477 = vmatpush1.xpose.msra.mxu0 0.0
    %7478 = vmatprep.subr.mxu0 0.0
    %7479 = vmatpush1.xpose.msra.mxu0 0.0
    %7480 = vmatprep.subr.mxu0 0.0
    %7481 = vmatpush1.xpose.msra.mxu0 0.0
    %7482 = vmatprep.subr.mxu0 0.0
    %7483 = vmatpush1.xpose.msra.mxu0 0.0
    %7484 = vmatprep.subr.mxu0 0.0
    %7485 = vmatpush1.xpose.msra.mxu0 0.0
    %7486 = vmatprep.subr.mxu0 0.0
    %7487 = vmatpush1.xpose.msra.mxu0 0.0
    %7488 = vmatprep.subr.mxu0 0.0
    %7489 = vmatpush1.xpose.msra.mxu0 0.0
    %7490 = vmatprep.subr.mxu0 0.0
    %7491 = vmatpush1.xpose.msra.mxu0 0.0
    %7492 = vmatprep.subr.mxu0 0.0
    %7493 = vmatpush1.xpose.msra.mxu0 0.0
    %7494 = vmatprep.subr.mxu0 0.0
    %7495 = vmatpush1.xpose.msra.mxu0 0.0
    %7496 = vmatprep.subr.mxu0 0.0
    %7497 = vmatpush1.xpose.msra.mxu0 0.0
    %7498 = vmatprep.subr.mxu0 0.0
    %7499 = vmatpush1.xpose.msra.mxu0 0.0
    %7500 = vmatprep.mubr.f32.mxu0 0.0
    %7501 = vmatmul.mubr.f32.gmra.mrb[0].mxu0 %v7430
    %v7502 = vpop.f32.mrb[0].mxu0
    %v7503 = vadd.f32 0.0, %v7502
    %v7504 = vpop.f32.mrb[0].mxu0
    %7505 = vdwg.mxu0
    %7506 = vrot.lane.b32.xlu0 %v6382, 112
    %v7507 = vpop.permute.xlu0 %7506
    %7508 = vrot.lane.b32.xlu0 %v6475, 112
    %v7509 = vpop.permute.xlu0 %7508
    %7510 = vrot.lane.b32.xlu0 %v6480, 112
    %v7511 = vpop.permute.xlu0 %7510
    %v7512 = vsel %vm378, %v7507, 0
    %v7514 = vsel %vm378, %v7509, 0
    %v7516 = vsel %vm378, %v7511, 0
    %7518 = vmatprep.subr.mxu0 0.0
    %7519 = vmatpush1.xpose.msra.mxu0 %v7514
    %7520 = vmatprep.subr.mxu0 0.0
    %7521 = vmatpush1.xpose.msra.mxu0 %v7516
    %7522 = vmatprep.subr.mxu0 0.0
    %7523 = vmatpush1.xpose.msra.mxu0 0.0
    %7524 = vmatprep.subr.mxu0 0.0
    %7525 = vmatpush1.xpose.msra.mxu0 0.0
    %7526 = vmatprep.subr.mxu0 0.0
    %7527 = vmatpush1.xpose.msra.mxu0 0.0
    %7528 = vmatprep.subr.mxu0 0.0
    %7529 = vmatpush1.xpose.msra.mxu0 0.0
    %7530 = vmatprep.subr.mxu0 0.0
    %7531 = vmatpush1.xpose.msra.mxu0 0.0
    %7532 = vmatprep.subr.mxu0 0.0
    %7533 = vmatpush1.xpose.msra.mxu0 0.0
    %7534 = vmatprep.subr.mxu0 0.0
    %7535 = vmatpush1.xpose.msra.mxu0 0.0
    %7536 = vmatprep.subr.mxu0 0.0
    %7537 = vmatpush1.xpose.msra.mxu0 0.0
    %7538 = vmatprep.subr.mxu0 0.0
    %7539 = vmatpush1.xpose.msra.mxu0 0.0
    %7540 = vmatprep.subr.mxu0 0.0
    %7541 = vmatpush1.xpose.msra.mxu0 0.0
    %7542 = vmatprep.subr.mxu0 0.0
    %7543 = vmatpush1.xpose.msra.mxu0 0.0
    %7544 = vmatprep.subr.mxu0 0.0
    %7545 = vmatpush1.xpose.msra.mxu0 0.0
    %7546 = vmatprep.subr.mxu0 0.0
    %7547 = vmatpush1.xpose.msra.mxu0 0.0
    %7548 = vmatprep.subr.mxu0 0.0
    %7549 = vmatpush1.xpose.msra.mxu0 0.0
    %7550 = vmatprep.subr.mxu0 0.0
    %7551 = vmatpush1.xpose.msra.mxu0 0.0
    %7552 = vmatprep.subr.mxu0 0.0
    %7553 = vmatpush1.xpose.msra.mxu0 0.0
    %7554 = vmatprep.subr.mxu0 0.0
    %7555 = vmatpush1.xpose.msra.mxu0 0.0
    %7556 = vmatprep.subr.mxu0 0.0
    %7557 = vmatpush1.xpose.msra.mxu0 0.0
    %7558 = vmatprep.subr.mxu0 0.0
    %7559 = vmatpush1.xpose.msra.mxu0 0.0
    %7560 = vmatprep.subr.mxu0 0.0
    %7561 = vmatpush1.xpose.msra.mxu0 0.0
    %7562 = vmatprep.subr.mxu0 0.0
    %7563 = vmatpush1.xpose.msra.mxu0 0.0
    %7564 = vmatprep.subr.mxu0 0.0
    %7565 = vmatpush1.xpose.msra.mxu0 0.0
    %7566 = vmatprep.subr.mxu0 0.0
    %7567 = vmatpush1.xpose.msra.mxu0 0.0
    %7568 = vmatprep.subr.mxu0 0.0
    %7569 = vmatpush1.xpose.msra.mxu0 0.0
    %7570 = vmatprep.subr.mxu0 0.0
    %7571 = vmatpush1.xpose.msra.mxu0 0.0
    %7572 = vmatprep.subr.mxu0 0.0
    %7573 = vmatpush1.xpose.msra.mxu0 0.0
    %7574 = vmatprep.subr.mxu0 0.0
    %7575 = vmatpush1.xpose.msra.mxu0 0.0
    %7576 = vmatprep.subr.mxu0 0.0
    %7577 = vmatpush1.xpose.msra.mxu0 0.0
    %7578 = vmatprep.subr.mxu0 0.0
    %7579 = vmatpush1.xpose.msra.mxu0 0.0
    %7580 = vmatprep.subr.mxu0 0.0
    %7581 = vmatpush1.xpose.msra.mxu0 0.0
    %7582 = vmatprep.mubr.f32.mxu0 0.0
    %7583 = vmatmul.mubr.f32.gmra.mrb[0].mxu0 %v7512
    %v7584 = vpop.f32.mrb[0].mxu0
    %v7585 = vadd.f32 0.0, %v7584
    %v7586 = vpop.f32.mrb[0].mxu0
    %7587 = vdwg.mxu0
    %v7588 = vsel %vm2540, %v7503, -inf
    %7589 = vmax.xlane.f32.xlu0 %v7588
    %v7590 = vpop.xlane.xlu0 %7589
    %v7591 = vsel %vm2540, %v7585, -inf
    %7592 = vmax.xlane.f32.xlu0 %v7591
    %v7593 = vpop.xlane.xlu0 %7592
    %v7594 = vsub.f32 %v7503, %v7590
    %v7595 = vsub.f32 %v7585, %v7593
    %v7596 = vmul.f32 %v7594, 1.442695
    %v7597 = vpow.pop %v7596
    %v7598 = vmul.f32 %v7595, 1.442695
    %v7599 = vpow.pop %v7598
    %v7600 = vsel %vm2540, %v7597, 0.0
    %7601 = vadd.xlane.f32.xlu0 %v7600
    %v7602 = vpop.xlane.xlu0 %7601
    %v7603 = vsel %vm2540, %v7599, 0.0
    %7604 = vadd.xlane.f32.xlu0 %v7603
    %v7605 = vpop.xlane.xlu0 %7604
    %v7606 = vrcp.pop %v7602
    %v7607 = vrcp.pop %v7605
    %v7608 = vmul.f32 %v7597, %v7606
    %v7609 = vmul.f32 %v7599, %v7607
    %7610 = vrot.lane.b32.xlu0 %v6563, 112
    %v7611 = vpop.permute.xlu0 %7610
    %7612 = vrot.lane.b32.xlu0 %v6568, 112
    %v7613 = vpop.permute.xlu0 %7612
    %v7617 = vsel %vm2540, %v7608, 0
    %7619 = vmatprep.subr.mxu0 0.0
    %7620 = vmatpush1.msra.mxu0 %v7611
    %7621 = vmatprep.subr.mxu0 0.0
    %7622 = vmatpush1.msra.mxu0 %v7613
    %7623 = vmatprep.subr.mxu0 0.0
    %7624 = vmatpush1.msra.mxu0 0.0
    %7625 = vmatprep.subr.mxu0 0.0
    %7626 = vmatpush1.msra.mxu0 0.0
    %7627 = vmatprep.subr.mxu0 0.0
    %7628 = vmatpush1.msra.mxu0 0.0
    %7629 = vmatprep.subr.mxu0 0.0
    %7630 = vmatpush1.msra.mxu0 0.0
    %7631 = vmatprep.subr.mxu0 0.0
    %7632 = vmatpush1.msra.mxu0 0.0
    %7633 = vmatprep.subr.mxu0 0.0
    %7634 = vmatpush1.msra.mxu0 0.0
    %7635 = vmatprep.subr.mxu0 0.0
    %7636 = vmatpush1.msra.mxu0 0.0
    %7637 = vmatprep.subr.mxu0 0.0
    %7638 = vmatpush1.msra.mxu0 0.0
    %7639 = vmatprep.subr.mxu0 0.0
    %7640 = vmatpush1.msra.mxu0 0.0
    %7641 = vmatprep.subr.mxu0 0.0
    %7642 = vmatpush1.msra.mxu0 0.0
    %7643 = vmatprep.subr.mxu0 0.0
    %7644 = vmatpush1.msra.mxu0 0.0
    %7645 = vmatprep.subr.mxu0 0.0
    %7646 = vmatpush1.msra.mxu0 0.0
    %7647 = vmatprep.subr.mxu0 0.0
    %7648 = vmatpush1.msra.mxu0 0.0
    %7649 = vmatprep.subr.mxu0 0.0
    %7650 = vmatpush1.msra.mxu0 0.0
    %7651 = vmatprep.subr.mxu0 0.0
    %7652 = vmatpush1.msra.mxu0 0.0
    %7653 = vmatprep.subr.mxu0 0.0
    %7654 = vmatpush1.msra.mxu0 0.0
    %7655 = vmatprep.subr.mxu0 0.0
    %7656 = vmatpush1.msra.mxu0 0.0
    %7657 = vmatprep.subr.mxu0 0.0
    %7658 = vmatpush1.msra.mxu0 0.0
    %7659 = vmatprep.subr.mxu0 0.0
    %7660 = vmatpush1.msra.mxu0 0.0
    %7661 = vmatprep.subr.mxu0 0.0
    %7662 = vmatpush1.msra.mxu0 0.0
    %7663 = vmatprep.subr.mxu0 0.0
    %7664 = vmatpush1.msra.mxu0 0.0
    %7665 = vmatprep.subr.mxu0 0.0
    %7666 = vmatpush1.msra.mxu0 0.0
    %7667 = vmatprep.subr.mxu0 0.0
    %7668 = vmatpush1.msra.mxu0 0.0
    %7669 = vmatprep.subr.mxu0 0.0
    %7670 = vmatpush1.msra.mxu0 0.0
    %7671 = vmatprep.subr.mxu0 0.0
    %7672 = vmatpush1.msra.mxu0 0.0
    %7673 = vmatprep.subr.mxu0 0.0
    %7674 = vmatpush1.msra.mxu0 0.0
    %7675 = vmatprep.subr.mxu0 0.0
    %7676 = vmatpush1.msra.mxu0 0.0
    %7677 = vmatprep.subr.mxu0 0.0
    %7678 = vmatpush1.msra.mxu0 0.0
    %7679 = vmatprep.subr.mxu0 0.0
    %7680 = vmatpush1.msra.mxu0 0.0
    %7681 = vmatprep.subr.mxu0 0.0
    %7682 = vmatpush1.msra.mxu0 0.0
    %7683 = vmatprep.mubr.f32.mxu0 0.0
    %7684 = vmatmul.mubr.f32.gmra.mrb[0].mxu0 %v7617
    %v7685 = vpop.f32.mrb[0].mxu0
    %v7686 = vadd.f32 0.0, %v7685
    %v7687 = vpop.f32.mrb[0].mxu0
    %7688 = vdwg.mxu0
    %7689 = vrot.lane.b32.xlu0 %v6573, 112
    %v7690 = vpop.permute.xlu0 %7689
    %7691 = vrot.lane.b32.xlu0 %v6578, 112
    %v7692 = vpop.permute.xlu0 %7691
    %v7696 = vsel %vm2540, %v7609, 0
    %7698 = vmatprep.subr.mxu0 0.0
    %7699 = vmatpush1.msra.mxu0 %v7690
    %7700 = vmatprep.subr.mxu0 0.0
    %7701 = vmatpush1.msra.mxu0 %v7692
    %7702 = vmatprep.subr.mxu0 0.0
    %7703 = vmatpush1.msra.mxu0 0.0
    %7704 = vmatprep.subr.mxu0 0.0
    %7705 = vmatpush1.msra.mxu0 0.0
    %7706 = vmatprep.subr.mxu0 0.0
    %7707 = vmatpush1.msra.mxu0 0.0
    %7708 = vmatprep.subr.mxu0 0.0
    %7709 = vmatpush1.msra.mxu0 0.0
    %7710 = vmatprep.subr.mxu0 0.0
    %7711 = vmatpush1.msra.mxu0 0.0
    %7712 = vmatprep.subr.mxu0 0.0
    %7713 = vmatpush1.msra.mxu0 0.0
    %7714 = vmatprep.subr.mxu0 0.0
    %7715 = vmatpush1.msra.mxu0 0.0
    %7716 = vmatprep.subr.mxu0 0.0
    %7717 = vmatpush1.msra.mxu0 0.0
    %7718 = vmatprep.subr.mxu0 0.0
    %7719 = vmatpush1.msra.mxu0 0.0
    %7720 = vmatprep.subr.mxu0 0.0
    %7721 = vmatpush1.msra.mxu0 0.0
    %7722 = vmatprep.subr.mxu0 0.0
    %7723 = vmatpush1.msra.mxu0 0.0
    %7724 = vmatprep.subr.mxu0 0.0
    %7725 = vmatpush1.msra.mxu0 0.0
    %7726 = vmatprep.subr.mxu0 0.0
    %7727 = vmatpush1.msra.mxu0 0.0
    %7728 = vmatprep.subr.mxu0 0.0
    %7729 = vmatpush1.msra.mxu0 0.0
    %7730 = vmatprep.subr.mxu0 0.0
    %7731 = vmatpush1.msra.mxu0 0.0
    %7732 = vmatprep.subr.mxu0 0.0
    %7733 = vmatpush1.msra.mxu0 0.0
    %7734 = vmatprep.subr.mxu0 0.0
    %7735 = vmatpush1.msra.mxu0 0.0
    %7736 = vmatprep.subr.mxu0 0.0
    %7737 = vmatpush1.msra.mxu0 0.0
    %7738 = vmatprep.subr.mxu0 0.0
    %7739 = vmatpush1.msra.mxu0 0.0
    %7740 = vmatprep.subr.mxu0 0.0
    %7741 = vmatpush1.msra.mxu0 0.0
    %7742 = vmatprep.subr.mxu0 0.0
    %7743 = vmatpush1.msra.mxu0 0.0
    %7744 = vmatprep.subr.mxu0 0.0
    %7745 = vmatpush1.msra.mxu0 0.0
    %7746 = vmatprep.subr.mxu0 0.0
    %7747 = vmatpush1.msra.mxu0 0.0
    %7748 = vmatprep.subr.mxu0 0.0
    %7749 = vmatpush1.msra.mxu0 0.0
    %7750 = vmatprep.subr.mxu0 0.0
    %7751 = vmatpush1.msra.mxu0 0.0
    %7752 = vmatprep.subr.mxu0 0.0
    %7753 = vmatpush1.msra.mxu0 0.0
    %7754 = vmatprep.subr.mxu0 0.0
    %7755 = vmatpush1.msra.mxu0 0.0
    %7756 = vmatprep.subr.mxu0 0.0
    %7757 = vmatpush1.msra.mxu0 0.0
    %7758 = vmatprep.subr.mxu0 0.0
    %7759 = vmatpush1.msra.mxu0 0.0
    %7760 = vmatprep.subr.mxu0 0.0
    %7761 = vmatpush1.msra.mxu0 0.0
    %7762 = vmatprep.mubr.f32.mxu0 0.0
    %7763 = vmatmul.mubr.f32.gmra.mrb[0].mxu0 %v7696
    %v7764 = vpop.f32.mrb[0].mxu0
    %v7765 = vadd.f32 0.0, %v7764
    %v7766 = vpop.f32.mrb[0].mxu0
    %7767 = vdwg.mxu0
    %v7769 = vsel %vm378, %v7686, 0
    %v7772 = vsel %vm378, %v7765, 0
    %7774 = vmatprep.subr.mxu0 0.0
    %7775 = vmatpush1.msra.mxu0 %v6584
    %7776 = vmatprep.subr.mxu0 0.0
    %7777 = vmatpush1.msra.mxu0 0.0
    %7778 = vmatprep.subr.mxu0 0.0
    %7779 = vmatpush1.msra.mxu0 0.0
    %7780 = vmatprep.subr.mxu0 0.0
    %7781 = vmatpush1.msra.mxu0 0.0
    %7782 = vmatprep.subr.mxu0 0.0
    %7783 = vmatpush1.msra.mxu0 0.0
    %7784 = vmatprep.subr.mxu0 0.0
    %7785 = vmatpush1.msra.mxu0 0.0
    %7786 = vmatprep.subr.mxu0 0.0
    %7787 = vmatpush1.msra.mxu0 0.0
    %7788 = vmatprep.subr.mxu0 0.0
    %7789 = vmatpush1.msra.mxu0 0.0
    %7790 = vmatprep.subr.mxu0 0.0
    %7791 = vmatpush1.msra.mxu0 0.0
    %7792 = vmatprep.subr.mxu0 0.0
    %7793 = vmatpush1.msra.mxu0 0.0
    %7794 = vmatprep.subr.mxu0 0.0
    %7795 = vmatpush1.msra.mxu0 0.0
    %7796 = vmatprep.subr.mxu0 0.0
    %7797 = vmatpush1.msra.mxu0 0.0
    %7798 = vmatprep.subr.mxu0 0.0
    %7799 = vmatpush1.msra.mxu0 0.0
    %7800 = vmatprep.subr.mxu0 0.0
    %7801 = vmatpush1.msra.mxu0 0.0
    %7802 = vmatprep.subr.mxu0 0.0
    %7803 = vmatpush1.msra.mxu0 0.0
    %7804 = vmatprep.subr.mxu0 0.0
    %7805 = vmatpush1.msra.mxu0 0.0
    %7806 = vmatprep.subr.mxu0 0.0
    %7807 = vmatpush1.msra.mxu0 0.0
    %7808 = vmatprep.subr.mxu0 0.0
    %7809 = vmatpush1.msra.mxu0 0.0
    %7810 = vmatprep.subr.mxu0 0.0
    %7811 = vmatpush1.msra.mxu0 0.0
    %7812 = vmatprep.subr.mxu0 0.0
    %7813 = vmatpush1.msra.mxu0 0.0
    %7814 = vmatprep.subr.mxu0 0.0
    %7815 = vmatpush1.msra.mxu0 0.0
    %7816 = vmatprep.subr.mxu0 0.0
    %7817 = vmatpush1.msra.mxu0 0.0
    %7818 = vmatprep.subr.mxu0 0.0
    %7819 = vmatpush1.msra.mxu0 0.0
    %7820 = vmatprep.subr.mxu0 0.0
    %7821 = vmatpush1.msra.mxu0 0.0
    %7822 = vmatprep.subr.mxu0 0.0
    %7823 = vmatpush1.msra.mxu0 0.0
    %7824 = vmatprep.subr.mxu0 0.0
    %7825 = vmatpush1.msra.mxu0 0.0
    %7826 = vmatprep.subr.mxu0 0.0
    %7827 = vmatpush1.msra.mxu0 0.0
    %7828 = vmatprep.subr.mxu0 0.0
    %7829 = vmatpush1.msra.mxu0 0.0
    %7830 = vmatprep.subr.mxu0 0.0
    %7831 = vmatpush1.msra.mxu0 0.0
    %7832 = vmatprep.subr.mxu0 0.0
    %7833 = vmatpush1.msra.mxu0 0.0
    %7834 = vmatprep.subr.mxu0 0.0
    %7835 = vmatpush1.msra.mxu0 0.0
    %7836 = vmatprep.subr.mxu0 0.0
    %7837 = vmatpush1.msra.mxu0 0.0
    %7838 = vmatprep.mubr.f32.mxu0 0.0
    %7839 = vmatmul.mubr.f32.gmra.mrb[0].mxu0 %v7769
    %v7840 = vpop.f32.mrb[0].mxu0
    %v7841 = vadd.f32 0.0, %v7840
    %v7842 = vpop.f32.mrb[0].mxu0
    %7843 = vmatprep.mubr.f32.mxu0 0.0
    %7844 = vmatmul.mubr.f32.gmra.mrb[0].mxu0 %v7772
    %v7845 = vpop.f32.mrb[0].mxu0
    %v7846 = vadd.f32 0.0, %v7845
    %v7847 = vpop.f32.mrb[0].mxu0
    %7848 = vdwg.mxu0
    %v7849 = vadd.f32 %v7416, %v7841
    %v7850 = vadd.f32 %v7421, %v7846
    %7851 = vrot.lane.b32.xlu0 %v6377, 104
    %v7852 = vpop.permute.xlu0 %7851
    %7853 = vrot.lane.b32.xlu0 %v6465, 104
    %v7854 = vpop.permute.xlu0 %7853
    %7855 = vrot.lane.b32.xlu0 %v6470, 104
    %v7856 = vpop.permute.xlu0 %7855
    %v7857 = vsel %vm378, %v7852, 0
    %v7859 = vsel %vm378, %v7854, 0
    %v7861 = vsel %vm378, %v7856, 0
    %7863 = vmatprep.subr.mxu0 0.0
    %7864 = vmatpush1.xpose.msra.mxu0 %v7859
    %7865 = vmatprep.subr.mxu0 0.0
    %7866 = vmatpush1.xpose.msra.mxu0 %v7861
    %7867 = vmatprep.subr.mxu0 0.0
    %7868 = vmatpush1.xpose.msra.mxu0 0.0
    %7869 = vmatprep.subr.mxu0 0.0
    %7870 = vmatpush1.xpose.msra.mxu0 0.0
    %7871 = vmatprep.subr.mxu0 0.0
    %7872 = vmatpush1.xpose.msra.mxu0 0.0
    %7873 = vmatprep.subr.mxu0 0.0
    %7874 = vmatpush1.xpose.msra.mxu0 0.0
    %7875 = vmatprep.subr.mxu0 0.0
    %7876 = vmatpush1.xpose.msra.mxu0 0.0
    %7877 = vmatprep.subr.mxu0 0.0
    %7878 = vmatpush1.xpose.msra.mxu0 0.0
    %7879 = vmatprep.subr.mxu0 0.0
    %7880 = vmatpush1.xpose.msra.mxu0 0.0
    %7881 = vmatprep.subr.mxu0 0.0
    %7882 = vmatpush1.xpose.msra.mxu0 0.0
    %7883 = vmatprep.subr.mxu0 0.0
    %7884 = vmatpush1.xpose.msra.mxu0 0.0
    %7885 = vmatprep.subr.mxu0 0.0
    %7886 = vmatpush1.xpose.msra.mxu0 0.0
    %7887 = vmatprep.subr.mxu0 0.0
    %7888 = vmatpush1.xpose.msra.mxu0 0.0
    %7889 = vmatprep.subr.mxu0 0.0
    %7890 = vmatpush1.xpose.msra.mxu0 0.0
    %7891 = vmatprep.subr.mxu0 0.0
    %7892 = vmatpush1.xpose.msra.mxu0 0.0
    %7893 = vmatprep.subr.mxu0 0.0
    %7894 = vmatpush1.xpose.msra.mxu0 0.0
    %7895 = vmatprep.subr.mxu0 0.0
    %7896 = vmatpush1.xpose.msra.mxu0 0.0
    %7897 = vmatprep.subr.mxu0 0.0
    %7898 = vmatpush1.xpose.msra.mxu0 0.0
    %7899 = vmatprep.subr.mxu0 0.0
    %7900 = vmatpush1.xpose.msra.mxu0 0.0
    %7901 = vmatprep.subr.mxu0 0.0
    %7902 = vmatpush1.xpose.msra.mxu0 0.0
    %7903 = vmatprep.subr.mxu0 0.0
    %7904 = vmatpush1.xpose.msra.mxu0 0.0
    %7905 = vmatprep.subr.mxu0 0.0
    %7906 = vmatpush1.xpose.msra.mxu0 0.0
    %7907 = vmatprep.subr.mxu0 0.0
    %7908 = vmatpush1.xpose.msra.mxu0 0.0
    %7909 = vmatprep.subr.mxu0 0.0
    %7910 = vmatpush1.xpose.msra.mxu0 0.0
    %7911 = vmatprep.subr.mxu0 0.0
    %7912 = vmatpush1.xpose.msra.mxu0 0.0
    %7913 = vmatprep.subr.mxu0 0.0
    %7914 = vmatpush1.xpose.msra.mxu0 0.0
    %7915 = vmatprep.subr.mxu0 0.0
    %7916 = vmatpush1.xpose.msra.mxu0 0.0
    %7917 = vmatprep.subr.mxu0 0.0
    %7918 = vmatpush1.xpose.msra.mxu0 0.0
    %7919 = vmatprep.subr.mxu0 0.0
    %7920 = vmatpush1.xpose.msra.mxu0 0.0
    %7921 = vmatprep.subr.mxu0 0.0
    %7922 = vmatpush1.xpose.msra.mxu0 0.0
    %7923 = vmatprep.subr.mxu0 0.0
    %7924 = vmatpush1.xpose.msra.mxu0 0.0
    %7925 = vmatprep.subr.mxu0 0.0
    %7926 = vmatpush1.xpose.msra.mxu0 0.0
    %7927 = vmatprep.mubr.f32.mxu0 0.0
    %7928 = vmatmul.mubr.f32.gmra.mrb[0].mxu0 %v7857
    %v7929 = vpop.f32.mrb[0].mxu0
    %v7930 = vadd.f32 0.0, %v7929
    %v7931 = vpop.f32.mrb[0].mxu0
    %7932 = vdwg.mxu0
    %7933 = vrot.lane.b32.xlu0 %v6382, 104
    %v7934 = vpop.permute.xlu0 %7933
    %7935 = vrot.lane.b32.xlu0 %v6475, 104
    %v7936 = vpop.permute.xlu0 %7935
    %7937 = vrot.lane.b32.xlu0 %v6480, 104
    %v7938 = vpop.permute.xlu0 %7937
    %v7939 = vsel %vm378, %v7934, 0
    %v7941 = vsel %vm378, %v7936, 0
    %v7943 = vsel %vm378, %v7938, 0
    %7945 = vmatprep.subr.mxu0 0.0
    %7946 = vmatpush1.xpose.msra.mxu0 %v7941
    %7947 = vmatprep.subr.mxu0 0.0
    %7948 = vmatpush1.xpose.msra.mxu0 %v7943
    %7949 = vmatprep.subr.mxu0 0.0
    %7950 = vmatpush1.xpose.msra.mxu0 0.0
    %7951 = vmatprep.subr.mxu0 0.0
    %7952 = vmatpush1.xpose.msra.mxu0 0.0
    %7953 = vmatprep.subr.mxu0 0.0
    %7954 = vmatpush1.xpose.msra.mxu0 0.0
    %7955 = vmatprep.subr.mxu0 0.0
    %7956 = vmatpush1.xpose.msra.mxu0 0.0
    %7957 = vmatprep.subr.mxu0 0.0
    %7958 = vmatpush1.xpose.msra.mxu0 0.0
    %7959 = vmatprep.subr.mxu0 0.0
    %7960 = vmatpush1.xpose.msra.mxu0 0.0
    %7961 = vmatprep.subr.mxu0 0.0
    %7962 = vmatpush1.xpose.msra.mxu0 0.0
    %7963 = vmatprep.subr.mxu0 0.0
    %7964 = vmatpush1.xpose.msra.mxu0 0.0
    %7965 = vmatprep.subr.mxu0 0.0
    %7966 = vmatpush1.xpose.msra.mxu0 0.0
    %7967 = vmatprep.subr.mxu0 0.0
    %7968 = vmatpush1.xpose.msra.mxu0 0.0
    %7969 = vmatprep.subr.mxu0 0.0
    %7970 = vmatpush1.xpose.msra.mxu0 0.0
    %7971 = vmatprep.subr.mxu0 0.0
    %7972 = vmatpush1.xpose.msra.mxu0 0.0
    %7973 = vmatprep.subr.mxu0 0.0
    %7974 = vmatpush1.xpose.msra.mxu0 0.0
    %7975 = vmatprep.subr.mxu0 0.0
    %7976 = vmatpush1.xpose.msra.mxu0 0.0
    %7977 = vmatprep.subr.mxu0 0.0
    %7978 = vmatpush1.xpose.msra.mxu0 0.0
    %7979 = vmatprep.subr.mxu0 0.0
    %7980 = vmatpush1.xpose.msra.mxu0 0.0
    %7981 = vmatprep.subr.mxu0 0.0
    %7982 = vmatpush1.xpose.msra.mxu0 0.0
    %7983 = vmatprep.subr.mxu0 0.0
    %7984 = vmatpush1.xpose.msra.mxu0 0.0
    %7985 = vmatprep.subr.mxu0 0.0
    %7986 = vmatpush1.xpose.msra.mxu0 0.0
    %7987 = vmatprep.subr.mxu0 0.0
    %7988 = vmatpush1.xpose.msra.mxu0 0.0
    %7989 = vmatprep.subr.mxu0 0.0
    %7990 = vmatpush1.xpose.msra.mxu0 0.0
    %7991 = vmatprep.subr.mxu0 0.0
    %7992 = vmatpush1.xpose.msra.mxu0 0.0
    %7993 = vmatprep.subr.mxu0 0.0
    %7994 = vmatpush1.xpose.msra.mxu0 0.0
    %7995 = vmatprep.subr.mxu0 0.0
    %7996 = vmatpush1.xpose.msra.mxu0 0.0
    %7997 = vmatprep.subr.mxu0 0.0
    %7998 = vmatpush1.xpose.msra.mxu0 0.0
    %7999 = vmatprep.subr.mxu0 0.0
    %8000 = vmatpush1.xpose.msra.mxu0 0.0
    %8001 = vmatprep.subr.mxu0 0.0
    %8002 = vmatpush1.xpose.msra.mxu0 0.0
    %8003 = vmatprep.subr.mxu0 0.0
    %8004 = vmatpush1.xpose.msra.mxu0 0.0
    %8005 = vmatprep.subr.mxu0 0.0
    %8006 = vmatpush1.xpose.msra.mxu0 0.0
    %8007 = vmatprep.subr.mxu0 0.0
    %8008 = vmatpush1.xpose.msra.mxu0 0.0
    %8009 = vmatprep.mubr.f32.mxu0 0.0
    %8010 = vmatmul.mubr.f32.gmra.mrb[0].mxu0 %v7939
    %v8011 = vpop.f32.mrb[0].mxu0
    %v8012 = vadd.f32 0.0, %v8011
    %v8013 = vpop.f32.mrb[0].mxu0
    %8014 = vdwg.mxu0
    %v8015 = vsel %vm2540, %v7930, -inf
    %8016 = vmax.xlane.f32.xlu0 %v8015
    %v8017 = vpop.xlane.xlu0 %8016
    %v8018 = vsel %vm2540, %v8012, -inf
    %8019 = vmax.xlane.f32.xlu0 %v8018
    %v8020 = vpop.xlane.xlu0 %8019
    %v8021 = vsub.f32 %v7930, %v8017
    %v8022 = vsub.f32 %v8012, %v8020
    %v8023 = vmul.f32 %v8021, 1.442695
    %v8024 = vpow.pop %v8023
    %v8025 = vmul.f32 %v8022, 1.442695
    %v8026 = vpow.pop %v8025
    %v8027 = vsel %vm2540, %v8024, 0.0
    %8028 = vadd.xlane.f32.xlu0 %v8027
    %v8029 = vpop.xlane.xlu0 %8028
    %v8030 = vsel %vm2540, %v8026, 0.0
    %8031 = vadd.xlane.f32.xlu0 %v8030
    %v8032 = vpop.xlane.xlu0 %8031
    %v8033 = vrcp.pop %v8029
    %v8034 = vrcp.pop %v8032
    %v8035 = vmul.f32 %v8024, %v8033
    %v8036 = vmul.f32 %v8026, %v8034
    %8037 = vrot.lane.b32.xlu0 %v6563, 104
    %v8038 = vpop.permute.xlu0 %8037
    %8039 = vrot.lane.b32.xlu0 %v6568, 104
    %v8040 = vpop.permute.xlu0 %8039
    %v8044 = vsel %vm2540, %v8035, 0
    %8046 = vmatprep.subr.mxu0 0.0
    %8047 = vmatpush1.msra.mxu0 %v8038
    %8048 = vmatprep.subr.mxu0 0.0
    %8049 = vmatpush1.msra.mxu0 %v8040
    %8050 = vmatprep.subr.mxu0 0.0
    %8051 = vmatpush1.msra.mxu0 0.0
    %8052 = vmatprep.subr.mxu0 0.0
    %8053 = vmatpush1.msra.mxu0 0.0
    %8054 = vmatprep.subr.mxu0 0.0
    %8055 = vmatpush1.msra.mxu0 0.0
    %8056 = vmatprep.subr.mxu0 0.0
    %8057 = vmatpush1.msra.mxu0 0.0
    %8058 = vmatprep.subr.mxu0 0.0
    %8059 = vmatpush1.msra.mxu0 0.0
    %8060 = vmatprep.subr.mxu0 0.0
    %8061 = vmatpush1.msra.mxu0 0.0
    %8062 = vmatprep.subr.mxu0 0.0
    %8063 = vmatpush1.msra.mxu0 0.0
    %8064 = vmatprep.subr.mxu0 0.0
    %8065 = vmatpush1.msra.mxu0 0.0
    %8066 = vmatprep.subr.mxu0 0.0
    %8067 = vmatpush1.msra.mxu0 0.0
    %8068 = vmatprep.subr.mxu0 0.0
    %8069 = vmatpush1.msra.mxu0 0.0
    %8070 = vmatprep.subr.mxu0 0.0
    %8071 = vmatpush1.msra.mxu0 0.0
    %8072 = vmatprep.subr.mxu0 0.0
    %8073 = vmatpush1.msra.mxu0 0.0
    %8074 = vmatprep.subr.mxu0 0.0
    %8075 = vmatpush1.msra.mxu0 0.0
    %8076 = vmatprep.subr.mxu0 0.0
    %8077 = vmatpush1.msra.mxu0 0.0
    %8078 = vmatprep.subr.mxu0 0.0
    %8079 = vmatpush1.msra.mxu0 0.0
    %8080 = vmatprep.subr.mxu0 0.0
    %8081 = vmatpush1.msra.mxu0 0.0
    %8082 = vmatprep.subr.mxu0 0.0
    %8083 = vmatpush1.msra.mxu0 0.0
    %8084 = vmatprep.subr.mxu0 0.0
    %8085 = vmatpush1.msra.mxu0 0.0
    %8086 = vmatprep.subr.mxu0 0.0
    %8087 = vmatpush1.msra.mxu0 0.0
    %8088 = vmatprep.subr.mxu0 0.0
    %8089 = vmatpush1.msra.mxu0 0.0
    %8090 = vmatprep.subr.mxu0 0.0
    %8091 = vmatpush1.msra.mxu0 0.0
    %8092 = vmatprep.subr.mxu0 0.0
    %8093 = vmatpush1.msra.mxu0 0.0
    %8094 = vmatprep.subr.mxu0 0.0
    %8095 = vmatpush1.msra.mxu0 0.0
    %8096 = vmatprep.subr.mxu0 0.0
    %8097 = vmatpush1.msra.mxu0 0.0
    %8098 = vmatprep.subr.mxu0 0.0
    %8099 = vmatpush1.msra.mxu0 0.0
    %8100 = vmatprep.subr.mxu0 0.0
    %8101 = vmatpush1.msra.mxu0 0.0
    %8102 = vmatprep.subr.mxu0 0.0
    %8103 = vmatpush1.msra.mxu0 0.0
    %8104 = vmatprep.subr.mxu0 0.0
    %8105 = vmatpush1.msra.mxu0 0.0
    %8106 = vmatprep.subr.mxu0 0.0
    %8107 = vmatpush1.msra.mxu0 0.0
    %8108 = vmatprep.subr.mxu0 0.0
    %8109 = vmatpush1.msra.mxu0 0.0
    %8110 = vmatprep.mubr.f32.mxu0 0.0
    %8111 = vmatmul.mubr.f32.gmra.mrb[0].mxu0 %v8044
    %v8112 = vpop.f32.mrb[0].mxu0
    %v8113 = vadd.f32 0.0, %v8112
    %v8114 = vpop.f32.mrb[0].mxu0
    %8115 = vdwg.mxu0
    %8116 = vrot.lane.b32.xlu0 %v6573, 104
    %v8117 = vpop.permute.xlu0 %8116
    %8118 = vrot.lane.b32.xlu0 %v6578, 104
    %v8119 = vpop.permute.xlu0 %8118
    %v8123 = vsel %vm2540, %v8036, 0
    %8125 = vmatprep.subr.mxu0 0.0
    %8126 = vmatpush1.msra.mxu0 %v8117
    %8127 = vmatprep.subr.mxu0 0.0
    %8128 = vmatpush1.msra.mxu0 %v8119
    %8129 = vmatprep.subr.mxu0 0.0
    %8130 = vmatpush1.msra.mxu0 0.0
    %8131 = vmatprep.subr.mxu0 0.0
    %8132 = vmatpush1.msra.mxu0 0.0
    %8133 = vmatprep.subr.mxu0 0.0
    %8134 = vmatpush1.msra.mxu0 0.0
    %8135 = vmatprep.subr.mxu0 0.0
    %8136 = vmatpush1.msra.mxu0 0.0
    %8137 = vmatprep.subr.mxu0 0.0
    %8138 = vmatpush1.msra.mxu0 0.0
    %8139 = vmatprep.subr.mxu0 0.0
    %8140 = vmatpush1.msra.mxu0 0.0
    %8141 = vmatprep.subr.mxu0 0.0
    %8142 = vmatpush1.msra.mxu0 0.0
    %8143 = vmatprep.subr.mxu0 0.0
    %8144 = vmatpush1.msra.mxu0 0.0
    %8145 = vmatprep.subr.mxu0 0.0
    %8146 = vmatpush1.msra.mxu0 0.0
    %8147 = vmatprep.subr.mxu0 0.0
    %8148 = vmatpush1.msra.mxu0 0.0
    %8149 = vmatprep.subr.mxu0 0.0
    %8150 = vmatpush1.msra.mxu0 0.0
    %8151 = vmatprep.subr.mxu0 0.0
    %8152 = vmatpush1.msra.mxu0 0.0
    %8153 = vmatprep.subr.mxu0 0.0
    %8154 = vmatpush1.msra.mxu0 0.0
    %8155 = vmatprep.subr.mxu0 0.0
    %8156 = vmatpush1.msra.mxu0 0.0
    %8157 = vmatprep.subr.mxu0 0.0
    %8158 = vmatpush1.msra.mxu0 0.0
    %8159 = vmatprep.subr.mxu0 0.0
    %8160 = vmatpush1.msra.mxu0 0.0
    %8161 = vmatprep.subr.mxu0 0.0
    %8162 = vmatpush1.msra.mxu0 0.0
    %8163 = vmatprep.subr.mxu0 0.0
    %8164 = vmatpush1.msra.mxu0 0.0
    %8165 = vmatprep.subr.mxu0 0.0
    %8166 = vmatpush1.msra.mxu0 0.0
    %8167 = vmatprep.subr.mxu0 0.0
    %8168 = vmatpush1.msra.mxu0 0.0
    %8169 = vmatprep.subr.mxu0 0.0
    %8170 = vmatpush1.msra.mxu0 0.0
    %8171 = vmatprep.subr.mxu0 0.0
    %8172 = vmatpush1.msra.mxu0 0.0
    %8173 = vmatprep.subr.mxu0 0.0
    %8174 = vmatpush1.msra.mxu0 0.0
    %8175 = vmatprep.subr.mxu0 0.0
    %8176 = vmatpush1.msra.mxu0 0.0
    %8177 = vmatprep.subr.mxu0 0.0
    %8178 = vmatpush1.msra.mxu0 0.0
    %8179 = vmatprep.subr.mxu0 0.0
    %8180 = vmatpush1.msra.mxu0 0.0
    %8181 = vmatprep.subr.mxu0 0.0
    %8182 = vmatpush1.msra.mxu0 0.0
    %8183 = vmatprep.subr.mxu0 0.0
    %8184 = vmatpush1.msra.mxu0 0.0
    %8185 = vmatprep.subr.mxu0 0.0
    %8186 = vmatpush1.msra.mxu0 0.0
    %8187 = vmatprep.subr.mxu0 0.0
    %8188 = vmatpush1.msra.mxu0 0.0
    %8189 = vmatprep.mubr.f32.mxu0 0.0
    %8190 = vmatmul.mubr.f32.gmra.mrb[0].mxu0 %v8123
    %v8191 = vpop.f32.mrb[0].mxu0
    %v8192 = vadd.f32 0.0, %v8191
    %v8193 = vpop.f32.mrb[0].mxu0
    %8194 = vdwg.mxu0
    %v8196 = vsel %vm378, %v8113, 0
    %v8199 = vsel %vm378, %v8192, 0
    %8201 = vmatprep.subr.mxu0 0.0
    %8202 = vmatpush1.msra.mxu0 %v6585
    %8203 = vmatprep.subr.mxu0 0.0
    %8204 = vmatpush1.msra.mxu0 0.0
    %8205 = vmatprep.subr.mxu0 0.0
    %8206 = vmatpush1.msra.mxu0 0.0
    %8207 = vmatprep.subr.mxu0 0.0
    %8208 = vmatpush1.msra.mxu0 0.0
    %8209 = vmatprep.subr.mxu0 0.0
    %8210 = vmatpush1.msra.mxu0 0.0
    %8211 = vmatprep.subr.mxu0 0.0
    %8212 = vmatpush1.msra.mxu0 0.0
    %8213 = vmatprep.subr.mxu0 0.0
    %8214 = vmatpush1.msra.mxu0 0.0
    %8215 = vmatprep.subr.mxu0 0.0
    %8216 = vmatpush1.msra.mxu0 0.0
    %8217 = vmatprep.subr.mxu0 0.0
    %8218 = vmatpush1.msra.mxu0 0.0
    %8219 = vmatprep.subr.mxu0 0.0
    %8220 = vmatpush1.msra.mxu0 0.0
    %8221 = vmatprep.subr.mxu0 0.0
    %8222 = vmatpush1.msra.mxu0 0.0
    %8223 = vmatprep.subr.mxu0 0.0
    %8224 = vmatpush1.msra.mxu0 0.0
    %8225 = vmatprep.subr.mxu0 0.0
    %8226 = vmatpush1.msra.mxu0 0.0
    %8227 = vmatprep.subr.mxu0 0.0
    %8228 = vmatpush1.msra.mxu0 0.0
    %8229 = vmatprep.subr.mxu0 0.0
    %8230 = vmatpush1.msra.mxu0 0.0
    %8231 = vmatprep.subr.mxu0 0.0
    %8232 = vmatpush1.msra.mxu0 0.0
    %8233 = vmatprep.subr.mxu0 0.0
    %8234 = vmatpush1.msra.mxu0 0.0
    %8235 = vmatprep.subr.mxu0 0.0
    %8236 = vmatpush1.msra.mxu0 0.0
    %8237 = vmatprep.subr.mxu0 0.0
    %8238 = vmatpush1.msra.mxu0 0.0
    %8239 = vmatprep.subr.mxu0 0.0
    %8240 = vmatpush1.msra.mxu0 0.0
    %8241 = vmatprep.subr.mxu0 0.0
    %8242 = vmatpush1.msra.mxu0 0.0
    %8243 = vmatprep.subr.mxu0 0.0
    %8244 = vmatpush1.msra.mxu0 0.0
    %8245 = vmatprep.subr.mxu0 0.0
    %8246 = vmatpush1.msra.mxu0 0.0
    %8247 = vmatprep.subr.mxu0 0.0
    %8248 = vmatpush1.msra.mxu0 0.0
    %8249 = vmatprep.subr.mxu0 0.0
    %8250 = vmatpush1.msra.mxu0 0.0
    %8251 = vmatprep.subr.mxu0 0.0
    %8252 = vmatpush1.msra.mxu0 0.0
    %8253 = vmatprep.subr.mxu0 0.0
    %8254 = vmatpush1.msra.mxu0 0.0
    %8255 = vmatprep.subr.mxu0 0.0
    %8256 = vmatpush1.msra.mxu0 0.0
    %8257 = vmatprep.subr.mxu0 0.0
    %8258 = vmatpush1.msra.mxu0 0.0
    %8259 = vmatprep.subr.mxu0 0.0
    %8260 = vmatpush1.msra.mxu0 0.0
    %8261 = vmatprep.subr.mxu0 0.0
    %8262 = vmatpush1.msra.mxu0 0.0
    %8263 = vmatprep.subr.mxu0 0.0
    %8264 = vmatpush1.msra.mxu0 0.0
    %8265 = vmatprep.mubr.f32.mxu0 0.0
    %8266 = vmatmul.mubr.f32.gmra.mrb[0].mxu0 %v8196
    %v8267 = vpop.f32.mrb[0].mxu0
    %v8268 = vadd.f32 0.0, %v8267
    %v8269 = vpop.f32.mrb[0].mxu0
    %8270 = vmatprep.mubr.f32.mxu0 0.0
    %8271 = vmatmul.mubr.f32.gmra.mrb[0].mxu0 %v8199
    %v8272 = vpop.f32.mrb[0].mxu0
    %v8273 = vadd.f32 0.0, %v8272
    %v8274 = vpop.f32.mrb[0].mxu0
    %8275 = vdwg.mxu0
    %v8276 = vadd.f32 %v7849, %v8268
    %v8277 = vadd.f32 %v7850, %v8273
    %v8279 = vlaneseq
    %v8280 = vshrl.u32 %v8279, 7
    %v8281 = vsub.s32 0, %v8280
    %v8282 = vrot.slane %v6587, %v8281
    %v8284 = vadd.f32 %v8276, %v8282
    %v8285 = vadd.f32 %v8277, %v8282
    %v8286 = vadd.f32 %v6287, %v8284
    %v8287 = vadd.f32 %v6288, %v8285
    %v8288 = vsel %vm196, %v8286, 0.0
    %8289 = vadd.xlane.f32.xlu0 %v8288
    %v8290 = vpop.xlane.xlu0 %8289
    %v8291 = vsel %vm196, %v8287, 0.0
    %8292 = vadd.xlane.f32.xlu0 %v8291
    %v8293 = vpop.xlane.xlu0 %8292
    %v8294 = vmul.f32 %v8290, %v2034
    %v8295 = vmul.f32 %v8293, %v2034
    %v8296 = vsub.f32 %v8286, %v8294
    %v8297 = vsub.f32 %v8287, %v8295
    %v8298 = vmul.f32 %v8296, %v8296
    %v8299 = vmul.f32 %v8297, %v8297
    %v8300 = vsel %vm196, %v8298, 0.0
    %8301 = vadd.xlane.f32.xlu0 %v8300
    %v8302 = vpop.xlane.xlu0 %8301
    %v8303 = vsel %vm196, %v8299, 0.0
    %8304 = vadd.xlane.f32.xlu0 %v8303
    %v8305 = vpop.xlane.xlu0 %8304
    %v8306 = vmul.f32 %v8302, %v2034
    %v8307 = vmul.f32 %v8305, %v2034
    %v8308 = vadd.f32 %v8306, 1e-05
    %v8309 = vadd.f32 %v8307, 1e-05
    %v8310 = vrsqrt.pop %v8308
    %v8311 = vrsqrt.pop %v8309
    %v8312 = vmul.f32 %v8296, %v8310
    %v8313 = vmul.f32 %v8297, %v8311
    %v8314 = vlaneseq
    %v8315 = vshrl.u32 %v8314, 7
    %v8316 = vsub.s32 1, %v8315
    %v8317 = vrot.slane %v4399, %v8316
    %v8318 = vmul.f32 %v8312, %v8317
    %v8319 = vmul.f32 %v8313, %v8317
    %v8320 = vlaneseq
    %v8321 = vshrl.u32 %v8320, 7
    %v8322 = vsub.s32 1, %v8321
    %v8323 = vrot.slane %v4401, %v8322
    %v8324 = vadd.f32 %v8318, %v8323
    %v8325 = vadd.f32 %v8319, %v8323
    %s8326 = scalar_lea.vmem [#allocation10], 32
    %v8327 = vld [vmem:[%s8326] sm:$0xff]
    %v8328 = vld [vmem:[%s8326 + $0x8] sm:$0xff]
    %v8329 = vld [vmem:[%s8326 + $0x10] sm:$0xff]
    %v8330 = vld [vmem:[%s8326 + $0x18] sm:$0xff]
    %s8331 = scalar_lea.vmem %s19, 1
    %v8332 = vld [vmem:[%s8331] sm:$0x1]
    %v8334 = vlaneseq
    %v8335 = vshrl.u32 %v8334, 7
    %v8336 = vsub.s32 0, %v8335
    %v8337 = vrot.slane %v8332, %v8336
    %v8340 = vsel %vm196, %v8324, 0
    %v8343 = vsel %vm196, %v8325, 0
    %8345 = vmatprep.subr.mxu0 0.0
    %8346 = vmatpush1.msra.mxu0 %v8327
    %8347 = vmatprep.subr.mxu0 0.0
    %8348 = vmatpush1.msra.mxu0 %v8328
    %8349 = vmatprep.subr.mxu0 0.0
    %8350 = vmatpush1.msra.mxu0 %v8329
    %8351 = vmatprep.subr.mxu0 0.0
    %8352 = vmatpush1.msra.mxu0 %v8330
    %8353 = vmatprep.subr.mxu0 0.0
    %8354 = vmatpush1.msra.mxu0 0.0
    %8355 = vmatprep.subr.mxu0 0.0
    %8356 = vmatpush1.msra.mxu0 0.0
    %8357 = vmatprep.subr.mxu0 0.0
    %8358 = vmatpush1.msra.mxu0 0.0
    %8359 = vmatprep.subr.mxu0 0.0
    %8360 = vmatpush1.msra.mxu0 0.0
    %8361 = vmatprep.subr.mxu0 0.0
    %8362 = vmatpush1.msra.mxu0 0.0
    %8363 = vmatprep.subr.mxu0 0.0
    %8364 = vmatpush1.msra.mxu0 0.0
    %8365 = vmatprep.subr.mxu0 0.0
    %8366 = vmatpush1.msra.mxu0 0.0
    %8367 = vmatprep.subr.mxu0 0.0
    %8368 = vmatpush1.msra.mxu0 0.0
    %8369 = vmatprep.subr.mxu0 0.0
    %8370 = vmatpush1.msra.mxu0 0.0
    %8371 = vmatprep.subr.mxu0 0.0
    %8372 = vmatpush1.msra.mxu0 0.0
    %8373 = vmatprep.subr.mxu0 0.0
    %8374 = vmatpush1.msra.mxu0 0.0
    %8375 = vmatprep.subr.mxu0 0.0
    %8376 = vmatpush1.msra.mxu0 0.0
    %8377 = vmatprep.subr.mxu0 0.0
    %8378 = vmatpush1.msra.mxu0 0.0
    %8379 = vmatprep.subr.mxu0 0.0
    %8380 = vmatpush1.msra.mxu0 0.0
    %8381 = vmatprep.subr.mxu0 0.0
    %8382 = vmatpush1.msra.mxu0 0.0
    %8383 = vmatprep.subr.mxu0 0.0
    %8384 = vmatpush1.msra.mxu0 0.0
    %8385 = vmatprep.subr.mxu0 0.0
    %8386 = vmatpush1.msra.mxu0 0.0
    %8387 = vmatprep.subr.mxu0 0.0
    %8388 = vmatpush1.msra.mxu0 0.0
    %8389 = vmatprep.subr.mxu0 0.0
    %8390 = vmatpush1.msra.mxu0 0.0
    %8391 = vmatprep.subr.mxu0 0.0
    %8392 = vmatpush1.msra.mxu0 0.0
    %8393 = vmatprep.subr.mxu0 0.0
    %8394 = vmatpush1.msra.mxu0 0.0
    %8395 = vmatprep.subr.mxu0 0.0
    %8396 = vmatpush1.msra.mxu0 0.0
    %8397 = vmatprep.subr.mxu0 0.0
    %8398 = vmatpush1.msra.mxu0 0.0
    %8399 = vmatprep.subr.mxu0 0.0
    %8400 = vmatpush1.msra.mxu0 0.0
    %8401 = vmatprep.subr.mxu0 0.0
    %8402 = vmatpush1.msra.mxu0 0.0
    %8403 = vmatprep.subr.mxu0 0.0
    %8404 = vmatpush1.msra.mxu0 0.0
    %8405 = vmatprep.subr.mxu0 0.0
    %8406 = vmatpush1.msra.mxu0 0.0
    %8407 = vmatprep.subr.mxu0 0.0
    %8408 = vmatpush1.msra.mxu0 0.0
    %8409 = vmatprep.mubr.f32.mxu0 0.0
    %8410 = vmatmul.mubr.f32.gmra.mrb[0].mxu0 %v8340
    %v8411 = vpop.f32.mrb[0].mxu0
    %v8412 = vadd.f32 %v8337, %v8411
    %v8413 = vpop.f32.mrb[0].mxu0
    %8414 = vmatprep.mubr.f32.mxu0 0.0
    %8415 = vmatmul.mubr.f32.gmra.mrb[0].mxu0 %v8343
    %v8416 = vpop.f32.mrb[0].mxu0
    %v8417 = vadd.f32 %v8337, %v8416
    %v8418 = vpop.f32.mrb[0].mxu0
    %8419 = vdwg.mxu0
    %v8420 = vmax.f32 %v8412, 0.0
    %v8421 = vmax.f32 %v8417, 0.0
    %s8422 = scalar_lea.vmem %s20, 64
    %v8423 = vld [vmem:[%s8422] sm:$0xff]
    %v8424 = vld [vmem:[%s8422 + $0x8] sm:$0xff]
    %v8425 = vld [vmem:[%s8422 + $0x10] sm:$0xff]
    %v8426 = vld [vmem:[%s8422 + $0x18] sm:$0xff]
    %v8427 = vld [vmem:[%s8422 + $0x20] sm:$0xff]
    %v8428 = vld [vmem:[%s8422 + $0x28] sm:$0xff]
    %v8429 = vld [vmem:[%s8422 + $0x30] sm:$0xff]
    %v8430 = vld [vmem:[%s8422 + $0x38] sm:$0xff]
    %s8431 = scalar_lea.vmem %s21, 1
    %v8432 = vld [vmem:[%s8431] sm:$0x1]
    %v8434 = vlaneseq
    %v8435 = vshrl.u32 %v8434, 7
    %v8436 = vsub.s32 0, %v8435
    %v8437 = vrot.slane %v8432, %v8436
    %v8440 = vsel %vm4230, %v8420, 0
    %v8443 = vsel %vm4230, %v8421, 0
    %8445 = vmatprep.subr.mxu0 0.0
    %8446 = vmatpush1.msra.mxu0 %v8423
    %8447 = vmatprep.subr.mxu0 0.0
    %8448 = vmatpush1.msra.mxu0 %v8424
    %8449 = vmatprep.subr.mxu0 0.0
    %8450 = vmatpush1.msra.mxu0 %v8425
    %8451 = vmatprep.subr.mxu0 0.0
    %8452 = vmatpush1.msra.mxu0 %v8426
    %8453 = vmatprep.subr.mxu0 0.0
    %8454 = vmatpush1.msra.mxu0 %v8427
    %8455 = vmatprep.subr.mxu0 0.0
    %8456 = vmatpush1.msra.mxu0 %v8428
    %8457 = vmatprep.subr.mxu0 0.0
    %8458 = vmatpush1.msra.mxu0 %v8429
    %8459 = vmatprep.subr.mxu0 0.0
    %8460 = vmatpush1.msra.mxu0 %v8430
    %8461 = vmatprep.subr.mxu0 0.0
    %8462 = vmatpush1.msra.mxu0 0.0
    %8463 = vmatprep.subr.mxu0 0.0
    %8464 = vmatpush1.msra.mxu0 0.0
    %8465 = vmatprep.subr.mxu0 0.0
    %8466 = vmatpush1.msra.mxu0 0.0
    %8467 = vmatprep.subr.mxu0 0.0
    %8468 = vmatpush1.msra.mxu0 0.0
    %8469 = vmatprep.subr.mxu0 0.0
    %8470 = vmatpush1.msra.mxu0 0.0
    %8471 = vmatprep.subr.mxu0 0.0
    %8472 = vmatpush1.msra.mxu0 0.0
    %8473 = vmatprep.subr.mxu0 0.0
    %8474 = vmatpush1.msra.mxu0 0.0
    %8475 = vmatprep.subr.mxu0 0.0
    %8476 = vmatpush1.msra.mxu0 0.0
    %8477 = vmatprep.subr.mxu0 0.0
    %8478 = vmatpush1.msra.mxu0 0.0
    %8479 = vmatprep.subr.mxu0 0.0
    %8480 = vmatpush1.msra.mxu0 0.0
    %8481 = vmatprep.subr.mxu0 0.0
    %8482 = vmatpush1.msra.mxu0 0.0
    %8483 = vmatprep.subr.mxu0 0.0
    %8484 = vmatpush1.msra.mxu0 0.0
    %8485 = vmatprep.subr.mxu0 0.0
    %8486 = vmatpush1.msra.mxu0 0.0
    %8487 = vmatprep.subr.mxu0 0.0
    %8488 = vmatpush1.msra.mxu0 0.0
    %8489 = vmatprep.subr.mxu0 0.0
    %8490 = vmatpush1.msra.mxu0 0.0
    %8491 = vmatprep.subr.mxu0 0.0
    %8492 = vmatpush1.msra.mxu0 0.0
    %8493 = vmatprep.subr.mxu0 0.0
    %8494 = vmatpush1.msra.mxu0 0.0
    %8495 = vmatprep.subr.mxu0 0.0
    %8496 = vmatpush1.msra.mxu0 0.0
    %8497 = vmatprep.subr.mxu0 0.0
    %8498 = vmatpush1.msra.mxu0 0.0
    %8499 = vmatprep.subr.mxu0 0.0
    %8500 = vmatpush1.msra.mxu0 0.0
    %8501 = vmatprep.subr.mxu0 0.0
    %8502 = vmatpush1.msra.mxu0 0.0
    %8503 = vmatprep.subr.mxu0 0.0
    %8504 = vmatpush1.msra.mxu0 0.0
    %8505 = vmatprep.subr.mxu0 0.0
    %8506 = vmatpush1.msra.mxu0 0.0
    %8507 = vmatprep.subr.mxu0 0.0
    %8508 = vmatpush1.msra.mxu0 0.0
    %8509 = vmatprep.mubr.f32.mxu0 0.0
    %8510 = vmatmul.mubr.f32.gmra.mrb[0].mxu0 %v8440
    %v8511 = vpop.f32.mrb[0].mxu0
    %v8512 = vadd.f32 %v8437, %v8511
    %v8513 = vpop.f32.mrb[0].mxu0
    %8514 = vmatprep.mubr.f32.mxu0 0.0
    %8515 = vmatmul.mubr.f32.gmra.mrb[0].mxu0 %v8443
    %v8516 = vpop.f32.mrb[0].mxu0
    %v8517 = vadd.f32 %v8437, %v8516
    %v8518 = vpop.f32.mrb[0].mxu0
    %8519 = vdwg.mxu0
    %v8520 = vadd.f32 %v8324, %v8512
    %v8521 = vadd.f32 %v8325, %v8517
    %v8522 = vsel %vm196, %v8520, 0.0
    %8523 = vadd.xlane.f32.xlu0 %v8522
    %v8524 = vpop.xlane.xlu0 %8523
    %v8525 = vsel %vm196, %v8521, 0.0
    %8526 = vadd.xlane.f32.xlu0 %v8525
    %v8527 = vpop.xlane.xlu0 %8526
    %v8528 = vmul.f32 %v8524, %v2034
    %v8529 = vmul.f32 %v8527, %v2034
    %v8530 = vsub.f32 %v8520, %v8528
    %v8531 = vsub.f32 %v8521, %v8529
    %v8532 = vmul.f32 %v8530, %v8530
    %v8533 = vmul.f32 %v8531, %v8531
    %v8534 = vsel %vm196, %v8532, 0.0
    %8535 = vadd.xlane.f32.xlu0 %v8534
    %v8536 = vpop.xlane.xlu0 %8535
    %v8537 = vsel %vm196, %v8533, 0.0
    %8538 = vadd.xlane.f32.xlu0 %v8537
    %v8539 = vpop.xlane.xlu0 %8538
    %v8540 = vmul.f32 %v8536, %v2034
    %v8541 = vmul.f32 %v8539, %v2034
    %v8542 = vadd.f32 %v8540, 1e-05
    %v8543 = vadd.f32 %v8541, 1e-05
    %v8544 = vrsqrt.pop %v8542
    %v8545 = vrsqrt.pop %v8543
    %v8546 = vmul.f32 %v8530, %v8544
    %v8547 = vmul.f32 %v8531, %v8545
    %v8548 = vlaneseq
    %v8549 = vshrl.u32 %v8548, 7
    %v8550 = vsub.s32 2, %v8549
    %v8551 = vrot.slane %v4399, %v8550
    %v8552 = vmul.f32 %v8546, %v8551
    %v8553 = vmul.f32 %v8547, %v8551
    %v8554 = vlaneseq
    %v8555 = vshrl.u32 %v8554, 7
    %v8556 = vsub.s32 2, %v8555
    %v8557 = vrot.slane %v4401, %v8556
    %v8558 = vadd.f32 %v8552, %v8557
    %v8559 = vadd.f32 %v8553, %v8557
    %v8560 = vld [vmem:[%s24] sm:$0x1]
    %v8561 = vld [vmem:[%s25] sm:$0x1]
    %v8562 = vsel %vm196, %v8558, 0.0
    %8563 = vadd.xlane.f32.xlu0 %v8562
    %v8564 = vpop.xlane.xlu0 %8563
    %v8565 = vsel %vm196, %v8559, 0.0
    %8566 = vadd.xlane.f32.xlu0 %v8565
    %v8567 = vpop.xlane.xlu0 %8566
    %v8568 = vmul.f32 %v8564, %v2034
    %v8569 = vmul.f32 %v8567, %v2034
    %v8570 = vsub.f32 %v8558, %v8568
    %v8571 = vsub.f32 %v8559, %v8569
    %v8572 = vmul.f32 %v8570, %v8570
    %v8573 = vmul.f32 %v8571, %v8571
    %v8574 = vsel %vm196, %v8572, 0.0
    %8575 = vadd.xlane.f32.xlu0 %v8574
    %v8576 = vpop.xlane.xlu0 %8575
    %v8577 = vsel %vm196, %v8573, 0.0
    %8578 = vadd.xlane.f32.xlu0 %v8577
    %v8579 = vpop.xlane.xlu0 %8578
    %v8580 = vmul.f32 %v8576, %v2034
    %v8581 = vmul.f32 %v8579, %v2034
    %v8582 = vadd.f32 %v8580, 1e-05
    %v8583 = vadd.f32 %v8581, 1e-05
    %v8584 = vrsqrt.pop %v8582
    %v8585 = vrsqrt.pop %v8583
    %v8586 = vmul.f32 %v8570, %v8584
    %v8587 = vmul.f32 %v8571, %v8585
    %v8589 = vlaneseq
    %v8590 = vshrl.u32 %v8589, 7
    %v8591 = vsub.s32 0, %v8590
    %v8592 = vrot.slane %v8560, %v8591
    %v8594 = vmul.f32 %v8586, %v8592
    %v8595 = vmul.f32 %v8587, %v8592
    %v8597 = vlaneseq
    %v8598 = vshrl.u32 %v8597, 7
    %v8599 = vsub.s32 0, %v8598
    %v8600 = vrot.slane %v8561, %v8599
    %v8602 = vadd.f32 %v8594, %v8600
    %v8603 = vadd.f32 %v8595, %v8600
    %s8604 = scalar_lea.vmem %s26, 16
    %8605 = vst.msk [vmem:[%s8604] sm:$0xff] %vm196, %v8602
    %8606 = vst.msk [vmem:[%s8604 + $0x8] sm:$0xff] %vm196, %v8603
    // Predicated region
    $region130: #{transformer_decoder.1} parent=1 // pred_check
      _
    $region131: #{transformer_decoder.1} parent=1 // pred_check_branch
      %8608 = sbr.rel (0) target = $region133
    $region132: #{transformer_decoder.1} parent=1 // pred_region
      _
    $region133: #{transformer_decoder.1} parent=1 // pred_fallthru
      _
    // Predicated region
    $region134: #{transformer_decoder.1} parent=1 // pred_check
      _
    $region135: #{transformer_decoder.1} parent=1 // pred_check_branch
      %8610 = sbr.rel (0) target = $region137
    $region136: #{transformer_decoder.1} parent=1 // pred_region
      _
    $region137: #{transformer_decoder.1} parent=1 // pred_fallthru
      _
    %8611 = vsyncpa [#allocation3], 1
    %8612 = vsyncpa [#allocation5], 1
    %8613 = vsyncpa [#allocation8], 1
    %8614 = vsyncpa [#allocation11], 1

</llo_original>
